<compile_context>
chip_gen: v7x
topology: tpu7x:2x2x1
jax: 0.10.0
libtpu: 0.0.40
codegen_flags: <defaults>
</compile_context>

<pallas_src>
import math
import jax
import jax.numpy as jnp
from jax import lax
from jax.experimental import pallas as pl
from jax.experimental.pallas import tpu as pltpu

# ----- module hyper-parameters (small, consistent with Memory.__init__) -----
INPUT_SIZE = 32
MEM_SIZE   = 32          # m
CELL_SIZE  = 16          # w
READ_HEADS = 4           # r
K          = CELL_SIZE   # self.key_size == 0  ->  k = cell_size
# interface_size = k*r + k + 2*(k + w) + 2*r + 5   (k here = cell_size)
IFACE = K * READ_HEADS + K + 2 * (K + CELL_SIZE) + 2 * READ_HEADS + 5   # = 157
EPS_LN = 1e-5            # GroupNorm eps
DELTA  = 1e-6            # δ used by the DNC util (cosine eps, allocation eps)

# packed output row layouts
#   o16 : (B, 41, 16) rows = [memory 0:32 | read_vectors 32:36 | read_keys 36:40 | write_key 40]
#   o32 : (B,  6, 32) rows = [read_weights 0:4 | write_weights 4 | usage 5]
O16_ROWS = MEM_SIZE + READ_HEADS + READ_HEADS + 1   # 41
O32_ROWS = READ_HEADS + 1 + 1                       # 6


# ----------------------------- kernel helpers -----------------------------
def _softplus(x):
    return jnp.maximum(x, 0.0) + jnp.log(1.0 + jnp.exp(-jnp.abs(x)))


def _sigmoid(x):
    return 1.0 / (1.0 + jnp.exp(-x))


def _softmax_last(x):
    m_ = jnp.max(x, axis=-1, keepdims=True)
    e = jnp.exp(x - m_)
    return e / jnp.sum(e, axis=-1, keepdims=True)


def _combine_heads(x, op):
    # Balanced elementwise `op` over the (static, small) head axis=1 of a
    # (bb, r, m) array. Fully vectorized over batch and memory slots; avoids
    # relying on reduce_prod / non-minor-axis reduction lowering.
    rows = [x[:, h:h + 1, :] for h in range(x.shape[1])]
    while len(rows) > 1:
        nxt = [op(rows[i], rows[i + 1]) for i in range(0, len(rows) - 1, 2)]
        if len(rows) % 2:
            nxt.append(rows[-1])
        rows = nxt
    return rows[0]


def _cosine_rows(keys, mem):
    # θ: cosine similarity of key rows against memory rows,
    #     dot / ((||key|| + δ) * ||mem|| + δ) per-row normalisation a/(||a||+δ).
    # TODO(synk): verify δ placement against the exact θ in baselines/dnc utils
    #             (some variants use dot / (||a||·||b|| + δ)).
    kn = jnp.sqrt(jnp.sum(keys * keys, axis=-1, keepdims=True))   # (bb, h, 1)
    mn = jnp.sqrt(jnp.sum(mem * mem, axis=-1, keepdims=True))     # (bb, m, 1)
    return jnp.einsum('bhk,bmk->bhm',
                      keys / (kn + DELTA), mem / (mn + DELTA),
                      preferred_element_type=jnp.float32)          # (bb, h, m)


# ------------------------------ fused kernel ------------------------------
def _dnc_fused_kernel(xi_ref, w_ref, gb_ref, mem_ref, rw_ref, wwu_ref,
                      o16_ref, o32_ref):
    bb = xi_ref.shape[0]
    m, w, r, k = MEM_SIZE, CELL_SIZE, READ_HEADS, K

    # ---- interface projection (MXU) + GroupNorm(1, IFACE) ----
    z = jnp.dot(xi_ref[...], w_ref[...], preferred_element_type=jnp.float32)   # (bb, IFACE)
    mu = jnp.mean(z, axis=-1, keepdims=True)
    var = jnp.mean(jnp.square(z - mu), axis=-1, keepdims=True)
    zeta = (z - mu) * lax.rsqrt(var + EPS_LN) * gb_ref[0:1, :] + gb_ref[1:2, :]

    # ---- slice ξ into activations (static lane slices, all inside the kernel) ----
    c = 0
    read_keys  = jnp.tanh(zeta[:, c:c + r * k]).reshape(bb, r, k); c += r * k   # (bb,r,k)
    read_str   = _softplus(zeta[:, c:c + r]).reshape(bb, r, 1);    c += r       # (bb,r,1)
    write_key  = jnp.tanh(zeta[:, c:c + k]).reshape(bb, 1, k);     c += k       # (bb,1,k)
    write_str  = _softplus(zeta[:, c:c + 1]).reshape(bb, 1, 1);    c += 1       # (bb,1,1)
    erase_vec  = _sigmoid(zeta[:, c:c + w]).reshape(bb, 1, w);     c += w       # (bb,1,w)
    write_vec  = jnp.tanh(zeta[:, c:c + w]).reshape(bb, 1, w);     c += w       # (bb,1,w)
    free_gates = _sigmoid(zeta[:, c:c + r]).reshape(bb, r, 1);     c += r       # (bb,r,1)
    alloc_gate = _softmax_last(zeta[:, c:c + 3]).reshape(bb, 1, 3); c += 3      # (bb,1,3)
    write_gate = _sigmoid(zeta[:, c:c + 1]).reshape(bb, 1, 1);     c += 1       # (bb,1,1)
    # remaining IFACE - c columns are produced but never consumed (matches PyTorch)

    memory  = mem_ref[...]                   # (bb, m, w)
    read_w  = rw_ref[...]                    # (bb, r, m)   (previous read weights)
    write_w = wwu_ref[:, 0:1, :]             # (bb, 1, m)   (previous write weights)
    usage   = wwu_ref[:, 1:2, :]             # (bb, 1, m)   (previous usage)

    # ---------------- usage vector (get_usage_vector) ----------------
    # single write head: 1 - prod(1 - ww) == ww
    usage1 = usage + (1.0 - usage) * write_w                                   # (bb,1,m)
    psi = _combine_heads(1.0 - free_gates * read_w, jnp.multiply)              # (bb,1,m)
    usage2 = usage1 * psi                                                      # stored usage

    # ---------------- write content weighting (pre-write memory) ----------------
    write_cw = _softmax_last(_cosine_rows(write_key, memory) * write_str)      # (bb,1,m)

    # ------------- allocation (sort-free topk/cumprod/gather equivalent) -------------
    # alloc[i] = (1 - u'_i) * Π_{j ranked before i} u'_j   with ascending-usage rank,
    # ties broken by index (stable).
    up = DELTA + (1.0 - DELTA) * usage2                    # (bb,1,m), strictly > 0
    up_col = jnp.swapaxes(up, 1, 2)                        # (bb,m,1)  plain transpose
    idx_j = lax.broadcasted_iota(jnp.int32, (m, m), 0)
    idx_i = lax.broadcasted_iota(jnp.int32, (m, m), 1)
    # before[b, j, i] == 1  iff slot j precedes slot i in ascending-usage order
    before = jnp.logical_or(
        up_col < up,
        jnp.logical_and(up_col == up, idx_j < idx_i)).astype(jnp.float32)      # (bb,m,m)
    log_prod = jnp.einsum('bqj,bji->bqi', jnp.log(up), before,
                          preferred_element_type=jnp.float32)                  # (bb,1,m)
    alloc = (1.0 - up) * jnp.exp(log_prod)                                     # (bb,1,m)

    # ---------------- write weighting ----------------
    mean_rw = _combine_heads(read_w, jnp.add) * (1.0 / r)                      # (bb,1,m)
    fw = (alloc_gate[:, :, 0:1] * mean_rw
          + alloc_gate[:, :, 1:2] * alloc
          + alloc_gate[:, :, 2:3] * write_cw)
    new_ww = write_gate * fw                                                   # (bb,1,m)

    # ---------------- erase + write memory (broadcasted outer products) ----------------
    ww_col = jnp.swapaxes(new_ww, 1, 2)                                        # (bb,m,1)
    new_mem = memory * (1.0 - ww_col * erase_vec) + ww_col * write_vec         # (bb,m,w)

    # ---------------- read (content weighting on post-write memory) ----------------
    new_rw = _softmax_last(_cosine_rows(read_keys, new_mem) * read_str)        # (bb,r,m)
    read_vectors = jnp.einsum('brm,bmw->brw', new_rw, new_mem,
                              preferred_element_type=jnp.float32)              # (bb,r,w)

    # ---------------- packed output slabs ----------------
    o16_ref[:, 0:m, :]                     = new_mem
    o16_ref[:, m:m + r, :]                 = read_vectors
    o16_ref[:, m + r:m + 2 * r, :]         = read_keys
    o16_ref[:, m + 2 * r:m + 2 * r + 1, :] = write_key
    o32_ref[:, 0:r, :]                     = new_rw
    o32_ref[:, r:r + 1, :]                 = new_ww
    o32_ref[:, r + 1:r + 2, :]             = usage2


# ------------------------------- wrappers -------------------------------
def init_params(key):
    # nn.Linear(INPUT_SIZE, IFACE, bias=False): uniform(-1/sqrt(in), 1/sqrt(in)).
    bound = 1.0 / math.sqrt(INPUT_SIZE)
    W = jax.random.uniform(key, (INPUT_SIZE, IFACE), jnp.float32, -bound, bound)
    gamma = jnp.ones((1, IFACE), jnp.float32)    # GroupNorm affine defaults
    beta = jnp.zeros((1, IFACE), jnp.float32)
    gb = jnp.concatenate([gamma, beta], axis=0)  # (2, IFACE) param slab
    return W, gb


def _round_up(x, n):
    return ((x + n - 1) // n) * n


def _pad_batch(x, bp):
    pad = bp - x.shape[0]
    if pad == 0:
        return x
    return jnp.concatenate(
        [x, jnp.zeros((pad,) + x.shape[1:], x.dtype)], axis=0)


def memory_module_forward(xi, hidden, params):
    W, gb = params
    B = xi.shape[0]
    m, w, r = MEM_SIZE, CELL_SIZE, READ_HEADS

    bb = min(64, _round_up(B, 8))        # batch elements per grid step (multiple of 8)
    bp = _round_up(B, bb)

    # pack the two (1, m)-shaped state rows into one slab: [write_weights; usage]
    wwu = jnp.concatenate(
        [hidden['write_weights'], hidden['usage_vector'][:, None, :]], axis=1)  # (B,2,m)

    xi_p  = _pad_batch(xi.astype(jnp.float32), bp)
    mem_p = _pad_batch(hidden['memory'].astype(jnp.float32), bp)
    rw_p  = _pad_batch(hidden['read_weights'].astype(jnp.float32), bp)
    wwu_p = _pad_batch(wwu.astype(jnp.float32), bp)

    o16, o32 = pl.pallas_call(
        _dnc_fused_kernel,
        grid=(bp // bb,),
        in_specs=[
            pl.BlockSpec((bb, INPUT_SIZE), lambda i: (i, 0)),
            pl.BlockSpec((INPUT_SIZE, IFACE), lambda i: (0, 0)),
            pl.BlockSpec((2, IFACE), lambda i: (0, 0)),
            pl.BlockSpec((bb, m, w), lambda i: (i, 0, 0)),
            pl.BlockSpec((bb, r, m), lambda i: (i, 0, 0)),
            pl.BlockSpec((bb, 2, m), lambda i: (i, 0, 0)),
        ],
        out_specs=(
            pl.BlockSpec((bb, O16_ROWS, w), lambda i: (i, 0, 0)),
            pl.BlockSpec((bb, O32_ROWS, m), lambda i: (i, 0, 0)),
        ),
        out_shape=(
            jax.ShapeDtypeStruct((bp, O16_ROWS, w), jnp.float32),
            jax.ShapeDtypeStruct((bp, O32_ROWS, m), jnp.float32),
        ),
        compiler_params=pltpu.CompilerParams(dimension_semantics=("parallel",)),
    )(xi_p, W, gb, mem_p, rw_p, wwu_p)

    read_vectors = o16[:B, m:m + r, :]                      # (B, r, w)
    new_hidden = dict(hidden)
    new_hidden['memory']        = o16[:B, 0:m, :]           # (B, m, w)
    new_hidden['read_weights']  = o32[:B, 0:r, :]           # (B, r, m)
    new_hidden['write_weights'] = o32[:B, r:r + 1, :]       # (B, 1, m)
    new_hidden['usage_vector']  = o32[:B, r + 1, :]         # (B, m)
    new_hidden['read_keys']  = list(hidden['read_keys'])  + [o16[:B, m + r:m + 2 * r, :]]
    new_hidden['write_keys'] = list(hidden['write_keys']) + [o16[:B, m + 2 * r:m + 2 * r + 1, :]]
    return read_vectors, new_hidden


# --------------------------------- demo ---------------------------------
if __name__ == "__main__":
    key = jax.random.PRNGKey(0)
    kp, kx, km, krw, kww, ku = jax.random.split(key, 6)
    B = 2

    params = init_params(kp)
    xi = jax.random.normal(kx, (B, INPUT_SIZE), jnp.float32)
    hidden = {
        'memory': 0.1 * jax.random.normal(km, (B, MEM_SIZE, CELL_SIZE), jnp.float32),
        'read_weights': jax.nn.softmax(
            jax.random.normal(krw, (B, READ_HEADS, MEM_SIZE), jnp.float32), axis=-1),
        'write_weights': jax.nn.softmax(
            jax.random.normal(kww, (B, 1, MEM_SIZE), jnp.float32), axis=-1),
        'usage_vector': jax.random.uniform(ku, (B, MEM_SIZE), jnp.float32, 0.05, 0.95),
        'read_keys': [],
        'write_keys': [],
    }

    read_vectors, hidden = memory_module_forward(xi, hidden, params)
    jax.block_until_ready(read_vectors)
    jax.block_until_ready(hidden['memory'])

    assert read_vectors.shape == (B, READ_HEADS, CELL_SIZE)
    assert hidden['memory'].shape == (B, MEM_SIZE, CELL_SIZE)
    assert hidden['read_weights'].shape == (B, READ_HEADS, MEM_SIZE)
    assert hidden['write_weights'].shape == (B, 1, MEM_SIZE)
    assert hidden['usage_vector'].shape == (B, MEM_SIZE)
    assert len(hidden['read_keys']) == 1 and len(hidden['write_keys']) == 1
    print("KERNEL_OK")
</pallas_src>

<mosaic_0001>
module attributes {stable_mosaic.version = 11 : i64} {
  func.func @_dnc_fused_kernel(%arg0: i32, %arg1: memref<8x32xf32, #tpu.memory_space<vmem>>, %arg2: memref<32x157xf32, #tpu.memory_space<vmem>>, %arg3: memref<2x157xf32, #tpu.memory_space<vmem>>, %arg4: memref<8x32x16xf32, #tpu.memory_space<vmem>>, %arg5: memref<8x4x32xf32, #tpu.memory_space<vmem>>, %arg6: memref<8x2x32xf32, #tpu.memory_space<vmem>>, %arg7: memref<8x41x16xf32, #tpu.memory_space<vmem>>, %arg8: memref<8x6x32xf32, #tpu.memory_space<vmem>>) attributes {dimension_semantics = [#tpu.dimension_semantics<parallel>], iteration_bounds = array<i64: 1>, scalar_prefetch = 0 : i64, scratch_operands = 0 : i64, tpu.core_type = #tpu.core_type<tc>, window_params = [{transform_indices = @transform_0, window_bounds = array<i64: 8, 32>}, {pipeline_mode = #tpu.pipeline_mode<synchronous>, transform_indices = @transform_1, window_bounds = array<i64: 32, 157>}, {pipeline_mode = #tpu.pipeline_mode<synchronous>, transform_indices = @transform_2, window_bounds = array<i64: 2, 157>}, {transform_indices = @transform_3, window_bounds = array<i64: 8, 32, 16>}, {transform_indices = @transform_4, window_bounds = array<i64: 8, 4, 32>}, {transform_indices = @transform_5, window_bounds = array<i64: 8, 2, 32>}, {transform_indices = @transform_6, window_bounds = array<i64: 8, 41, 16>}, {transform_indices = @transform_7, window_bounds = array<i64: 8, 6, 32>}]} {
    %c0 = arith.constant 0 : index
    %c0_0 = arith.constant 0 : index
    %0 = vector.load %arg1[%c0, %c0_0] : memref<8x32xf32, #tpu.memory_space<vmem>>, vector<8x32xf32>
    %c0_1 = arith.constant 0 : index
    %c0_2 = arith.constant 0 : index
    %1 = vector.load %arg2[%c0_1, %c0_2] : memref<32x157xf32, #tpu.memory_space<vmem>>, vector<32x157xf32>
    %cst = arith.constant dense<0.000000e+00> : vector<8x157xf32>
    %2 = tpu.matmul %0, %1, %cst {dimension_numbers = #tpu.dot_dimension_numbers<[1], [0], [0], [1], [0, 0, 1, 1], [], []>} : vector<8x32xf32>, vector<32x157xf32>, vector<8x157xf32> -> vector<8x157xf32>
    %cst_3 = arith.constant dense<0.000000e+00> : vector<8xf32>
    %3 = vector.multi_reduction <add>, %2, %cst_3 [1] : vector<8x157xf32> to vector<8xf32>
    %4 = vector.shape_cast %3 : vector<8xf32> to vector<8x1xf32>
    %cst_4 = arith.constant 1.570000e+02 : f32
    %5 = vector.broadcast %cst_4 : f32 to vector<8x1xf32>
    %6 = arith.divf %4, %5 : vector<8x1xf32>
    %7 = vector.broadcast %6 : vector<8x1xf32> to vector<8x157xf32>
    %8 = arith.subf %2, %7 : vector<8x157xf32>
    %9 = arith.mulf %8, %8 : vector<8x157xf32>
    %cst_5 = arith.constant dense<0.000000e+00> : vector<8xf32>
    %10 = vector.multi_reduction <add>, %9, %cst_5 [1] : vector<8x157xf32> to vector<8xf32>
    %11 = vector.shape_cast %10 : vector<8xf32> to vector<8x1xf32>
    %cst_6 = arith.constant 1.570000e+02 : f32
    %12 = vector.broadcast %cst_6 : f32 to vector<8x1xf32>
    %13 = arith.divf %11, %12 : vector<8x1xf32>
    %14 = vector.broadcast %6 : vector<8x1xf32> to vector<8x157xf32>
    %15 = arith.subf %2, %14 : vector<8x157xf32>
    %cst_7 = arith.constant 9.99999974E-6 : f32
    %16 = vector.broadcast %cst_7 : f32 to vector<8x1xf32>
    %17 = arith.addf %13, %16 : vector<8x1xf32>
    %18 = math.rsqrt %17 : vector<8x1xf32>
    %19 = vector.broadcast %18 : vector<8x1xf32> to vector<8x157xf32>
    %20 = arith.mulf %15, %19 : vector<8x157xf32>
    %c0_8 = arith.constant 0 : index
    %c0_9 = arith.constant 0 : index
    %21 = vector.load %arg3[%c0_8, %c0_9] : memref<2x157xf32, #tpu.memory_space<vmem>>, vector<1x157xf32>
    %22 = vector.broadcast %21 : vector<1x157xf32> to vector<8x157xf32>
    %23 = arith.mulf %20, %22 : vector<8x157xf32>
    %c1 = arith.constant 1 : index
    %c0_10 = arith.constant 0 : index
    %24 = vector.load %arg3[%c1, %c0_10] : memref<2x157xf32, #tpu.memory_space<vmem>>, vector<1x157xf32>
    %25 = vector.broadcast %24 : vector<1x157xf32> to vector<8x157xf32>
    %26 = arith.addf %23, %25 : vector<8x157xf32>
    %27 = vector.extract_strided_slice %26 {offsets = [0, 0], sizes = [8, 64], strides = [1, 1]} : vector<8x157xf32> to vector<8x64xf32>
    %28 = math.tanh %27 : vector<8x64xf32>
    %29 = vector.shape_cast %28 : vector<8x64xf32> to vector<8x4x16xf32>
    %30 = vector.extract_strided_slice %26 {offsets = [0, 64], sizes = [8, 4], strides = [1, 1]} : vector<8x157xf32> to vector<8x4xf32>
    %cst_11 = arith.constant 0.000000e+00 : f32
    %31 = vector.broadcast %cst_11 : f32 to vector<8x4xf32>
    %32 = arith.maximumf %30, %31 : vector<8x4xf32>
    %33 = math.absf %30 : vector<8x4xf32>
    %cst_12 = arith.constant 0.000000e+00 : f32
    %34 = vector.broadcast %cst_12 : f32 to vector<8x4xf32>
    %35 = arith.subf %34, %33 : vector<8x4xf32>
    %36 = math.exp %35 : vector<8x4xf32>
    %cst_13 = arith.constant 1.000000e+00 : f32
    %37 = vector.broadcast %cst_13 : f32 to vector<8x4xf32>
    %38 = arith.addf %37, %36 : vector<8x4xf32>
    %39 = math.log %38 : vector<8x4xf32>
    %40 = arith.addf %32, %39 : vector<8x4xf32>
    %41 = vector.shape_cast %40 : vector<8x4xf32> to vector<8x4x1xf32>
    %42 = vector.extract_strided_slice %26 {offsets = [0, 68], sizes = [8, 16], strides = [1, 1]} : vector<8x157xf32> to vector<8x16xf32>
    %43 = math.tanh %42 : vector<8x16xf32>
    %44 = vector.shape_cast %43 : vector<8x16xf32> to vector<8x1x16xf32>
    %45 = vector.extract_strided_slice %26 {offsets = [0, 84], sizes = [8, 1], strides = [1, 1]} : vector<8x157xf32> to vector<8x1xf32>
    %cst_14 = arith.constant 0.000000e+00 : f32
    %46 = vector.broadcast %cst_14 : f32 to vector<8x1xf32>
    %47 = arith.maximumf %45, %46 : vector<8x1xf32>
    %48 = math.absf %45 : vector<8x1xf32>
    %cst_15 = arith.constant 0.000000e+00 : f32
    %49 = vector.broadcast %cst_15 : f32 to vector<8x1xf32>
    %50 = arith.subf %49, %48 : vector<8x1xf32>
    %51 = math.exp %50 : vector<8x1xf32>
    %cst_16 = arith.constant 1.000000e+00 : f32
    %52 = vector.broadcast %cst_16 : f32 to vector<8x1xf32>
    %53 = arith.addf %52, %51 : vector<8x1xf32>
    %54 = math.log %53 : vector<8x1xf32>
    %55 = arith.addf %47, %54 : vector<8x1xf32>
    %56 = vector.shape_cast %55 : vector<8x1xf32> to vector<8x1x1xf32>
    %57 = vector.extract_strided_slice %26 {offsets = [0, 85], sizes = [8, 16], strides = [1, 1]} : vector<8x157xf32> to vector<8x16xf32>
    %cst_17 = arith.constant 0.000000e+00 : f32
    %58 = vector.broadcast %cst_17 : f32 to vector<8x16xf32>
    %59 = arith.subf %58, %57 : vector<8x16xf32>
    %60 = math.exp %59 : vector<8x16xf32>
    %cst_18 = arith.constant 1.000000e+00 : f32
    %61 = vector.broadcast %cst_18 : f32 to vector<8x16xf32>
    %62 = arith.addf %61, %60 : vector<8x16xf32>
    %cst_19 = arith.constant 1.000000e+00 : f32
    %63 = vector.broadcast %cst_19 : f32 to vector<8x16xf32>
    %64 = arith.divf %63, %62 : vector<8x16xf32>
    %65 = vector.shape_cast %64 : vector<8x16xf32> to vector<8x1x16xf32>
    %66 = vector.extract_strided_slice %26 {offsets = [0, 101], sizes = [8, 16], strides = [1, 1]} : vector<8x157xf32> to vector<8x16xf32>
    %67 = math.tanh %66 : vector<8x16xf32>
    %68 = vector.shape_cast %67 : vector<8x16xf32> to vector<8x1x16xf32>
    %69 = vector.extract_strided_slice %26 {offsets = [0, 117], sizes = [8, 4], strides = [1, 1]} : vector<8x157xf32> to vector<8x4xf32>
    %cst_20 = arith.constant 0.000000e+00 : f32
    %70 = vector.broadcast %cst_20 : f32 to vector<8x4xf32>
    %71 = arith.subf %70, %69 : vector<8x4xf32>
    %72 = math.exp %71 : vector<8x4xf32>
    %cst_21 = arith.constant 1.000000e+00 : f32
    %73 = vector.broadcast %cst_21 : f32 to vector<8x4xf32>
    %74 = arith.addf %73, %72 : vector<8x4xf32>
    %cst_22 = arith.constant 1.000000e+00 : f32
    %75 = vector.broadcast %cst_22 : f32 to vector<8x4xf32>
    %76 = arith.divf %75, %74 : vector<8x4xf32>
    %77 = vector.shape_cast %76 : vector<8x4xf32> to vector<8x4x1xf32>
    %78 = vector.extract_strided_slice %26 {offsets = [0, 121], sizes = [8, 3], strides = [1, 1]} : vector<8x157xf32> to vector<8x3xf32>
    %cst_23 = arith.constant dense<0xFF800000> : vector<8xf32>
    %79 = vector.multi_reduction <maximumf>, %78, %cst_23 [1] : vector<8x3xf32> to vector<8xf32>
    %80 = vector.shape_cast %79 : vector<8xf32> to vector<8x1xf32>
    %81 = vector.broadcast %80 : vector<8x1xf32> to vector<8x3xf32>
    %82 = arith.subf %78, %81 : vector<8x3xf32>
    %83 = math.exp %82 : vector<8x3xf32>
    %cst_24 = arith.constant dense<0.000000e+00> : vector<8xf32>
    %84 = vector.multi_reduction <add>, %83, %cst_24 [1] : vector<8x3xf32> to vector<8xf32>
    %85 = vector.shape_cast %84 : vector<8xf32> to vector<8x1xf32>
    %86 = vector.broadcast %85 : vector<8x1xf32> to vector<8x3xf32>
    %87 = arith.divf %83, %86 : vector<8x3xf32>
    %88 = vector.shape_cast %87 : vector<8x3xf32> to vector<8x1x3xf32>
    %89 = vector.extract_strided_slice %26 {offsets = [0, 124], sizes = [8, 1], strides = [1, 1]} : vector<8x157xf32> to vector<8x1xf32>
    %cst_25 = arith.constant 0.000000e+00 : f32
    %90 = vector.broadcast %cst_25 : f32 to vector<8x1xf32>
    %91 = arith.subf %90, %89 : vector<8x1xf32>
    %92 = math.exp %91 : vector<8x1xf32>
    %cst_26 = arith.constant 1.000000e+00 : f32
    %93 = vector.broadcast %cst_26 : f32 to vector<8x1xf32>
    %94 = arith.addf %93, %92 : vector<8x1xf32>
    %cst_27 = arith.constant 1.000000e+00 : f32
    %95 = vector.broadcast %cst_27 : f32 to vector<8x1xf32>
    %96 = arith.divf %95, %94 : vector<8x1xf32>
    %97 = vector.shape_cast %96 : vector<8x1xf32> to vector<8x1x1xf32>
    %c0_28 = arith.constant 0 : index
    %c0_29 = arith.constant 0 : index
    %c0_30 = arith.constant 0 : index
    %98 = vector.load %arg4[%c0_28, %c0_29, %c0_30] : memref<8x32x16xf32, #tpu.memory_space<vmem>>, vector<8x32x16xf32>
    %c0_31 = arith.constant 0 : index
    %c0_32 = arith.constant 0 : index
    %c0_33 = arith.constant 0 : index
    %99 = vector.load %arg5[%c0_31, %c0_32, %c0_33] : memref<8x4x32xf32, #tpu.memory_space<vmem>>, vector<8x4x32xf32>
    %c0_34 = arith.constant 0 : index
    %c0_35 = arith.constant 0 : index
    %c0_36 = arith.constant 0 : index
    %100 = vector.load %arg6[%c0_34, %c0_35, %c0_36] : memref<8x2x32xf32, #tpu.memory_space<vmem>>, vector<8x1x32xf32>
    %c0_37 = arith.constant 0 : index
    %c1_38 = arith.constant 1 : index
    %c0_39 = arith.constant 0 : index
    %101 = vector.load %arg6[%c0_37, %c1_38, %c0_39] : memref<8x2x32xf32, #tpu.memory_space<vmem>>, vector<8x1x32xf32>
    %cst_40 = arith.constant 1.000000e+00 : f32
    %102 = vector.broadcast %cst_40 : f32 to vector<8x1x32xf32>
    %103 = arith.subf %102, %101 : vector<8x1x32xf32>
    %104 = arith.mulf %103, %100 : vector<8x1x32xf32>
    %105 = arith.addf %101, %104 : vector<8x1x32xf32>
    %106 = vector.broadcast %77 : vector<8x4x1xf32> to vector<8x4x32xf32>
    %107 = arith.mulf %106, %99 : vector<8x4x32xf32>
    %cst_41 = arith.constant 1.000000e+00 : f32
    %108 = vector.broadcast %cst_41 : f32 to vector<8x4x32xf32>
    %109 = arith.subf %108, %107 : vector<8x4x32xf32>
    %110 = vector.extract_strided_slice %109 {offsets = [0, 0, 0], sizes = [8, 1, 32], strides = [1, 1, 1]} : vector<8x4x32xf32> to vector<8x1x32xf32>
    %111 = vector.extract_strided_slice %109 {offsets = [0, 1, 0], sizes = [8, 1, 32], strides = [1, 1, 1]} : vector<8x4x32xf32> to vector<8x1x32xf32>
    %112 = vector.extract_strided_slice %109 {offsets = [0, 2, 0], sizes = [8, 1, 32], strides = [1, 1, 1]} : vector<8x4x32xf32> to vector<8x1x32xf32>
    %113 = vector.extract_strided_slice %109 {offsets = [0, 3, 0], sizes = [8, 1, 32], strides = [1, 1, 1]} : vector<8x4x32xf32> to vector<8x1x32xf32>
    %114 = arith.mulf %110, %111 : vector<8x1x32xf32>
    %115 = arith.mulf %112, %113 : vector<8x1x32xf32>
    %116 = arith.mulf %114, %115 : vector<8x1x32xf32>
    %117 = arith.mulf %105, %116 : vector<8x1x32xf32>
    %118 = arith.mulf %44, %44 : vector<8x1x16xf32>
    %cst_42 = arith.constant dense<0.000000e+00> : vector<8x1xf32>
    %119 = vector.multi_reduction <add>, %118, %cst_42 [2] : vector<8x1x16xf32> to vector<8x1xf32>
    %120 = vector.shape_cast %119 : vector<8x1xf32> to vector<8x1x1xf32>
    %121 = math.sqrt %120 : vector<8x1x1xf32>
    %122 = arith.mulf %98, %98 : vector<8x32x16xf32>
    %cst_43 = arith.constant dense<0.000000e+00> : vector<8x32xf32>
    %123 = vector.multi_reduction <add>, %122, %cst_43 [2] : vector<8x32x16xf32> to vector<8x32xf32>
    %124 = vector.shape_cast %123 : vector<8x32xf32> to vector<8x32x1xf32>
    %125 = math.sqrt %124 : vector<8x32x1xf32>
    %cst_44 = arith.constant 9.99999997E-7 : f32
    %126 = vector.broadcast %cst_44 : f32 to vector<8x1x1xf32>
    %127 = arith.addf %121, %126 : vector<8x1x1xf32>
    %128 = vector.broadcast %127 : vector<8x1x1xf32> to vector<8x1x16xf32>
    %129 = arith.divf %44, %128 : vector<8x1x16xf32>
    %cst_45 = arith.constant 9.99999997E-7 : f32
    %130 = vector.broadcast %cst_45 : f32 to vector<8x32x1xf32>
    %131 = arith.addf %125, %130 : vector<8x32x1xf32>
    %132 = vector.broadcast %131 : vector<8x32x1xf32> to vector<8x32x16xf32>
    %133 = arith.divf %98, %132 : vector<8x32x16xf32>
    "tpu.trace_start"() <{level = 10 : i32, message = "bhk,bmk->bhm"}> : () -> ()
    %cst_46 = arith.constant dense<0.000000e+00> : vector<8x1x32xf32>
    %134 = tpu.matmul %129, %133, %cst_46 {dimension_numbers = #tpu.dot_dimension_numbers<[2], [2], [1], [1], [0, 0, 0, 1, 1, 1], [0], [0]>} : vector<8x1x16xf32>, vector<8x32x16xf32>, vector<8x1x32xf32> -> vector<8x1x32xf32>
    "tpu.trace_stop"() : () -> ()
    %135 = vector.broadcast %56 : vector<8x1x1xf32> to vector<8x1x32xf32>
    %136 = arith.mulf %134, %135 : vector<8x1x32xf32>
    %cst_47 = arith.constant dense<0xFF800000> : vector<8x1xf32>
    %137 = vector.multi_reduction <maximumf>, %136, %cst_47 [2] : vector<8x1x32xf32> to vector<8x1xf32>
    %138 = vector.shape_cast %137 : vector<8x1xf32> to vector<8x1x1xf32>
    %139 = vector.broadcast %138 : vector<8x1x1xf32> to vector<8x1x32xf32>
    %140 = arith.subf %136, %139 : vector<8x1x32xf32>
    %141 = math.exp %140 : vector<8x1x32xf32>
    %cst_48 = arith.constant dense<0.000000e+00> : vector<8x1xf32>
    %142 = vector.multi_reduction <add>, %141, %cst_48 [2] : vector<8x1x32xf32> to vector<8x1xf32>
    %143 = vector.shape_cast %142 : vector<8x1xf32> to vector<8x1x1xf32>
    %144 = vector.broadcast %143 : vector<8x1x1xf32> to vector<8x1x32xf32>
    %145 = arith.divf %141, %144 : vector<8x1x32xf32>
    %cst_49 = arith.constant 0.999998986 : f32
    %146 = vector.broadcast %cst_49 : f32 to vector<8x1x32xf32>
    %147 = arith.mulf %146, %117 : vector<8x1x32xf32>
    %cst_50 = arith.constant 9.99999997E-7 : f32
    %148 = vector.broadcast %cst_50 : f32 to vector<8x1x32xf32>
    %149 = arith.addf %148, %147 : vector<8x1x32xf32>
    %150 = tpu.transpose %149, [0, 2, 1] : vector<8x1x32xf32> -> vector<8x32x1xf32>
    %151 = tpu.iota {dimensions = array<i32: 0>} : vector<32x32xi32>
    %152 = tpu.iota {dimensions = array<i32: 1>} : vector<32x32xi32>
    %153 = vector.broadcast %150 : vector<8x32x1xf32> to vector<8x32x32xf32>
    %154 = vector.broadcast %149 : vector<8x1x32xf32> to vector<8x32x32xf32>
    %155 = arith.cmpf olt, %153, %154 : vector<8x32x32xf32>
    %156 = vector.broadcast %150 : vector<8x32x1xf32> to vector<8x32x32xf32>
    %157 = vector.broadcast %149 : vector<8x1x32xf32> to vector<8x32x32xf32>
    %158 = arith.cmpf oeq, %156, %157 : vector<8x32x32xf32>
    %159 = arith.cmpi slt, %151, %152 : vector<32x32xi32>
    %160 = vector.shape_cast %159 : vector<32x32xi1> to vector<1x32x32xi1>
    %161 = vector.broadcast %160 : vector<1x32x32xi1> to vector<8x32x32xi1>
    %162 = arith.andi %158, %161 : vector<8x32x32xi1>
    %163 = arith.ori %155, %162 : vector<8x32x32xi1>
    %164 = arith.extui %163 : vector<8x32x32xi1> to vector<8x32x32xi32>
    %165 = arith.sitofp %164 : vector<8x32x32xi32> to vector<8x32x32xf32>
    %166 = math.log %149 : vector<8x1x32xf32>
    "tpu.trace_start"() <{level = 10 : i32, message = "bqj,bji->bqi"}> : () -> ()
    %cst_51 = arith.constant dense<0.000000e+00> : vector<8x1x32xf32>
    %167 = tpu.matmul %166, %165, %cst_51 {dimension_numbers = #tpu.dot_dimension_numbers<[2], [1], [1], [2], [0, 0, 0, 1, 1, 2], [0], [0]>} : vector<8x1x32xf32>, vector<8x32x32xf32>, vector<8x1x32xf32> -> vector<8x1x32xf32>
    "tpu.trace_stop"() : () -> ()
    %cst_52 = arith.constant 1.000000e+00 : f32
    %168 = vector.broadcast %cst_52 : f32 to vector<8x1x32xf32>
    %169 = arith.subf %168, %149 : vector<8x1x32xf32>
    %170 = math.exp %167 : vector<8x1x32xf32>
    %171 = arith.mulf %169, %170 : vector<8x1x32xf32>
    %172 = vector.extract_strided_slice %99 {offsets = [0, 0, 0], sizes = [8, 1, 32], strides = [1, 1, 1]} : vector<8x4x32xf32> to vector<8x1x32xf32>
    %173 = vector.extract_strided_slice %99 {offsets = [0, 1, 0], sizes = [8, 1, 32], strides = [1, 1, 1]} : vector<8x4x32xf32> to vector<8x1x32xf32>
    %174 = vector.extract_strided_slice %99 {offsets = [0, 2, 0], sizes = [8, 1, 32], strides = [1, 1, 1]} : vector<8x4x32xf32> to vector<8x1x32xf32>
    %175 = vector.extract_strided_slice %99 {offsets = [0, 3, 0], sizes = [8, 1, 32], strides = [1, 1, 1]} : vector<8x4x32xf32> to vector<8x1x32xf32>
    %176 = arith.addf %172, %173 : vector<8x1x32xf32>
    %177 = arith.addf %174, %175 : vector<8x1x32xf32>
    %178 = arith.addf %176, %177 : vector<8x1x32xf32>
    %cst_53 = arith.constant 2.500000e-01 : f32
    %179 = vector.broadcast %cst_53 : f32 to vector<8x1x32xf32>
    %180 = arith.mulf %178, %179 : vector<8x1x32xf32>
    %181 = vector.extract_strided_slice %88 {offsets = [0, 0, 0], sizes = [8, 1, 1], strides = [1, 1, 1]} : vector<8x1x3xf32> to vector<8x1x1xf32>
    %182 = vector.broadcast %181 : vector<8x1x1xf32> to vector<8x1x32xf32>
    %183 = arith.mulf %182, %180 : vector<8x1x32xf32>
    %184 = vector.extract_strided_slice %88 {offsets = [0, 0, 1], sizes = [8, 1, 1], strides = [1, 1, 1]} : vector<8x1x3xf32> to vector<8x1x1xf32>
    %185 = vector.broadcast %184 : vector<8x1x1xf32> to vector<8x1x32xf32>
    %186 = arith.mulf %185, %171 : vector<8x1x32xf32>
    %187 = arith.addf %183, %186 : vector<8x1x32xf32>
    %188 = vector.extract_strided_slice %88 {offsets = [0, 0, 2], sizes = [8, 1, 1], strides = [1, 1, 1]} : vector<8x1x3xf32> to vector<8x1x1xf32>
    %189 = vector.broadcast %188 : vector<8x1x1xf32> to vector<8x1x32xf32>
    %190 = arith.mulf %189, %145 : vector<8x1x32xf32>
    %191 = arith.addf %187, %190 : vector<8x1x32xf32>
    %192 = vector.broadcast %97 : vector<8x1x1xf32> to vector<8x1x32xf32>
    %193 = arith.mulf %192, %191 : vector<8x1x32xf32>
    %194 = tpu.transpose %193, [0, 2, 1] : vector<8x1x32xf32> -> vector<8x32x1xf32>
    %195 = vector.broadcast %194 : vector<8x32x1xf32> to vector<8x32x16xf32>
    %196 = vector.broadcast %65 : vector<8x1x16xf32> to vector<8x32x16xf32>
    %197 = arith.mulf %195, %196 : vector<8x32x16xf32>
    %cst_54 = arith.constant 1.000000e+00 : f32
    %198 = vector.broadcast %cst_54 : f32 to vector<8x32x16xf32>
    %199 = arith.subf %198, %197 : vector<8x32x16xf32>
    %200 = arith.mulf %98, %199 : vector<8x32x16xf32>
    %201 = vector.broadcast %194 : vector<8x32x1xf32> to vector<8x32x16xf32>
    %202 = vector.broadcast %68 : vector<8x1x16xf32> to vector<8x32x16xf32>
    %203 = arith.mulf %201, %202 : vector<8x32x16xf32>
    %204 = arith.addf %200, %203 : vector<8x32x16xf32>
    %205 = arith.mulf %29, %29 : vector<8x4x16xf32>
    %cst_55 = arith.constant dense<0.000000e+00> : vector<8x4xf32>
    %206 = vector.multi_reduction <add>, %205, %cst_55 [2] : vector<8x4x16xf32> to vector<8x4xf32>
    %207 = vector.shape_cast %206 : vector<8x4xf32> to vector<8x4x1xf32>
    %208 = math.sqrt %207 : vector<8x4x1xf32>
    %209 = arith.mulf %204, %204 : vector<8x32x16xf32>
    %cst_56 = arith.constant dense<0.000000e+00> : vector<8x32xf32>
    %210 = vector.multi_reduction <add>, %209, %cst_56 [2] : vector<8x32x16xf32> to vector<8x32xf32>
    %211 = vector.shape_cast %210 : vector<8x32xf32> to vector<8x32x1xf32>
    %212 = math.sqrt %211 : vector<8x32x1xf32>
    %cst_57 = arith.constant 9.99999997E-7 : f32
    %213 = vector.broadcast %cst_57 : f32 to vector<8x4x1xf32>
    %214 = arith.addf %208, %213 : vector<8x4x1xf32>
    %215 = vector.broadcast %214 : vector<8x4x1xf32> to vector<8x4x16xf32>
    %216 = arith.divf %29, %215 : vector<8x4x16xf32>
    %cst_58 = arith.constant 9.99999997E-7 : f32
    %217 = vector.broadcast %cst_58 : f32 to vector<8x32x1xf32>
    %218 = arith.addf %212, %217 : vector<8x32x1xf32>
    %219 = vector.broadcast %218 : vector<8x32x1xf32> to vector<8x32x16xf32>
    %220 = arith.divf %204, %219 : vector<8x32x16xf32>
    "tpu.trace_start"() <{level = 10 : i32, message = "bhk,bmk->bhm"}> : () -> ()
    %cst_59 = arith.constant dense<0.000000e+00> : vector<8x4x32xf32>
    %221 = tpu.matmul %216, %220, %cst_59 {dimension_numbers = #tpu.dot_dimension_numbers<[2], [2], [1], [1], [0, 0, 0, 1, 1, 1], [0], [0]>} : vector<8x4x16xf32>, vector<8x32x16xf32>, vector<8x4x32xf32> -> vector<8x4x32xf32>
    "tpu.trace_stop"() : () -> ()
    %222 = vector.broadcast %41 : vector<8x4x1xf32> to vector<8x4x32xf32>
    %223 = arith.mulf %221, %222 : vector<8x4x32xf32>
    %cst_60 = arith.constant dense<0xFF800000> : vector<8x4xf32>
    %224 = vector.multi_reduction <maximumf>, %223, %cst_60 [2] : vector<8x4x32xf32> to vector<8x4xf32>
    %225 = vector.shape_cast %224 : vector<8x4xf32> to vector<8x4x1xf32>
    %226 = vector.broadcast %225 : vector<8x4x1xf32> to vector<8x4x32xf32>
    %227 = arith.subf %223, %226 : vector<8x4x32xf32>
    %228 = math.exp %227 : vector<8x4x32xf32>
    %cst_61 = arith.constant dense<0.000000e+00> : vector<8x4xf32>
    %229 = vector.multi_reduction <add>, %228, %cst_61 [2] : vector<8x4x32xf32> to vector<8x4xf32>
    %230 = vector.shape_cast %229 : vector<8x4xf32> to vector<8x4x1xf32>
    %231 = vector.broadcast %230 : vector<8x4x1xf32> to vector<8x4x32xf32>
    %232 = arith.divf %228, %231 : vector<8x4x32xf32>
    "tpu.trace_start"() <{level = 10 : i32, message = "brm,bmw->brw"}> : () -> ()
    %cst_62 = arith.constant dense<0.000000e+00> : vector<8x4x16xf32>
    %233 = tpu.matmul %232, %204, %cst_62 {dimension_numbers = #tpu.dot_dimension_numbers<[2], [1], [1], [2], [0, 0, 0, 1, 1, 2], [0], [0]>} : vector<8x4x32xf32>, vector<8x32x16xf32>, vector<8x4x16xf32> -> vector<8x4x16xf32>
    "tpu.trace_stop"() : () -> ()
    %c0_63 = arith.constant 0 : index
    %c0_64 = arith.constant 0 : index
    %c0_65 = arith.constant 0 : index
    %234 = vector.load %arg7[%c0_63, %c0_64, %c0_65] : memref<8x41x16xf32, #tpu.memory_space<vmem>>, vector<8x32x16xf32>
    tpu.vector_store %arg7[%c0_63, %c0_64, %c0_65], %204 {strides = array<i32>} : memref<8x41x16xf32, #tpu.memory_space<vmem>>, vector<8x32x16xf32>,
    %c0_66 = arith.constant 0 : index
    %c32 = arith.constant 32 : index
    %c0_67 = arith.constant 0 : index
    %235 = vector.load %arg7[%c0_66, %c32, %c0_67] : memref<8x41x16xf32, #tpu.memory_space<vmem>>, vector<8x4x16xf32>
    tpu.vector_store %arg7[%c0_66, %c32, %c0_67], %233 {strides = array<i32>} : memref<8x41x16xf32, #tpu.memory_space<vmem>>, vector<8x4x16xf32>,
    %c0_68 = arith.constant 0 : index
    %c36 = arith.constant 36 : index
    %c0_69 = arith.constant 0 : index
    %236 = vector.load %arg7[%c0_68, %c36, %c0_69] : memref<8x41x16xf32, #tpu.memory_space<vmem>>, vector<8x4x16xf32>
    tpu.vector_store %arg7[%c0_68, %c36, %c0_69], %29 {strides = array<i32>} : memref<8x41x16xf32, #tpu.memory_space<vmem>>, vector<8x4x16xf32>,
    %c0_70 = arith.constant 0 : index
    %c40 = arith.constant 40 : index
    %c0_71 = arith.constant 0 : index
    %237 = vector.load %arg7[%c0_70, %c40, %c0_71] : memref<8x41x16xf32, #tpu.memory_space<vmem>>, vector<8x1x16xf32>
    tpu.vector_store %arg7[%c0_70, %c40, %c0_71], %44 {strides = array<i32>} : memref<8x41x16xf32, #tpu.memory_space<vmem>>, vector<8x1x16xf32>,
    %c0_72 = arith.constant 0 : index
    %c0_73 = arith.constant 0 : index
    %c0_74 = arith.constant 0 : index
    %238 = vector.load %arg8[%c0_72, %c0_73, %c0_74] : memref<8x6x32xf32, #tpu.memory_space<vmem>>, vector<8x4x32xf32>
    tpu.vector_store %arg8[%c0_72, %c0_73, %c0_74], %232 {strides = array<i32>} : memref<8x6x32xf32, #tpu.memory_space<vmem>>, vector<8x4x32xf32>,
    %c0_75 = arith.constant 0 : index
    %c4 = arith.constant 4 : index
    %c0_76 = arith.constant 0 : index
    %239 = vector.load %arg8[%c0_75, %c4, %c0_76] : memref<8x6x32xf32, #tpu.memory_space<vmem>>, vector<8x1x32xf32>
    tpu.vector_store %arg8[%c0_75, %c4, %c0_76], %193 {strides = array<i32>} : memref<8x6x32xf32, #tpu.memory_space<vmem>>, vector<8x1x32xf32>,
    %c0_77 = arith.constant 0 : index
    %c5 = arith.constant 5 : index
    %c0_78 = arith.constant 0 : index
    %240 = vector.load %arg8[%c0_77, %c5, %c0_78] : memref<8x6x32xf32, #tpu.memory_space<vmem>>, vector<8x1x32xf32>
    tpu.vector_store %arg8[%c0_77, %c5, %c0_78], %117 {strides = array<i32>} : memref<8x6x32xf32, #tpu.memory_space<vmem>>, vector<8x1x32xf32>,
    return
  }
  func.func @transform_0(%arg0: i32) -> (i32, i32) {
    %c0_i32 = arith.constant 0 : i32
    %c0_i32_0 = arith.constant 0 : i32
    return %arg0, %c0_i32 : i32, i32
  }
  func.func @transform_1(%arg0: i32) -> (i32, i32) {
    %c0_i32 = arith.constant 0 : i32
    %c0_i32_0 = arith.constant 0 : i32
    %c0_i32_1 = arith.constant 0 : i32
    return %c0_i32, %c0_i32_0 : i32, i32
  }
  func.func @transform_2(%arg0: i32) -> (i32, i32) {
    %c0_i32 = arith.constant 0 : i32
    %c0_i32_0 = arith.constant 0 : i32
    %c0_i32_1 = arith.constant 0 : i32
    return %c0_i32, %c0_i32_0 : i32, i32
  }
  func.func @transform_3(%arg0: i32) -> (i32, i32, i32) {
    %c0_i32 = arith.constant 0 : i32
    %c0_i32_0 = arith.constant 0 : i32
    %c0_i32_1 = arith.constant 0 : i32
    return %arg0, %c0_i32, %c0_i32_0 : i32, i32, i32
  }
  func.func @transform_4(%arg0: i32) -> (i32, i32, i32) {
    %c0_i32 = arith.constant 0 : i32
    %c0_i32_0 = arith.constant 0 : i32
    %c0_i32_1 = arith.constant 0 : i32
    return %arg0, %c0_i32, %c0_i32_0 : i32, i32, i32
  }
  func.func @transform_5(%arg0: i32) -> (i32, i32, i32) {
    %c0_i32 = arith.constant 0 : i32
    %c0_i32_0 = arith.constant 0 : i32
    %c0_i32_1 = arith.constant 0 : i32
    return %arg0, %c0_i32, %c0_i32_0 : i32, i32, i32
  }
  func.func @transform_6(%arg0: i32) -> (i32, i32, i32) {
    %c0_i32 = arith.constant 0 : i32
    %c0_i32_0 = arith.constant 0 : i32
    %c0_i32_1 = arith.constant 0 : i32
    return %arg0, %c0_i32, %c0_i32_0 : i32, i32, i32
  }
  func.func @transform_7(%arg0: i32) -> (i32, i32, i32) {
    %c0_i32 = arith.constant 0 : i32
    %c0_i32_0 = arith.constant 0 : i32
    %c0_i32_1 = arith.constant 0 : i32
    return %arg0, %c0_i32, %c0_i32_0 : i32, i32, i32
  }
}

</mosaic_0001>

<llo_original>
// kernel: tpu_custom_call.1
$region0: #{tpu_custom_call.1}
  #allocation0 [shape = 'u32[]', space=smem, size = 0x4, offset = 0x4, fixed_abs, tag = 'smem constant byte address 0x4 - core index']
  #allocation1 [shape = 'u32[144,128]{1,0:T(1,128)}', space=vmem, size = 0x12000, scoped, tag = 'internal scratch']
  %s0 = inlined_call_operand.vmem [shape: f32[8,32], index: 0, kind: input, shape index: {}]
  %s1 = inlined_call_operand.vmem [shape: f32[32,157], index: 1, kind: input, shape index: {}]
  %s2 = inlined_call_operand.vmem [shape: f32[2,157], index: 2, kind: input, shape index: {}]
  %s3 = inlined_call_operand.vmem [shape: f32[8,32,16], index: 3, kind: input, shape index: {}]
  %s4 = inlined_call_operand.vmem [shape: f32[8,4,32], index: 4, kind: input, shape index: {}]
  %s5 = inlined_call_operand.vmem [shape: f32[8,2,32], index: 5, kind: input, shape index: {}]
  %s6 = inlined_call_operand.vmem [shape: f32[8,41,16], index: 6, kind: output, shape index: {0}]
  %s7 = inlined_call_operand.vmem [shape: f32[8,6,32], index: 7, kind: output, shape index: {1}]
  %8 = xla_tuple %s6, %s7
  %s9 = sld [smem:[#allocation0]]
  $region42: #{tpu_custom_call.1} parent=0
    _
  %s11 = ssub.s32 1, %s9
  %s12 = scalar_select 0, %s11, %s9
  // Predicated region
  $region2: #{tpu_custom_call.1} parent=0 // pred_check
    _
  $region3: #{tpu_custom_call.1} parent=0 // pred_check_branch
    %14 = sbr.rel (0) target = $region5
  $region4: #{tpu_custom_call.1} parent=0 // pred_region
    _
  $region5: #{tpu_custom_call.1} parent=0 // pred_fallthru
    _
  // Predicated region
  $region6: #{tpu_custom_call.1} parent=0 // pred_check
    _
  $region7: #{tpu_custom_call.1} parent=0 // pred_check_branch
    %16 = sbr.rel (0) target = $region9
  $region8: #{tpu_custom_call.1} parent=0 // pred_region
    _
  $region9: #{tpu_custom_call.1} parent=0 // pred_fallthru
    _
  // Predicated region
  $region10: #{tpu_custom_call.1} parent=0 // pred_check
    _
  $region11: #{tpu_custom_call.1} parent=0 // pred_check_branch
    %18 = sbr.rel (0) target = $region13
  $region12: #{tpu_custom_call.1} parent=0 // pred_region
    _
  $region13: #{tpu_custom_call.1} parent=0 // pred_fallthru
    _
  // Predicated region
  $region14: #{tpu_custom_call.1} parent=0 // pred_check
    _
  $region15: #{tpu_custom_call.1} parent=0 // pred_check_branch
    %20 = sbr.rel (0) target = $region17
  $region16: #{tpu_custom_call.1} parent=0 // pred_region
    _
  $region17: #{tpu_custom_call.1} parent=0 // pred_fallthru
    _
  // Predicated region
  $region18: #{tpu_custom_call.1} parent=0 // pred_check
    _
  $region19: #{tpu_custom_call.1} parent=0 // pred_check_branch
    %22 = sbr.rel (0) target = $region21
  $region20: #{tpu_custom_call.1} parent=0 // pred_region
    _
  $region21: #{tpu_custom_call.1} parent=0 // pred_fallthru
    _
  // Predicated region
  $region22: #{tpu_custom_call.1} parent=0 // pred_check
    _
  $region23: #{tpu_custom_call.1} parent=0 // pred_check_branch
    %24 = sbr.rel (0) target = $region25
  $region24: #{tpu_custom_call.1} parent=0 // pred_region
    _
  $region25: #{tpu_custom_call.1} parent=0 // pred_fallthru
    _
  %v25 = vld [vmem:[%s0] sm:$0xff]
  %v26 = vld [vmem:[%s1] sm:$0xff]
  %v27 = vld [vmem:[%s1 + $0x8] sm:$0xff]
  %v28 = vld [vmem:[%s1 + $0x10] sm:$0xff]
  %v29 = vld [vmem:[%s1 + $0x18] sm:$0xff]
  %v30 = vld [vmem:[%s1 + $0x20] sm:$0xff]
  %v31 = vld [vmem:[%s1 + $0x28] sm:$0xff]
  %v32 = vld [vmem:[%s1 + $0x30] sm:$0xff]
  %v33 = vld [vmem:[%s1 + $0x38] sm:$0xff]
  %vm34 = vcmask 261120
  %v36 = vsel %vm34, %v25, 0
  %38 = vmatprep.subr.mxu0 %v27
  %39 = vmatpush1.msra.mxu0 %v26
  %40 = vmatprep.subr.mxu0 %v29
  %41 = vmatpush1.msra.mxu0 %v28
  %42 = vmatprep.subr.mxu0 %v31
  %43 = vmatpush1.msra.mxu0 %v30
  %44 = vmatprep.subr.mxu0 %v33
  %45 = vmatpush1.msra.mxu0 %v32
  %46 = vmatprep.subr.mxu0 0.0
  %47 = vmatpush1.msra.mxu0 0.0
  %48 = vmatprep.subr.mxu0 0.0
  %49 = vmatpush1.msra.mxu0 0.0
  %50 = vmatprep.subr.mxu0 0.0
  %51 = vmatpush1.msra.mxu0 0.0
  %52 = vmatprep.subr.mxu0 0.0
  %53 = vmatpush1.msra.mxu0 0.0
  %54 = vmatprep.subr.mxu0 0.0
  %55 = vmatpush1.msra.mxu0 0.0
  %56 = vmatprep.subr.mxu0 0.0
  %57 = vmatpush1.msra.mxu0 0.0
  %58 = vmatprep.subr.mxu0 0.0
  %59 = vmatpush1.msra.mxu0 0.0
  %60 = vmatprep.subr.mxu0 0.0
  %61 = vmatpush1.msra.mxu0 0.0
  %62 = vmatprep.subr.mxu0 0.0
  %63 = vmatpush1.msra.mxu0 0.0
  %64 = vmatprep.subr.mxu0 0.0
  %65 = vmatpush1.msra.mxu0 0.0
  %66 = vmatprep.subr.mxu0 0.0
  %67 = vmatpush1.msra.mxu0 0.0
  %68 = vmatprep.subr.mxu0 0.0
  %69 = vmatpush1.msra.mxu0 0.0
  %70 = vmatprep.subr.mxu0 0.0
  %71 = vmatpush1.msra.mxu0 0.0
  %72 = vmatprep.subr.mxu0 0.0
  %73 = vmatpush1.msra.mxu0 0.0
  %74 = vmatprep.subr.mxu0 0.0
  %75 = vmatpush1.msra.mxu0 0.0
  %76 = vmatprep.subr.mxu0 0.0
  %77 = vmatpush1.msra.mxu0 0.0
  %78 = vmatprep.subr.mxu0 0.0
  %79 = vmatpush1.msra.mxu0 0.0
  %80 = vmatprep.subr.mxu0 0.0
  %81 = vmatpush1.msra.mxu0 0.0
  %82 = vmatprep.subr.mxu0 0.0
  %83 = vmatpush1.msra.mxu0 0.0
  %84 = vmatprep.subr.mxu0 0.0
  %85 = vmatpush1.msra.mxu0 0.0
  %86 = vmatprep.subr.mxu0 0.0
  %87 = vmatpush1.msra.mxu0 0.0
  %88 = vmatprep.subr.mxu0 0.0
  %89 = vmatpush1.msra.mxu0 0.0
  %90 = vmatprep.subr.mxu0 0.0
  %91 = vmatpush1.msra.mxu0 0.0
  %92 = vmatprep.subr.mxu0 0.0
  %93 = vmatpush1.msra.mxu0 0.0
  %94 = vmatprep.subr.mxu0 0.0
  %95 = vmatpush1.msra.mxu0 0.0
  %96 = vmatprep.subr.mxu0 0.0
  %97 = vmatpush1.msra.mxu0 0.0
  %98 = vmatprep.subr.mxu0 0.0
  %99 = vmatpush1.msra.mxu0 0.0
  %100 = vmatprep.subr.mxu0 0.0
  %101 = vmatpush1.msra.mxu0 0.0
  %102 = vmatprep.mubr.f32.mxu0 0.0
  %103 = vmatmul.mubr.f32.gmra.mrb[0].mxu0 %v36
  %v104 = vpop.f32.mrb[0].mxu0
  %v105 = vadd.f32 0.0, %v104
  %v106 = vpop.f32.mrb[0].mxu0
  %v107 = vadd.f32 0.0, %v106
  %108 = vdwg.mxu0
  %vm109 = vcmask 236544
  %v110 = vsel %vm109, %v107, 0.0
  %v111 = vadd.f32 %v105, %v110
  %112 = vadd.xlane.f32.xlu0 %v111
  %v113 = vpop.xlane.xlu0 %112
  %v114 = vrcp.pop 157.0
  %v115 = vmul.f32 %v113, %v114
  %v116 = vsub.f32 %v105, %v115
  %v117 = vsub.f32 %v107, %v115
  %v118 = vmul.f32 %v116, %v116
  %v119 = vmul.f32 %v117, %v117
  %v120 = vsel %vm109, %v119, 0.0
  %v121 = vadd.f32 %v118, %v120
  %122 = vadd.xlane.f32.xlu0 %v121
  %v123 = vpop.xlane.xlu0 %122
  %v124 = vmul.f32 %v123, %v114
  %v125 = vadd.f32 %v124, 1e-05
  %v126 = vrsqrt.pop %v125
  %v127 = vmul.f32 %v116, %v126
  %v128 = vld [vmem:[%s2] ss:$2 sm:$0x3]
  %v130 = vlaneseq
  %v131 = vshrl.u32 %v130, 7
  %v132 = vsub.s32 0, %v131
  %v133 = vrot.slane %v128, %v132
  %v135 = vmul.f32 %v127, %v133
  %s136 = scalar_lea.vmem %s2, 1
  %v137 = vld [vmem:[%s136] ss:$2 sm:$0x3]
  %v139 = vlaneseq
  %v140 = vshrl.u32 %v139, 7
  %v141 = vsub.s32 0, %v140
  %v142 = vrot.slane %v137, %v141
  %v144 = vadd.f32 %v135, %v142
  %v145 = vtanh.pop %v144
  %147 = vrot.lane.b32.xlu0 %v145, 112
  %v148 = vpop.permute.xlu0 %147
  %150 = vrot.lane.b32.xlu0 %v145, 96
  %v151 = vpop.permute.xlu0 %150
  %153 = vrot.lane.b32.xlu0 %v145, 80
  %v154 = vpop.permute.xlu0 %153
  %v156 = vcombine.low %v145, %v151
  %v157 = vcombine.high %v145, %v151
  %v159 = vunpack.c.l.s4 1983009808
  %v160 = vunpack.c.0.s8 %v159
  %v161 = vlaneseq
  %v162 = vshrl.u32 %v161, 7
  %v163 = vsub.s32 %v160, %v162
  %v164 = vrot.slane %v156, %v163
  %v166 = vunpack.c.l.s4 1983009808
  %v167 = vunpack.c.0.s8 %v166
  %v168 = vlaneseq
  %v169 = vshrl.u32 %v168, 7
  %v170 = vsub.s32 %v167, %v169
  %v171 = vrot.slane %v157, %v170
  %v172 = vcombine.low %v148, %v154
  %v173 = vcombine.high %v148, %v154
  %v175 = vunpack.c.l.s4 1983009808
  %v176 = vunpack.c.0.s8 %v175
  %v177 = vlaneseq
  %v178 = vshrl.u32 %v177, 7
  %v179 = vsub.s32 %v176, %v178
  %v180 = vrot.slane %v172, %v179
  %v182 = vunpack.c.l.s4 1983009808
  %v183 = vunpack.c.0.s8 %v182
  %v184 = vlaneseq
  %v185 = vshrl.u32 %v184, 7
  %v186 = vsub.s32 %v183, %v185
  %v187 = vrot.slane %v173, %v186
  %v188 = vcombine.low %v164, %v180
  %v189 = vcombine.high %v164, %v180
  %v191 = vunpack.c.l.s4 1934713408
  %v192 = vunpack.c.0.s8 %v191
  %v193 = vlaneseq
  %v194 = vshrl.u32 %v193, 7
  %v195 = vsub.s32 %v192, %v194
  %v196 = vrot.slane %v188, %v195
  %v198 = vunpack.c.l.s4 1934713408
  %v199 = vunpack.c.0.s8 %v198
  %v200 = vlaneseq
  %v201 = vshrl.u32 %v200, 7
  %v202 = vsub.s32 %v199, %v201
  %v203 = vrot.slane %v189, %v202
  %v204 = vcombine.low %v171, %v187
  %v205 = vcombine.high %v171, %v187
  %v207 = vunpack.c.l.s4 1934713408
  %v208 = vunpack.c.0.s8 %v207
  %v209 = vlaneseq
  %v210 = vshrl.u32 %v209, 7
  %v211 = vsub.s32 %v208, %v210
  %v212 = vrot.slane %v204, %v211
  %v214 = vunpack.c.l.s4 1934713408
  %v215 = vunpack.c.0.s8 %v214
  %v216 = vlaneseq
  %v217 = vshrl.u32 %v216, 7
  %v218 = vsub.s32 %v215, %v217
  %v219 = vrot.slane %v205, %v218
  %v220 = vcombine.high %v196, 0.0
  %v221 = vcombine.high %v203, 0.0
  %v222 = vcombine.high %v212, 0.0
  %v223 = vcombine.high %v219, 0.0
  %v224 = vmax.f32 %v144, 0.0
  %v225 = vand.u32 2147483647, %v144
  %v226 = vsub.f32 0.0, %v225
  %v227 = vmul.f32 %v226, 1.442695
  %v228 = vpow.pop %v227
  %v229 = vadd.f32 %v228, 1.0
  %v230 = vlog2.pop %v229
  %v231 = vmul.f32 %v230, 0.6931472
  %v232 = vadd.f32 %v224, %v231
  %v233 = vlaneseq
  %v234 = vshrl.u32 %v233, 7
  %v235 = vsub.s32 0, %v234
  %v236 = vrot.slane %v232, %v235
  %s238 = sor.u32 256, 64
  %239 = vbcast.lane.b32.xlu0 %v236, %s238
  %v240 = vpop.permute.xlu0 %239
  %v241 = vlaneseq
  %v242 = vshrl.u32 %v241, 7
  %v243 = vsub.s32 1, %v242
  %v244 = vrot.slane %v232, %v243
  %s246 = sor.u32 256, 64
  %247 = vbcast.lane.b32.xlu0 %v244, %s246
  %v248 = vpop.permute.xlu0 %247
  %v249 = vlaneseq
  %v250 = vshrl.u32 %v249, 7
  %v251 = vsub.s32 2, %v250
  %v252 = vrot.slane %v232, %v251
  %s254 = sor.u32 256, 64
  %255 = vbcast.lane.b32.xlu0 %v252, %s254
  %v256 = vpop.permute.xlu0 %255
  %v257 = vlaneseq
  %v258 = vshrl.u32 %v257, 7
  %v259 = vsub.s32 3, %v258
  %v260 = vrot.slane %v232, %v259
  %s262 = sor.u32 256, 64
  %263 = vbcast.lane.b32.xlu0 %v260, %s262
  %v264 = vpop.permute.xlu0 %263
  %v265 = vlaneseq
  %v266 = vshrl.u32 %v265, 7
  %v267 = vsub.s32 4, %v266
  %v268 = vrot.slane %v232, %v267
  %s270 = sor.u32 256, 64
  %271 = vbcast.lane.b32.xlu0 %v268, %s270
  %v272 = vpop.permute.xlu0 %271
  %v273 = vlaneseq
  %v274 = vshrl.u32 %v273, 7
  %v275 = vsub.s32 5, %v274
  %v276 = vrot.slane %v232, %v275
  %s278 = sor.u32 256, 64
  %279 = vbcast.lane.b32.xlu0 %v276, %s278
  %v280 = vpop.permute.xlu0 %279
  %v281 = vlaneseq
  %v282 = vshrl.u32 %v281, 7
  %v283 = vsub.s32 6, %v282
  %v284 = vrot.slane %v232, %v283
  %s286 = sor.u32 256, 64
  %287 = vbcast.lane.b32.xlu0 %v284, %s286
  %v288 = vpop.permute.xlu0 %287
  %v289 = vlaneseq
  %v290 = vshrl.u32 %v289, 7
  %v291 = vsub.s32 7, %v290
  %v292 = vrot.slane %v232, %v291
  %s294 = sor.u32 256, 64
  %295 = vbcast.lane.b32.xlu0 %v292, %s294
  %v296 = vpop.permute.xlu0 %295
  %v297 = vcombine.high %v145, %v145
  %v299 = vunpack.c.l.s4 1966171168
  %v300 = vunpack.c.0.s8 %v299
  %v301 = vlaneseq
  %v302 = vshrl.u32 %v301, 7
  %v303 = vsub.s32 %v300, %v302
  %v304 = vrot.slane %v145, %v303
  %v306 = vunpack.c.l.s4 1966171168
  %v307 = vunpack.c.0.s8 %v306
  %v308 = vlaneseq
  %v309 = vshrl.u32 %v308, 7
  %v310 = vsub.s32 %v307, %v309
  %v311 = vrot.slane %v297, %v310
  %v312 = vcombine.high %v304, %v304
  %v313 = vcombine.high %v311, %v311
  %v315 = vunpack.c.l.s4 1966171168
  %v316 = vunpack.c.0.s8 %v315
  %v317 = vlaneseq
  %v318 = vshrl.u32 %v317, 7
  %v319 = vsub.s32 %v316, %v318
  %v320 = vrot.slane %v304, %v319
  %v322 = vunpack.c.l.s4 1966171168
  %v323 = vunpack.c.0.s8 %v322
  %v324 = vlaneseq
  %v325 = vshrl.u32 %v324, 7
  %v326 = vsub.s32 %v323, %v325
  %v327 = vrot.slane %v311, %v326
  %v329 = vunpack.c.l.s4 1966171168
  %v330 = vunpack.c.0.s8 %v329
  %v331 = vlaneseq
  %v332 = vshrl.u32 %v331, 7
  %v333 = vsub.s32 %v330, %v332
  %v334 = vrot.slane %v312, %v333
  %v336 = vunpack.c.l.s4 1966171168
  %v337 = vunpack.c.0.s8 %v336
  %v338 = vlaneseq
  %v339 = vshrl.u32 %v338, 7
  %v340 = vsub.s32 %v337, %v339
  %v341 = vrot.slane %v313, %v340
  %v342 = vcombine.high %v320, %v320
  %v343 = vcombine.high %v327, %v327
  %v344 = vcombine.high %v334, %v334
  %v345 = vcombine.high %v341, %v341
  %v355 = vcombine.high %v232, %v232
  %v357 = vunpack.c.l.s4 1966171168
  %v358 = vunpack.c.0.s8 %v357
  %v359 = vlaneseq
  %v360 = vshrl.u32 %v359, 7
  %v361 = vsub.s32 %v358, %v360
  %v362 = vrot.slane %v232, %v361
  %v364 = vunpack.c.l.s4 1966171168
  %v365 = vunpack.c.0.s8 %v364
  %v366 = vlaneseq
  %v367 = vshrl.u32 %v366, 7
  %v368 = vsub.s32 %v365, %v367
  %v369 = vrot.slane %v355, %v368
  %v370 = vcombine.high %v362, %v362
  %v371 = vcombine.high %v369, %v369
  %v373 = vunpack.c.l.s4 1966171168
  %v374 = vunpack.c.0.s8 %v373
  %v375 = vlaneseq
  %v376 = vshrl.u32 %v375, 7
  %v377 = vsub.s32 %v374, %v376
  %v378 = vrot.slane %v362, %v377
  %v380 = vunpack.c.l.s4 1966171168
  %v381 = vunpack.c.0.s8 %v380
  %v382 = vlaneseq
  %v383 = vshrl.u32 %v382, 7
  %v384 = vsub.s32 %v381, %v383
  %v385 = vrot.slane %v369, %v384
  %v387 = vunpack.c.l.s4 1966171168
  %v388 = vunpack.c.0.s8 %v387
  %v389 = vlaneseq
  %v390 = vshrl.u32 %v389, 7
  %v391 = vsub.s32 %v388, %v390
  %v392 = vrot.slane %v370, %v391
  %v394 = vunpack.c.l.s4 1966171168
  %v395 = vunpack.c.0.s8 %v394
  %v396 = vlaneseq
  %v397 = vshrl.u32 %v396, 7
  %v398 = vsub.s32 %v395, %v397
  %v399 = vrot.slane %v371, %v398
  %v400 = vcombine.high %v378, %v378
  %v401 = vcombine.high %v385, %v385
  %v402 = vcombine.high %v392, %v392
  %v403 = vcombine.high %v399, %v399
  %v404 = vsub.f32 0.0, %v144
  %v405 = vmul.f32 %v404, 1.442695
  %v406 = vpow.pop %v405
  %v407 = vadd.f32 %v406, 1.0
  %v408 = vrcp.pop %v407
  %v409 = vmul.f32 1.0, %v408
  %v411 = vcombine.high %v409, %v409
  %v413 = vunpack.c.l.s4 1966171168
  %v414 = vunpack.c.0.s8 %v413
  %v415 = vlaneseq
  %v416 = vshrl.u32 %v415, 7
  %v417 = vsub.s32 %v414, %v416
  %v418 = vrot.slane %v409, %v417
  %v420 = vunpack.c.l.s4 1966171168
  %v421 = vunpack.c.0.s8 %v420
  %v422 = vlaneseq
  %v423 = vshrl.u32 %v422, 7
  %v424 = vsub.s32 %v421, %v423
  %v425 = vrot.slane %v411, %v424
  %v426 = vcombine.high %v418, %v418
  %v427 = vcombine.high %v425, %v425
  %v429 = vunpack.c.l.s4 1966171168
  %v430 = vunpack.c.0.s8 %v429
  %v431 = vlaneseq
  %v432 = vshrl.u32 %v431, 7
  %v433 = vsub.s32 %v430, %v432
  %v434 = vrot.slane %v418, %v433
  %v436 = vunpack.c.l.s4 1966171168
  %v437 = vunpack.c.0.s8 %v436
  %v438 = vlaneseq
  %v439 = vshrl.u32 %v438, 7
  %v440 = vsub.s32 %v437, %v439
  %v441 = vrot.slane %v425, %v440
  %v443 = vunpack.c.l.s4 1966171168
  %v444 = vunpack.c.0.s8 %v443
  %v445 = vlaneseq
  %v446 = vshrl.u32 %v445, 7
  %v447 = vsub.s32 %v444, %v446
  %v448 = vrot.slane %v426, %v447
  %v450 = vunpack.c.l.s4 1966171168
  %v451 = vunpack.c.0.s8 %v450
  %v452 = vlaneseq
  %v453 = vshrl.u32 %v452, 7
  %v454 = vsub.s32 %v451, %v453
  %v455 = vrot.slane %v427, %v454
  %v456 = vcombine.high %v434, %v434
  %v457 = vcombine.high %v441, %v441
  %v458 = vcombine.high %v448, %v448
  %v459 = vcombine.high %v455, %v455
  %v460 = vlaneseq
  %v461 = vshrl.u32 %v460, 7
  %v462 = vsub.s32 0, %v461
  %v463 = vrot.slane %v409, %v462
  %s465 = sor.u32 256, 117
  %466 = vbcast.lane.b32.xlu0 %v463, %s465
  %v467 = vpop.permute.xlu0 %466
  %v468 = vlaneseq
  %v469 = vshrl.u32 %v468, 7
  %v470 = vsub.s32 1, %v469
  %v471 = vrot.slane %v409, %v470
  %s473 = sor.u32 256, 117
  %474 = vbcast.lane.b32.xlu0 %v471, %s473
  %v475 = vpop.permute.xlu0 %474
  %v476 = vlaneseq
  %v477 = vshrl.u32 %v476, 7
  %v478 = vsub.s32 2, %v477
  %v479 = vrot.slane %v409, %v478
  %s481 = sor.u32 256, 117
  %482 = vbcast.lane.b32.xlu0 %v479, %s481
  %v483 = vpop.permute.xlu0 %482
  %v484 = vlaneseq
  %v485 = vshrl.u32 %v484, 7
  %v486 = vsub.s32 3, %v485
  %v487 = vrot.slane %v409, %v486
  %s489 = sor.u32 256, 117
  %490 = vbcast.lane.b32.xlu0 %v487, %s489
  %v491 = vpop.permute.xlu0 %490
  %v492 = vlaneseq
  %v493 = vshrl.u32 %v492, 7
  %v494 = vsub.s32 4, %v493
  %v495 = vrot.slane %v409, %v494
  %s497 = sor.u32 256, 117
  %498 = vbcast.lane.b32.xlu0 %v495, %s497
  %v499 = vpop.permute.xlu0 %498
  %v500 = vlaneseq
  %v501 = vshrl.u32 %v500, 7
  %v502 = vsub.s32 5, %v501
  %v503 = vrot.slane %v409, %v502
  %s505 = sor.u32 256, 117
  %506 = vbcast.lane.b32.xlu0 %v503, %s505
  %v507 = vpop.permute.xlu0 %506
  %v508 = vlaneseq
  %v509 = vshrl.u32 %v508, 7
  %v510 = vsub.s32 6, %v509
  %v511 = vrot.slane %v409, %v510
  %s513 = sor.u32 256, 117
  %514 = vbcast.lane.b32.xlu0 %v511, %s513
  %v515 = vpop.permute.xlu0 %514
  %v516 = vlaneseq
  %v517 = vshrl.u32 %v516, 7
  %v518 = vsub.s32 7, %v517
  %v519 = vrot.slane %v409, %v518
  %s521 = sor.u32 256, 117
  %522 = vbcast.lane.b32.xlu0 %v519, %s521
  %v523 = vpop.permute.xlu0 %522
  %vm524 = vcmask 1015752
  %v525 = vsel %vm524, %v144, -inf
  %526 = vmax.xlane.f32.xlu0 %v525
  %v527 = vpop.xlane.xlu0 %526
  %v528 = vsub.f32 %v144, %v527
  %v529 = vmul.f32 %v528, 1.442695
  %v530 = vpow.pop %v529
  %532 = vrot.lane.b32.xlu0 %v530, 7
  %v533 = vpop.permute.xlu0 %532
  %vm535 = vcmask 23552
  %v536 = vsel %vm535, %v533, 0.0
  %537 = vadd.xlane.f32.xlu0 %v536
  %v538 = vpop.xlane.xlu0 %537
  %v539 = vrcp.pop %v538
  %v540 = vmul.f32 %v530, %v539
  %v542 = vcombine.high %v540, %v540
  %v544 = vunpack.c.l.s4 1966171168
  %v545 = vunpack.c.0.s8 %v544
  %v546 = vlaneseq
  %v547 = vshrl.u32 %v546, 7
  %v548 = vsub.s32 %v545, %v547
  %v549 = vrot.slane %v540, %v548
  %v551 = vunpack.c.l.s4 1966171168
  %v552 = vunpack.c.0.s8 %v551
  %v553 = vlaneseq
  %v554 = vshrl.u32 %v553, 7
  %v555 = vsub.s32 %v552, %v554
  %v556 = vrot.slane %v542, %v555
  %v557 = vcombine.high %v549, %v549
  %v558 = vcombine.high %v556, %v556
  %v560 = vunpack.c.l.s4 1966171168
  %v561 = vunpack.c.0.s8 %v560
  %v562 = vlaneseq
  %v563 = vshrl.u32 %v562, 7
  %v564 = vsub.s32 %v561, %v563
  %v565 = vrot.slane %v549, %v564
  %v567 = vunpack.c.l.s4 1966171168
  %v568 = vunpack.c.0.s8 %v567
  %v569 = vlaneseq
  %v570 = vshrl.u32 %v569, 7
  %v571 = vsub.s32 %v568, %v570
  %v572 = vrot.slane %v556, %v571
  %v574 = vunpack.c.l.s4 1966171168
  %v575 = vunpack.c.0.s8 %v574
  %v576 = vlaneseq
  %v577 = vshrl.u32 %v576, 7
  %v578 = vsub.s32 %v575, %v577
  %v579 = vrot.slane %v557, %v578
  %v581 = vunpack.c.l.s4 1966171168
  %v582 = vunpack.c.0.s8 %v581
  %v583 = vlaneseq
  %v584 = vshrl.u32 %v583, 7
  %v585 = vsub.s32 %v582, %v584
  %v586 = vrot.slane %v558, %v585
  %v587 = vcombine.high %v565, %v565
  %v588 = vcombine.high %v572, %v572
  %v589 = vcombine.high %v579, %v579
  %v590 = vcombine.high %v586, %v586
  %v591 = vld [vmem:[%s3] sm:$0xff]
  %v592 = vld [vmem:[%s3 + $0x8] sm:$0xff]
  %v593 = vld [vmem:[%s3 + $0x10] sm:$0xff]
  %v594 = vld [vmem:[%s3 + $0x18] sm:$0xff]
  %v595 = vld [vmem:[%s3 + $0x20] sm:$0xff]
  %v596 = vld [vmem:[%s3 + $0x28] sm:$0xff]
  %v597 = vld [vmem:[%s3 + $0x30] sm:$0xff]
  %v598 = vld [vmem:[%s3 + $0x38] sm:$0xff]
  %v599 = vld [vmem:[%s3 + $0x40] sm:$0xff]
  %v600 = vld [vmem:[%s3 + $0x48] sm:$0xff]
  %v601 = vld [vmem:[%s3 + $0x50] sm:$0xff]
  %v602 = vld [vmem:[%s3 + $0x58] sm:$0xff]
  %v603 = vld [vmem:[%s3 + $0x60] sm:$0xff]
  %v604 = vld [vmem:[%s3 + $0x68] sm:$0xff]
  %v605 = vld [vmem:[%s3 + $0x70] sm:$0xff]
  %v606 = vld [vmem:[%s3 + $0x78] sm:$0xff]
  %v607 = vld [vmem:[%s3 + $0x80] sm:$0xff]
  %v608 = vld [vmem:[%s3 + $0x88] sm:$0xff]
  %v609 = vld [vmem:[%s3 + $0x90] sm:$0xff]
  %v610 = vld [vmem:[%s3 + $0x98] sm:$0xff]
  %v611 = vld [vmem:[%s3 + $0xa0] sm:$0xff]
  %v612 = vld [vmem:[%s3 + $0xa8] sm:$0xff]
  %v613 = vld [vmem:[%s3 + $0xb0] sm:$0xff]
  %v614 = vld [vmem:[%s3 + $0xb8] sm:$0xff]
  %v615 = vld [vmem:[%s3 + $0xc0] sm:$0xff]
  %v616 = vld [vmem:[%s3 + $0xc8] sm:$0xff]
  %v617 = vld [vmem:[%s3 + $0xd0] sm:$0xff]
  %v618 = vld [vmem:[%s3 + $0xd8] sm:$0xff]
  %v619 = vld [vmem:[%s3 + $0xe0] sm:$0xff]
  %v620 = vld [vmem:[%s3 + $0xe8] sm:$0xff]
  %v621 = vld [vmem:[%s3 + $0xf0] sm:$0xff]
  %v622 = vld [vmem:[%s3 + $0xf8] sm:$0xff]
  %v623 = vld [vmem:[%s4] sm:$0xf]
  %v624 = vld [vmem:[%s4 + $0x4] sm:$0xf]
  %v625 = vld [vmem:[%s4 + $0x8] sm:$0xf]
  %v626 = vld [vmem:[%s4 + $0xc] sm:$0xf]
  %v627 = vld [vmem:[%s4 + $0x10] sm:$0xf]
  %v628 = vld [vmem:[%s4 + $0x14] sm:$0xf]
  %v629 = vld [vmem:[%s4 + $0x18] sm:$0xf]
  %v630 = vld [vmem:[%s4 + $0x1c] sm:$0xf]
  %v631 = vld [vmem:[%s5] sm:$0x1]
  %v632 = vld [vmem:[%s5 + $0x2] sm:$0x1]
  %v633 = vld [vmem:[%s5 + $0x4] sm:$0x1]
  %v634 = vld [vmem:[%s5 + $0x6] sm:$0x1]
  %v635 = vld [vmem:[%s5 + $0x8] sm:$0x1]
  %v636 = vld [vmem:[%s5 + $0xa] sm:$0x1]
  %v637 = vld [vmem:[%s5 + $0xc] sm:$0x1]
  %v638 = vld [vmem:[%s5 + $0xe] sm:$0x1]
  %v639 = vld [vmem:[%s5 + $0x1] sm:$0x1]
  %v640 = vld [vmem:[%s5 + $0x3] sm:$0x1]
  %v641 = vld [vmem:[%s5 + $0x5] sm:$0x1]
  %v642 = vld [vmem:[%s5 + $0x7] sm:$0x1]
  %v643 = vld [vmem:[%s5 + $0x9] sm:$0x1]
  %v644 = vld [vmem:[%s5 + $0xb] sm:$0x1]
  %v645 = vld [vmem:[%s5 + $0xd] sm:$0x1]
  %v646 = vld [vmem:[%s5 + $0xf] sm:$0x1]
  %v647 = vsub.f32 1.0, %v639
  %v648 = vsub.f32 1.0, %v640
  %v649 = vsub.f32 1.0, %v641
  %v650 = vsub.f32 1.0, %v642
  %v651 = vsub.f32 1.0, %v643
  %v652 = vsub.f32 1.0, %v644
  %v653 = vsub.f32 1.0, %v645
  %v654 = vsub.f32 1.0, %v646
  %v655 = vmul.f32 %v647, %v631
  %v656 = vmul.f32 %v648, %v632
  %v657 = vmul.f32 %v649, %v633
  %v658 = vmul.f32 %v650, %v634
  %v659 = vmul.f32 %v651, %v635
  %v660 = vmul.f32 %v652, %v636
  %v661 = vmul.f32 %v653, %v637
  %v662 = vmul.f32 %v654, %v638
  %v663 = vadd.f32 %v639, %v655
  %v664 = vadd.f32 %v640, %v656
  %v665 = vadd.f32 %v641, %v657
  %v666 = vadd.f32 %v642, %v658
  %v667 = vadd.f32 %v643, %v659
  %v668 = vadd.f32 %v644, %v660
  %v669 = vadd.f32 %v645, %v661
  %v670 = vadd.f32 %v646, %v662
  %v671 = vmul.f32 %v467, %v623
  %v672 = vmul.f32 %v475, %v624
  %v673 = vmul.f32 %v483, %v625
  %v674 = vmul.f32 %v491, %v626
  %v675 = vmul.f32 %v499, %v627
  %v676 = vmul.f32 %v507, %v628
  %v677 = vmul.f32 %v515, %v629
  %v678 = vmul.f32 %v523, %v630
  %v679 = vsub.f32 1.0, %v671
  %v680 = vsub.f32 1.0, %v672
  %v681 = vsub.f32 1.0, %v673
  %v682 = vsub.f32 1.0, %v674
  %v683 = vsub.f32 1.0, %v675
  %v684 = vsub.f32 1.0, %v676
  %v685 = vsub.f32 1.0, %v677
  %v686 = vsub.f32 1.0, %v678
  %v695 = vrot.slane %v679, 1
  %v696 = vrot.slane %v680, 1
  %v697 = vrot.slane %v681, 1
  %v698 = vrot.slane %v682, 1
  %v699 = vrot.slane %v683, 1
  %v700 = vrot.slane %v684, 1
  %v701 = vrot.slane %v685, 1
  %v702 = vrot.slane %v686, 1
  %v711 = vmul.f32 %v679, %v695
  %v712 = vmul.f32 %v680, %v696
  %v713 = vmul.f32 %v681, %v697
  %v714 = vmul.f32 %v682, %v698
  %v715 = vmul.f32 %v683, %v699
  %v716 = vmul.f32 %v684, %v700
  %v717 = vmul.f32 %v685, %v701
  %v718 = vmul.f32 %v686, %v702
  %v727 = vrot.slane %v711, 2
  %v728 = vrot.slane %v712, 2
  %v729 = vrot.slane %v713, 2
  %v730 = vrot.slane %v714, 2
  %v731 = vrot.slane %v715, 2
  %v732 = vrot.slane %v716, 2
  %v733 = vrot.slane %v717, 2
  %v734 = vrot.slane %v718, 2
  %v743 = vmul.f32 %v711, %v727
  %v744 = vmul.f32 %v712, %v728
  %v745 = vmul.f32 %v713, %v729
  %v746 = vmul.f32 %v714, %v730
  %v747 = vmul.f32 %v715, %v731
  %v748 = vmul.f32 %v716, %v732
  %v749 = vmul.f32 %v717, %v733
  %v750 = vmul.f32 %v718, %v734
  %v751 = vmul.f32 %v663, %v743
  %v752 = vmul.f32 %v664, %v744
  %v753 = vmul.f32 %v665, %v745
  %v754 = vmul.f32 %v666, %v746
  %v755 = vmul.f32 %v667, %v747
  %v756 = vmul.f32 %v668, %v748
  %v757 = vmul.f32 %v669, %v749
  %v758 = vmul.f32 %v670, %v750
  %v759 = vmul.f32 %v320, %v320
  %v760 = vmul.f32 %v334, %v334
  %v761 = vmul.f32 %v342, %v342
  %v762 = vmul.f32 %v344, %v344
  %v763 = vmul.f32 %v327, %v327
  %v764 = vmul.f32 %v341, %v341
  %v765 = vmul.f32 %v343, %v343
  %v766 = vmul.f32 %v345, %v345
  %v775 = vlaneseq
  %v776 = vshrl.u32 %v775, 7
  %v777 = vsub.s32 0, %v776
  %v778 = vrot.slane %v759, %v777
  %v779 = vlaneseq
  %v780 = vshrl.u32 %v779, 7
  %v781 = vsub.s32 0, %v780
  %v782 = vrot.slane %v760, %v781
  %v783 = vlaneseq
  %v784 = vshrl.u32 %v783, 7
  %v785 = vsub.s32 0, %v784
  %v786 = vrot.slane %v761, %v785
  %v787 = vlaneseq
  %v788 = vshrl.u32 %v787, 7
  %v789 = vsub.s32 0, %v788
  %v790 = vrot.slane %v762, %v789
  %v791 = vlaneseq
  %v792 = vshrl.u32 %v791, 7
  %v793 = vsub.s32 0, %v792
  %v794 = vrot.slane %v763, %v793
  %v795 = vlaneseq
  %v796 = vshrl.u32 %v795, 7
  %v797 = vsub.s32 0, %v796
  %v798 = vrot.slane %v764, %v797
  %v799 = vlaneseq
  %v800 = vshrl.u32 %v799, 7
  %v801 = vsub.s32 0, %v800
  %v802 = vrot.slane %v765, %v801
  %v803 = vlaneseq
  %v804 = vshrl.u32 %v803, 7
  %v805 = vsub.s32 0, %v804
  %v806 = vrot.slane %v766, %v805
  %807 = vrot.lane.b32.xlu0 %v778, 60
  %v808 = vpop.permute.xlu0 %807
  %809 = vrot.lane.b32.xlu0 %v782, 60
  %v810 = vpop.permute.xlu0 %809
  %811 = vrot.lane.b32.xlu0 %v786, 60
  %v812 = vpop.permute.xlu0 %811
  %813 = vrot.lane.b32.xlu0 %v790, 60
  %v814 = vpop.permute.xlu0 %813
  %815 = vrot.lane.b32.xlu0 %v794, 60
  %v816 = vpop.permute.xlu0 %815
  %817 = vrot.lane.b32.xlu0 %v798, 60
  %v818 = vpop.permute.xlu0 %817
  %819 = vrot.lane.b32.xlu0 %v802, 60
  %v820 = vpop.permute.xlu0 %819
  %821 = vrot.lane.b32.xlu0 %v806, 60
  %v822 = vpop.permute.xlu0 %821
  %vm831 = vcmask 122880
  %v832 = vsel %vm831, %v808, 0.0
  %833 = vadd.xlane.f32.xlu0 %v832
  %v834 = vpop.xlane.xlu0 %833
  %v835 = vsel %vm831, %v810, 0.0
  %836 = vadd.xlane.f32.xlu0 %v835
  %v837 = vpop.xlane.xlu0 %836
  %v838 = vsel %vm831, %v812, 0.0
  %839 = vadd.xlane.f32.xlu0 %v838
  %v840 = vpop.xlane.xlu0 %839
  %v841 = vsel %vm831, %v814, 0.0
  %842 = vadd.xlane.f32.xlu0 %v841
  %v843 = vpop.xlane.xlu0 %842
  %v844 = vsel %vm831, %v816, 0.0
  %845 = vadd.xlane.f32.xlu0 %v844
  %v846 = vpop.xlane.xlu0 %845
  %v847 = vsel %vm831, %v818, 0.0
  %848 = vadd.xlane.f32.xlu0 %v847
  %v849 = vpop.xlane.xlu0 %848
  %v850 = vsel %vm831, %v820, 0.0
  %851 = vadd.xlane.f32.xlu0 %v850
  %v852 = vpop.xlane.xlu0 %851
  %v853 = vsel %vm831, %v822, 0.0
  %854 = vadd.xlane.f32.xlu0 %v853
  %v855 = vpop.xlane.xlu0 %854
  %v856 = vrsqrt.pop %v834
  %v857 = vmul.f32 %v834, %v856
  %vm858 = vcmp.eq.f32.partialorder %v834, inf
  %v859 = vsel %vm858, %v834, %v857
  %vm860 = vcmp.eq.f32.partialorder %v834, 0.0
  %v861 = vand.u32 %v834, 2147483648
  %v862 = vsel %vm860, %v861, %v859
  %v863 = vrsqrt.pop %v837
  %v864 = vmul.f32 %v837, %v863
  %vm865 = vcmp.eq.f32.partialorder %v837, inf
  %v866 = vsel %vm865, %v837, %v864
  %vm867 = vcmp.eq.f32.partialorder %v837, 0.0
  %v868 = vand.u32 %v837, 2147483648
  %v869 = vsel %vm867, %v868, %v866
  %v870 = vrsqrt.pop %v840
  %v871 = vmul.f32 %v840, %v870
  %vm872 = vcmp.eq.f32.partialorder %v840, inf
  %v873 = vsel %vm872, %v840, %v871
  %vm874 = vcmp.eq.f32.partialorder %v840, 0.0
  %v875 = vand.u32 %v840, 2147483648
  %v876 = vsel %vm874, %v875, %v873
  %v877 = vrsqrt.pop %v843
  %v878 = vmul.f32 %v843, %v877
  %vm879 = vcmp.eq.f32.partialorder %v843, inf
  %v880 = vsel %vm879, %v843, %v878
  %vm881 = vcmp.eq.f32.partialorder %v843, 0.0
  %v882 = vand.u32 %v843, 2147483648
  %v883 = vsel %vm881, %v882, %v880
  %v884 = vrsqrt.pop %v846
  %v885 = vmul.f32 %v846, %v884
  %vm886 = vcmp.eq.f32.partialorder %v846, inf
  %v887 = vsel %vm886, %v846, %v885
  %vm888 = vcmp.eq.f32.partialorder %v846, 0.0
  %v889 = vand.u32 %v846, 2147483648
  %v890 = vsel %vm888, %v889, %v887
  %v891 = vrsqrt.pop %v849
  %v892 = vmul.f32 %v849, %v891
  %vm893 = vcmp.eq.f32.partialorder %v849, inf
  %v894 = vsel %vm893, %v849, %v892
  %vm895 = vcmp.eq.f32.partialorder %v849, 0.0
  %v896 = vand.u32 %v849, 2147483648
  %v897 = vsel %vm895, %v896, %v894
  %v898 = vrsqrt.pop %v852
  %v899 = vmul.f32 %v852, %v898
  %vm900 = vcmp.eq.f32.partialorder %v852, inf
  %v901 = vsel %vm900, %v852, %v899
  %vm902 = vcmp.eq.f32.partialorder %v852, 0.0
  %v903 = vand.u32 %v852, 2147483648
  %v904 = vsel %vm902, %v903, %v901
  %v905 = vrsqrt.pop %v855
  %v906 = vmul.f32 %v855, %v905
  %vm907 = vcmp.eq.f32.partialorder %v855, inf
  %v908 = vsel %vm907, %v855, %v906
  %vm909 = vcmp.eq.f32.partialorder %v855, 0.0
  %v910 = vand.u32 %v855, 2147483648
  %v911 = vsel %vm909, %v910, %v908
  %v912 = vmul.f32 %v591, %v591
  %v913 = vmul.f32 %v592, %v592
  %v914 = vmul.f32 %v593, %v593
  %v915 = vmul.f32 %v594, %v594
  %v916 = vmul.f32 %v595, %v595
  %v917 = vmul.f32 %v596, %v596
  %v918 = vmul.f32 %v597, %v597
  %v919 = vmul.f32 %v598, %v598
  %v920 = vmul.f32 %v599, %v599
  %v921 = vmul.f32 %v600, %v600
  %v922 = vmul.f32 %v601, %v601
  %v923 = vmul.f32 %v602, %v602
  %v924 = vmul.f32 %v603, %v603
  %v925 = vmul.f32 %v604, %v604
  %v926 = vmul.f32 %v605, %v605
  %v927 = vmul.f32 %v606, %v606
  %v928 = vmul.f32 %v607, %v607
  %v929 = vmul.f32 %v608, %v608
  %v930 = vmul.f32 %v609, %v609
  %v931 = vmul.f32 %v610, %v610
  %v932 = vmul.f32 %v611, %v611
  %v933 = vmul.f32 %v612, %v612
  %v934 = vmul.f32 %v613, %v613
  %v935 = vmul.f32 %v614, %v614
  %v936 = vmul.f32 %v615, %v615
  %v937 = vmul.f32 %v616, %v616
  %v938 = vmul.f32 %v617, %v617
  %v939 = vmul.f32 %v618, %v618
  %v940 = vmul.f32 %v619, %v619
  %v941 = vmul.f32 %v620, %v620
  %v942 = vmul.f32 %v621, %v621
  %v943 = vmul.f32 %v622, %v622
  %vm944 = vcmask 130048
  %v945 = vsel %vm944, %v912, 0.0
  %946 = vadd.xlane.f32.xlu0 %v945
  %v947 = vpop.xlane.xlu0 %946
  %v948 = vsel %vm944, %v913, 0.0
  %949 = vadd.xlane.f32.xlu0 %v948
  %v950 = vpop.xlane.xlu0 %949
  %v951 = vsel %vm944, %v914, 0.0
  %952 = vadd.xlane.f32.xlu0 %v951
  %v953 = vpop.xlane.xlu0 %952
  %v954 = vsel %vm944, %v915, 0.0
  %955 = vadd.xlane.f32.xlu0 %v954
  %v956 = vpop.xlane.xlu0 %955
  %v957 = vsel %vm944, %v916, 0.0
  %958 = vadd.xlane.f32.xlu0 %v957
  %v959 = vpop.xlane.xlu0 %958
  %v960 = vsel %vm944, %v917, 0.0
  %961 = vadd.xlane.f32.xlu0 %v960
  %v962 = vpop.xlane.xlu0 %961
  %v963 = vsel %vm944, %v918, 0.0
  %964 = vadd.xlane.f32.xlu0 %v963
  %v965 = vpop.xlane.xlu0 %964
  %v966 = vsel %vm944, %v919, 0.0
  %967 = vadd.xlane.f32.xlu0 %v966
  %v968 = vpop.xlane.xlu0 %967
  %v969 = vsel %vm944, %v920, 0.0
  %970 = vadd.xlane.f32.xlu0 %v969
  %v971 = vpop.xlane.xlu0 %970
  %v972 = vsel %vm944, %v921, 0.0
  %973 = vadd.xlane.f32.xlu0 %v972
  %v974 = vpop.xlane.xlu0 %973
  %v975 = vsel %vm944, %v922, 0.0
  %976 = vadd.xlane.f32.xlu0 %v975
  %v977 = vpop.xlane.xlu0 %976
  %v978 = vsel %vm944, %v923, 0.0
  %979 = vadd.xlane.f32.xlu0 %v978
  %v980 = vpop.xlane.xlu0 %979
  %v981 = vsel %vm944, %v924, 0.0
  %982 = vadd.xlane.f32.xlu0 %v981
  %v983 = vpop.xlane.xlu0 %982
  %v984 = vsel %vm944, %v925, 0.0
  %985 = vadd.xlane.f32.xlu0 %v984
  %v986 = vpop.xlane.xlu0 %985
  %v987 = vsel %vm944, %v926, 0.0
  %988 = vadd.xlane.f32.xlu0 %v987
  %v989 = vpop.xlane.xlu0 %988
  %v990 = vsel %vm944, %v927, 0.0
  %991 = vadd.xlane.f32.xlu0 %v990
  %v992 = vpop.xlane.xlu0 %991
  %v993 = vsel %vm944, %v928, 0.0
  %994 = vadd.xlane.f32.xlu0 %v993
  %v995 = vpop.xlane.xlu0 %994
  %v996 = vsel %vm944, %v929, 0.0
  %997 = vadd.xlane.f32.xlu0 %v996
  %v998 = vpop.xlane.xlu0 %997
  %v999 = vsel %vm944, %v930, 0.0
  %1000 = vadd.xlane.f32.xlu0 %v999
  %v1001 = vpop.xlane.xlu0 %1000
  %v1002 = vsel %vm944, %v931, 0.0
  %1003 = vadd.xlane.f32.xlu0 %v1002
  %v1004 = vpop.xlane.xlu0 %1003
  %v1005 = vsel %vm944, %v932, 0.0
  %1006 = vadd.xlane.f32.xlu0 %v1005
  %v1007 = vpop.xlane.xlu0 %1006
  %v1008 = vsel %vm944, %v933, 0.0
  %1009 = vadd.xlane.f32.xlu0 %v1008
  %v1010 = vpop.xlane.xlu0 %1009
  %v1011 = vsel %vm944, %v934, 0.0
  %1012 = vadd.xlane.f32.xlu0 %v1011
  %v1013 = vpop.xlane.xlu0 %1012
  %v1014 = vsel %vm944, %v935, 0.0
  %1015 = vadd.xlane.f32.xlu0 %v1014
  %v1016 = vpop.xlane.xlu0 %1015
  %v1017 = vsel %vm944, %v936, 0.0
  %1018 = vadd.xlane.f32.xlu0 %v1017
  %v1019 = vpop.xlane.xlu0 %1018
  %v1020 = vsel %vm944, %v937, 0.0
  %1021 = vadd.xlane.f32.xlu0 %v1020
  %v1022 = vpop.xlane.xlu0 %1021
  %v1023 = vsel %vm944, %v938, 0.0
  %1024 = vadd.xlane.f32.xlu0 %v1023
  %v1025 = vpop.xlane.xlu0 %1024
  %v1026 = vsel %vm944, %v939, 0.0
  %1027 = vadd.xlane.f32.xlu0 %v1026
  %v1028 = vpop.xlane.xlu0 %1027
  %v1029 = vsel %vm944, %v940, 0.0
  %1030 = vadd.xlane.f32.xlu0 %v1029
  %v1031 = vpop.xlane.xlu0 %1030
  %v1032 = vsel %vm944, %v941, 0.0
  %1033 = vadd.xlane.f32.xlu0 %v1032
  %v1034 = vpop.xlane.xlu0 %1033
  %v1035 = vsel %vm944, %v942, 0.0
  %1036 = vadd.xlane.f32.xlu0 %v1035
  %v1037 = vpop.xlane.xlu0 %1036
  %v1038 = vsel %vm944, %v943, 0.0
  %1039 = vadd.xlane.f32.xlu0 %v1038
  %v1040 = vpop.xlane.xlu0 %1039
  %v1041 = vrsqrt.pop %v947
  %v1042 = vmul.f32 %v947, %v1041
  %vm1043 = vcmp.eq.f32.partialorder %v947, inf
  %v1044 = vsel %vm1043, %v947, %v1042
  %vm1045 = vcmp.eq.f32.partialorder %v947, 0.0
  %v1046 = vand.u32 %v947, 2147483648
  %v1047 = vsel %vm1045, %v1046, %v1044
  %v1048 = vrsqrt.pop %v950
  %v1049 = vmul.f32 %v950, %v1048
  %vm1050 = vcmp.eq.f32.partialorder %v950, inf
  %v1051 = vsel %vm1050, %v950, %v1049
  %vm1052 = vcmp.eq.f32.partialorder %v950, 0.0
  %v1053 = vand.u32 %v950, 2147483648
  %v1054 = vsel %vm1052, %v1053, %v1051
  %v1055 = vrsqrt.pop %v953
  %v1056 = vmul.f32 %v953, %v1055
  %vm1057 = vcmp.eq.f32.partialorder %v953, inf
  %v1058 = vsel %vm1057, %v953, %v1056
  %vm1059 = vcmp.eq.f32.partialorder %v953, 0.0
  %v1060 = vand.u32 %v953, 2147483648
  %v1061 = vsel %vm1059, %v1060, %v1058
  %v1062 = vrsqrt.pop %v956
  %v1063 = vmul.f32 %v956, %v1062
  %vm1064 = vcmp.eq.f32.partialorder %v956, inf
  %v1065 = vsel %vm1064, %v956, %v1063
  %vm1066 = vcmp.eq.f32.partialorder %v956, 0.0
  %v1067 = vand.u32 %v956, 2147483648
  %v1068 = vsel %vm1066, %v1067, %v1065
  %v1069 = vrsqrt.pop %v959
  %v1070 = vmul.f32 %v959, %v1069
  %vm1071 = vcmp.eq.f32.partialorder %v959, inf
  %v1072 = vsel %vm1071, %v959, %v1070
  %vm1073 = vcmp.eq.f32.partialorder %v959, 0.0
  %v1074 = vand.u32 %v959, 2147483648
  %v1075 = vsel %vm1073, %v1074, %v1072
  %v1076 = vrsqrt.pop %v962
  %v1077 = vmul.f32 %v962, %v1076
  %vm1078 = vcmp.eq.f32.partialorder %v962, inf
  %v1079 = vsel %vm1078, %v962, %v1077
  %vm1080 = vcmp.eq.f32.partialorder %v962, 0.0
  %v1081 = vand.u32 %v962, 2147483648
  %v1082 = vsel %vm1080, %v1081, %v1079
  %v1083 = vrsqrt.pop %v965
  %v1084 = vmul.f32 %v965, %v1083
  %vm1085 = vcmp.eq.f32.partialorder %v965, inf
  %v1086 = vsel %vm1085, %v965, %v1084
  %vm1087 = vcmp.eq.f32.partialorder %v965, 0.0
  %v1088 = vand.u32 %v965, 2147483648
  %v1089 = vsel %vm1087, %v1088, %v1086
  %v1090 = vrsqrt.pop %v968
  %v1091 = vmul.f32 %v968, %v1090
  %vm1092 = vcmp.eq.f32.partialorder %v968, inf
  %v1093 = vsel %vm1092, %v968, %v1091
  %vm1094 = vcmp.eq.f32.partialorder %v968, 0.0
  %v1095 = vand.u32 %v968, 2147483648
  %v1096 = vsel %vm1094, %v1095, %v1093
  %v1097 = vrsqrt.pop %v971
  %v1098 = vmul.f32 %v971, %v1097
  %vm1099 = vcmp.eq.f32.partialorder %v971, inf
  %v1100 = vsel %vm1099, %v971, %v1098
  %vm1101 = vcmp.eq.f32.partialorder %v971, 0.0
  %v1102 = vand.u32 %v971, 2147483648
  %v1103 = vsel %vm1101, %v1102, %v1100
  %v1104 = vrsqrt.pop %v974
  %v1105 = vmul.f32 %v974, %v1104
  %vm1106 = vcmp.eq.f32.partialorder %v974, inf
  %v1107 = vsel %vm1106, %v974, %v1105
  %vm1108 = vcmp.eq.f32.partialorder %v974, 0.0
  %v1109 = vand.u32 %v974, 2147483648
  %v1110 = vsel %vm1108, %v1109, %v1107
  %v1111 = vrsqrt.pop %v977
  %v1112 = vmul.f32 %v977, %v1111
  %vm1113 = vcmp.eq.f32.partialorder %v977, inf
  %v1114 = vsel %vm1113, %v977, %v1112
  %vm1115 = vcmp.eq.f32.partialorder %v977, 0.0
  %v1116 = vand.u32 %v977, 2147483648
  %v1117 = vsel %vm1115, %v1116, %v1114
  %v1118 = vrsqrt.pop %v980
  %v1119 = vmul.f32 %v980, %v1118
  %vm1120 = vcmp.eq.f32.partialorder %v980, inf
  %v1121 = vsel %vm1120, %v980, %v1119
  %vm1122 = vcmp.eq.f32.partialorder %v980, 0.0
  %v1123 = vand.u32 %v980, 2147483648
  %v1124 = vsel %vm1122, %v1123, %v1121
  %v1125 = vrsqrt.pop %v983
  %v1126 = vmul.f32 %v983, %v1125
  %vm1127 = vcmp.eq.f32.partialorder %v983, inf
  %v1128 = vsel %vm1127, %v983, %v1126
  %vm1129 = vcmp.eq.f32.partialorder %v983, 0.0
  %v1130 = vand.u32 %v983, 2147483648
  %v1131 = vsel %vm1129, %v1130, %v1128
  %v1132 = vrsqrt.pop %v986
  %v1133 = vmul.f32 %v986, %v1132
  %vm1134 = vcmp.eq.f32.partialorder %v986, inf
  %v1135 = vsel %vm1134, %v986, %v1133
  %vm1136 = vcmp.eq.f32.partialorder %v986, 0.0
  %v1137 = vand.u32 %v986, 2147483648
  %v1138 = vsel %vm1136, %v1137, %v1135
  %v1139 = vrsqrt.pop %v989
  %v1140 = vmul.f32 %v989, %v1139
  %vm1141 = vcmp.eq.f32.partialorder %v989, inf
  %v1142 = vsel %vm1141, %v989, %v1140
  %vm1143 = vcmp.eq.f32.partialorder %v989, 0.0
  %v1144 = vand.u32 %v989, 2147483648
  %v1145 = vsel %vm1143, %v1144, %v1142
  %v1146 = vrsqrt.pop %v992
  %v1147 = vmul.f32 %v992, %v1146
  %vm1148 = vcmp.eq.f32.partialorder %v992, inf
  %v1149 = vsel %vm1148, %v992, %v1147
  %vm1150 = vcmp.eq.f32.partialorder %v992, 0.0
  %v1151 = vand.u32 %v992, 2147483648
  %v1152 = vsel %vm1150, %v1151, %v1149
  %v1153 = vrsqrt.pop %v995
  %v1154 = vmul.f32 %v995, %v1153
  %vm1155 = vcmp.eq.f32.partialorder %v995, inf
  %v1156 = vsel %vm1155, %v995, %v1154
  %vm1157 = vcmp.eq.f32.partialorder %v995, 0.0
  %v1158 = vand.u32 %v995, 2147483648
  %v1159 = vsel %vm1157, %v1158, %v1156
  %v1160 = vrsqrt.pop %v998
  %v1161 = vmul.f32 %v998, %v1160
  %vm1162 = vcmp.eq.f32.partialorder %v998, inf
  %v1163 = vsel %vm1162, %v998, %v1161
  %vm1164 = vcmp.eq.f32.partialorder %v998, 0.0
  %v1165 = vand.u32 %v998, 2147483648
  %v1166 = vsel %vm1164, %v1165, %v1163
  %v1167 = vrsqrt.pop %v1001
  %v1168 = vmul.f32 %v1001, %v1167
  %vm1169 = vcmp.eq.f32.partialorder %v1001, inf
  %v1170 = vsel %vm1169, %v1001, %v1168
  %vm1171 = vcmp.eq.f32.partialorder %v1001, 0.0
  %v1172 = vand.u32 %v1001, 2147483648
  %v1173 = vsel %vm1171, %v1172, %v1170
  %v1174 = vrsqrt.pop %v1004
  %v1175 = vmul.f32 %v1004, %v1174
  %vm1176 = vcmp.eq.f32.partialorder %v1004, inf
  %v1177 = vsel %vm1176, %v1004, %v1175
  %vm1178 = vcmp.eq.f32.partialorder %v1004, 0.0
  %v1179 = vand.u32 %v1004, 2147483648
  %v1180 = vsel %vm1178, %v1179, %v1177
  %v1181 = vrsqrt.pop %v1007
  %v1182 = vmul.f32 %v1007, %v1181
  %vm1183 = vcmp.eq.f32.partialorder %v1007, inf
  %v1184 = vsel %vm1183, %v1007, %v1182
  %vm1185 = vcmp.eq.f32.partialorder %v1007, 0.0
  %v1186 = vand.u32 %v1007, 2147483648
  %v1187 = vsel %vm1185, %v1186, %v1184
  %v1188 = vrsqrt.pop %v1010
  %v1189 = vmul.f32 %v1010, %v1188
  %vm1190 = vcmp.eq.f32.partialorder %v1010, inf
  %v1191 = vsel %vm1190, %v1010, %v1189
  %vm1192 = vcmp.eq.f32.partialorder %v1010, 0.0
  %v1193 = vand.u32 %v1010, 2147483648
  %v1194 = vsel %vm1192, %v1193, %v1191
  %v1195 = vrsqrt.pop %v1013
  %v1196 = vmul.f32 %v1013, %v1195
  %vm1197 = vcmp.eq.f32.partialorder %v1013, inf
  %v1198 = vsel %vm1197, %v1013, %v1196
  %vm1199 = vcmp.eq.f32.partialorder %v1013, 0.0
  %v1200 = vand.u32 %v1013, 2147483648
  %v1201 = vsel %vm1199, %v1200, %v1198
  %v1202 = vrsqrt.pop %v1016
  %v1203 = vmul.f32 %v1016, %v1202
  %vm1204 = vcmp.eq.f32.partialorder %v1016, inf
  %v1205 = vsel %vm1204, %v1016, %v1203
  %vm1206 = vcmp.eq.f32.partialorder %v1016, 0.0
  %v1207 = vand.u32 %v1016, 2147483648
  %v1208 = vsel %vm1206, %v1207, %v1205
  %v1209 = vrsqrt.pop %v1019
  %v1210 = vmul.f32 %v1019, %v1209
  %vm1211 = vcmp.eq.f32.partialorder %v1019, inf
  %v1212 = vsel %vm1211, %v1019, %v1210
  %vm1213 = vcmp.eq.f32.partialorder %v1019, 0.0
  %v1214 = vand.u32 %v1019, 2147483648
  %v1215 = vsel %vm1213, %v1214, %v1212
  %v1216 = vrsqrt.pop %v1022
  %v1217 = vmul.f32 %v1022, %v1216
  %vm1218 = vcmp.eq.f32.partialorder %v1022, inf
  %v1219 = vsel %vm1218, %v1022, %v1217
  %vm1220 = vcmp.eq.f32.partialorder %v1022, 0.0
  %v1221 = vand.u32 %v1022, 2147483648
  %v1222 = vsel %vm1220, %v1221, %v1219
  %v1223 = vrsqrt.pop %v1025
  %v1224 = vmul.f32 %v1025, %v1223
  %vm1225 = vcmp.eq.f32.partialorder %v1025, inf
  %v1226 = vsel %vm1225, %v1025, %v1224
  %vm1227 = vcmp.eq.f32.partialorder %v1025, 0.0
  %v1228 = vand.u32 %v1025, 2147483648
  %v1229 = vsel %vm1227, %v1228, %v1226
  %v1230 = vrsqrt.pop %v1028
  %v1231 = vmul.f32 %v1028, %v1230
  %vm1232 = vcmp.eq.f32.partialorder %v1028, inf
  %v1233 = vsel %vm1232, %v1028, %v1231
  %vm1234 = vcmp.eq.f32.partialorder %v1028, 0.0
  %v1235 = vand.u32 %v1028, 2147483648
  %v1236 = vsel %vm1234, %v1235, %v1233
  %v1237 = vrsqrt.pop %v1031
  %v1238 = vmul.f32 %v1031, %v1237
  %vm1239 = vcmp.eq.f32.partialorder %v1031, inf
  %v1240 = vsel %vm1239, %v1031, %v1238
  %vm1241 = vcmp.eq.f32.partialorder %v1031, 0.0
  %v1242 = vand.u32 %v1031, 2147483648
  %v1243 = vsel %vm1241, %v1242, %v1240
  %v1244 = vrsqrt.pop %v1034
  %v1245 = vmul.f32 %v1034, %v1244
  %vm1246 = vcmp.eq.f32.partialorder %v1034, inf
  %v1247 = vsel %vm1246, %v1034, %v1245
  %vm1248 = vcmp.eq.f32.partialorder %v1034, 0.0
  %v1249 = vand.u32 %v1034, 2147483648
  %v1250 = vsel %vm1248, %v1249, %v1247
  %v1251 = vrsqrt.pop %v1037
  %v1252 = vmul.f32 %v1037, %v1251
  %vm1253 = vcmp.eq.f32.partialorder %v1037, inf
  %v1254 = vsel %vm1253, %v1037, %v1252
  %vm1255 = vcmp.eq.f32.partialorder %v1037, 0.0
  %v1256 = vand.u32 %v1037, 2147483648
  %v1257 = vsel %vm1255, %v1256, %v1254
  %v1258 = vrsqrt.pop %v1040
  %v1259 = vmul.f32 %v1040, %v1258
  %vm1260 = vcmp.eq.f32.partialorder %v1040, inf
  %v1261 = vsel %vm1260, %v1040, %v1259
  %vm1262 = vcmp.eq.f32.partialorder %v1040, 0.0
  %v1263 = vand.u32 %v1040, 2147483648
  %v1264 = vsel %vm1262, %v1263, %v1261
  %v1265 = vadd.f32 %v862, 1e-06
  %v1266 = vadd.f32 %v869, 1e-06
  %v1267 = vadd.f32 %v876, 1e-06
  %v1268 = vadd.f32 %v883, 1e-06
  %v1269 = vadd.f32 %v890, 1e-06
  %v1270 = vadd.f32 %v897, 1e-06
  %v1271 = vadd.f32 %v904, 1e-06
  %v1272 = vadd.f32 %v911, 1e-06
  %v1273 = vrcp.pop %v1265
  %v1274 = vmul.f32 %v320, %v1273
  %v1275 = vrcp.pop %v1266
  %v1276 = vmul.f32 %v334, %v1275
  %v1277 = vrcp.pop %v1267
  %v1278 = vmul.f32 %v342, %v1277
  %v1279 = vrcp.pop %v1268
  %v1280 = vmul.f32 %v344, %v1279
  %v1281 = vrcp.pop %v1269
  %v1282 = vmul.f32 %v327, %v1281
  %v1283 = vrcp.pop %v1270
  %v1284 = vmul.f32 %v341, %v1283
  %v1285 = vrcp.pop %v1271
  %v1286 = vmul.f32 %v343, %v1285
  %v1287 = vrcp.pop %v1272
  %v1288 = vmul.f32 %v345, %v1287
  %v1289 = vadd.f32 %v1047, 1e-06
  %v1290 = vadd.f32 %v1054, 1e-06
  %v1291 = vadd.f32 %v1061, 1e-06
  %v1292 = vadd.f32 %v1068, 1e-06
  %v1293 = vadd.f32 %v1075, 1e-06
  %v1294 = vadd.f32 %v1082, 1e-06
  %v1295 = vadd.f32 %v1089, 1e-06
  %v1296 = vadd.f32 %v1096, 1e-06
  %v1297 = vadd.f32 %v1103, 1e-06
  %v1298 = vadd.f32 %v1110, 1e-06
  %v1299 = vadd.f32 %v1117, 1e-06
  %v1300 = vadd.f32 %v1124, 1e-06
  %v1301 = vadd.f32 %v1131, 1e-06
  %v1302 = vadd.f32 %v1138, 1e-06
  %v1303 = vadd.f32 %v1145, 1e-06
  %v1304 = vadd.f32 %v1152, 1e-06
  %v1305 = vadd.f32 %v1159, 1e-06
  %v1306 = vadd.f32 %v1166, 1e-06
  %v1307 = vadd.f32 %v1173, 1e-06
  %v1308 = vadd.f32 %v1180, 1e-06
  %v1309 = vadd.f32 %v1187, 1e-06
  %v1310 = vadd.f32 %v1194, 1e-06
  %v1311 = vadd.f32 %v1201, 1e-06
  %v1312 = vadd.f32 %v1208, 1e-06
  %v1313 = vadd.f32 %v1215, 1e-06
  %v1314 = vadd.f32 %v1222, 1e-06
  %v1315 = vadd.f32 %v1229, 1e-06
  %v1316 = vadd.f32 %v1236, 1e-06
  %v1317 = vadd.f32 %v1243, 1e-06
  %v1318 = vadd.f32 %v1250, 1e-06
  %v1319 = vadd.f32 %v1257, 1e-06
  %v1320 = vadd.f32 %v1264, 1e-06
  %v1321 = vrcp.pop %v1289
  %v1322 = vmul.f32 %v591, %v1321
  %v1323 = vrcp.pop %v1290
  %v1324 = vmul.f32 %v592, %v1323
  %v1325 = vrcp.pop %v1291
  %v1326 = vmul.f32 %v593, %v1325
  %v1327 = vrcp.pop %v1292
  %v1328 = vmul.f32 %v594, %v1327
  %v1329 = vrcp.pop %v1293
  %v1330 = vmul.f32 %v595, %v1329
  %v1331 = vrcp.pop %v1294
  %v1332 = vmul.f32 %v596, %v1331
  %v1333 = vrcp.pop %v1295
  %v1334 = vmul.f32 %v597, %v1333
  %v1335 = vrcp.pop %v1296
  %v1336 = vmul.f32 %v598, %v1335
  %v1337 = vrcp.pop %v1297
  %v1338 = vmul.f32 %v599, %v1337
  %v1339 = vrcp.pop %v1298
  %v1340 = vmul.f32 %v600, %v1339
  %v1341 = vrcp.pop %v1299
  %v1342 = vmul.f32 %v601, %v1341
  %v1343 = vrcp.pop %v1300
  %v1344 = vmul.f32 %v602, %v1343
  %v1345 = vrcp.pop %v1301
  %v1346 = vmul.f32 %v603, %v1345
  %v1347 = vrcp.pop %v1302
  %v1348 = vmul.f32 %v604, %v1347
  %v1349 = vrcp.pop %v1303
  %v1350 = vmul.f32 %v605, %v1349
  %v1351 = vrcp.pop %v1304
  %v1352 = vmul.f32 %v606, %v1351
  %v1353 = vrcp.pop %v1305
  %v1354 = vmul.f32 %v607, %v1353
  %v1355 = vrcp.pop %v1306
  %v1356 = vmul.f32 %v608, %v1355
  %v1357 = vrcp.pop %v1307
  %v1358 = vmul.f32 %v609, %v1357
  %v1359 = vrcp.pop %v1308
  %v1360 = vmul.f32 %v610, %v1359
  %v1361 = vrcp.pop %v1309
  %v1362 = vmul.f32 %v611, %v1361
  %v1363 = vrcp.pop %v1310
  %v1364 = vmul.f32 %v612, %v1363
  %v1365 = vrcp.pop %v1311
  %v1366 = vmul.f32 %v613, %v1365
  %v1367 = vrcp.pop %v1312
  %v1368 = vmul.f32 %v614, %v1367
  %v1369 = vrcp.pop %v1313
  %v1370 = vmul.f32 %v615, %v1369
  %v1371 = vrcp.pop %v1314
  %v1372 = vmul.f32 %v616, %v1371
  %v1373 = vrcp.pop %v1315
  %v1374 = vmul.f32 %v617, %v1373
  %v1375 = vrcp.pop %v1316
  %v1376 = vmul.f32 %v618, %v1375
  %v1377 = vrcp.pop %v1317
  %v1378 = vmul.f32 %v619, %v1377
  %v1379 = vrcp.pop %v1318
  %v1380 = vmul.f32 %v620, %v1379
  %v1381 = vrcp.pop %v1319
  %v1382 = vmul.f32 %v621, %v1381
  %v1383 = vrcp.pop %v1320
  %v1384 = vmul.f32 %v622, %v1383
  %v1386 = vlaneseq
  %v1387 = vshrl.u32 %v1386, 7
  %v1388 = vsub.s32 0, %v1387
  %v1389 = vrot.slane %v1274, %v1388
  %1390 = vrot.lane.b32.xlu0 %v1389, 60
  %v1391 = vpop.permute.xlu0 %1390
  %v1392 = vsel %vm944, %v1391, 0
  %v1395 = vsel %vm944, %v1322, 0
  %v1398 = vsel %vm944, %v1324, 0
  %v1401 = vsel %vm944, %v1326, 0
  %v1404 = vsel %vm944, %v1328, 0
  %1406 = vmatprep.subr.mxu0 0.0
  %1407 = vmatpush1.xpose.msra.mxu0 %v1395
  %1408 = vmatprep.subr.mxu0 0.0
  %1409 = vmatpush1.xpose.msra.mxu0 %v1398
  %1410 = vmatprep.subr.mxu0 0.0
  %1411 = vmatpush1.xpose.msra.mxu0 %v1401
  %1412 = vmatprep.subr.mxu0 0.0
  %1413 = vmatpush1.xpose.msra.mxu0 %v1404
  %1414 = vmatprep.subr.mxu0 0.0
  %1415 = vmatpush1.xpose.msra.mxu0 0.0
  %1416 = vmatprep.subr.mxu0 0.0
  %1417 = vmatpush1.xpose.msra.mxu0 0.0
  %1418 = vmatprep.subr.mxu0 0.0
  %1419 = vmatpush1.xpose.msra.mxu0 0.0
  %1420 = vmatprep.subr.mxu0 0.0
  %1421 = vmatpush1.xpose.msra.mxu0 0.0
  %1422 = vmatprep.subr.mxu0 0.0
  %1423 = vmatpush1.xpose.msra.mxu0 0.0
  %1424 = vmatprep.subr.mxu0 0.0
  %1425 = vmatpush1.xpose.msra.mxu0 0.0
  %1426 = vmatprep.subr.mxu0 0.0
  %1427 = vmatpush1.xpose.msra.mxu0 0.0
  %1428 = vmatprep.subr.mxu0 0.0
  %1429 = vmatpush1.xpose.msra.mxu0 0.0
  %1430 = vmatprep.subr.mxu0 0.0
  %1431 = vmatpush1.xpose.msra.mxu0 0.0
  %1432 = vmatprep.subr.mxu0 0.0
  %1433 = vmatpush1.xpose.msra.mxu0 0.0
  %1434 = vmatprep.subr.mxu0 0.0
  %1435 = vmatpush1.xpose.msra.mxu0 0.0
  %1436 = vmatprep.subr.mxu0 0.0
  %1437 = vmatpush1.xpose.msra.mxu0 0.0
  %1438 = vmatprep.subr.mxu0 0.0
  %1439 = vmatpush1.xpose.msra.mxu0 0.0
  %1440 = vmatprep.subr.mxu0 0.0
  %1441 = vmatpush1.xpose.msra.mxu0 0.0
  %1442 = vmatprep.subr.mxu0 0.0
  %1443 = vmatpush1.xpose.msra.mxu0 0.0
  %1444 = vmatprep.subr.mxu0 0.0
  %1445 = vmatpush1.xpose.msra.mxu0 0.0
  %1446 = vmatprep.subr.mxu0 0.0
  %1447 = vmatpush1.xpose.msra.mxu0 0.0
  %1448 = vmatprep.subr.mxu0 0.0
  %1449 = vmatpush1.xpose.msra.mxu0 0.0
  %1450 = vmatprep.subr.mxu0 0.0
  %1451 = vmatpush1.xpose.msra.mxu0 0.0
  %1452 = vmatprep.subr.mxu0 0.0
  %1453 = vmatpush1.xpose.msra.mxu0 0.0
  %1454 = vmatprep.subr.mxu0 0.0
  %1455 = vmatpush1.xpose.msra.mxu0 0.0
  %1456 = vmatprep.subr.mxu0 0.0
  %1457 = vmatpush1.xpose.msra.mxu0 0.0
  %1458 = vmatprep.subr.mxu0 0.0
  %1459 = vmatpush1.xpose.msra.mxu0 0.0
  %1460 = vmatprep.subr.mxu0 0.0
  %1461 = vmatpush1.xpose.msra.mxu0 0.0
  %1462 = vmatprep.subr.mxu0 0.0
  %1463 = vmatpush1.xpose.msra.mxu0 0.0
  %1464 = vmatprep.subr.mxu0 0.0
  %1465 = vmatpush1.xpose.msra.mxu0 0.0
  %1466 = vmatprep.subr.mxu0 0.0
  %1467 = vmatpush1.xpose.msra.mxu0 0.0
  %1468 = vmatprep.subr.mxu0 0.0
  %1469 = vmatpush1.xpose.msra.mxu0 0.0
  %1470 = vmatprep.mubr.f32.mxu0 0.0
  %1471 = vmatmul.mubr.f32.gmra.mrb[0].mxu0 %v1392
  %v1472 = vpop.f32.mrb[0].mxu0
  %v1473 = vadd.f32 0.0, %v1472
  %v1474 = vpop.f32.mrb[0].mxu0
  %1475 = vdwg.mxu0
  %v1477 = vlaneseq
  %v1478 = vshrl.u32 %v1477, 7
  %v1479 = vsub.s32 0, %v1478
  %v1480 = vrot.slane %v1276, %v1479
  %1481 = vrot.lane.b32.xlu0 %v1480, 60
  %v1482 = vpop.permute.xlu0 %1481
  %v1483 = vsel %vm944, %v1482, 0
  %v1486 = vsel %vm944, %v1330, 0
  %v1489 = vsel %vm944, %v1332, 0
  %v1492 = vsel %vm944, %v1334, 0
  %v1495 = vsel %vm944, %v1336, 0
  %1497 = vmatprep.subr.mxu0 0.0
  %1498 = vmatpush1.xpose.msra.mxu0 %v1486
  %1499 = vmatprep.subr.mxu0 0.0
  %1500 = vmatpush1.xpose.msra.mxu0 %v1489
  %1501 = vmatprep.subr.mxu0 0.0
  %1502 = vmatpush1.xpose.msra.mxu0 %v1492
  %1503 = vmatprep.subr.mxu0 0.0
  %1504 = vmatpush1.xpose.msra.mxu0 %v1495
  %1505 = vmatprep.subr.mxu0 0.0
  %1506 = vmatpush1.xpose.msra.mxu0 0.0
  %1507 = vmatprep.subr.mxu0 0.0
  %1508 = vmatpush1.xpose.msra.mxu0 0.0
  %1509 = vmatprep.subr.mxu0 0.0
  %1510 = vmatpush1.xpose.msra.mxu0 0.0
  %1511 = vmatprep.subr.mxu0 0.0
  %1512 = vmatpush1.xpose.msra.mxu0 0.0
  %1513 = vmatprep.subr.mxu0 0.0
  %1514 = vmatpush1.xpose.msra.mxu0 0.0
  %1515 = vmatprep.subr.mxu0 0.0
  %1516 = vmatpush1.xpose.msra.mxu0 0.0
  %1517 = vmatprep.subr.mxu0 0.0
  %1518 = vmatpush1.xpose.msra.mxu0 0.0
  %1519 = vmatprep.subr.mxu0 0.0
  %1520 = vmatpush1.xpose.msra.mxu0 0.0
  %1521 = vmatprep.subr.mxu0 0.0
  %1522 = vmatpush1.xpose.msra.mxu0 0.0
  %1523 = vmatprep.subr.mxu0 0.0
  %1524 = vmatpush1.xpose.msra.mxu0 0.0
  %1525 = vmatprep.subr.mxu0 0.0
  %1526 = vmatpush1.xpose.msra.mxu0 0.0
  %1527 = vmatprep.subr.mxu0 0.0
  %1528 = vmatpush1.xpose.msra.mxu0 0.0
  %1529 = vmatprep.subr.mxu0 0.0
  %1530 = vmatpush1.xpose.msra.mxu0 0.0
  %1531 = vmatprep.subr.mxu0 0.0
  %1532 = vmatpush1.xpose.msra.mxu0 0.0
  %1533 = vmatprep.subr.mxu0 0.0
  %1534 = vmatpush1.xpose.msra.mxu0 0.0
  %1535 = vmatprep.subr.mxu0 0.0
  %1536 = vmatpush1.xpose.msra.mxu0 0.0
  %1537 = vmatprep.subr.mxu0 0.0
  %1538 = vmatpush1.xpose.msra.mxu0 0.0
  %1539 = vmatprep.subr.mxu0 0.0
  %1540 = vmatpush1.xpose.msra.mxu0 0.0
  %1541 = vmatprep.subr.mxu0 0.0
  %1542 = vmatpush1.xpose.msra.mxu0 0.0
  %1543 = vmatprep.subr.mxu0 0.0
  %1544 = vmatpush1.xpose.msra.mxu0 0.0
  %1545 = vmatprep.subr.mxu0 0.0
  %1546 = vmatpush1.xpose.msra.mxu0 0.0
  %1547 = vmatprep.subr.mxu0 0.0
  %1548 = vmatpush1.xpose.msra.mxu0 0.0
  %1549 = vmatprep.subr.mxu0 0.0
  %1550 = vmatpush1.xpose.msra.mxu0 0.0
  %1551 = vmatprep.subr.mxu0 0.0
  %1552 = vmatpush1.xpose.msra.mxu0 0.0
  %1553 = vmatprep.subr.mxu0 0.0
  %1554 = vmatpush1.xpose.msra.mxu0 0.0
  %1555 = vmatprep.subr.mxu0 0.0
  %1556 = vmatpush1.xpose.msra.mxu0 0.0
  %1557 = vmatprep.subr.mxu0 0.0
  %1558 = vmatpush1.xpose.msra.mxu0 0.0
  %1559 = vmatprep.subr.mxu0 0.0
  %1560 = vmatpush1.xpose.msra.mxu0 0.0
  %1561 = vmatprep.mubr.f32.mxu0 0.0
  %1562 = vmatmul.mubr.f32.gmra.mrb[0].mxu0 %v1483
  %v1563 = vpop.f32.mrb[0].mxu0
  %v1564 = vadd.f32 0.0, %v1563
  %v1565 = vpop.f32.mrb[0].mxu0
  %1566 = vdwg.mxu0
  %v1568 = vlaneseq
  %v1569 = vshrl.u32 %v1568, 7
  %v1570 = vsub.s32 0, %v1569
  %v1571 = vrot.slane %v1278, %v1570
  %1572 = vrot.lane.b32.xlu0 %v1571, 60
  %v1573 = vpop.permute.xlu0 %1572
  %v1574 = vsel %vm944, %v1573, 0
  %v1577 = vsel %vm944, %v1338, 0
  %v1580 = vsel %vm944, %v1340, 0
  %v1583 = vsel %vm944, %v1342, 0
  %v1586 = vsel %vm944, %v1344, 0
  %1588 = vmatprep.subr.mxu0 0.0
  %1589 = vmatpush1.xpose.msra.mxu0 %v1577
  %1590 = vmatprep.subr.mxu0 0.0
  %1591 = vmatpush1.xpose.msra.mxu0 %v1580
  %1592 = vmatprep.subr.mxu0 0.0
  %1593 = vmatpush1.xpose.msra.mxu0 %v1583
  %1594 = vmatprep.subr.mxu0 0.0
  %1595 = vmatpush1.xpose.msra.mxu0 %v1586
  %1596 = vmatprep.subr.mxu0 0.0
  %1597 = vmatpush1.xpose.msra.mxu0 0.0
  %1598 = vmatprep.subr.mxu0 0.0
  %1599 = vmatpush1.xpose.msra.mxu0 0.0
  %1600 = vmatprep.subr.mxu0 0.0
  %1601 = vmatpush1.xpose.msra.mxu0 0.0
  %1602 = vmatprep.subr.mxu0 0.0
  %1603 = vmatpush1.xpose.msra.mxu0 0.0
  %1604 = vmatprep.subr.mxu0 0.0
  %1605 = vmatpush1.xpose.msra.mxu0 0.0
  %1606 = vmatprep.subr.mxu0 0.0
  %1607 = vmatpush1.xpose.msra.mxu0 0.0
  %1608 = vmatprep.subr.mxu0 0.0
  %1609 = vmatpush1.xpose.msra.mxu0 0.0
  %1610 = vmatprep.subr.mxu0 0.0
  %1611 = vmatpush1.xpose.msra.mxu0 0.0
  %1612 = vmatprep.subr.mxu0 0.0
  %1613 = vmatpush1.xpose.msra.mxu0 0.0
  %1614 = vmatprep.subr.mxu0 0.0
  %1615 = vmatpush1.xpose.msra.mxu0 0.0
  %1616 = vmatprep.subr.mxu0 0.0
  %1617 = vmatpush1.xpose.msra.mxu0 0.0
  %1618 = vmatprep.subr.mxu0 0.0
  %1619 = vmatpush1.xpose.msra.mxu0 0.0
  %1620 = vmatprep.subr.mxu0 0.0
  %1621 = vmatpush1.xpose.msra.mxu0 0.0
  %1622 = vmatprep.subr.mxu0 0.0
  %1623 = vmatpush1.xpose.msra.mxu0 0.0
  %1624 = vmatprep.subr.mxu0 0.0
  %1625 = vmatpush1.xpose.msra.mxu0 0.0
  %1626 = vmatprep.subr.mxu0 0.0
  %1627 = vmatpush1.xpose.msra.mxu0 0.0
  %1628 = vmatprep.subr.mxu0 0.0
  %1629 = vmatpush1.xpose.msra.mxu0 0.0
  %1630 = vmatprep.subr.mxu0 0.0
  %1631 = vmatpush1.xpose.msra.mxu0 0.0
  %1632 = vmatprep.subr.mxu0 0.0
  %1633 = vmatpush1.xpose.msra.mxu0 0.0
  %1634 = vmatprep.subr.mxu0 0.0
  %1635 = vmatpush1.xpose.msra.mxu0 0.0
  %1636 = vmatprep.subr.mxu0 0.0
  %1637 = vmatpush1.xpose.msra.mxu0 0.0
  %1638 = vmatprep.subr.mxu0 0.0
  %1639 = vmatpush1.xpose.msra.mxu0 0.0
  %1640 = vmatprep.subr.mxu0 0.0
  %1641 = vmatpush1.xpose.msra.mxu0 0.0
  %1642 = vmatprep.subr.mxu0 0.0
  %1643 = vmatpush1.xpose.msra.mxu0 0.0
  %1644 = vmatprep.subr.mxu0 0.0
  %1645 = vmatpush1.xpose.msra.mxu0 0.0
  %1646 = vmatprep.subr.mxu0 0.0
  %1647 = vmatpush1.xpose.msra.mxu0 0.0
  %1648 = vmatprep.subr.mxu0 0.0
  %1649 = vmatpush1.xpose.msra.mxu0 0.0
  %1650 = vmatprep.subr.mxu0 0.0
  %1651 = vmatpush1.xpose.msra.mxu0 0.0
  %1652 = vmatprep.mubr.f32.mxu0 0.0
  %1653 = vmatmul.mubr.f32.gmra.mrb[0].mxu0 %v1574
  %v1654 = vpop.f32.mrb[0].mxu0
  %v1655 = vadd.f32 0.0, %v1654
  %v1656 = vpop.f32.mrb[0].mxu0
  %1657 = vdwg.mxu0
  %v1659 = vlaneseq
  %v1660 = vshrl.u32 %v1659, 7
  %v1661 = vsub.s32 0, %v1660
  %v1662 = vrot.slane %v1280, %v1661
  %1663 = vrot.lane.b32.xlu0 %v1662, 60
  %v1664 = vpop.permute.xlu0 %1663
  %v1665 = vsel %vm944, %v1664, 0
  %v1668 = vsel %vm944, %v1346, 0
  %v1671 = vsel %vm944, %v1348, 0
  %v1674 = vsel %vm944, %v1350, 0
  %v1677 = vsel %vm944, %v1352, 0
  %1679 = vmatprep.subr.mxu0 0.0
  %1680 = vmatpush1.xpose.msra.mxu0 %v1668
  %1681 = vmatprep.subr.mxu0 0.0
  %1682 = vmatpush1.xpose.msra.mxu0 %v1671
  %1683 = vmatprep.subr.mxu0 0.0
  %1684 = vmatpush1.xpose.msra.mxu0 %v1674
  %1685 = vmatprep.subr.mxu0 0.0
  %1686 = vmatpush1.xpose.msra.mxu0 %v1677
  %1687 = vmatprep.subr.mxu0 0.0
  %1688 = vmatpush1.xpose.msra.mxu0 0.0
  %1689 = vmatprep.subr.mxu0 0.0
  %1690 = vmatpush1.xpose.msra.mxu0 0.0
  %1691 = vmatprep.subr.mxu0 0.0
  %1692 = vmatpush1.xpose.msra.mxu0 0.0
  %1693 = vmatprep.subr.mxu0 0.0
  %1694 = vmatpush1.xpose.msra.mxu0 0.0
  %1695 = vmatprep.subr.mxu0 0.0
  %1696 = vmatpush1.xpose.msra.mxu0 0.0
  %1697 = vmatprep.subr.mxu0 0.0
  %1698 = vmatpush1.xpose.msra.mxu0 0.0
  %1699 = vmatprep.subr.mxu0 0.0
  %1700 = vmatpush1.xpose.msra.mxu0 0.0
  %1701 = vmatprep.subr.mxu0 0.0
  %1702 = vmatpush1.xpose.msra.mxu0 0.0
  %1703 = vmatprep.subr.mxu0 0.0
  %1704 = vmatpush1.xpose.msra.mxu0 0.0
  %1705 = vmatprep.subr.mxu0 0.0
  %1706 = vmatpush1.xpose.msra.mxu0 0.0
  %1707 = vmatprep.subr.mxu0 0.0
  %1708 = vmatpush1.xpose.msra.mxu0 0.0
  %1709 = vmatprep.subr.mxu0 0.0
  %1710 = vmatpush1.xpose.msra.mxu0 0.0
  %1711 = vmatprep.subr.mxu0 0.0
  %1712 = vmatpush1.xpose.msra.mxu0 0.0
  %1713 = vmatprep.subr.mxu0 0.0
  %1714 = vmatpush1.xpose.msra.mxu0 0.0
  %1715 = vmatprep.subr.mxu0 0.0
  %1716 = vmatpush1.xpose.msra.mxu0 0.0
  %1717 = vmatprep.subr.mxu0 0.0
  %1718 = vmatpush1.xpose.msra.mxu0 0.0
  %1719 = vmatprep.subr.mxu0 0.0
  %1720 = vmatpush1.xpose.msra.mxu0 0.0
  %1721 = vmatprep.subr.mxu0 0.0
  %1722 = vmatpush1.xpose.msra.mxu0 0.0
  %1723 = vmatprep.subr.mxu0 0.0
  %1724 = vmatpush1.xpose.msra.mxu0 0.0
  %1725 = vmatprep.subr.mxu0 0.0
  %1726 = vmatpush1.xpose.msra.mxu0 0.0
  %1727 = vmatprep.subr.mxu0 0.0
  %1728 = vmatpush1.xpose.msra.mxu0 0.0
  %1729 = vmatprep.subr.mxu0 0.0
  %1730 = vmatpush1.xpose.msra.mxu0 0.0
  %1731 = vmatprep.subr.mxu0 0.0
  %1732 = vmatpush1.xpose.msra.mxu0 0.0
  %1733 = vmatprep.subr.mxu0 0.0
  %1734 = vmatpush1.xpose.msra.mxu0 0.0
  %1735 = vmatprep.subr.mxu0 0.0
  %1736 = vmatpush1.xpose.msra.mxu0 0.0
  %1737 = vmatprep.subr.mxu0 0.0
  %1738 = vmatpush1.xpose.msra.mxu0 0.0
  %1739 = vmatprep.subr.mxu0 0.0
  %1740 = vmatpush1.xpose.msra.mxu0 0.0
  %1741 = vmatprep.subr.mxu0 0.0
  %1742 = vmatpush1.xpose.msra.mxu0 0.0
  %1743 = vmatprep.mubr.f32.mxu0 0.0
  %1744 = vmatmul.mubr.f32.gmra.mrb[0].mxu0 %v1665
  %v1745 = vpop.f32.mrb[0].mxu0
  %v1746 = vadd.f32 0.0, %v1745
  %v1747 = vpop.f32.mrb[0].mxu0
  %1748 = vdwg.mxu0
  %v1750 = vlaneseq
  %v1751 = vshrl.u32 %v1750, 7
  %v1752 = vsub.s32 0, %v1751
  %v1753 = vrot.slane %v1282, %v1752
  %1754 = vrot.lane.b32.xlu0 %v1753, 60
  %v1755 = vpop.permute.xlu0 %1754
  %v1756 = vsel %vm944, %v1755, 0
  %v1759 = vsel %vm944, %v1354, 0
  %v1762 = vsel %vm944, %v1356, 0
  %v1765 = vsel %vm944, %v1358, 0
  %v1768 = vsel %vm944, %v1360, 0
  %1770 = vmatprep.subr.mxu0 0.0
  %1771 = vmatpush1.xpose.msra.mxu0 %v1759
  %1772 = vmatprep.subr.mxu0 0.0
  %1773 = vmatpush1.xpose.msra.mxu0 %v1762
  %1774 = vmatprep.subr.mxu0 0.0
  %1775 = vmatpush1.xpose.msra.mxu0 %v1765
  %1776 = vmatprep.subr.mxu0 0.0
  %1777 = vmatpush1.xpose.msra.mxu0 %v1768
  %1778 = vmatprep.subr.mxu0 0.0
  %1779 = vmatpush1.xpose.msra.mxu0 0.0
  %1780 = vmatprep.subr.mxu0 0.0
  %1781 = vmatpush1.xpose.msra.mxu0 0.0
  %1782 = vmatprep.subr.mxu0 0.0
  %1783 = vmatpush1.xpose.msra.mxu0 0.0
  %1784 = vmatprep.subr.mxu0 0.0
  %1785 = vmatpush1.xpose.msra.mxu0 0.0
  %1786 = vmatprep.subr.mxu0 0.0
  %1787 = vmatpush1.xpose.msra.mxu0 0.0
  %1788 = vmatprep.subr.mxu0 0.0
  %1789 = vmatpush1.xpose.msra.mxu0 0.0
  %1790 = vmatprep.subr.mxu0 0.0
  %1791 = vmatpush1.xpose.msra.mxu0 0.0
  %1792 = vmatprep.subr.mxu0 0.0
  %1793 = vmatpush1.xpose.msra.mxu0 0.0
  %1794 = vmatprep.subr.mxu0 0.0
  %1795 = vmatpush1.xpose.msra.mxu0 0.0
  %1796 = vmatprep.subr.mxu0 0.0
  %1797 = vmatpush1.xpose.msra.mxu0 0.0
  %1798 = vmatprep.subr.mxu0 0.0
  %1799 = vmatpush1.xpose.msra.mxu0 0.0
  %1800 = vmatprep.subr.mxu0 0.0
  %1801 = vmatpush1.xpose.msra.mxu0 0.0
  %1802 = vmatprep.subr.mxu0 0.0
  %1803 = vmatpush1.xpose.msra.mxu0 0.0
  %1804 = vmatprep.subr.mxu0 0.0
  %1805 = vmatpush1.xpose.msra.mxu0 0.0
  %1806 = vmatprep.subr.mxu0 0.0
  %1807 = vmatpush1.xpose.msra.mxu0 0.0
  %1808 = vmatprep.subr.mxu0 0.0
  %1809 = vmatpush1.xpose.msra.mxu0 0.0
  %1810 = vmatprep.subr.mxu0 0.0
  %1811 = vmatpush1.xpose.msra.mxu0 0.0
  %1812 = vmatprep.subr.mxu0 0.0
  %1813 = vmatpush1.xpose.msra.mxu0 0.0
  %1814 = vmatprep.subr.mxu0 0.0
  %1815 = vmatpush1.xpose.msra.mxu0 0.0
  %1816 = vmatprep.subr.mxu0 0.0
  %1817 = vmatpush1.xpose.msra.mxu0 0.0
  %1818 = vmatprep.subr.mxu0 0.0
  %1819 = vmatpush1.xpose.msra.mxu0 0.0
  %1820 = vmatprep.subr.mxu0 0.0
  %1821 = vmatpush1.xpose.msra.mxu0 0.0
  %1822 = vmatprep.subr.mxu0 0.0
  %1823 = vmatpush1.xpose.msra.mxu0 0.0
  %1824 = vmatprep.subr.mxu0 0.0
  %1825 = vmatpush1.xpose.msra.mxu0 0.0
  %1826 = vmatprep.subr.mxu0 0.0
  %1827 = vmatpush1.xpose.msra.mxu0 0.0
  %1828 = vmatprep.subr.mxu0 0.0
  %1829 = vmatpush1.xpose.msra.mxu0 0.0
  %1830 = vmatprep.subr.mxu0 0.0
  %1831 = vmatpush1.xpose.msra.mxu0 0.0
  %1832 = vmatprep.subr.mxu0 0.0
  %1833 = vmatpush1.xpose.msra.mxu0 0.0
  %1834 = vmatprep.mubr.f32.mxu0 0.0
  %1835 = vmatmul.mubr.f32.gmra.mrb[0].mxu0 %v1756
  %v1836 = vpop.f32.mrb[0].mxu0
  %v1837 = vadd.f32 0.0, %v1836
  %v1838 = vpop.f32.mrb[0].mxu0
  %1839 = vdwg.mxu0
  %v1841 = vlaneseq
  %v1842 = vshrl.u32 %v1841, 7
  %v1843 = vsub.s32 0, %v1842
  %v1844 = vrot.slane %v1284, %v1843
  %1845 = vrot.lane.b32.xlu0 %v1844, 60
  %v1846 = vpop.permute.xlu0 %1845
  %v1847 = vsel %vm944, %v1846, 0
  %v1850 = vsel %vm944, %v1362, 0
  %v1853 = vsel %vm944, %v1364, 0
  %v1856 = vsel %vm944, %v1366, 0
  %v1859 = vsel %vm944, %v1368, 0
  %1861 = vmatprep.subr.mxu0 0.0
  %1862 = vmatpush1.xpose.msra.mxu0 %v1850
  %1863 = vmatprep.subr.mxu0 0.0
  %1864 = vmatpush1.xpose.msra.mxu0 %v1853
  %1865 = vmatprep.subr.mxu0 0.0
  %1866 = vmatpush1.xpose.msra.mxu0 %v1856
  %1867 = vmatprep.subr.mxu0 0.0
  %1868 = vmatpush1.xpose.msra.mxu0 %v1859
  %1869 = vmatprep.subr.mxu0 0.0
  %1870 = vmatpush1.xpose.msra.mxu0 0.0
  %1871 = vmatprep.subr.mxu0 0.0
  %1872 = vmatpush1.xpose.msra.mxu0 0.0
  %1873 = vmatprep.subr.mxu0 0.0
  %1874 = vmatpush1.xpose.msra.mxu0 0.0
  %1875 = vmatprep.subr.mxu0 0.0
  %1876 = vmatpush1.xpose.msra.mxu0 0.0
  %1877 = vmatprep.subr.mxu0 0.0
  %1878 = vmatpush1.xpose.msra.mxu0 0.0
  %1879 = vmatprep.subr.mxu0 0.0
  %1880 = vmatpush1.xpose.msra.mxu0 0.0
  %1881 = vmatprep.subr.mxu0 0.0
  %1882 = vmatpush1.xpose.msra.mxu0 0.0
  %1883 = vmatprep.subr.mxu0 0.0
  %1884 = vmatpush1.xpose.msra.mxu0 0.0
  %1885 = vmatprep.subr.mxu0 0.0
  %1886 = vmatpush1.xpose.msra.mxu0 0.0
  %1887 = vmatprep.subr.mxu0 0.0
  %1888 = vmatpush1.xpose.msra.mxu0 0.0
  %1889 = vmatprep.subr.mxu0 0.0
  %1890 = vmatpush1.xpose.msra.mxu0 0.0
  %1891 = vmatprep.subr.mxu0 0.0
  %1892 = vmatpush1.xpose.msra.mxu0 0.0
  %1893 = vmatprep.subr.mxu0 0.0
  %1894 = vmatpush1.xpose.msra.mxu0 0.0
  %1895 = vmatprep.subr.mxu0 0.0
  %1896 = vmatpush1.xpose.msra.mxu0 0.0
  %1897 = vmatprep.subr.mxu0 0.0
  %1898 = vmatpush1.xpose.msra.mxu0 0.0
  %1899 = vmatprep.subr.mxu0 0.0
  %1900 = vmatpush1.xpose.msra.mxu0 0.0
  %1901 = vmatprep.subr.mxu0 0.0
  %1902 = vmatpush1.xpose.msra.mxu0 0.0
  %1903 = vmatprep.subr.mxu0 0.0
  %1904 = vmatpush1.xpose.msra.mxu0 0.0
  %1905 = vmatprep.subr.mxu0 0.0
  %1906 = vmatpush1.xpose.msra.mxu0 0.0
  %1907 = vmatprep.subr.mxu0 0.0
  %1908 = vmatpush1.xpose.msra.mxu0 0.0
  %1909 = vmatprep.subr.mxu0 0.0
  %1910 = vmatpush1.xpose.msra.mxu0 0.0
  %1911 = vmatprep.subr.mxu0 0.0
  %1912 = vmatpush1.xpose.msra.mxu0 0.0
  %1913 = vmatprep.subr.mxu0 0.0
  %1914 = vmatpush1.xpose.msra.mxu0 0.0
  %1915 = vmatprep.subr.mxu0 0.0
  %1916 = vmatpush1.xpose.msra.mxu0 0.0
  %1917 = vmatprep.subr.mxu0 0.0
  %1918 = vmatpush1.xpose.msra.mxu0 0.0
  %1919 = vmatprep.subr.mxu0 0.0
  %1920 = vmatpush1.xpose.msra.mxu0 0.0
  %1921 = vmatprep.subr.mxu0 0.0
  %1922 = vmatpush1.xpose.msra.mxu0 0.0
  %1923 = vmatprep.subr.mxu0 0.0
  %1924 = vmatpush1.xpose.msra.mxu0 0.0
  %1925 = vmatprep.mubr.f32.mxu0 0.0
  %1926 = vmatmul.mubr.f32.gmra.mrb[0].mxu0 %v1847
  %v1927 = vpop.f32.mrb[0].mxu0
  %v1928 = vadd.f32 0.0, %v1927
  %v1929 = vpop.f32.mrb[0].mxu0
  %1930 = vdwg.mxu0
  %v1932 = vlaneseq
  %v1933 = vshrl.u32 %v1932, 7
  %v1934 = vsub.s32 0, %v1933
  %v1935 = vrot.slane %v1286, %v1934
  %1936 = vrot.lane.b32.xlu0 %v1935, 60
  %v1937 = vpop.permute.xlu0 %1936
  %v1938 = vsel %vm944, %v1937, 0
  %v1941 = vsel %vm944, %v1370, 0
  %v1944 = vsel %vm944, %v1372, 0
  %v1947 = vsel %vm944, %v1374, 0
  %v1950 = vsel %vm944, %v1376, 0
  %1952 = vmatprep.subr.mxu0 0.0
  %1953 = vmatpush1.xpose.msra.mxu0 %v1941
  %1954 = vmatprep.subr.mxu0 0.0
  %1955 = vmatpush1.xpose.msra.mxu0 %v1944
  %1956 = vmatprep.subr.mxu0 0.0
  %1957 = vmatpush1.xpose.msra.mxu0 %v1947
  %1958 = vmatprep.subr.mxu0 0.0
  %1959 = vmatpush1.xpose.msra.mxu0 %v1950
  %1960 = vmatprep.subr.mxu0 0.0
  %1961 = vmatpush1.xpose.msra.mxu0 0.0
  %1962 = vmatprep.subr.mxu0 0.0
  %1963 = vmatpush1.xpose.msra.mxu0 0.0
  %1964 = vmatprep.subr.mxu0 0.0
  %1965 = vmatpush1.xpose.msra.mxu0 0.0
  %1966 = vmatprep.subr.mxu0 0.0
  %1967 = vmatpush1.xpose.msra.mxu0 0.0
  %1968 = vmatprep.subr.mxu0 0.0
  %1969 = vmatpush1.xpose.msra.mxu0 0.0
  %1970 = vmatprep.subr.mxu0 0.0
  %1971 = vmatpush1.xpose.msra.mxu0 0.0
  %1972 = vmatprep.subr.mxu0 0.0
  %1973 = vmatpush1.xpose.msra.mxu0 0.0
  %1974 = vmatprep.subr.mxu0 0.0
  %1975 = vmatpush1.xpose.msra.mxu0 0.0
  %1976 = vmatprep.subr.mxu0 0.0
  %1977 = vmatpush1.xpose.msra.mxu0 0.0
  %1978 = vmatprep.subr.mxu0 0.0
  %1979 = vmatpush1.xpose.msra.mxu0 0.0
  %1980 = vmatprep.subr.mxu0 0.0
  %1981 = vmatpush1.xpose.msra.mxu0 0.0
  %1982 = vmatprep.subr.mxu0 0.0
  %1983 = vmatpush1.xpose.msra.mxu0 0.0
  %1984 = vmatprep.subr.mxu0 0.0
  %1985 = vmatpush1.xpose.msra.mxu0 0.0
  %1986 = vmatprep.subr.mxu0 0.0
  %1987 = vmatpush1.xpose.msra.mxu0 0.0
  %1988 = vmatprep.subr.mxu0 0.0
  %1989 = vmatpush1.xpose.msra.mxu0 0.0
  %1990 = vmatprep.subr.mxu0 0.0
  %1991 = vmatpush1.xpose.msra.mxu0 0.0
  %1992 = vmatprep.subr.mxu0 0.0
  %1993 = vmatpush1.xpose.msra.mxu0 0.0
  %1994 = vmatprep.subr.mxu0 0.0
  %1995 = vmatpush1.xpose.msra.mxu0 0.0
  %1996 = vmatprep.subr.mxu0 0.0
  %1997 = vmatpush1.xpose.msra.mxu0 0.0
  %1998 = vmatprep.subr.mxu0 0.0
  %1999 = vmatpush1.xpose.msra.mxu0 0.0
  %2000 = vmatprep.subr.mxu0 0.0
  %2001 = vmatpush1.xpose.msra.mxu0 0.0
  %2002 = vmatprep.subr.mxu0 0.0
  %2003 = vmatpush1.xpose.msra.mxu0 0.0
  %2004 = vmatprep.subr.mxu0 0.0
  %2005 = vmatpush1.xpose.msra.mxu0 0.0
  %2006 = vmatprep.subr.mxu0 0.0
  %2007 = vmatpush1.xpose.msra.mxu0 0.0
  %2008 = vmatprep.subr.mxu0 0.0
  %2009 = vmatpush1.xpose.msra.mxu0 0.0
  %2010 = vmatprep.subr.mxu0 0.0
  %2011 = vmatpush1.xpose.msra.mxu0 0.0
  %2012 = vmatprep.subr.mxu0 0.0
  %2013 = vmatpush1.xpose.msra.mxu0 0.0
  %2014 = vmatprep.subr.mxu0 0.0
  %2015 = vmatpush1.xpose.msra.mxu0 0.0
  %2016 = vmatprep.mubr.f32.mxu0 0.0
  %2017 = vmatmul.mubr.f32.gmra.mrb[0].mxu0 %v1938
  %v2018 = vpop.f32.mrb[0].mxu0
  %v2019 = vadd.f32 0.0, %v2018
  %v2020 = vpop.f32.mrb[0].mxu0
  %2021 = vdwg.mxu0
  %v2023 = vlaneseq
  %v2024 = vshrl.u32 %v2023, 7
  %v2025 = vsub.s32 0, %v2024
  %v2026 = vrot.slane %v1288, %v2025
  %2027 = vrot.lane.b32.xlu0 %v2026, 60
  %v2028 = vpop.permute.xlu0 %2027
  %v2029 = vsel %vm944, %v2028, 0
  %v2032 = vsel %vm944, %v1378, 0
  %v2035 = vsel %vm944, %v1380, 0
  %v2038 = vsel %vm944, %v1382, 0
  %v2041 = vsel %vm944, %v1384, 0
  %2043 = vmatprep.subr.mxu0 0.0
  %2044 = vmatpush1.xpose.msra.mxu0 %v2032
  %2045 = vmatprep.subr.mxu0 0.0
  %2046 = vmatpush1.xpose.msra.mxu0 %v2035
  %2047 = vmatprep.subr.mxu0 0.0
  %2048 = vmatpush1.xpose.msra.mxu0 %v2038
  %2049 = vmatprep.subr.mxu0 0.0
  %2050 = vmatpush1.xpose.msra.mxu0 %v2041
  %2051 = vmatprep.subr.mxu0 0.0
  %2052 = vmatpush1.xpose.msra.mxu0 0.0
  %2053 = vmatprep.subr.mxu0 0.0
  %2054 = vmatpush1.xpose.msra.mxu0 0.0
  %2055 = vmatprep.subr.mxu0 0.0
  %2056 = vmatpush1.xpose.msra.mxu0 0.0
  %2057 = vmatprep.subr.mxu0 0.0
  %2058 = vmatpush1.xpose.msra.mxu0 0.0
  %2059 = vmatprep.subr.mxu0 0.0
  %2060 = vmatpush1.xpose.msra.mxu0 0.0
  %2061 = vmatprep.subr.mxu0 0.0
  %2062 = vmatpush1.xpose.msra.mxu0 0.0
  %2063 = vmatprep.subr.mxu0 0.0
  %2064 = vmatpush1.xpose.msra.mxu0 0.0
  %2065 = vmatprep.subr.mxu0 0.0
  %2066 = vmatpush1.xpose.msra.mxu0 0.0
  %2067 = vmatprep.subr.mxu0 0.0
  %2068 = vmatpush1.xpose.msra.mxu0 0.0
  %2069 = vmatprep.subr.mxu0 0.0
  %2070 = vmatpush1.xpose.msra.mxu0 0.0
  %2071 = vmatprep.subr.mxu0 0.0
  %2072 = vmatpush1.xpose.msra.mxu0 0.0
  %2073 = vmatprep.subr.mxu0 0.0
  %2074 = vmatpush1.xpose.msra.mxu0 0.0
  %2075 = vmatprep.subr.mxu0 0.0
  %2076 = vmatpush1.xpose.msra.mxu0 0.0
  %2077 = vmatprep.subr.mxu0 0.0
  %2078 = vmatpush1.xpose.msra.mxu0 0.0
  %2079 = vmatprep.subr.mxu0 0.0
  %2080 = vmatpush1.xpose.msra.mxu0 0.0
  %2081 = vmatprep.subr.mxu0 0.0
  %2082 = vmatpush1.xpose.msra.mxu0 0.0
  %2083 = vmatprep.subr.mxu0 0.0
  %2084 = vmatpush1.xpose.msra.mxu0 0.0
  %2085 = vmatprep.subr.mxu0 0.0
  %2086 = vmatpush1.xpose.msra.mxu0 0.0
  %2087 = vmatprep.subr.mxu0 0.0
  %2088 = vmatpush1.xpose.msra.mxu0 0.0
  %2089 = vmatprep.subr.mxu0 0.0
  %2090 = vmatpush1.xpose.msra.mxu0 0.0
  %2091 = vmatprep.subr.mxu0 0.0
  %2092 = vmatpush1.xpose.msra.mxu0 0.0
  %2093 = vmatprep.subr.mxu0 0.0
  %2094 = vmatpush1.xpose.msra.mxu0 0.0
  %2095 = vmatprep.subr.mxu0 0.0
  %2096 = vmatpush1.xpose.msra.mxu0 0.0
  %2097 = vmatprep.subr.mxu0 0.0
  %2098 = vmatpush1.xpose.msra.mxu0 0.0
  %2099 = vmatprep.subr.mxu0 0.0
  %2100 = vmatpush1.xpose.msra.mxu0 0.0
  %2101 = vmatprep.subr.mxu0 0.0
  %2102 = vmatpush1.xpose.msra.mxu0 0.0
  %2103 = vmatprep.subr.mxu0 0.0
  %2104 = vmatpush1.xpose.msra.mxu0 0.0
  %2105 = vmatprep.subr.mxu0 0.0
  %2106 = vmatpush1.xpose.msra.mxu0 0.0
  %2107 = vmatprep.mubr.f32.mxu0 0.0
  %2108 = vmatmul.mubr.f32.gmra.mrb[0].mxu0 %v2029
  %v2109 = vpop.f32.mrb[0].mxu0
  %v2110 = vadd.f32 0.0, %v2109
  %v2111 = vpop.f32.mrb[0].mxu0
  %2112 = vdwg.mxu0
  %2113 = vset.pattern.permute.xlu0 84
  %2114 = vperm.xlu0 %2113, %v378
  %v2115 = vpop.permute.xlu0 %2114
  %v2117 = vlaneseq
  %v2118 = vshrl.u32 %v2117, 7
  %v2119 = vsub.s32 0, %v2118
  %v2120 = vrot.slane %v2115, %v2119
  %2121 = vset.pattern.permute.xlu0 84
  %2122 = vperm.xlu0 %2121, %v392
  %v2123 = vpop.permute.xlu0 %2122
  %v2125 = vlaneseq
  %v2126 = vshrl.u32 %v2125, 7
  %v2127 = vsub.s32 0, %v2126
  %v2128 = vrot.slane %v2123, %v2127
  %2129 = vset.pattern.permute.xlu0 84
  %2130 = vperm.xlu0 %2129, %v400
  %v2131 = vpop.permute.xlu0 %2130
  %v2133 = vlaneseq
  %v2134 = vshrl.u32 %v2133, 7
  %v2135 = vsub.s32 0, %v2134
  %v2136 = vrot.slane %v2131, %v2135
  %2137 = vset.pattern.permute.xlu0 84
  %2138 = vperm.xlu0 %2137, %v402
  %v2139 = vpop.permute.xlu0 %2138
  %v2141 = vlaneseq
  %v2142 = vshrl.u32 %v2141, 7
  %v2143 = vsub.s32 0, %v2142
  %v2144 = vrot.slane %v2139, %v2143
  %2145 = vset.pattern.permute.xlu0 84
  %2146 = vperm.xlu0 %2145, %v385
  %v2147 = vpop.permute.xlu0 %2146
  %v2149 = vlaneseq
  %v2150 = vshrl.u32 %v2149, 7
  %v2151 = vsub.s32 0, %v2150
  %v2152 = vrot.slane %v2147, %v2151
  %2153 = vset.pattern.permute.xlu0 84
  %2154 = vperm.xlu0 %2153, %v399
  %v2155 = vpop.permute.xlu0 %2154
  %v2157 = vlaneseq
  %v2158 = vshrl.u32 %v2157, 7
  %v2159 = vsub.s32 0, %v2158
  %v2160 = vrot.slane %v2155, %v2159
  %2161 = vset.pattern.permute.xlu0 84
  %2162 = vperm.xlu0 %2161, %v401
  %v2163 = vpop.permute.xlu0 %2162
  %v2165 = vlaneseq
  %v2166 = vshrl.u32 %v2165, 7
  %v2167 = vsub.s32 0, %v2166
  %v2168 = vrot.slane %v2163, %v2167
  %2169 = vset.pattern.permute.xlu0 84
  %2170 = vperm.xlu0 %2169, %v403
  %v2171 = vpop.permute.xlu0 %2170
  %v2173 = vlaneseq
  %v2174 = vshrl.u32 %v2173, 7
  %v2175 = vsub.s32 0, %v2174
  %v2176 = vrot.slane %v2171, %v2175
  %v2177 = vmul.f32 %v1473, %v2120
  %v2178 = vmul.f32 %v1564, %v2128
  %v2179 = vmul.f32 %v1655, %v2136
  %v2180 = vmul.f32 %v1746, %v2144
  %v2181 = vmul.f32 %v1837, %v2152
  %v2182 = vmul.f32 %v1928, %v2160
  %v2183 = vmul.f32 %v2019, %v2168
  %v2184 = vmul.f32 %v2110, %v2176
  %vm2185 = vcmask 253952
  %v2186 = vsel %vm2185, %v2177, -inf
  %2187 = vmax.xlane.f32.xlu0 %v2186
  %v2188 = vpop.xlane.xlu0 %2187
  %v2189 = vsel %vm2185, %v2178, -inf
  %2190 = vmax.xlane.f32.xlu0 %v2189
  %v2191 = vpop.xlane.xlu0 %2190
  %v2192 = vsel %vm2185, %v2179, -inf
  %2193 = vmax.xlane.f32.xlu0 %v2192
  %v2194 = vpop.xlane.xlu0 %2193
  %v2195 = vsel %vm2185, %v2180, -inf
  %2196 = vmax.xlane.f32.xlu0 %v2195
  %v2197 = vpop.xlane.xlu0 %2196
  %v2198 = vsel %vm2185, %v2181, -inf
  %2199 = vmax.xlane.f32.xlu0 %v2198
  %v2200 = vpop.xlane.xlu0 %2199
  %v2201 = vsel %vm2185, %v2182, -inf
  %2202 = vmax.xlane.f32.xlu0 %v2201
  %v2203 = vpop.xlane.xlu0 %2202
  %v2204 = vsel %vm2185, %v2183, -inf
  %2205 = vmax.xlane.f32.xlu0 %v2204
  %v2206 = vpop.xlane.xlu0 %2205
  %v2207 = vsel %vm2185, %v2184, -inf
  %2208 = vmax.xlane.f32.xlu0 %v2207
  %v2209 = vpop.xlane.xlu0 %2208
  %v2210 = vsub.f32 %v2177, %v2188
  %v2211 = vsub.f32 %v2178, %v2191
  %v2212 = vsub.f32 %v2179, %v2194
  %v2213 = vsub.f32 %v2180, %v2197
  %v2214 = vsub.f32 %v2181, %v2200
  %v2215 = vsub.f32 %v2182, %v2203
  %v2216 = vsub.f32 %v2183, %v2206
  %v2217 = vsub.f32 %v2184, %v2209
  %v2218 = vmul.f32 %v2210, 1.442695
  %v2219 = vpow.pop %v2218
  %v2220 = vmul.f32 %v2211, 1.442695
  %v2221 = vpow.pop %v2220
  %v2222 = vmul.f32 %v2212, 1.442695
  %v2223 = vpow.pop %v2222
  %v2224 = vmul.f32 %v2213, 1.442695
  %v2225 = vpow.pop %v2224
  %v2226 = vmul.f32 %v2214, 1.442695
  %v2227 = vpow.pop %v2226
  %v2228 = vmul.f32 %v2215, 1.442695
  %v2229 = vpow.pop %v2228
  %v2230 = vmul.f32 %v2216, 1.442695
  %v2231 = vpow.pop %v2230
  %v2232 = vmul.f32 %v2217, 1.442695
  %v2233 = vpow.pop %v2232
  %v2234 = vsel %vm2185, %v2219, 0.0
  %2235 = vadd.xlane.f32.xlu0 %v2234
  %v2236 = vpop.xlane.xlu0 %2235
  %v2237 = vsel %vm2185, %v2221, 0.0
  %2238 = vadd.xlane.f32.xlu0 %v2237
  %v2239 = vpop.xlane.xlu0 %2238
  %v2240 = vsel %vm2185, %v2223, 0.0
  %2241 = vadd.xlane.f32.xlu0 %v2240
  %v2242 = vpop.xlane.xlu0 %2241
  %v2243 = vsel %vm2185, %v2225, 0.0
  %2244 = vadd.xlane.f32.xlu0 %v2243
  %v2245 = vpop.xlane.xlu0 %2244
  %v2246 = vsel %vm2185, %v2227, 0.0
  %2247 = vadd.xlane.f32.xlu0 %v2246
  %v2248 = vpop.xlane.xlu0 %2247
  %v2249 = vsel %vm2185, %v2229, 0.0
  %2250 = vadd.xlane.f32.xlu0 %v2249
  %v2251 = vpop.xlane.xlu0 %2250
  %v2252 = vsel %vm2185, %v2231, 0.0
  %2253 = vadd.xlane.f32.xlu0 %v2252
  %v2254 = vpop.xlane.xlu0 %2253
  %v2255 = vsel %vm2185, %v2233, 0.0
  %2256 = vadd.xlane.f32.xlu0 %v2255
  %v2257 = vpop.xlane.xlu0 %2256
  %v2258 = vrcp.pop %v2236
  %v2259 = vmul.f32 %v2219, %v2258
  %v2260 = vrcp.pop %v2239
  %v2261 = vmul.f32 %v2221, %v2260
  %v2262 = vrcp.pop %v2242
  %v2263 = vmul.f32 %v2223, %v2262
  %v2264 = vrcp.pop %v2245
  %v2265 = vmul.f32 %v2225, %v2264
  %v2266 = vrcp.pop %v2248
  %v2267 = vmul.f32 %v2227, %v2266
  %v2268 = vrcp.pop %v2251
  %v2269 = vmul.f32 %v2229, %v2268
  %v2270 = vrcp.pop %v2254
  %v2271 = vmul.f32 %v2231, %v2270
  %v2272 = vrcp.pop %v2257
  %v2273 = vmul.f32 %v2233, %v2272
  %v2274 = vmul.f32 %v751, 0.999999
  %v2275 = vmul.f32 %v752, 0.999999
  %v2276 = vmul.f32 %v753, 0.999999
  %v2277 = vmul.f32 %v754, 0.999999
  %v2278 = vmul.f32 %v755, 0.999999
  %v2279 = vmul.f32 %v756, 0.999999
  %v2280 = vmul.f32 %v757, 0.999999
  %v2281 = vmul.f32 %v758, 0.999999
  %v2282 = vadd.f32 %v2274, 1e-06
  %v2283 = vadd.f32 %v2275, 1e-06
  %v2284 = vadd.f32 %v2276, 1e-06
  %v2285 = vadd.f32 %v2277, 1e-06
  %v2286 = vadd.f32 %v2278, 1e-06
  %v2287 = vadd.f32 %v2279, 1e-06
  %v2288 = vadd.f32 %v2280, 1e-06
  %v2289 = vadd.f32 %v2281, 1e-06
  %2290 = vxpose.xlu0.b32.start [1/16] %v2282, 128
  %2291 = vxpose.xlu0.b32.cont [2/16] 0.0, 128
  %2292 = vxpose.xlu0.b32.cont [3/16] 0.0, 128
  %2293 = vxpose.xlu0.b32.cont [4/16] 0.0, 128
  %2294 = vxpose.xlu0.b32.cont [5/16] 0.0, 128
  %2295 = vxpose.xlu0.b32.cont [6/16] 0.0, 128
  %2296 = vxpose.xlu0.b32.cont [7/16] 0.0, 128
  %2297 = vxpose.xlu0.b32.cont [8/16] 0.0, 128
  %2298 = vxpose.xlu0.b32.cont [9/16] 0.0, 128
  %2299 = vxpose.xlu0.b32.cont [10/16] 0.0, 128
  %2300 = vxpose.xlu0.b32.cont [11/16] 0.0, 128
  %2301 = vxpose.xlu0.b32.cont [12/16] 0.0, 128
  %2302 = vxpose.xlu0.b32.cont [13/16] 0.0, 128
  %2303 = vxpose.xlu0.b32.cont [14/16] 0.0, 128
  %2304 = vxpose.xlu0.b32.cont [15/16] 0.0, 128
  %2305 = vxpose.xlu0.b32.end [16/16] 0.0, 128
  %v2306 = vpop.trf.xlu0
  %v2307 = vpop.trf.xlu0
  %v2308 = vpop.trf.xlu0
  %v2309 = vpop.trf.xlu0
  %v2310 = vpop.trf.xlu0
  %v2311 = vpop.trf.xlu0
  %v2312 = vpop.trf.xlu0
  %v2313 = vpop.trf.xlu0
  %v2314 = vpop.trf.xlu0
  %v2315 = vpop.trf.xlu0
  %v2316 = vpop.trf.xlu0
  %v2317 = vpop.trf.xlu0
  %v2318 = vpop.trf.xlu0
  %v2319 = vpop.trf.xlu0
  %v2320 = vpop.trf.xlu0
  %v2321 = vpop.trf.xlu0
  %2322 = vxpose.xlu0.b32.start [1/16] %v2283, 128
  %2323 = vxpose.xlu0.b32.cont [2/16] 0.0, 128
  %2324 = vxpose.xlu0.b32.cont [3/16] 0.0, 128
  %2325 = vxpose.xlu0.b32.cont [4/16] 0.0, 128
  %2326 = vxpose.xlu0.b32.cont [5/16] 0.0, 128
  %2327 = vxpose.xlu0.b32.cont [6/16] 0.0, 128
  %2328 = vxpose.xlu0.b32.cont [7/16] 0.0, 128
  %2329 = vxpose.xlu0.b32.cont [8/16] 0.0, 128
  %2330 = vxpose.xlu0.b32.cont [9/16] 0.0, 128
  %2331 = vxpose.xlu0.b32.cont [10/16] 0.0, 128
  %2332 = vxpose.xlu0.b32.cont [11/16] 0.0, 128
  %2333 = vxpose.xlu0.b32.cont [12/16] 0.0, 128
  %2334 = vxpose.xlu0.b32.cont [13/16] 0.0, 128
  %2335 = vxpose.xlu0.b32.cont [14/16] 0.0, 128
  %2336 = vxpose.xlu0.b32.cont [15/16] 0.0, 128
  %2337 = vxpose.xlu0.b32.end [16/16] 0.0, 128
  %v2338 = vpop.trf.xlu0
  %v2339 = vpop.trf.xlu0
  %v2340 = vpop.trf.xlu0
  %v2341 = vpop.trf.xlu0
  %v2342 = vpop.trf.xlu0
  %v2343 = vpop.trf.xlu0
  %v2344 = vpop.trf.xlu0
  %v2345 = vpop.trf.xlu0
  %v2346 = vpop.trf.xlu0
  %v2347 = vpop.trf.xlu0
  %v2348 = vpop.trf.xlu0
  %v2349 = vpop.trf.xlu0
  %v2350 = vpop.trf.xlu0
  %v2351 = vpop.trf.xlu0
  %v2352 = vpop.trf.xlu0
  %v2353 = vpop.trf.xlu0
  %2354 = vxpose.xlu0.b32.start [1/16] %v2284, 128
  %2355 = vxpose.xlu0.b32.cont [2/16] 0.0, 128
  %2356 = vxpose.xlu0.b32.cont [3/16] 0.0, 128
  %2357 = vxpose.xlu0.b32.cont [4/16] 0.0, 128
  %2358 = vxpose.xlu0.b32.cont [5/16] 0.0, 128
  %2359 = vxpose.xlu0.b32.cont [6/16] 0.0, 128
  %2360 = vxpose.xlu0.b32.cont [7/16] 0.0, 128
  %2361 = vxpose.xlu0.b32.cont [8/16] 0.0, 128
  %2362 = vxpose.xlu0.b32.cont [9/16] 0.0, 128
  %2363 = vxpose.xlu0.b32.cont [10/16] 0.0, 128
  %2364 = vxpose.xlu0.b32.cont [11/16] 0.0, 128
  %2365 = vxpose.xlu0.b32.cont [12/16] 0.0, 128
  %2366 = vxpose.xlu0.b32.cont [13/16] 0.0, 128
  %2367 = vxpose.xlu0.b32.cont [14/16] 0.0, 128
  %2368 = vxpose.xlu0.b32.cont [15/16] 0.0, 128
  %2369 = vxpose.xlu0.b32.end [16/16] 0.0, 128
  %v2370 = vpop.trf.xlu0
  %v2371 = vpop.trf.xlu0
  %v2372 = vpop.trf.xlu0
  %v2373 = vpop.trf.xlu0
  %v2374 = vpop.trf.xlu0
  %v2375 = vpop.trf.xlu0
  %v2376 = vpop.trf.xlu0
  %v2377 = vpop.trf.xlu0
  %v2378 = vpop.trf.xlu0
  %v2379 = vpop.trf.xlu0
  %v2380 = vpop.trf.xlu0
  %v2381 = vpop.trf.xlu0
  %v2382 = vpop.trf.xlu0
  %v2383 = vpop.trf.xlu0
  %v2384 = vpop.trf.xlu0
  %v2385 = vpop.trf.xlu0
  %2386 = vxpose.xlu0.b32.start [1/16] %v2285, 128
  %2387 = vxpose.xlu0.b32.cont [2/16] 0.0, 128
  %2388 = vxpose.xlu0.b32.cont [3/16] 0.0, 128
  %2389 = vxpose.xlu0.b32.cont [4/16] 0.0, 128
  %2390 = vxpose.xlu0.b32.cont [5/16] 0.0, 128
  %2391 = vxpose.xlu0.b32.cont [6/16] 0.0, 128
  %2392 = vxpose.xlu0.b32.cont [7/16] 0.0, 128
  %2393 = vxpose.xlu0.b32.cont [8/16] 0.0, 128
  %2394 = vxpose.xlu0.b32.cont [9/16] 0.0, 128
  %2395 = vxpose.xlu0.b32.cont [10/16] 0.0, 128
  %2396 = vxpose.xlu0.b32.cont [11/16] 0.0, 128
  %2397 = vxpose.xlu0.b32.cont [12/16] 0.0, 128
  %2398 = vxpose.xlu0.b32.cont [13/16] 0.0, 128
  %2399 = vxpose.xlu0.b32.cont [14/16] 0.0, 128
  %2400 = vxpose.xlu0.b32.cont [15/16] 0.0, 128
  %2401 = vxpose.xlu0.b32.end [16/16] 0.0, 128
  %v2402 = vpop.trf.xlu0
  %v2403 = vpop.trf.xlu0
  %v2404 = vpop.trf.xlu0
  %v2405 = vpop.trf.xlu0
  %v2406 = vpop.trf.xlu0
  %v2407 = vpop.trf.xlu0
  %v2408 = vpop.trf.xlu0
  %v2409 = vpop.trf.xlu0
  %v2410 = vpop.trf.xlu0
  %v2411 = vpop.trf.xlu0
  %v2412 = vpop.trf.xlu0
  %v2413 = vpop.trf.xlu0
  %v2414 = vpop.trf.xlu0
  %v2415 = vpop.trf.xlu0
  %v2416 = vpop.trf.xlu0
  %v2417 = vpop.trf.xlu0
  %2418 = vxpose.xlu0.b32.start [1/16] %v2286, 128
  %2419 = vxpose.xlu0.b32.cont [2/16] 0.0, 128
  %2420 = vxpose.xlu0.b32.cont [3/16] 0.0, 128
  %2421 = vxpose.xlu0.b32.cont [4/16] 0.0, 128
  %2422 = vxpose.xlu0.b32.cont [5/16] 0.0, 128
  %2423 = vxpose.xlu0.b32.cont [6/16] 0.0, 128
  %2424 = vxpose.xlu0.b32.cont [7/16] 0.0, 128
  %2425 = vxpose.xlu0.b32.cont [8/16] 0.0, 128
  %2426 = vxpose.xlu0.b32.cont [9/16] 0.0, 128
  %2427 = vxpose.xlu0.b32.cont [10/16] 0.0, 128
  %2428 = vxpose.xlu0.b32.cont [11/16] 0.0, 128
  %2429 = vxpose.xlu0.b32.cont [12/16] 0.0, 128
  %2430 = vxpose.xlu0.b32.cont [13/16] 0.0, 128
  %2431 = vxpose.xlu0.b32.cont [14/16] 0.0, 128
  %2432 = vxpose.xlu0.b32.cont [15/16] 0.0, 128
  %2433 = vxpose.xlu0.b32.end [16/16] 0.0, 128
  %v2434 = vpop.trf.xlu0
  %v2435 = vpop.trf.xlu0
  %v2436 = vpop.trf.xlu0
  %v2437 = vpop.trf.xlu0
  %v2438 = vpop.trf.xlu0
  %v2439 = vpop.trf.xlu0
  %v2440 = vpop.trf.xlu0
  %v2441 = vpop.trf.xlu0
  %v2442 = vpop.trf.xlu0
  %v2443 = vpop.trf.xlu0
  %v2444 = vpop.trf.xlu0
  %v2445 = vpop.trf.xlu0
  %v2446 = vpop.trf.xlu0
  %v2447 = vpop.trf.xlu0
  %v2448 = vpop.trf.xlu0
  %v2449 = vpop.trf.xlu0
  %2450 = vxpose.xlu0.b32.start [1/16] %v2287, 128
  %2451 = vxpose.xlu0.b32.cont [2/16] 0.0, 128
  %2452 = vxpose.xlu0.b32.cont [3/16] 0.0, 128
  %2453 = vxpose.xlu0.b32.cont [4/16] 0.0, 128
  %2454 = vxpose.xlu0.b32.cont [5/16] 0.0, 128
  %2455 = vxpose.xlu0.b32.cont [6/16] 0.0, 128
  %2456 = vxpose.xlu0.b32.cont [7/16] 0.0, 128
  %2457 = vxpose.xlu0.b32.cont [8/16] 0.0, 128
  %2458 = vxpose.xlu0.b32.cont [9/16] 0.0, 128
  %2459 = vxpose.xlu0.b32.cont [10/16] 0.0, 128
  %2460 = vxpose.xlu0.b32.cont [11/16] 0.0, 128
  %2461 = vxpose.xlu0.b32.cont [12/16] 0.0, 128
  %2462 = vxpose.xlu0.b32.cont [13/16] 0.0, 128
  %2463 = vxpose.xlu0.b32.cont [14/16] 0.0, 128
  %2464 = vxpose.xlu0.b32.cont [15/16] 0.0, 128
  %2465 = vxpose.xlu0.b32.end [16/16] 0.0, 128
  %v2466 = vpop.trf.xlu0
  %v2467 = vpop.trf.xlu0
  %v2468 = vpop.trf.xlu0
  %v2469 = vpop.trf.xlu0
  %v2470 = vpop.trf.xlu0
  %v2471 = vpop.trf.xlu0
  %v2472 = vpop.trf.xlu0
  %v2473 = vpop.trf.xlu0
  %v2474 = vpop.trf.xlu0
  %v2475 = vpop.trf.xlu0
  %v2476 = vpop.trf.xlu0
  %v2477 = vpop.trf.xlu0
  %v2478 = vpop.trf.xlu0
  %v2479 = vpop.trf.xlu0
  %v2480 = vpop.trf.xlu0
  %v2481 = vpop.trf.xlu0
  %2482 = vxpose.xlu0.b32.start [1/16] %v2288, 128
  %2483 = vxpose.xlu0.b32.cont [2/16] 0.0, 128
  %2484 = vxpose.xlu0.b32.cont [3/16] 0.0, 128
  %2485 = vxpose.xlu0.b32.cont [4/16] 0.0, 128
  %2486 = vxpose.xlu0.b32.cont [5/16] 0.0, 128
  %2487 = vxpose.xlu0.b32.cont [6/16] 0.0, 128
  %2488 = vxpose.xlu0.b32.cont [7/16] 0.0, 128
  %2489 = vxpose.xlu0.b32.cont [8/16] 0.0, 128
  %2490 = vxpose.xlu0.b32.cont [9/16] 0.0, 128
  %2491 = vxpose.xlu0.b32.cont [10/16] 0.0, 128
  %2492 = vxpose.xlu0.b32.cont [11/16] 0.0, 128
  %2493 = vxpose.xlu0.b32.cont [12/16] 0.0, 128
  %2494 = vxpose.xlu0.b32.cont [13/16] 0.0, 128
  %2495 = vxpose.xlu0.b32.cont [14/16] 0.0, 128
  %2496 = vxpose.xlu0.b32.cont [15/16] 0.0, 128
  %2497 = vxpose.xlu0.b32.end [16/16] 0.0, 128
  %v2498 = vpop.trf.xlu0
  %v2499 = vpop.trf.xlu0
  %v2500 = vpop.trf.xlu0
  %v2501 = vpop.trf.xlu0
  %v2502 = vpop.trf.xlu0
  %v2503 = vpop.trf.xlu0
  %v2504 = vpop.trf.xlu0
  %v2505 = vpop.trf.xlu0
  %v2506 = vpop.trf.xlu0
  %v2507 = vpop.trf.xlu0
  %v2508 = vpop.trf.xlu0
  %v2509 = vpop.trf.xlu0
  %v2510 = vpop.trf.xlu0
  %v2511 = vpop.trf.xlu0
  %v2512 = vpop.trf.xlu0
  %v2513 = vpop.trf.xlu0
  %2514 = vxpose.xlu0.b32.start [1/16] %v2289, 128
  %2515 = vxpose.xlu0.b32.cont [2/16] 0.0, 128
  %2516 = vxpose.xlu0.b32.cont [3/16] 0.0, 128
  %2517 = vxpose.xlu0.b32.cont [4/16] 0.0, 128
  %2518 = vxpose.xlu0.b32.cont [5/16] 0.0, 128
  %2519 = vxpose.xlu0.b32.cont [6/16] 0.0, 128
  %2520 = vxpose.xlu0.b32.cont [7/16] 0.0, 128
  %2521 = vxpose.xlu0.b32.cont [8/16] 0.0, 128
  %2522 = vxpose.xlu0.b32.cont [9/16] 0.0, 128
  %2523 = vxpose.xlu0.b32.cont [10/16] 0.0, 128
  %2524 = vxpose.xlu0.b32.cont [11/16] 0.0, 128
  %2525 = vxpose.xlu0.b32.cont [12/16] 0.0, 128
  %2526 = vxpose.xlu0.b32.cont [13/16] 0.0, 128
  %2527 = vxpose.xlu0.b32.cont [14/16] 0.0, 128
  %2528 = vxpose.xlu0.b32.cont [15/16] 0.0, 128
  %2529 = vxpose.xlu0.b32.end [16/16] 0.0, 128
  %v2530 = vpop.trf.xlu0
  %v2531 = vpop.trf.xlu0
  %v2532 = vpop.trf.xlu0
  %v2533 = vpop.trf.xlu0
  %v2534 = vpop.trf.xlu0
  %v2535 = vpop.trf.xlu0
  %v2536 = vpop.trf.xlu0
  %v2537 = vpop.trf.xlu0
  %v2538 = vpop.trf.xlu0
  %v2539 = vpop.trf.xlu0
  %v2540 = vpop.trf.xlu0
  %v2541 = vpop.trf.xlu0
  %v2542 = vpop.trf.xlu0
  %v2543 = vpop.trf.xlu0
  %v2544 = vpop.trf.xlu0
  %v2545 = vpop.trf.xlu0
  %v2546 = vlaneseq
  %v2547 = vshrl.u32 %v2546, 7
  %v2548 = vadd.s32 %v2547, 8
  %v2549 = vadd.s32 %v2547, 16
  %v2550 = vadd.s32 %v2547, 24
  %v2551 = vlaneseq
  %v2552 = vand.u32 %v2551, 127
  %2554 = vset.pattern.permute.xlu0 0
  %2555 = vperm.xlu0 %2554, %v2306
  %v2556 = vpop.permute.xlu0 %2555
  %2559 = vset.pattern.permute.xlu0 0
  %2560 = vperm.xlu0 %2559, %v2307
  %v2561 = vpop.permute.xlu0 %2560
  %2564 = vset.pattern.permute.xlu0 0
  %2565 = vperm.xlu0 %2564, %v2308
  %v2566 = vpop.permute.xlu0 %2565
  %2569 = vset.pattern.permute.xlu0 0
  %2570 = vperm.xlu0 %2569, %v2309
  %v2571 = vpop.permute.xlu0 %2570
  %2574 = vset.pattern.permute.xlu0 0
  %2575 = vperm.xlu0 %2574, %v2338
  %v2576 = vpop.permute.xlu0 %2575
  %2579 = vset.pattern.permute.xlu0 0
  %2580 = vperm.xlu0 %2579, %v2339
  %v2581 = vpop.permute.xlu0 %2580
  %2584 = vset.pattern.permute.xlu0 0
  %2585 = vperm.xlu0 %2584, %v2340
  %v2586 = vpop.permute.xlu0 %2585
  %2589 = vset.pattern.permute.xlu0 0
  %2590 = vperm.xlu0 %2589, %v2341
  %v2591 = vpop.permute.xlu0 %2590
  %2594 = vset.pattern.permute.xlu0 0
  %2595 = vperm.xlu0 %2594, %v2370
  %v2596 = vpop.permute.xlu0 %2595
  %2599 = vset.pattern.permute.xlu0 0
  %2600 = vperm.xlu0 %2599, %v2371
  %v2601 = vpop.permute.xlu0 %2600
  %2604 = vset.pattern.permute.xlu0 0
  %2605 = vperm.xlu0 %2604, %v2372
  %v2606 = vpop.permute.xlu0 %2605
  %2609 = vset.pattern.permute.xlu0 0
  %2610 = vperm.xlu0 %2609, %v2373
  %v2611 = vpop.permute.xlu0 %2610
  %2614 = vset.pattern.permute.xlu0 0
  %2615 = vperm.xlu0 %2614, %v2402
  %v2616 = vpop.permute.xlu0 %2615
  %2619 = vset.pattern.permute.xlu0 0
  %2620 = vperm.xlu0 %2619, %v2403
  %v2621 = vpop.permute.xlu0 %2620
  %2624 = vset.pattern.permute.xlu0 0
  %2625 = vperm.xlu0 %2624, %v2404
  %v2626 = vpop.permute.xlu0 %2625
  %2629 = vset.pattern.permute.xlu0 0
  %2630 = vperm.xlu0 %2629, %v2405
  %v2631 = vpop.permute.xlu0 %2630
  %2634 = vset.pattern.permute.xlu0 0
  %2635 = vperm.xlu0 %2634, %v2434
  %v2636 = vpop.permute.xlu0 %2635
  %2639 = vset.pattern.permute.xlu0 0
  %2640 = vperm.xlu0 %2639, %v2435
  %v2641 = vpop.permute.xlu0 %2640
  %2644 = vset.pattern.permute.xlu0 0
  %2645 = vperm.xlu0 %2644, %v2436
  %v2646 = vpop.permute.xlu0 %2645
  %2649 = vset.pattern.permute.xlu0 0
  %2650 = vperm.xlu0 %2649, %v2437
  %v2651 = vpop.permute.xlu0 %2650
  %2654 = vset.pattern.permute.xlu0 0
  %2655 = vperm.xlu0 %2654, %v2466
  %v2656 = vpop.permute.xlu0 %2655
  %2659 = vset.pattern.permute.xlu0 0
  %2660 = vperm.xlu0 %2659, %v2467
  %v2661 = vpop.permute.xlu0 %2660
  %2664 = vset.pattern.permute.xlu0 0
  %2665 = vperm.xlu0 %2664, %v2468
  %v2666 = vpop.permute.xlu0 %2665
  %2669 = vset.pattern.permute.xlu0 0
  %2670 = vperm.xlu0 %2669, %v2469
  %v2671 = vpop.permute.xlu0 %2670
  %2674 = vset.pattern.permute.xlu0 0
  %2675 = vperm.xlu0 %2674, %v2498
  %v2676 = vpop.permute.xlu0 %2675
  %2679 = vset.pattern.permute.xlu0 0
  %2680 = vperm.xlu0 %2679, %v2499
  %v2681 = vpop.permute.xlu0 %2680
  %2684 = vset.pattern.permute.xlu0 0
  %2685 = vperm.xlu0 %2684, %v2500
  %v2686 = vpop.permute.xlu0 %2685
  %2689 = vset.pattern.permute.xlu0 0
  %2690 = vperm.xlu0 %2689, %v2501
  %v2691 = vpop.permute.xlu0 %2690
  %2694 = vset.pattern.permute.xlu0 0
  %2695 = vperm.xlu0 %2694, %v2530
  %v2696 = vpop.permute.xlu0 %2695
  %2699 = vset.pattern.permute.xlu0 0
  %2700 = vperm.xlu0 %2699, %v2531
  %v2701 = vpop.permute.xlu0 %2700
  %2704 = vset.pattern.permute.xlu0 0
  %2705 = vperm.xlu0 %2704, %v2532
  %v2706 = vpop.permute.xlu0 %2705
  %2709 = vset.pattern.permute.xlu0 0
  %2710 = vperm.xlu0 %2709, %v2533
  %v2711 = vpop.permute.xlu0 %2710
  %v2713 = vlaneseq
  %v2714 = vshrl.u32 %v2713, 7
  %v2715 = vsub.s32 0, %v2714
  %v2716 = vrot.slane %v2282, %v2715
  %v2717 = vlaneseq
  %v2718 = vshrl.u32 %v2717, 7
  %v2719 = vsub.s32 0, %v2718
  %v2720 = vrot.slane %v2283, %v2719
  %v2721 = vlaneseq
  %v2722 = vshrl.u32 %v2721, 7
  %v2723 = vsub.s32 0, %v2722
  %v2724 = vrot.slane %v2284, %v2723
  %v2725 = vlaneseq
  %v2726 = vshrl.u32 %v2725, 7
  %v2727 = vsub.s32 0, %v2726
  %v2728 = vrot.slane %v2285, %v2727
  %v2729 = vlaneseq
  %v2730 = vshrl.u32 %v2729, 7
  %v2731 = vsub.s32 0, %v2730
  %v2732 = vrot.slane %v2286, %v2731
  %v2733 = vlaneseq
  %v2734 = vshrl.u32 %v2733, 7
  %v2735 = vsub.s32 0, %v2734
  %v2736 = vrot.slane %v2287, %v2735
  %v2737 = vlaneseq
  %v2738 = vshrl.u32 %v2737, 7
  %v2739 = vsub.s32 0, %v2738
  %v2740 = vrot.slane %v2288, %v2739
  %v2741 = vlaneseq
  %v2742 = vshrl.u32 %v2741, 7
  %v2743 = vsub.s32 0, %v2742
  %v2744 = vrot.slane %v2289, %v2743
  %vm2745 = vcmp.lt.f32.partialorder %v2556, %v2716
  %vm2746 = vcmp.lt.f32.partialorder %v2561, %v2716
  %vm2747 = vcmp.lt.f32.partialorder %v2566, %v2716
  %vm2748 = vcmp.lt.f32.partialorder %v2571, %v2716
  %vm2749 = vcmp.lt.f32.partialorder %v2576, %v2720
  %vm2750 = vcmp.lt.f32.partialorder %v2581, %v2720
  %vm2751 = vcmp.lt.f32.partialorder %v2586, %v2720
  %vm2752 = vcmp.lt.f32.partialorder %v2591, %v2720
  %vm2753 = vcmp.lt.f32.partialorder %v2596, %v2724
  %vm2754 = vcmp.lt.f32.partialorder %v2601, %v2724
  %vm2755 = vcmp.lt.f32.partialorder %v2606, %v2724
  %vm2756 = vcmp.lt.f32.partialorder %v2611, %v2724
  %vm2757 = vcmp.lt.f32.partialorder %v2616, %v2728
  %vm2758 = vcmp.lt.f32.partialorder %v2621, %v2728
  %vm2759 = vcmp.lt.f32.partialorder %v2626, %v2728
  %vm2760 = vcmp.lt.f32.partialorder %v2631, %v2728
  %vm2761 = vcmp.lt.f32.partialorder %v2636, %v2732
  %vm2762 = vcmp.lt.f32.partialorder %v2641, %v2732
  %vm2763 = vcmp.lt.f32.partialorder %v2646, %v2732
  %vm2764 = vcmp.lt.f32.partialorder %v2651, %v2732
  %vm2765 = vcmp.lt.f32.partialorder %v2656, %v2736
  %vm2766 = vcmp.lt.f32.partialorder %v2661, %v2736
  %vm2767 = vcmp.lt.f32.partialorder %v2666, %v2736
  %vm2768 = vcmp.lt.f32.partialorder %v2671, %v2736
  %vm2769 = vcmp.lt.f32.partialorder %v2676, %v2740
  %vm2770 = vcmp.lt.f32.partialorder %v2681, %v2740
  %vm2771 = vcmp.lt.f32.partialorder %v2686, %v2740
  %vm2772 = vcmp.lt.f32.partialorder %v2691, %v2740
  %vm2773 = vcmp.lt.f32.partialorder %v2696, %v2744
  %vm2774 = vcmp.lt.f32.partialorder %v2701, %v2744
  %vm2775 = vcmp.lt.f32.partialorder %v2706, %v2744
  %vm2776 = vcmp.lt.f32.partialorder %v2711, %v2744
  %vm2777 = vcmp.eq.f32.partialorder %v2556, %v2716
  %vm2778 = vcmp.eq.f32.partialorder %v2561, %v2716
  %vm2779 = vcmp.eq.f32.partialorder %v2566, %v2716
  %vm2780 = vcmp.eq.f32.partialorder %v2571, %v2716
  %vm2781 = vcmp.eq.f32.partialorder %v2576, %v2720
  %vm2782 = vcmp.eq.f32.partialorder %v2581, %v2720
  %vm2783 = vcmp.eq.f32.partialorder %v2586, %v2720
  %vm2784 = vcmp.eq.f32.partialorder %v2591, %v2720
  %vm2785 = vcmp.eq.f32.partialorder %v2596, %v2724
  %vm2786 = vcmp.eq.f32.partialorder %v2601, %v2724
  %vm2787 = vcmp.eq.f32.partialorder %v2606, %v2724
  %vm2788 = vcmp.eq.f32.partialorder %v2611, %v2724
  %vm2789 = vcmp.eq.f32.partialorder %v2616, %v2728
  %vm2790 = vcmp.eq.f32.partialorder %v2621, %v2728
  %vm2791 = vcmp.eq.f32.partialorder %v2626, %v2728
  %vm2792 = vcmp.eq.f32.partialorder %v2631, %v2728
  %vm2793 = vcmp.eq.f32.partialorder %v2636, %v2732
  %vm2794 = vcmp.eq.f32.partialorder %v2641, %v2732
  %vm2795 = vcmp.eq.f32.partialorder %v2646, %v2732
  %vm2796 = vcmp.eq.f32.partialorder %v2651, %v2732
  %vm2797 = vcmp.eq.f32.partialorder %v2656, %v2736
  %vm2798 = vcmp.eq.f32.partialorder %v2661, %v2736
  %vm2799 = vcmp.eq.f32.partialorder %v2666, %v2736
  %vm2800 = vcmp.eq.f32.partialorder %v2671, %v2736
  %vm2801 = vcmp.eq.f32.partialorder %v2676, %v2740
  %vm2802 = vcmp.eq.f32.partialorder %v2681, %v2740
  %vm2803 = vcmp.eq.f32.partialorder %v2686, %v2740
  %vm2804 = vcmp.eq.f32.partialorder %v2691, %v2740
  %vm2805 = vcmp.eq.f32.partialorder %v2696, %v2744
  %vm2806 = vcmp.eq.f32.partialorder %v2701, %v2744
  %vm2807 = vcmp.eq.f32.partialorder %v2706, %v2744
  %vm2808 = vcmp.eq.f32.partialorder %v2711, %v2744
  %vm2809 = vcmp.lt.s32.totalorder %v2547, %v2552
  %vm2810 = vcmp.lt.s32.totalorder %v2548, %v2552
  %vm2811 = vcmp.lt.s32.totalorder %v2549, %v2552
  %vm2812 = vcmp.lt.s32.totalorder %v2550, %v2552
  %v2813 = vsel %vm2809, 1, 0
  %v2814 = vsel %vm2810, 1, 0
  %v2815 = vsel %vm2811, 1, 0
  %v2816 = vsel %vm2812, 1, 0
  %vm2817 = vcmp.eq.s32.totalorder %v2813, 1
  %vm2818 = vcmp.eq.s32.totalorder %v2814, 1
  %vm2819 = vcmp.eq.s32.totalorder %v2815, 1
  %vm2820 = vcmp.eq.s32.totalorder %v2816, 1
  %vm2821 = vmand %vm2777, %vm2817
  %vm2822 = vmand %vm2778, %vm2818
  %vm2823 = vmand %vm2779, %vm2819
  %vm2824 = vmand %vm2780, %vm2820
  %vm2825 = vmand %vm2781, %vm2817
  %vm2826 = vmand %vm2782, %vm2818
  %vm2827 = vmand %vm2783, %vm2819
  %vm2828 = vmand %vm2784, %vm2820
  %vm2829 = vmand %vm2785, %vm2817
  %vm2830 = vmand %vm2786, %vm2818
  %vm2831 = vmand %vm2787, %vm2819
  %vm2832 = vmand %vm2788, %vm2820
  %vm2833 = vmand %vm2789, %vm2817
  %vm2834 = vmand %vm2790, %vm2818
  %vm2835 = vmand %vm2791, %vm2819
  %vm2836 = vmand %vm2792, %vm2820
  %vm2837 = vmand %vm2793, %vm2817
  %vm2838 = vmand %vm2794, %vm2818
  %vm2839 = vmand %vm2795, %vm2819
  %vm2840 = vmand %vm2796, %vm2820
  %vm2841 = vmand %vm2797, %vm2817
  %vm2842 = vmand %vm2798, %vm2818
  %vm2843 = vmand %vm2799, %vm2819
  %vm2844 = vmand %vm2800, %vm2820
  %vm2845 = vmand %vm2801, %vm2817
  %vm2846 = vmand %vm2802, %vm2818
  %vm2847 = vmand %vm2803, %vm2819
  %vm2848 = vmand %vm2804, %vm2820
  %vm2849 = vmand %vm2805, %vm2817
  %vm2850 = vmand %vm2806, %vm2818
  %vm2851 = vmand %vm2807, %vm2819
  %vm2852 = vmand %vm2808, %vm2820
  %vm2853 = vmor %vm2745, %vm2821
  %vm2854 = vmor %vm2746, %vm2822
  %vm2855 = vmor %vm2747, %vm2823
  %vm2856 = vmor %vm2748, %vm2824
  %vm2857 = vmor %vm2749, %vm2825
  %vm2858 = vmor %vm2750, %vm2826
  %vm2859 = vmor %vm2751, %vm2827
  %vm2860 = vmor %vm2752, %vm2828
  %vm2861 = vmor %vm2753, %vm2829
  %vm2862 = vmor %vm2754, %vm2830
  %vm2863 = vmor %vm2755, %vm2831
  %vm2864 = vmor %vm2756, %vm2832
  %vm2865 = vmor %vm2757, %vm2833
  %vm2866 = vmor %vm2758, %vm2834
  %vm2867 = vmor %vm2759, %vm2835
  %vm2868 = vmor %vm2760, %vm2836
  %vm2869 = vmor %vm2761, %vm2837
  %vm2870 = vmor %vm2762, %vm2838
  %vm2871 = vmor %vm2763, %vm2839
  %vm2872 = vmor %vm2764, %vm2840
  %vm2873 = vmor %vm2765, %vm2841
  %vm2874 = vmor %vm2766, %vm2842
  %vm2875 = vmor %vm2767, %vm2843
  %vm2876 = vmor %vm2768, %vm2844
  %vm2877 = vmor %vm2769, %vm2845
  %vm2878 = vmor %vm2770, %vm2846
  %vm2879 = vmor %vm2771, %vm2847
  %vm2880 = vmor %vm2772, %vm2848
  %vm2881 = vmor %vm2773, %vm2849
  %vm2882 = vmor %vm2774, %vm2850
  %vm2883 = vmor %vm2775, %vm2851
  %vm2884 = vmor %vm2776, %vm2852
  %v2885 = vsel %vm2853, 1, 0
  %v2886 = vsel %vm2854, 1, 0
  %v2887 = vsel %vm2855, 1, 0
  %v2888 = vsel %vm2856, 1, 0
  %v2889 = vsel %vm2857, 1, 0
  %v2890 = vsel %vm2858, 1, 0
  %v2891 = vsel %vm2859, 1, 0
  %v2892 = vsel %vm2860, 1, 0
  %v2893 = vsel %vm2861, 1, 0
  %v2894 = vsel %vm2862, 1, 0
  %v2895 = vsel %vm2863, 1, 0
  %v2896 = vsel %vm2864, 1, 0
  %v2897 = vsel %vm2865, 1, 0
  %v2898 = vsel %vm2866, 1, 0
  %v2899 = vsel %vm2867, 1, 0
  %v2900 = vsel %vm2868, 1, 0
  %v2901 = vsel %vm2869, 1, 0
  %v2902 = vsel %vm2870, 1, 0
  %v2903 = vsel %vm2871, 1, 0
  %v2904 = vsel %vm2872, 1, 0
  %v2905 = vsel %vm2873, 1, 0
  %v2906 = vsel %vm2874, 1, 0
  %v2907 = vsel %vm2875, 1, 0
  %v2908 = vsel %vm2876, 1, 0
  %v2909 = vsel %vm2877, 1, 0
  %v2910 = vsel %vm2878, 1, 0
  %v2911 = vsel %vm2879, 1, 0
  %v2912 = vsel %vm2880, 1, 0
  %v2913 = vsel %vm2881, 1, 0
  %v2914 = vsel %vm2882, 1, 0
  %v2915 = vsel %vm2883, 1, 0
  %v2916 = vsel %vm2884, 1, 0
  %v2917 = vcvt.s32.f32 %v2885
  %v2918 = vcvt.s32.f32 %v2886
  %v2919 = vcvt.s32.f32 %v2887
  %v2920 = vcvt.s32.f32 %v2888
  %v2921 = vcvt.s32.f32 %v2889
  %v2922 = vcvt.s32.f32 %v2890
  %v2923 = vcvt.s32.f32 %v2891
  %v2924 = vcvt.s32.f32 %v2892
  %v2925 = vcvt.s32.f32 %v2893
  %v2926 = vcvt.s32.f32 %v2894
  %v2927 = vcvt.s32.f32 %v2895
  %v2928 = vcvt.s32.f32 %v2896
  %v2929 = vcvt.s32.f32 %v2897
  %v2930 = vcvt.s32.f32 %v2898
  %v2931 = vcvt.s32.f32 %v2899
  %v2932 = vcvt.s32.f32 %v2900
  %v2933 = vcvt.s32.f32 %v2901
  %v2934 = vcvt.s32.f32 %v2902
  %v2935 = vcvt.s32.f32 %v2903
  %v2936 = vcvt.s32.f32 %v2904
  %v2937 = vcvt.s32.f32 %v2905
  %v2938 = vcvt.s32.f32 %v2906
  %v2939 = vcvt.s32.f32 %v2907
  %v2940 = vcvt.s32.f32 %v2908
  %v2941 = vcvt.s32.f32 %v2909
  %v2942 = vcvt.s32.f32 %v2910
  %v2943 = vcvt.s32.f32 %v2911
  %v2944 = vcvt.s32.f32 %v2912
  %v2945 = vcvt.s32.f32 %v2913
  %v2946 = vcvt.s32.f32 %v2914
  %v2947 = vcvt.s32.f32 %v2915
  %v2948 = vcvt.s32.f32 %v2916
  %v2949 = vlog2.pop %v2282
  %v2950 = vmul.f32 %v2949, 0.6931472
  %v2951 = vlog2.pop %v2283
  %v2952 = vmul.f32 %v2951, 0.6931472
  %v2953 = vlog2.pop %v2284
  %v2954 = vmul.f32 %v2953, 0.6931472
  %v2955 = vlog2.pop %v2285
  %v2956 = vmul.f32 %v2955, 0.6931472
  %v2957 = vlog2.pop %v2286
  %v2958 = vmul.f32 %v2957, 0.6931472
  %v2959 = vlog2.pop %v2287
  %v2960 = vmul.f32 %v2959, 0.6931472
  %v2961 = vlog2.pop %v2288
  %v2962 = vmul.f32 %v2961, 0.6931472
  %v2963 = vlog2.pop %v2289
  %v2964 = vmul.f32 %v2963, 0.6931472
  %v2966 = vsel %vm34, %v2950, 0
  %2968 = vmatprep.subr.mxu0 0.0
  %2969 = vmatpush1.msra.mxu0 %v2917
  %2970 = vmatprep.subr.mxu0 0.0
  %2971 = vmatpush1.msra.mxu0 %v2918
  %2972 = vmatprep.subr.mxu0 0.0
  %2973 = vmatpush1.msra.mxu0 %v2919
  %2974 = vmatprep.subr.mxu0 0.0
  %2975 = vmatpush1.msra.mxu0 %v2920
  %2976 = vmatprep.subr.mxu0 0.0
  %2977 = vmatpush1.msra.mxu0 0.0
  %2978 = vmatprep.subr.mxu0 0.0
  %2979 = vmatpush1.msra.mxu0 0.0
  %2980 = vmatprep.subr.mxu0 0.0
  %2981 = vmatpush1.msra.mxu0 0.0
  %2982 = vmatprep.subr.mxu0 0.0
  %2983 = vmatpush1.msra.mxu0 0.0
  %2984 = vmatprep.subr.mxu0 0.0
  %2985 = vmatpush1.msra.mxu0 0.0
  %2986 = vmatprep.subr.mxu0 0.0
  %2987 = vmatpush1.msra.mxu0 0.0
  %2988 = vmatprep.subr.mxu0 0.0
  %2989 = vmatpush1.msra.mxu0 0.0
  %2990 = vmatprep.subr.mxu0 0.0
  %2991 = vmatpush1.msra.mxu0 0.0
  %2992 = vmatprep.subr.mxu0 0.0
  %2993 = vmatpush1.msra.mxu0 0.0
  %2994 = vmatprep.subr.mxu0 0.0
  %2995 = vmatpush1.msra.mxu0 0.0
  %2996 = vmatprep.subr.mxu0 0.0
  %2997 = vmatpush1.msra.mxu0 0.0
  %2998 = vmatprep.subr.mxu0 0.0
  %2999 = vmatpush1.msra.mxu0 0.0
  %3000 = vmatprep.subr.mxu0 0.0
  %3001 = vmatpush1.msra.mxu0 0.0
  %3002 = vmatprep.subr.mxu0 0.0
  %3003 = vmatpush1.msra.mxu0 0.0
  %3004 = vmatprep.subr.mxu0 0.0
  %3005 = vmatpush1.msra.mxu0 0.0
  %3006 = vmatprep.subr.mxu0 0.0
  %3007 = vmatpush1.msra.mxu0 0.0
  %3008 = vmatprep.subr.mxu0 0.0
  %3009 = vmatpush1.msra.mxu0 0.0
  %3010 = vmatprep.subr.mxu0 0.0
  %3011 = vmatpush1.msra.mxu0 0.0
  %3012 = vmatprep.subr.mxu0 0.0
  %3013 = vmatpush1.msra.mxu0 0.0
  %3014 = vmatprep.subr.mxu0 0.0
  %3015 = vmatpush1.msra.mxu0 0.0
  %3016 = vmatprep.subr.mxu0 0.0
  %3017 = vmatpush1.msra.mxu0 0.0
  %3018 = vmatprep.subr.mxu0 0.0
  %3019 = vmatpush1.msra.mxu0 0.0
  %3020 = vmatprep.subr.mxu0 0.0
  %3021 = vmatpush1.msra.mxu0 0.0
  %3022 = vmatprep.subr.mxu0 0.0
  %3023 = vmatpush1.msra.mxu0 0.0
  %3024 = vmatprep.subr.mxu0 0.0
  %3025 = vmatpush1.msra.mxu0 0.0
  %3026 = vmatprep.subr.mxu0 0.0
  %3027 = vmatpush1.msra.mxu0 0.0
  %3028 = vmatprep.subr.mxu0 0.0
  %3029 = vmatpush1.msra.mxu0 0.0
  %3030 = vmatprep.subr.mxu0 0.0
  %3031 = vmatpush1.msra.mxu0 0.0
  %3032 = vmatprep.mubr.f32.mxu0 0.0
  %3033 = vmatmul.mubr.f32.gmra.mrb[0].mxu0 %v2966
  %v3034 = vpop.f32.mrb[0].mxu0
  %v3035 = vadd.f32 0.0, %v3034
  %v3036 = vpop.f32.mrb[0].mxu0
  %3037 = vdwg.mxu0
  %v3039 = vsel %vm34, %v2952, 0
  %3041 = vmatprep.subr.mxu0 0.0
  %3042 = vmatpush1.msra.mxu0 %v2921
  %3043 = vmatprep.subr.mxu0 0.0
  %3044 = vmatpush1.msra.mxu0 %v2922
  %3045 = vmatprep.subr.mxu0 0.0
  %3046 = vmatpush1.msra.mxu0 %v2923
  %3047 = vmatprep.subr.mxu0 0.0
  %3048 = vmatpush1.msra.mxu0 %v2924
  %3049 = vmatprep.subr.mxu0 0.0
  %3050 = vmatpush1.msra.mxu0 0.0
  %3051 = vmatprep.subr.mxu0 0.0
  %3052 = vmatpush1.msra.mxu0 0.0
  %3053 = vmatprep.subr.mxu0 0.0
  %3054 = vmatpush1.msra.mxu0 0.0
  %3055 = vmatprep.subr.mxu0 0.0
  %3056 = vmatpush1.msra.mxu0 0.0
  %3057 = vmatprep.subr.mxu0 0.0
  %3058 = vmatpush1.msra.mxu0 0.0
  %3059 = vmatprep.subr.mxu0 0.0
  %3060 = vmatpush1.msra.mxu0 0.0
  %3061 = vmatprep.subr.mxu0 0.0
  %3062 = vmatpush1.msra.mxu0 0.0
  %3063 = vmatprep.subr.mxu0 0.0
  %3064 = vmatpush1.msra.mxu0 0.0
  %3065 = vmatprep.subr.mxu0 0.0
  %3066 = vmatpush1.msra.mxu0 0.0
  %3067 = vmatprep.subr.mxu0 0.0
  %3068 = vmatpush1.msra.mxu0 0.0
  %3069 = vmatprep.subr.mxu0 0.0
  %3070 = vmatpush1.msra.mxu0 0.0
  %3071 = vmatprep.subr.mxu0 0.0
  %3072 = vmatpush1.msra.mxu0 0.0
  %3073 = vmatprep.subr.mxu0 0.0
  %3074 = vmatpush1.msra.mxu0 0.0
  %3075 = vmatprep.subr.mxu0 0.0
  %3076 = vmatpush1.msra.mxu0 0.0
  %3077 = vmatprep.subr.mxu0 0.0
  %3078 = vmatpush1.msra.mxu0 0.0
  %3079 = vmatprep.subr.mxu0 0.0
  %3080 = vmatpush1.msra.mxu0 0.0
  %3081 = vmatprep.subr.mxu0 0.0
  %3082 = vmatpush1.msra.mxu0 0.0
  %3083 = vmatprep.subr.mxu0 0.0
  %3084 = vmatpush1.msra.mxu0 0.0
  %3085 = vmatprep.subr.mxu0 0.0
  %3086 = vmatpush1.msra.mxu0 0.0
  %3087 = vmatprep.subr.mxu0 0.0
  %3088 = vmatpush1.msra.mxu0 0.0
  %3089 = vmatprep.subr.mxu0 0.0
  %3090 = vmatpush1.msra.mxu0 0.0
  %3091 = vmatprep.subr.mxu0 0.0
  %3092 = vmatpush1.msra.mxu0 0.0
  %3093 = vmatprep.subr.mxu0 0.0
  %3094 = vmatpush1.msra.mxu0 0.0
  %3095 = vmatprep.subr.mxu0 0.0
  %3096 = vmatpush1.msra.mxu0 0.0
  %3097 = vmatprep.subr.mxu0 0.0
  %3098 = vmatpush1.msra.mxu0 0.0
  %3099 = vmatprep.subr.mxu0 0.0
  %3100 = vmatpush1.msra.mxu0 0.0
  %3101 = vmatprep.subr.mxu0 0.0
  %3102 = vmatpush1.msra.mxu0 0.0
  %3103 = vmatprep.subr.mxu0 0.0
  %3104 = vmatpush1.msra.mxu0 0.0
  %3105 = vmatprep.mubr.f32.mxu0 0.0
  %3106 = vmatmul.mubr.f32.gmra.mrb[0].mxu0 %v3039
  %v3107 = vpop.f32.mrb[0].mxu0
  %v3108 = vadd.f32 0.0, %v3107
  %v3109 = vpop.f32.mrb[0].mxu0
  %3110 = vdwg.mxu0
  %v3112 = vsel %vm34, %v2954, 0
  %3114 = vmatprep.subr.mxu0 0.0
  %3115 = vmatpush1.msra.mxu0 %v2925
  %3116 = vmatprep.subr.mxu0 0.0
  %3117 = vmatpush1.msra.mxu0 %v2926
  %3118 = vmatprep.subr.mxu0 0.0
  %3119 = vmatpush1.msra.mxu0 %v2927
  %3120 = vmatprep.subr.mxu0 0.0
  %3121 = vmatpush1.msra.mxu0 %v2928
  %3122 = vmatprep.subr.mxu0 0.0
  %3123 = vmatpush1.msra.mxu0 0.0
  %3124 = vmatprep.subr.mxu0 0.0
  %3125 = vmatpush1.msra.mxu0 0.0
  %3126 = vmatprep.subr.mxu0 0.0
  %3127 = vmatpush1.msra.mxu0 0.0
  %3128 = vmatprep.subr.mxu0 0.0
  %3129 = vmatpush1.msra.mxu0 0.0
  %3130 = vmatprep.subr.mxu0 0.0
  %3131 = vmatpush1.msra.mxu0 0.0
  %3132 = vmatprep.subr.mxu0 0.0
  %3133 = vmatpush1.msra.mxu0 0.0
  %3134 = vmatprep.subr.mxu0 0.0
  %3135 = vmatpush1.msra.mxu0 0.0
  %3136 = vmatprep.subr.mxu0 0.0
  %3137 = vmatpush1.msra.mxu0 0.0
  %3138 = vmatprep.subr.mxu0 0.0
  %3139 = vmatpush1.msra.mxu0 0.0
  %3140 = vmatprep.subr.mxu0 0.0
  %3141 = vmatpush1.msra.mxu0 0.0
  %3142 = vmatprep.subr.mxu0 0.0
  %3143 = vmatpush1.msra.mxu0 0.0
  %3144 = vmatprep.subr.mxu0 0.0
  %3145 = vmatpush1.msra.mxu0 0.0
  %3146 = vmatprep.subr.mxu0 0.0
  %3147 = vmatpush1.msra.mxu0 0.0
  %3148 = vmatprep.subr.mxu0 0.0
  %3149 = vmatpush1.msra.mxu0 0.0
  %3150 = vmatprep.subr.mxu0 0.0
  %3151 = vmatpush1.msra.mxu0 0.0
  %3152 = vmatprep.subr.mxu0 0.0
  %3153 = vmatpush1.msra.mxu0 0.0
  %3154 = vmatprep.subr.mxu0 0.0
  %3155 = vmatpush1.msra.mxu0 0.0
  %3156 = vmatprep.subr.mxu0 0.0
  %3157 = vmatpush1.msra.mxu0 0.0
  %3158 = vmatprep.subr.mxu0 0.0
  %3159 = vmatpush1.msra.mxu0 0.0
  %3160 = vmatprep.subr.mxu0 0.0
  %3161 = vmatpush1.msra.mxu0 0.0
  %3162 = vmatprep.subr.mxu0 0.0
  %3163 = vmatpush1.msra.mxu0 0.0
  %3164 = vmatprep.subr.mxu0 0.0
  %3165 = vmatpush1.msra.mxu0 0.0
  %3166 = vmatprep.subr.mxu0 0.0
  %3167 = vmatpush1.msra.mxu0 0.0
  %3168 = vmatprep.subr.mxu0 0.0
  %3169 = vmatpush1.msra.mxu0 0.0
  %3170 = vmatprep.subr.mxu0 0.0
  %3171 = vmatpush1.msra.mxu0 0.0
  %3172 = vmatprep.subr.mxu0 0.0
  %3173 = vmatpush1.msra.mxu0 0.0
  %3174 = vmatprep.subr.mxu0 0.0
  %3175 = vmatpush1.msra.mxu0 0.0
  %3176 = vmatprep.subr.mxu0 0.0
  %3177 = vmatpush1.msra.mxu0 0.0
  %3178 = vmatprep.mubr.f32.mxu0 0.0
  %3179 = vmatmul.mubr.f32.gmra.mrb[0].mxu0 %v3112
  %v3180 = vpop.f32.mrb[0].mxu0
  %v3181 = vadd.f32 0.0, %v3180
  %v3182 = vpop.f32.mrb[0].mxu0
  %3183 = vdwg.mxu0
  %v3185 = vsel %vm34, %v2956, 0
  %3187 = vmatprep.subr.mxu0 0.0
  %3188 = vmatpush1.msra.mxu0 %v2929
  %3189 = vmatprep.subr.mxu0 0.0
  %3190 = vmatpush1.msra.mxu0 %v2930
  %3191 = vmatprep.subr.mxu0 0.0
  %3192 = vmatpush1.msra.mxu0 %v2931
  %3193 = vmatprep.subr.mxu0 0.0
  %3194 = vmatpush1.msra.mxu0 %v2932
  %3195 = vmatprep.subr.mxu0 0.0
  %3196 = vmatpush1.msra.mxu0 0.0
  %3197 = vmatprep.subr.mxu0 0.0
  %3198 = vmatpush1.msra.mxu0 0.0
  %3199 = vmatprep.subr.mxu0 0.0
  %3200 = vmatpush1.msra.mxu0 0.0
  %3201 = vmatprep.subr.mxu0 0.0
  %3202 = vmatpush1.msra.mxu0 0.0
  %3203 = vmatprep.subr.mxu0 0.0
  %3204 = vmatpush1.msra.mxu0 0.0
  %3205 = vmatprep.subr.mxu0 0.0
  %3206 = vmatpush1.msra.mxu0 0.0
  %3207 = vmatprep.subr.mxu0 0.0
  %3208 = vmatpush1.msra.mxu0 0.0
  %3209 = vmatprep.subr.mxu0 0.0
  %3210 = vmatpush1.msra.mxu0 0.0
  %3211 = vmatprep.subr.mxu0 0.0
  %3212 = vmatpush1.msra.mxu0 0.0
  %3213 = vmatprep.subr.mxu0 0.0
  %3214 = vmatpush1.msra.mxu0 0.0
  %3215 = vmatprep.subr.mxu0 0.0
  %3216 = vmatpush1.msra.mxu0 0.0
  %3217 = vmatprep.subr.mxu0 0.0
  %3218 = vmatpush1.msra.mxu0 0.0
  %3219 = vmatprep.subr.mxu0 0.0
  %3220 = vmatpush1.msra.mxu0 0.0
  %3221 = vmatprep.subr.mxu0 0.0
  %3222 = vmatpush1.msra.mxu0 0.0
  %3223 = vmatprep.subr.mxu0 0.0
  %3224 = vmatpush1.msra.mxu0 0.0
  %3225 = vmatprep.subr.mxu0 0.0
  %3226 = vmatpush1.msra.mxu0 0.0
  %3227 = vmatprep.subr.mxu0 0.0
  %3228 = vmatpush1.msra.mxu0 0.0
  %3229 = vmatprep.subr.mxu0 0.0
  %3230 = vmatpush1.msra.mxu0 0.0
  %3231 = vmatprep.subr.mxu0 0.0
  %3232 = vmatpush1.msra.mxu0 0.0
  %3233 = vmatprep.subr.mxu0 0.0
  %3234 = vmatpush1.msra.mxu0 0.0
  %3235 = vmatprep.subr.mxu0 0.0
  %3236 = vmatpush1.msra.mxu0 0.0
  %3237 = vmatprep.subr.mxu0 0.0
  %3238 = vmatpush1.msra.mxu0 0.0
  %3239 = vmatprep.subr.mxu0 0.0
  %3240 = vmatpush1.msra.mxu0 0.0
  %3241 = vmatprep.subr.mxu0 0.0
  %3242 = vmatpush1.msra.mxu0 0.0
  %3243 = vmatprep.subr.mxu0 0.0
  %3244 = vmatpush1.msra.mxu0 0.0
  %3245 = vmatprep.subr.mxu0 0.0
  %3246 = vmatpush1.msra.mxu0 0.0
  %3247 = vmatprep.subr.mxu0 0.0
  %3248 = vmatpush1.msra.mxu0 0.0
  %3249 = vmatprep.subr.mxu0 0.0
  %3250 = vmatpush1.msra.mxu0 0.0
  %3251 = vmatprep.mubr.f32.mxu0 0.0
  %3252 = vmatmul.mubr.f32.gmra.mrb[0].mxu0 %v3185
  %v3253 = vpop.f32.mrb[0].mxu0
  %v3254 = vadd.f32 0.0, %v3253
  %v3255 = vpop.f32.mrb[0].mxu0
  %3256 = vdwg.mxu0
  %v3258 = vsel %vm34, %v2958, 0
  %3260 = vmatprep.subr.mxu0 0.0
  %3261 = vmatpush1.msra.mxu0 %v2933
  %3262 = vmatprep.subr.mxu0 0.0
  %3263 = vmatpush1.msra.mxu0 %v2934
  %3264 = vmatprep.subr.mxu0 0.0
  %3265 = vmatpush1.msra.mxu0 %v2935
  %3266 = vmatprep.subr.mxu0 0.0
  %3267 = vmatpush1.msra.mxu0 %v2936
  %3268 = vmatprep.subr.mxu0 0.0
  %3269 = vmatpush1.msra.mxu0 0.0
  %3270 = vmatprep.subr.mxu0 0.0
  %3271 = vmatpush1.msra.mxu0 0.0
  %3272 = vmatprep.subr.mxu0 0.0
  %3273 = vmatpush1.msra.mxu0 0.0
  %3274 = vmatprep.subr.mxu0 0.0
  %3275 = vmatpush1.msra.mxu0 0.0
  %3276 = vmatprep.subr.mxu0 0.0
  %3277 = vmatpush1.msra.mxu0 0.0
  %3278 = vmatprep.subr.mxu0 0.0
  %3279 = vmatpush1.msra.mxu0 0.0
  %3280 = vmatprep.subr.mxu0 0.0
  %3281 = vmatpush1.msra.mxu0 0.0
  %3282 = vmatprep.subr.mxu0 0.0
  %3283 = vmatpush1.msra.mxu0 0.0
  %3284 = vmatprep.subr.mxu0 0.0
  %3285 = vmatpush1.msra.mxu0 0.0
  %3286 = vmatprep.subr.mxu0 0.0
  %3287 = vmatpush1.msra.mxu0 0.0
  %3288 = vmatprep.subr.mxu0 0.0
  %3289 = vmatpush1.msra.mxu0 0.0
  %3290 = vmatprep.subr.mxu0 0.0
  %3291 = vmatpush1.msra.mxu0 0.0
  %3292 = vmatprep.subr.mxu0 0.0
  %3293 = vmatpush1.msra.mxu0 0.0
  %3294 = vmatprep.subr.mxu0 0.0
  %3295 = vmatpush1.msra.mxu0 0.0
  %3296 = vmatprep.subr.mxu0 0.0
  %3297 = vmatpush1.msra.mxu0 0.0
  %3298 = vmatprep.subr.mxu0 0.0
  %3299 = vmatpush1.msra.mxu0 0.0
  %3300 = vmatprep.subr.mxu0 0.0
  %3301 = vmatpush1.msra.mxu0 0.0
  %3302 = vmatprep.subr.mxu0 0.0
  %3303 = vmatpush1.msra.mxu0 0.0
  %3304 = vmatprep.subr.mxu0 0.0
  %3305 = vmatpush1.msra.mxu0 0.0
  %3306 = vmatprep.subr.mxu0 0.0
  %3307 = vmatpush1.msra.mxu0 0.0
  %3308 = vmatprep.subr.mxu0 0.0
  %3309 = vmatpush1.msra.mxu0 0.0
  %3310 = vmatprep.subr.mxu0 0.0
  %3311 = vmatpush1.msra.mxu0 0.0
  %3312 = vmatprep.subr.mxu0 0.0
  %3313 = vmatpush1.msra.mxu0 0.0
  %3314 = vmatprep.subr.mxu0 0.0
  %3315 = vmatpush1.msra.mxu0 0.0
  %3316 = vmatprep.subr.mxu0 0.0
  %3317 = vmatpush1.msra.mxu0 0.0
  %3318 = vmatprep.subr.mxu0 0.0
  %3319 = vmatpush1.msra.mxu0 0.0
  %3320 = vmatprep.subr.mxu0 0.0
  %3321 = vmatpush1.msra.mxu0 0.0
  %3322 = vmatprep.subr.mxu0 0.0
  %3323 = vmatpush1.msra.mxu0 0.0
  %3324 = vmatprep.mubr.f32.mxu0 0.0
  %3325 = vmatmul.mubr.f32.gmra.mrb[0].mxu0 %v3258
  %v3326 = vpop.f32.mrb[0].mxu0
  %v3327 = vadd.f32 0.0, %v3326
  %v3328 = vpop.f32.mrb[0].mxu0
  %3329 = vdwg.mxu0
  %v3331 = vsel %vm34, %v2960, 0
  %3333 = vmatprep.subr.mxu0 0.0
  %3334 = vmatpush1.msra.mxu0 %v2937
  %3335 = vmatprep.subr.mxu0 0.0
  %3336 = vmatpush1.msra.mxu0 %v2938
  %3337 = vmatprep.subr.mxu0 0.0
  %3338 = vmatpush1.msra.mxu0 %v2939
  %3339 = vmatprep.subr.mxu0 0.0
  %3340 = vmatpush1.msra.mxu0 %v2940
  %3341 = vmatprep.subr.mxu0 0.0
  %3342 = vmatpush1.msra.mxu0 0.0
  %3343 = vmatprep.subr.mxu0 0.0
  %3344 = vmatpush1.msra.mxu0 0.0
  %3345 = vmatprep.subr.mxu0 0.0
  %3346 = vmatpush1.msra.mxu0 0.0
  %3347 = vmatprep.subr.mxu0 0.0
  %3348 = vmatpush1.msra.mxu0 0.0
  %3349 = vmatprep.subr.mxu0 0.0
  %3350 = vmatpush1.msra.mxu0 0.0
  %3351 = vmatprep.subr.mxu0 0.0
  %3352 = vmatpush1.msra.mxu0 0.0
  %3353 = vmatprep.subr.mxu0 0.0
  %3354 = vmatpush1.msra.mxu0 0.0
  %3355 = vmatprep.subr.mxu0 0.0
  %3356 = vmatpush1.msra.mxu0 0.0
  %3357 = vmatprep.subr.mxu0 0.0
  %3358 = vmatpush1.msra.mxu0 0.0
  %3359 = vmatprep.subr.mxu0 0.0
  %3360 = vmatpush1.msra.mxu0 0.0
  %3361 = vmatprep.subr.mxu0 0.0
  %3362 = vmatpush1.msra.mxu0 0.0
  %3363 = vmatprep.subr.mxu0 0.0
  %3364 = vmatpush1.msra.mxu0 0.0
  %3365 = vmatprep.subr.mxu0 0.0
  %3366 = vmatpush1.msra.mxu0 0.0
  %3367 = vmatprep.subr.mxu0 0.0
  %3368 = vmatpush1.msra.mxu0 0.0
  %3369 = vmatprep.subr.mxu0 0.0
  %3370 = vmatpush1.msra.mxu0 0.0
  %3371 = vmatprep.subr.mxu0 0.0
  %3372 = vmatpush1.msra.mxu0 0.0
  %3373 = vmatprep.subr.mxu0 0.0
  %3374 = vmatpush1.msra.mxu0 0.0
  %3375 = vmatprep.subr.mxu0 0.0
  %3376 = vmatpush1.msra.mxu0 0.0
  %3377 = vmatprep.subr.mxu0 0.0
  %3378 = vmatpush1.msra.mxu0 0.0
  %3379 = vmatprep.subr.mxu0 0.0
  %3380 = vmatpush1.msra.mxu0 0.0
  %3381 = vmatprep.subr.mxu0 0.0
  %3382 = vmatpush1.msra.mxu0 0.0
  %3383 = vmatprep.subr.mxu0 0.0
  %3384 = vmatpush1.msra.mxu0 0.0
  %3385 = vmatprep.subr.mxu0 0.0
  %3386 = vmatpush1.msra.mxu0 0.0
  %3387 = vmatprep.subr.mxu0 0.0
  %3388 = vmatpush1.msra.mxu0 0.0
  %3389 = vmatprep.subr.mxu0 0.0
  %3390 = vmatpush1.msra.mxu0 0.0
  %3391 = vmatprep.subr.mxu0 0.0
  %3392 = vmatpush1.msra.mxu0 0.0
  %3393 = vmatprep.subr.mxu0 0.0
  %3394 = vmatpush1.msra.mxu0 0.0
  %3395 = vmatprep.subr.mxu0 0.0
  %3396 = vmatpush1.msra.mxu0 0.0
  %3397 = vmatprep.mubr.f32.mxu0 0.0
  %3398 = vmatmul.mubr.f32.gmra.mrb[0].mxu0 %v3331
  %v3399 = vpop.f32.mrb[0].mxu0
  %v3400 = vadd.f32 0.0, %v3399
  %v3401 = vpop.f32.mrb[0].mxu0
  %3402 = vdwg.mxu0
  %v3404 = vsel %vm34, %v2962, 0
  %3406 = vmatprep.subr.mxu0 0.0
  %3407 = vmatpush1.msra.mxu0 %v2941
  %3408 = vmatprep.subr.mxu0 0.0
  %3409 = vmatpush1.msra.mxu0 %v2942
  %3410 = vmatprep.subr.mxu0 0.0
  %3411 = vmatpush1.msra.mxu0 %v2943
  %3412 = vmatprep.subr.mxu0 0.0
  %3413 = vmatpush1.msra.mxu0 %v2944
  %3414 = vmatprep.subr.mxu0 0.0
  %3415 = vmatpush1.msra.mxu0 0.0
  %3416 = vmatprep.subr.mxu0 0.0
  %3417 = vmatpush1.msra.mxu0 0.0
  %3418 = vmatprep.subr.mxu0 0.0
  %3419 = vmatpush1.msra.mxu0 0.0
  %3420 = vmatprep.subr.mxu0 0.0
  %3421 = vmatpush1.msra.mxu0 0.0
  %3422 = vmatprep.subr.mxu0 0.0
  %3423 = vmatpush1.msra.mxu0 0.0
  %3424 = vmatprep.subr.mxu0 0.0
  %3425 = vmatpush1.msra.mxu0 0.0
  %3426 = vmatprep.subr.mxu0 0.0
  %3427 = vmatpush1.msra.mxu0 0.0
  %3428 = vmatprep.subr.mxu0 0.0
  %3429 = vmatpush1.msra.mxu0 0.0
  %3430 = vmatprep.subr.mxu0 0.0
  %3431 = vmatpush1.msra.mxu0 0.0
  %3432 = vmatprep.subr.mxu0 0.0
  %3433 = vmatpush1.msra.mxu0 0.0
  %3434 = vmatprep.subr.mxu0 0.0
  %3435 = vmatpush1.msra.mxu0 0.0
  %3436 = vmatprep.subr.mxu0 0.0
  %3437 = vmatpush1.msra.mxu0 0.0
  %3438 = vmatprep.subr.mxu0 0.0
  %3439 = vmatpush1.msra.mxu0 0.0
  %3440 = vmatprep.subr.mxu0 0.0
  %3441 = vmatpush1.msra.mxu0 0.0
  %3442 = vmatprep.subr.mxu0 0.0
  %3443 = vmatpush1.msra.mxu0 0.0
  %3444 = vmatprep.subr.mxu0 0.0
  %3445 = vmatpush1.msra.mxu0 0.0
  %3446 = vmatprep.subr.mxu0 0.0
  %3447 = vmatpush1.msra.mxu0 0.0
  %3448 = vmatprep.subr.mxu0 0.0
  %3449 = vmatpush1.msra.mxu0 0.0
  %3450 = vmatprep.subr.mxu0 0.0
  %3451 = vmatpush1.msra.mxu0 0.0
  %3452 = vmatprep.subr.mxu0 0.0
  %3453 = vmatpush1.msra.mxu0 0.0
  %3454 = vmatprep.subr.mxu0 0.0
  %3455 = vmatpush1.msra.mxu0 0.0
  %3456 = vmatprep.subr.mxu0 0.0
  %3457 = vmatpush1.msra.mxu0 0.0
  %3458 = vmatprep.subr.mxu0 0.0
  %3459 = vmatpush1.msra.mxu0 0.0
  %3460 = vmatprep.subr.mxu0 0.0
  %3461 = vmatpush1.msra.mxu0 0.0
  %3462 = vmatprep.subr.mxu0 0.0
  %3463 = vmatpush1.msra.mxu0 0.0
  %3464 = vmatprep.subr.mxu0 0.0
  %3465 = vmatpush1.msra.mxu0 0.0
  %3466 = vmatprep.subr.mxu0 0.0
  %3467 = vmatpush1.msra.mxu0 0.0
  %3468 = vmatprep.subr.mxu0 0.0
  %3469 = vmatpush1.msra.mxu0 0.0
  %3470 = vmatprep.mubr.f32.mxu0 0.0
  %3471 = vmatmul.mubr.f32.gmra.mrb[0].mxu0 %v3404
  %v3472 = vpop.f32.mrb[0].mxu0
  %v3473 = vadd.f32 0.0, %v3472
  %v3474 = vpop.f32.mrb[0].mxu0
  %3475 = vdwg.mxu0
  %v3477 = vsel %vm34, %v2964, 0
  %3479 = vmatprep.subr.mxu0 0.0
  %3480 = vmatpush1.msra.mxu0 %v2945
  %3481 = vmatprep.subr.mxu0 0.0
  %3482 = vmatpush1.msra.mxu0 %v2946
  %3483 = vmatprep.subr.mxu0 0.0
  %3484 = vmatpush1.msra.mxu0 %v2947
  %3485 = vmatprep.subr.mxu0 0.0
  %3486 = vmatpush1.msra.mxu0 %v2948
  %3487 = vmatprep.subr.mxu0 0.0
  %3488 = vmatpush1.msra.mxu0 0.0
  %3489 = vmatprep.subr.mxu0 0.0
  %3490 = vmatpush1.msra.mxu0 0.0
  %3491 = vmatprep.subr.mxu0 0.0
  %3492 = vmatpush1.msra.mxu0 0.0
  %3493 = vmatprep.subr.mxu0 0.0
  %3494 = vmatpush1.msra.mxu0 0.0
  %3495 = vmatprep.subr.mxu0 0.0
  %3496 = vmatpush1.msra.mxu0 0.0
  %3497 = vmatprep.subr.mxu0 0.0
  %3498 = vmatpush1.msra.mxu0 0.0
  %3499 = vmatprep.subr.mxu0 0.0
  %3500 = vmatpush1.msra.mxu0 0.0
  %3501 = vmatprep.subr.mxu0 0.0
  %3502 = vmatpush1.msra.mxu0 0.0
  %3503 = vmatprep.subr.mxu0 0.0
  %3504 = vmatpush1.msra.mxu0 0.0
  %3505 = vmatprep.subr.mxu0 0.0
  %3506 = vmatpush1.msra.mxu0 0.0
  %3507 = vmatprep.subr.mxu0 0.0
  %3508 = vmatpush1.msra.mxu0 0.0
  %3509 = vmatprep.subr.mxu0 0.0
  %3510 = vmatpush1.msra.mxu0 0.0
  %3511 = vmatprep.subr.mxu0 0.0
  %3512 = vmatpush1.msra.mxu0 0.0
  %3513 = vmatprep.subr.mxu0 0.0
  %3514 = vmatpush1.msra.mxu0 0.0
  %3515 = vmatprep.subr.mxu0 0.0
  %3516 = vmatpush1.msra.mxu0 0.0
  %3517 = vmatprep.subr.mxu0 0.0
  %3518 = vmatpush1.msra.mxu0 0.0
  %3519 = vmatprep.subr.mxu0 0.0
  %3520 = vmatpush1.msra.mxu0 0.0
  %3521 = vmatprep.subr.mxu0 0.0
  %3522 = vmatpush1.msra.mxu0 0.0
  %3523 = vmatprep.subr.mxu0 0.0
  %3524 = vmatpush1.msra.mxu0 0.0
  %3525 = vmatprep.subr.mxu0 0.0
  %3526 = vmatpush1.msra.mxu0 0.0
  %3527 = vmatprep.subr.mxu0 0.0
  %3528 = vmatpush1.msra.mxu0 0.0
  %3529 = vmatprep.subr.mxu0 0.0
  %3530 = vmatpush1.msra.mxu0 0.0
  %3531 = vmatprep.subr.mxu0 0.0
  %3532 = vmatpush1.msra.mxu0 0.0
  %3533 = vmatprep.subr.mxu0 0.0
  %3534 = vmatpush1.msra.mxu0 0.0
  %3535 = vmatprep.subr.mxu0 0.0
  %3536 = vmatpush1.msra.mxu0 0.0
  %3537 = vmatprep.subr.mxu0 0.0
  %3538 = vmatpush1.msra.mxu0 0.0
  %3539 = vmatprep.subr.mxu0 0.0
  %3540 = vmatpush1.msra.mxu0 0.0
  %3541 = vmatprep.subr.mxu0 0.0
  %3542 = vmatpush1.msra.mxu0 0.0
  %3543 = vmatprep.mubr.f32.mxu0 0.0
  %3544 = vmatmul.mubr.f32.gmra.mrb[0].mxu0 %v3477
  %v3545 = vpop.f32.mrb[0].mxu0
  %v3546 = vadd.f32 0.0, %v3545
  %v3547 = vpop.f32.mrb[0].mxu0
  %3548 = vdwg.mxu0
  %v3549 = vsub.f32 1.0, %v2282
  %v3550 = vsub.f32 1.0, %v2283
  %v3551 = vsub.f32 1.0, %v2284
  %v3552 = vsub.f32 1.0, %v2285
  %v3553 = vsub.f32 1.0, %v2286
  %v3554 = vsub.f32 1.0, %v2287
  %v3555 = vsub.f32 1.0, %v2288
  %v3556 = vsub.f32 1.0, %v2289
  %v3557 = vmul.f32 %v3035, 1.442695
  %v3558 = vpow.pop %v3557
  %v3559 = vmul.f32 %v3108, 1.442695
  %v3560 = vpow.pop %v3559
  %v3561 = vmul.f32 %v3181, 1.442695
  %v3562 = vpow.pop %v3561
  %v3563 = vmul.f32 %v3254, 1.442695
  %v3564 = vpow.pop %v3563
  %v3565 = vmul.f32 %v3327, 1.442695
  %v3566 = vpow.pop %v3565
  %v3567 = vmul.f32 %v3400, 1.442695
  %v3568 = vpow.pop %v3567
  %v3569 = vmul.f32 %v3473, 1.442695
  %v3570 = vpow.pop %v3569
  %v3571 = vmul.f32 %v3546, 1.442695
  %v3572 = vpow.pop %v3571
  %v3573 = vmul.f32 %v3549, %v3558
  %v3574 = vmul.f32 %v3550, %v3560
  %v3575 = vmul.f32 %v3551, %v3562
  %v3576 = vmul.f32 %v3552, %v3564
  %v3577 = vmul.f32 %v3553, %v3566
  %v3578 = vmul.f32 %v3554, %v3568
  %v3579 = vmul.f32 %v3555, %v3570
  %v3580 = vmul.f32 %v3556, %v3572
  %v3589 = vrot.slane %v623, 1
  %v3590 = vrot.slane %v624, 1
  %v3591 = vrot.slane %v625, 1
  %v3592 = vrot.slane %v626, 1
  %v3593 = vrot.slane %v627, 1
  %v3594 = vrot.slane %v628, 1
  %v3595 = vrot.slane %v629, 1
  %v3596 = vrot.slane %v630, 1
  %v3605 = vadd.f32 %v623, %v3589
  %v3606 = vadd.f32 %v624, %v3590
  %v3607 = vadd.f32 %v625, %v3591
  %v3608 = vadd.f32 %v626, %v3592
  %v3609 = vadd.f32 %v627, %v3593
  %v3610 = vadd.f32 %v628, %v3594
  %v3611 = vadd.f32 %v629, %v3595
  %v3612 = vadd.f32 %v630, %v3596
  %v3621 = vrot.slane %v3605, 2
  %v3622 = vrot.slane %v3606, 2
  %v3623 = vrot.slane %v3607, 2
  %v3624 = vrot.slane %v3608, 2
  %v3625 = vrot.slane %v3609, 2
  %v3626 = vrot.slane %v3610, 2
  %v3627 = vrot.slane %v3611, 2
  %v3628 = vrot.slane %v3612, 2
  %v3637 = vadd.f32 %v3605, %v3621
  %v3638 = vadd.f32 %v3606, %v3622
  %v3639 = vadd.f32 %v3607, %v3623
  %v3640 = vadd.f32 %v3608, %v3624
  %v3641 = vadd.f32 %v3609, %v3625
  %v3642 = vadd.f32 %v3610, %v3626
  %v3643 = vadd.f32 %v3611, %v3627
  %v3644 = vadd.f32 %v3612, %v3628
  %v3645 = vmul.f32 %v3637, 0.25
  %v3646 = vmul.f32 %v3638, 0.25
  %v3647 = vmul.f32 %v3639, 0.25
  %v3648 = vmul.f32 %v3640, 0.25
  %v3649 = vmul.f32 %v3641, 0.25
  %v3650 = vmul.f32 %v3642, 0.25
  %v3651 = vmul.f32 %v3643, 0.25
  %v3652 = vmul.f32 %v3644, 0.25
  %3653 = vset.pattern.permute.xlu0 121
  %3654 = vperm.xlu0 %3653, %v565
  %v3655 = vpop.permute.xlu0 %3654
  %v3657 = vlaneseq
  %v3658 = vshrl.u32 %v3657, 7
  %v3659 = vsub.s32 0, %v3658
  %v3660 = vrot.slane %v3655, %v3659
  %3661 = vset.pattern.permute.xlu0 121
  %3662 = vperm.xlu0 %3661, %v579
  %v3663 = vpop.permute.xlu0 %3662
  %v3665 = vlaneseq
  %v3666 = vshrl.u32 %v3665, 7
  %v3667 = vsub.s32 0, %v3666
  %v3668 = vrot.slane %v3663, %v3667
  %3669 = vset.pattern.permute.xlu0 121
  %3670 = vperm.xlu0 %3669, %v587
  %v3671 = vpop.permute.xlu0 %3670
  %v3673 = vlaneseq
  %v3674 = vshrl.u32 %v3673, 7
  %v3675 = vsub.s32 0, %v3674
  %v3676 = vrot.slane %v3671, %v3675
  %3677 = vset.pattern.permute.xlu0 121
  %3678 = vperm.xlu0 %3677, %v589
  %v3679 = vpop.permute.xlu0 %3678
  %v3681 = vlaneseq
  %v3682 = vshrl.u32 %v3681, 7
  %v3683 = vsub.s32 0, %v3682
  %v3684 = vrot.slane %v3679, %v3683
  %3685 = vset.pattern.permute.xlu0 121
  %3686 = vperm.xlu0 %3685, %v572
  %v3687 = vpop.permute.xlu0 %3686
  %v3689 = vlaneseq
  %v3690 = vshrl.u32 %v3689, 7
  %v3691 = vsub.s32 0, %v3690
  %v3692 = vrot.slane %v3687, %v3691
  %3693 = vset.pattern.permute.xlu0 121
  %3694 = vperm.xlu0 %3693, %v586
  %v3695 = vpop.permute.xlu0 %3694
  %v3697 = vlaneseq
  %v3698 = vshrl.u32 %v3697, 7
  %v3699 = vsub.s32 0, %v3698
  %v3700 = vrot.slane %v3695, %v3699
  %3701 = vset.pattern.permute.xlu0 121
  %3702 = vperm.xlu0 %3701, %v588
  %v3703 = vpop.permute.xlu0 %3702
  %v3705 = vlaneseq
  %v3706 = vshrl.u32 %v3705, 7
  %v3707 = vsub.s32 0, %v3706
  %v3708 = vrot.slane %v3703, %v3707
  %3709 = vset.pattern.permute.xlu0 121
  %3710 = vperm.xlu0 %3709, %v590
  %v3711 = vpop.permute.xlu0 %3710
  %v3713 = vlaneseq
  %v3714 = vshrl.u32 %v3713, 7
  %v3715 = vsub.s32 0, %v3714
  %v3716 = vrot.slane %v3711, %v3715
  %v3717 = vmul.f32 %v3660, %v3645
  %v3718 = vmul.f32 %v3668, %v3646
  %v3719 = vmul.f32 %v3676, %v3647
  %v3720 = vmul.f32 %v3684, %v3648
  %v3721 = vmul.f32 %v3692, %v3649
  %v3722 = vmul.f32 %v3700, %v3650
  %v3723 = vmul.f32 %v3708, %v3651
  %v3724 = vmul.f32 %v3716, %v3652
  %3725 = vset.pattern.permute.xlu0 122
  %3726 = vperm.xlu0 %3725, %v565
  %v3727 = vpop.permute.xlu0 %3726
  %v3729 = vlaneseq
  %v3730 = vshrl.u32 %v3729, 7
  %v3731 = vsub.s32 0, %v3730
  %v3732 = vrot.slane %v3727, %v3731
  %3733 = vset.pattern.permute.xlu0 122
  %3734 = vperm.xlu0 %3733, %v579
  %v3735 = vpop.permute.xlu0 %3734
  %v3737 = vlaneseq
  %v3738 = vshrl.u32 %v3737, 7
  %v3739 = vsub.s32 0, %v3738
  %v3740 = vrot.slane %v3735, %v3739
  %3741 = vset.pattern.permute.xlu0 122
  %3742 = vperm.xlu0 %3741, %v587
  %v3743 = vpop.permute.xlu0 %3742
  %v3745 = vlaneseq
  %v3746 = vshrl.u32 %v3745, 7
  %v3747 = vsub.s32 0, %v3746
  %v3748 = vrot.slane %v3743, %v3747
  %3749 = vset.pattern.permute.xlu0 122
  %3750 = vperm.xlu0 %3749, %v589
  %v3751 = vpop.permute.xlu0 %3750
  %v3753 = vlaneseq
  %v3754 = vshrl.u32 %v3753, 7
  %v3755 = vsub.s32 0, %v3754
  %v3756 = vrot.slane %v3751, %v3755
  %3757 = vset.pattern.permute.xlu0 122
  %3758 = vperm.xlu0 %3757, %v572
  %v3759 = vpop.permute.xlu0 %3758
  %v3761 = vlaneseq
  %v3762 = vshrl.u32 %v3761, 7
  %v3763 = vsub.s32 0, %v3762
  %v3764 = vrot.slane %v3759, %v3763
  %3765 = vset.pattern.permute.xlu0 122
  %3766 = vperm.xlu0 %3765, %v586
  %v3767 = vpop.permute.xlu0 %3766
  %v3769 = vlaneseq
  %v3770 = vshrl.u32 %v3769, 7
  %v3771 = vsub.s32 0, %v3770
  %v3772 = vrot.slane %v3767, %v3771
  %3773 = vset.pattern.permute.xlu0 122
  %3774 = vperm.xlu0 %3773, %v588
  %v3775 = vpop.permute.xlu0 %3774
  %v3777 = vlaneseq
  %v3778 = vshrl.u32 %v3777, 7
  %v3779 = vsub.s32 0, %v3778
  %v3780 = vrot.slane %v3775, %v3779
  %3781 = vset.pattern.permute.xlu0 122
  %3782 = vperm.xlu0 %3781, %v590
  %v3783 = vpop.permute.xlu0 %3782
  %v3785 = vlaneseq
  %v3786 = vshrl.u32 %v3785, 7
  %v3787 = vsub.s32 0, %v3786
  %v3788 = vrot.slane %v3783, %v3787
  %v3789 = vmul.f32 %v3732, %v3573
  %v3790 = vmul.f32 %v3740, %v3574
  %v3791 = vmul.f32 %v3748, %v3575
  %v3792 = vmul.f32 %v3756, %v3576
  %v3793 = vmul.f32 %v3764, %v3577
  %v3794 = vmul.f32 %v3772, %v3578
  %v3795 = vmul.f32 %v3780, %v3579
  %v3796 = vmul.f32 %v3788, %v3580
  %v3797 = vadd.f32 %v3717, %v3789
  %v3798 = vadd.f32 %v3718, %v3790
  %v3799 = vadd.f32 %v3719, %v3791
  %v3800 = vadd.f32 %v3720, %v3792
  %v3801 = vadd.f32 %v3721, %v3793
  %v3802 = vadd.f32 %v3722, %v3794
  %v3803 = vadd.f32 %v3723, %v3795
  %v3804 = vadd.f32 %v3724, %v3796
  %3805 = vset.pattern.permute.xlu0 123
  %3806 = vperm.xlu0 %3805, %v565
  %v3807 = vpop.permute.xlu0 %3806
  %v3809 = vlaneseq
  %v3810 = vshrl.u32 %v3809, 7
  %v3811 = vsub.s32 0, %v3810
  %v3812 = vrot.slane %v3807, %v3811
  %3813 = vset.pattern.permute.xlu0 123
  %3814 = vperm.xlu0 %3813, %v579
  %v3815 = vpop.permute.xlu0 %3814
  %v3817 = vlaneseq
  %v3818 = vshrl.u32 %v3817, 7
  %v3819 = vsub.s32 0, %v3818
  %v3820 = vrot.slane %v3815, %v3819
  %3821 = vset.pattern.permute.xlu0 123
  %3822 = vperm.xlu0 %3821, %v587
  %v3823 = vpop.permute.xlu0 %3822
  %v3825 = vlaneseq
  %v3826 = vshrl.u32 %v3825, 7
  %v3827 = vsub.s32 0, %v3826
  %v3828 = vrot.slane %v3823, %v3827
  %3829 = vset.pattern.permute.xlu0 123
  %3830 = vperm.xlu0 %3829, %v589
  %v3831 = vpop.permute.xlu0 %3830
  %v3833 = vlaneseq
  %v3834 = vshrl.u32 %v3833, 7
  %v3835 = vsub.s32 0, %v3834
  %v3836 = vrot.slane %v3831, %v3835
  %3837 = vset.pattern.permute.xlu0 123
  %3838 = vperm.xlu0 %3837, %v572
  %v3839 = vpop.permute.xlu0 %3838
  %v3841 = vlaneseq
  %v3842 = vshrl.u32 %v3841, 7
  %v3843 = vsub.s32 0, %v3842
  %v3844 = vrot.slane %v3839, %v3843
  %3845 = vset.pattern.permute.xlu0 123
  %3846 = vperm.xlu0 %3845, %v586
  %v3847 = vpop.permute.xlu0 %3846
  %v3849 = vlaneseq
  %v3850 = vshrl.u32 %v3849, 7
  %v3851 = vsub.s32 0, %v3850
  %v3852 = vrot.slane %v3847, %v3851
  %3853 = vset.pattern.permute.xlu0 123
  %3854 = vperm.xlu0 %3853, %v588
  %v3855 = vpop.permute.xlu0 %3854
  %v3857 = vlaneseq
  %v3858 = vshrl.u32 %v3857, 7
  %v3859 = vsub.s32 0, %v3858
  %v3860 = vrot.slane %v3855, %v3859
  %3861 = vset.pattern.permute.xlu0 123
  %3862 = vperm.xlu0 %3861, %v590
  %v3863 = vpop.permute.xlu0 %3862
  %v3865 = vlaneseq
  %v3866 = vshrl.u32 %v3865, 7
  %v3867 = vsub.s32 0, %v3866
  %v3868 = vrot.slane %v3863, %v3867
  %v3869 = vmul.f32 %v3812, %v2259
  %v3870 = vmul.f32 %v3820, %v2261
  %v3871 = vmul.f32 %v3828, %v2263
  %v3872 = vmul.f32 %v3836, %v2265
  %v3873 = vmul.f32 %v3844, %v2267
  %v3874 = vmul.f32 %v3852, %v2269
  %v3875 = vmul.f32 %v3860, %v2271
  %v3876 = vmul.f32 %v3868, %v2273
  %v3877 = vadd.f32 %v3797, %v3869
  %v3878 = vadd.f32 %v3798, %v3870
  %v3879 = vadd.f32 %v3799, %v3871
  %v3880 = vadd.f32 %v3800, %v3872
  %v3881 = vadd.f32 %v3801, %v3873
  %v3882 = vadd.f32 %v3802, %v3874
  %v3883 = vadd.f32 %v3803, %v3875
  %v3884 = vadd.f32 %v3804, %v3876
  %3885 = vset.pattern.permute.xlu0 124
  %3886 = vperm.xlu0 %3885, %v434
  %v3887 = vpop.permute.xlu0 %3886
  %v3889 = vlaneseq
  %v3890 = vshrl.u32 %v3889, 7
  %v3891 = vsub.s32 0, %v3890
  %v3892 = vrot.slane %v3887, %v3891
  %3893 = vset.pattern.permute.xlu0 124
  %3894 = vperm.xlu0 %3893, %v448
  %v3895 = vpop.permute.xlu0 %3894
  %v3897 = vlaneseq
  %v3898 = vshrl.u32 %v3897, 7
  %v3899 = vsub.s32 0, %v3898
  %v3900 = vrot.slane %v3895, %v3899
  %3901 = vset.pattern.permute.xlu0 124
  %3902 = vperm.xlu0 %3901, %v456
  %v3903 = vpop.permute.xlu0 %3902
  %v3905 = vlaneseq
  %v3906 = vshrl.u32 %v3905, 7
  %v3907 = vsub.s32 0, %v3906
  %v3908 = vrot.slane %v3903, %v3907
  %3909 = vset.pattern.permute.xlu0 124
  %3910 = vperm.xlu0 %3909, %v458
  %v3911 = vpop.permute.xlu0 %3910
  %v3913 = vlaneseq
  %v3914 = vshrl.u32 %v3913, 7
  %v3915 = vsub.s32 0, %v3914
  %v3916 = vrot.slane %v3911, %v3915
  %3917 = vset.pattern.permute.xlu0 124
  %3918 = vperm.xlu0 %3917, %v441
  %v3919 = vpop.permute.xlu0 %3918
  %v3921 = vlaneseq
  %v3922 = vshrl.u32 %v3921, 7
  %v3923 = vsub.s32 0, %v3922
  %v3924 = vrot.slane %v3919, %v3923
  %3925 = vset.pattern.permute.xlu0 124
  %3926 = vperm.xlu0 %3925, %v455
  %v3927 = vpop.permute.xlu0 %3926
  %v3929 = vlaneseq
  %v3930 = vshrl.u32 %v3929, 7
  %v3931 = vsub.s32 0, %v3930
  %v3932 = vrot.slane %v3927, %v3931
  %3933 = vset.pattern.permute.xlu0 124
  %3934 = vperm.xlu0 %3933, %v457
  %v3935 = vpop.permute.xlu0 %3934
  %v3937 = vlaneseq
  %v3938 = vshrl.u32 %v3937, 7
  %v3939 = vsub.s32 0, %v3938
  %v3940 = vrot.slane %v3935, %v3939
  %3941 = vset.pattern.permute.xlu0 124
  %3942 = vperm.xlu0 %3941, %v459
  %v3943 = vpop.permute.xlu0 %3942
  %v3945 = vlaneseq
  %v3946 = vshrl.u32 %v3945, 7
  %v3947 = vsub.s32 0, %v3946
  %v3948 = vrot.slane %v3943, %v3947
  %v3949 = vmul.f32 %v3892, %v3877
  %v3950 = vmul.f32 %v3900, %v3878
  %v3951 = vmul.f32 %v3908, %v3879
  %v3952 = vmul.f32 %v3916, %v3880
  %v3953 = vmul.f32 %v3924, %v3881
  %v3954 = vmul.f32 %v3932, %v3882
  %v3955 = vmul.f32 %v3940, %v3883
  %v3956 = vmul.f32 %v3948, %v3884
  %3957 = vxpose.xlu0.b32.start [1/16] %v3949, 128
  %3958 = vxpose.xlu0.b32.cont [2/16] 0.0, 128
  %3959 = vxpose.xlu0.b32.cont [3/16] 0.0, 128
  %3960 = vxpose.xlu0.b32.cont [4/16] 0.0, 128
  %3961 = vxpose.xlu0.b32.cont [5/16] 0.0, 128
  %3962 = vxpose.xlu0.b32.cont [6/16] 0.0, 128
  %3963 = vxpose.xlu0.b32.cont [7/16] 0.0, 128
  %3964 = vxpose.xlu0.b32.cont [8/16] 0.0, 128
  %3965 = vxpose.xlu0.b32.cont [9/16] 0.0, 128
  %3966 = vxpose.xlu0.b32.cont [10/16] 0.0, 128
  %3967 = vxpose.xlu0.b32.cont [11/16] 0.0, 128
  %3968 = vxpose.xlu0.b32.cont [12/16] 0.0, 128
  %3969 = vxpose.xlu0.b32.cont [13/16] 0.0, 128
  %3970 = vxpose.xlu0.b32.cont [14/16] 0.0, 128
  %3971 = vxpose.xlu0.b32.cont [15/16] 0.0, 128
  %3972 = vxpose.xlu0.b32.end [16/16] 0.0, 128
  %v3973 = vpop.trf.xlu0
  %v3974 = vpop.trf.xlu0
  %v3975 = vpop.trf.xlu0
  %v3976 = vpop.trf.xlu0
  %v3977 = vpop.trf.xlu0
  %v3978 = vpop.trf.xlu0
  %v3979 = vpop.trf.xlu0
  %v3980 = vpop.trf.xlu0
  %v3981 = vpop.trf.xlu0
  %v3982 = vpop.trf.xlu0
  %v3983 = vpop.trf.xlu0
  %v3984 = vpop.trf.xlu0
  %v3985 = vpop.trf.xlu0
  %v3986 = vpop.trf.xlu0
  %v3987 = vpop.trf.xlu0
  %v3988 = vpop.trf.xlu0
  %3989 = vxpose.xlu0.b32.start [1/16] %v3950, 128
  %3990 = vxpose.xlu0.b32.cont [2/16] 0.0, 128
  %3991 = vxpose.xlu0.b32.cont [3/16] 0.0, 128
  %3992 = vxpose.xlu0.b32.cont [4/16] 0.0, 128
  %3993 = vxpose.xlu0.b32.cont [5/16] 0.0, 128
  %3994 = vxpose.xlu0.b32.cont [6/16] 0.0, 128
  %3995 = vxpose.xlu0.b32.cont [7/16] 0.0, 128
  %3996 = vxpose.xlu0.b32.cont [8/16] 0.0, 128
  %3997 = vxpose.xlu0.b32.cont [9/16] 0.0, 128
  %3998 = vxpose.xlu0.b32.cont [10/16] 0.0, 128
  %3999 = vxpose.xlu0.b32.cont [11/16] 0.0, 128
  %4000 = vxpose.xlu0.b32.cont [12/16] 0.0, 128
  %4001 = vxpose.xlu0.b32.cont [13/16] 0.0, 128
  %4002 = vxpose.xlu0.b32.cont [14/16] 0.0, 128
  %4003 = vxpose.xlu0.b32.cont [15/16] 0.0, 128
  %4004 = vxpose.xlu0.b32.end [16/16] 0.0, 128
  %v4005 = vpop.trf.xlu0
  %v4006 = vpop.trf.xlu0
  %v4007 = vpop.trf.xlu0
  %v4008 = vpop.trf.xlu0
  %v4009 = vpop.trf.xlu0
  %v4010 = vpop.trf.xlu0
  %v4011 = vpop.trf.xlu0
  %v4012 = vpop.trf.xlu0
  %v4013 = vpop.trf.xlu0
  %v4014 = vpop.trf.xlu0
  %v4015 = vpop.trf.xlu0
  %v4016 = vpop.trf.xlu0
  %v4017 = vpop.trf.xlu0
  %v4018 = vpop.trf.xlu0
  %v4019 = vpop.trf.xlu0
  %v4020 = vpop.trf.xlu0
  %4021 = vxpose.xlu0.b32.start [1/16] %v3951, 128
  %4022 = vxpose.xlu0.b32.cont [2/16] 0.0, 128
  %4023 = vxpose.xlu0.b32.cont [3/16] 0.0, 128
  %4024 = vxpose.xlu0.b32.cont [4/16] 0.0, 128
  %4025 = vxpose.xlu0.b32.cont [5/16] 0.0, 128
  %4026 = vxpose.xlu0.b32.cont [6/16] 0.0, 128
  %4027 = vxpose.xlu0.b32.cont [7/16] 0.0, 128
  %4028 = vxpose.xlu0.b32.cont [8/16] 0.0, 128
  %4029 = vxpose.xlu0.b32.cont [9/16] 0.0, 128
  %4030 = vxpose.xlu0.b32.cont [10/16] 0.0, 128
  %4031 = vxpose.xlu0.b32.cont [11/16] 0.0, 128
  %4032 = vxpose.xlu0.b32.cont [12/16] 0.0, 128
  %4033 = vxpose.xlu0.b32.cont [13/16] 0.0, 128
  %4034 = vxpose.xlu0.b32.cont [14/16] 0.0, 128
  %4035 = vxpose.xlu0.b32.cont [15/16] 0.0, 128
  %4036 = vxpose.xlu0.b32.end [16/16] 0.0, 128
  %v4037 = vpop.trf.xlu0
  %v4038 = vpop.trf.xlu0
  %v4039 = vpop.trf.xlu0
  %v4040 = vpop.trf.xlu0
  %v4041 = vpop.trf.xlu0
  %v4042 = vpop.trf.xlu0
  %v4043 = vpop.trf.xlu0
  %v4044 = vpop.trf.xlu0
  %v4045 = vpop.trf.xlu0
  %v4046 = vpop.trf.xlu0
  %v4047 = vpop.trf.xlu0
  %v4048 = vpop.trf.xlu0
  %v4049 = vpop.trf.xlu0
  %v4050 = vpop.trf.xlu0
  %v4051 = vpop.trf.xlu0
  %v4052 = vpop.trf.xlu0
  %4053 = vxpose.xlu0.b32.start [1/16] %v3952, 128
  %4054 = vxpose.xlu0.b32.cont [2/16] 0.0, 128
  %4055 = vxpose.xlu0.b32.cont [3/16] 0.0, 128
  %4056 = vxpose.xlu0.b32.cont [4/16] 0.0, 128
  %4057 = vxpose.xlu0.b32.cont [5/16] 0.0, 128
  %4058 = vxpose.xlu0.b32.cont [6/16] 0.0, 128
  %4059 = vxpose.xlu0.b32.cont [7/16] 0.0, 128
  %4060 = vxpose.xlu0.b32.cont [8/16] 0.0, 128
  %4061 = vxpose.xlu0.b32.cont [9/16] 0.0, 128
  %4062 = vxpose.xlu0.b32.cont [10/16] 0.0, 128
  %4063 = vxpose.xlu0.b32.cont [11/16] 0.0, 128
  %4064 = vxpose.xlu0.b32.cont [12/16] 0.0, 128
  %4065 = vxpose.xlu0.b32.cont [13/16] 0.0, 128
  %4066 = vxpose.xlu0.b32.cont [14/16] 0.0, 128
  %4067 = vxpose.xlu0.b32.cont [15/16] 0.0, 128
  %4068 = vxpose.xlu0.b32.end [16/16] 0.0, 128
  %v4069 = vpop.trf.xlu0
  %v4070 = vpop.trf.xlu0
  %v4071 = vpop.trf.xlu0
  %v4072 = vpop.trf.xlu0
  %v4073 = vpop.trf.xlu0
  %v4074 = vpop.trf.xlu0
  %v4075 = vpop.trf.xlu0
  %v4076 = vpop.trf.xlu0
  %v4077 = vpop.trf.xlu0
  %v4078 = vpop.trf.xlu0
  %v4079 = vpop.trf.xlu0
  %v4080 = vpop.trf.xlu0
  %v4081 = vpop.trf.xlu0
  %v4082 = vpop.trf.xlu0
  %v4083 = vpop.trf.xlu0
  %v4084 = vpop.trf.xlu0
  %4085 = vxpose.xlu0.b32.start [1/16] %v3953, 128
  %4086 = vxpose.xlu0.b32.cont [2/16] 0.0, 128
  %4087 = vxpose.xlu0.b32.cont [3/16] 0.0, 128
  %4088 = vxpose.xlu0.b32.cont [4/16] 0.0, 128
  %4089 = vxpose.xlu0.b32.cont [5/16] 0.0, 128
  %4090 = vxpose.xlu0.b32.cont [6/16] 0.0, 128
  %4091 = vxpose.xlu0.b32.cont [7/16] 0.0, 128
  %4092 = vxpose.xlu0.b32.cont [8/16] 0.0, 128
  %4093 = vxpose.xlu0.b32.cont [9/16] 0.0, 128
  %4094 = vxpose.xlu0.b32.cont [10/16] 0.0, 128
  %4095 = vxpose.xlu0.b32.cont [11/16] 0.0, 128
  %4096 = vxpose.xlu0.b32.cont [12/16] 0.0, 128
  %4097 = vxpose.xlu0.b32.cont [13/16] 0.0, 128
  %4098 = vxpose.xlu0.b32.cont [14/16] 0.0, 128
  %4099 = vxpose.xlu0.b32.cont [15/16] 0.0, 128
  %4100 = vxpose.xlu0.b32.end [16/16] 0.0, 128
  %v4101 = vpop.trf.xlu0
  %v4102 = vpop.trf.xlu0
  %v4103 = vpop.trf.xlu0
  %v4104 = vpop.trf.xlu0
  %v4105 = vpop.trf.xlu0
  %v4106 = vpop.trf.xlu0
  %v4107 = vpop.trf.xlu0
  %v4108 = vpop.trf.xlu0
  %v4109 = vpop.trf.xlu0
  %v4110 = vpop.trf.xlu0
  %v4111 = vpop.trf.xlu0
  %v4112 = vpop.trf.xlu0
  %v4113 = vpop.trf.xlu0
  %v4114 = vpop.trf.xlu0
  %v4115 = vpop.trf.xlu0
  %v4116 = vpop.trf.xlu0
  %4117 = vxpose.xlu0.b32.start [1/16] %v3954, 128
  %4118 = vxpose.xlu0.b32.cont [2/16] 0.0, 128
  %4119 = vxpose.xlu0.b32.cont [3/16] 0.0, 128
  %4120 = vxpose.xlu0.b32.cont [4/16] 0.0, 128
  %4121 = vxpose.xlu0.b32.cont [5/16] 0.0, 128
  %4122 = vxpose.xlu0.b32.cont [6/16] 0.0, 128
  %4123 = vxpose.xlu0.b32.cont [7/16] 0.0, 128
  %4124 = vxpose.xlu0.b32.cont [8/16] 0.0, 128
  %4125 = vxpose.xlu0.b32.cont [9/16] 0.0, 128
  %4126 = vxpose.xlu0.b32.cont [10/16] 0.0, 128
  %4127 = vxpose.xlu0.b32.cont [11/16] 0.0, 128
  %4128 = vxpose.xlu0.b32.cont [12/16] 0.0, 128
  %4129 = vxpose.xlu0.b32.cont [13/16] 0.0, 128
  %4130 = vxpose.xlu0.b32.cont [14/16] 0.0, 128
  %4131 = vxpose.xlu0.b32.cont [15/16] 0.0, 128
  %4132 = vxpose.xlu0.b32.end [16/16] 0.0, 128
  %v4133 = vpop.trf.xlu0
  %v4134 = vpop.trf.xlu0
  %v4135 = vpop.trf.xlu0
  %v4136 = vpop.trf.xlu0
  %v4137 = vpop.trf.xlu0
  %v4138 = vpop.trf.xlu0
  %v4139 = vpop.trf.xlu0
  %v4140 = vpop.trf.xlu0
  %v4141 = vpop.trf.xlu0
  %v4142 = vpop.trf.xlu0
  %v4143 = vpop.trf.xlu0
  %v4144 = vpop.trf.xlu0
  %v4145 = vpop.trf.xlu0
  %v4146 = vpop.trf.xlu0
  %v4147 = vpop.trf.xlu0
  %v4148 = vpop.trf.xlu0
  %4149 = vxpose.xlu0.b32.start [1/16] %v3955, 128
  %4150 = vxpose.xlu0.b32.cont [2/16] 0.0, 128
  %4151 = vxpose.xlu0.b32.cont [3/16] 0.0, 128
  %4152 = vxpose.xlu0.b32.cont [4/16] 0.0, 128
  %4153 = vxpose.xlu0.b32.cont [5/16] 0.0, 128
  %4154 = vxpose.xlu0.b32.cont [6/16] 0.0, 128
  %4155 = vxpose.xlu0.b32.cont [7/16] 0.0, 128
  %4156 = vxpose.xlu0.b32.cont [8/16] 0.0, 128
  %4157 = vxpose.xlu0.b32.cont [9/16] 0.0, 128
  %4158 = vxpose.xlu0.b32.cont [10/16] 0.0, 128
  %4159 = vxpose.xlu0.b32.cont [11/16] 0.0, 128
  %4160 = vxpose.xlu0.b32.cont [12/16] 0.0, 128
  %4161 = vxpose.xlu0.b32.cont [13/16] 0.0, 128
  %4162 = vxpose.xlu0.b32.cont [14/16] 0.0, 128
  %4163 = vxpose.xlu0.b32.cont [15/16] 0.0, 128
  %4164 = vxpose.xlu0.b32.end [16/16] 0.0, 128
  %v4165 = vpop.trf.xlu0
  %v4166 = vpop.trf.xlu0
  %v4167 = vpop.trf.xlu0
  %v4168 = vpop.trf.xlu0
  %v4169 = vpop.trf.xlu0
  %v4170 = vpop.trf.xlu0
  %v4171 = vpop.trf.xlu0
  %v4172 = vpop.trf.xlu0
  %v4173 = vpop.trf.xlu0
  %v4174 = vpop.trf.xlu0
  %v4175 = vpop.trf.xlu0
  %v4176 = vpop.trf.xlu0
  %v4177 = vpop.trf.xlu0
  %v4178 = vpop.trf.xlu0
  %v4179 = vpop.trf.xlu0
  %v4180 = vpop.trf.xlu0
  %4181 = vxpose.xlu0.b32.start [1/16] %v3956, 128
  %4182 = vxpose.xlu0.b32.cont [2/16] 0.0, 128
  %4183 = vxpose.xlu0.b32.cont [3/16] 0.0, 128
  %4184 = vxpose.xlu0.b32.cont [4/16] 0.0, 128
  %4185 = vxpose.xlu0.b32.cont [5/16] 0.0, 128
  %4186 = vxpose.xlu0.b32.cont [6/16] 0.0, 128
  %4187 = vxpose.xlu0.b32.cont [7/16] 0.0, 128
  %4188 = vxpose.xlu0.b32.cont [8/16] 0.0, 128
  %4189 = vxpose.xlu0.b32.cont [9/16] 0.0, 128
  %4190 = vxpose.xlu0.b32.cont [10/16] 0.0, 128
  %4191 = vxpose.xlu0.b32.cont [11/16] 0.0, 128
  %4192 = vxpose.xlu0.b32.cont [12/16] 0.0, 128
  %4193 = vxpose.xlu0.b32.cont [13/16] 0.0, 128
  %4194 = vxpose.xlu0.b32.cont [14/16] 0.0, 128
  %4195 = vxpose.xlu0.b32.cont [15/16] 0.0, 128
  %4196 = vxpose.xlu0.b32.end [16/16] 0.0, 128
  %v4197 = vpop.trf.xlu0
  %v4198 = vpop.trf.xlu0
  %v4199 = vpop.trf.xlu0
  %v4200 = vpop.trf.xlu0
  %v4201 = vpop.trf.xlu0
  %v4202 = vpop.trf.xlu0
  %v4203 = vpop.trf.xlu0
  %v4204 = vpop.trf.xlu0
  %v4205 = vpop.trf.xlu0
  %v4206 = vpop.trf.xlu0
  %v4207 = vpop.trf.xlu0
  %v4208 = vpop.trf.xlu0
  %v4209 = vpop.trf.xlu0
  %v4210 = vpop.trf.xlu0
  %v4211 = vpop.trf.xlu0
  %v4212 = vpop.trf.xlu0
  %4214 = vset.pattern.permute.xlu0 0
  %4215 = vperm.xlu0 %4214, %v3973
  %v4216 = vpop.permute.xlu0 %4215
  %4219 = vset.pattern.permute.xlu0 0
  %4220 = vperm.xlu0 %4219, %v3974
  %v4221 = vpop.permute.xlu0 %4220
  %4224 = vset.pattern.permute.xlu0 0
  %4225 = vperm.xlu0 %4224, %v3975
  %v4226 = vpop.permute.xlu0 %4225
  %4229 = vset.pattern.permute.xlu0 0
  %4230 = vperm.xlu0 %4229, %v3976
  %v4231 = vpop.permute.xlu0 %4230
  %4234 = vset.pattern.permute.xlu0 0
  %4235 = vperm.xlu0 %4234, %v4005
  %v4236 = vpop.permute.xlu0 %4235
  %4239 = vset.pattern.permute.xlu0 0
  %4240 = vperm.xlu0 %4239, %v4006
  %v4241 = vpop.permute.xlu0 %4240
  %4244 = vset.pattern.permute.xlu0 0
  %4245 = vperm.xlu0 %4244, %v4007
  %v4246 = vpop.permute.xlu0 %4245
  %4249 = vset.pattern.permute.xlu0 0
  %4250 = vperm.xlu0 %4249, %v4008
  %v4251 = vpop.permute.xlu0 %4250
  %4254 = vset.pattern.permute.xlu0 0
  %4255 = vperm.xlu0 %4254, %v4037
  %v4256 = vpop.permute.xlu0 %4255
  %4259 = vset.pattern.permute.xlu0 0
  %4260 = vperm.xlu0 %4259, %v4038
  %v4261 = vpop.permute.xlu0 %4260
  %4264 = vset.pattern.permute.xlu0 0
  %4265 = vperm.xlu0 %4264, %v4039
  %v4266 = vpop.permute.xlu0 %4265
  %4269 = vset.pattern.permute.xlu0 0
  %4270 = vperm.xlu0 %4269, %v4040
  %v4271 = vpop.permute.xlu0 %4270
  %4274 = vset.pattern.permute.xlu0 0
  %4275 = vperm.xlu0 %4274, %v4069
  %v4276 = vpop.permute.xlu0 %4275
  %4279 = vset.pattern.permute.xlu0 0
  %4280 = vperm.xlu0 %4279, %v4070
  %v4281 = vpop.permute.xlu0 %4280
  %4284 = vset.pattern.permute.xlu0 0
  %4285 = vperm.xlu0 %4284, %v4071
  %v4286 = vpop.permute.xlu0 %4285
  %4289 = vset.pattern.permute.xlu0 0
  %4290 = vperm.xlu0 %4289, %v4072
  %v4291 = vpop.permute.xlu0 %4290
  %4294 = vset.pattern.permute.xlu0 0
  %4295 = vperm.xlu0 %4294, %v4101
  %v4296 = vpop.permute.xlu0 %4295
  %4299 = vset.pattern.permute.xlu0 0
  %4300 = vperm.xlu0 %4299, %v4102
  %v4301 = vpop.permute.xlu0 %4300
  %4304 = vset.pattern.permute.xlu0 0
  %4305 = vperm.xlu0 %4304, %v4103
  %v4306 = vpop.permute.xlu0 %4305
  %4309 = vset.pattern.permute.xlu0 0
  %4310 = vperm.xlu0 %4309, %v4104
  %v4311 = vpop.permute.xlu0 %4310
  %4314 = vset.pattern.permute.xlu0 0
  %4315 = vperm.xlu0 %4314, %v4133
  %v4316 = vpop.permute.xlu0 %4315
  %4319 = vset.pattern.permute.xlu0 0
  %4320 = vperm.xlu0 %4319, %v4134
  %v4321 = vpop.permute.xlu0 %4320
  %4324 = vset.pattern.permute.xlu0 0
  %4325 = vperm.xlu0 %4324, %v4135
  %v4326 = vpop.permute.xlu0 %4325
  %4329 = vset.pattern.permute.xlu0 0
  %4330 = vperm.xlu0 %4329, %v4136
  %v4331 = vpop.permute.xlu0 %4330
  %4334 = vset.pattern.permute.xlu0 0
  %4335 = vperm.xlu0 %4334, %v4165
  %v4336 = vpop.permute.xlu0 %4335
  %4339 = vset.pattern.permute.xlu0 0
  %4340 = vperm.xlu0 %4339, %v4166
  %v4341 = vpop.permute.xlu0 %4340
  %4344 = vset.pattern.permute.xlu0 0
  %4345 = vperm.xlu0 %4344, %v4167
  %v4346 = vpop.permute.xlu0 %4345
  %4349 = vset.pattern.permute.xlu0 0
  %4350 = vperm.xlu0 %4349, %v4168
  %v4351 = vpop.permute.xlu0 %4350
  %4354 = vset.pattern.permute.xlu0 0
  %4355 = vperm.xlu0 %4354, %v4197
  %v4356 = vpop.permute.xlu0 %4355
  %4359 = vset.pattern.permute.xlu0 0
  %4360 = vperm.xlu0 %4359, %v4198
  %v4361 = vpop.permute.xlu0 %4360
  %4364 = vset.pattern.permute.xlu0 0
  %4365 = vperm.xlu0 %4364, %v4199
  %v4366 = vpop.permute.xlu0 %4365
  %4369 = vset.pattern.permute.xlu0 0
  %4370 = vperm.xlu0 %4369, %v4200
  %v4371 = vpop.permute.xlu0 %4370
  %v4373 = vlaneseq
  %v4374 = vshrl.u32 %v4373, 7
  %v4375 = vsub.s32 0, %v4374
  %v4376 = vrot.slane %v434, %v4375
  %v4377 = vlaneseq
  %v4378 = vshrl.u32 %v4377, 7
  %v4379 = vsub.s32 0, %v4378
  %v4380 = vrot.slane %v448, %v4379
  %v4381 = vlaneseq
  %v4382 = vshrl.u32 %v4381, 7
  %v4383 = vsub.s32 0, %v4382
  %v4384 = vrot.slane %v456, %v4383
  %v4385 = vlaneseq
  %v4386 = vshrl.u32 %v4385, 7
  %v4387 = vsub.s32 0, %v4386
  %v4388 = vrot.slane %v458, %v4387
  %v4389 = vlaneseq
  %v4390 = vshrl.u32 %v4389, 7
  %v4391 = vsub.s32 0, %v4390
  %v4392 = vrot.slane %v441, %v4391
  %v4393 = vlaneseq
  %v4394 = vshrl.u32 %v4393, 7
  %v4395 = vsub.s32 0, %v4394
  %v4396 = vrot.slane %v455, %v4395
  %v4397 = vlaneseq
  %v4398 = vshrl.u32 %v4397, 7
  %v4399 = vsub.s32 0, %v4398
  %v4400 = vrot.slane %v457, %v4399
  %v4401 = vlaneseq
  %v4402 = vshrl.u32 %v4401, 7
  %v4403 = vsub.s32 0, %v4402
  %v4404 = vrot.slane %v459, %v4403
  %v4413 = vmul.f32 %v4216, %v4376
  %v4414 = vmul.f32 %v4221, %v4376
  %v4415 = vmul.f32 %v4226, %v4376
  %v4416 = vmul.f32 %v4231, %v4376
  %v4417 = vmul.f32 %v4236, %v4380
  %v4418 = vmul.f32 %v4241, %v4380
  %v4419 = vmul.f32 %v4246, %v4380
  %v4420 = vmul.f32 %v4251, %v4380
  %v4421 = vmul.f32 %v4256, %v4384
  %v4422 = vmul.f32 %v4261, %v4384
  %v4423 = vmul.f32 %v4266, %v4384
  %v4424 = vmul.f32 %v4271, %v4384
  %v4425 = vmul.f32 %v4276, %v4388
  %v4426 = vmul.f32 %v4281, %v4388
  %v4427 = vmul.f32 %v4286, %v4388
  %v4428 = vmul.f32 %v4291, %v4388
  %v4429 = vmul.f32 %v4296, %v4392
  %v4430 = vmul.f32 %v4301, %v4392
  %v4431 = vmul.f32 %v4306, %v4392
  %v4432 = vmul.f32 %v4311, %v4392
  %v4433 = vmul.f32 %v4316, %v4396
  %v4434 = vmul.f32 %v4321, %v4396
  %v4435 = vmul.f32 %v4326, %v4396
  %v4436 = vmul.f32 %v4331, %v4396
  %v4437 = vmul.f32 %v4336, %v4400
  %v4438 = vmul.f32 %v4341, %v4400
  %v4439 = vmul.f32 %v4346, %v4400
  %v4440 = vmul.f32 %v4351, %v4400
  %v4441 = vmul.f32 %v4356, %v4404
  %v4442 = vmul.f32 %v4361, %v4404
  %v4443 = vmul.f32 %v4366, %v4404
  %v4444 = vmul.f32 %v4371, %v4404
  %v4445 = vsub.f32 1.0, %v4413
  %v4446 = vsub.f32 1.0, %v4414
  %v4447 = vsub.f32 1.0, %v4415
  %v4448 = vsub.f32 1.0, %v4416
  %v4449 = vsub.f32 1.0, %v4417
  %v4450 = vsub.f32 1.0, %v4418
  %v4451 = vsub.f32 1.0, %v4419
  %v4452 = vsub.f32 1.0, %v4420
  %v4453 = vsub.f32 1.0, %v4421
  %v4454 = vsub.f32 1.0, %v4422
  %v4455 = vsub.f32 1.0, %v4423
  %v4456 = vsub.f32 1.0, %v4424
  %v4457 = vsub.f32 1.0, %v4425
  %v4458 = vsub.f32 1.0, %v4426
  %v4459 = vsub.f32 1.0, %v4427
  %v4460 = vsub.f32 1.0, %v4428
  %v4461 = vsub.f32 1.0, %v4429
  %v4462 = vsub.f32 1.0, %v4430
  %v4463 = vsub.f32 1.0, %v4431
  %v4464 = vsub.f32 1.0, %v4432
  %v4465 = vsub.f32 1.0, %v4433
  %v4466 = vsub.f32 1.0, %v4434
  %v4467 = vsub.f32 1.0, %v4435
  %v4468 = vsub.f32 1.0, %v4436
  %v4469 = vsub.f32 1.0, %v4437
  %v4470 = vsub.f32 1.0, %v4438
  %v4471 = vsub.f32 1.0, %v4439
  %v4472 = vsub.f32 1.0, %v4440
  %v4473 = vsub.f32 1.0, %v4441
  %v4474 = vsub.f32 1.0, %v4442
  %v4475 = vsub.f32 1.0, %v4443
  %v4476 = vsub.f32 1.0, %v4444
  %4509 = vrot.lane.b32.xlu0 %v4445, 43
  %v4510 = vpop.permute.xlu0 %4509
  %4511 = vrot.lane.b32.xlu0 %v4446, 43
  %v4512 = vpop.permute.xlu0 %4511
  %4513 = vrot.lane.b32.xlu0 %v4447, 43
  %v4514 = vpop.permute.xlu0 %4513
  %4515 = vrot.lane.b32.xlu0 %v4448, 43
  %v4516 = vpop.permute.xlu0 %4515
  %4517 = vrot.lane.b32.xlu0 %v4449, 43
  %v4518 = vpop.permute.xlu0 %4517
  %4519 = vrot.lane.b32.xlu0 %v4450, 43
  %v4520 = vpop.permute.xlu0 %4519
  %4521 = vrot.lane.b32.xlu0 %v4451, 43
  %v4522 = vpop.permute.xlu0 %4521
  %4523 = vrot.lane.b32.xlu0 %v4452, 43
  %v4524 = vpop.permute.xlu0 %4523
  %4525 = vrot.lane.b32.xlu0 %v4453, 43
  %v4526 = vpop.permute.xlu0 %4525
  %4527 = vrot.lane.b32.xlu0 %v4454, 43
  %v4528 = vpop.permute.xlu0 %4527
  %4529 = vrot.lane.b32.xlu0 %v4455, 43
  %v4530 = vpop.permute.xlu0 %4529
  %4531 = vrot.lane.b32.xlu0 %v4456, 43
  %v4532 = vpop.permute.xlu0 %4531
  %4533 = vrot.lane.b32.xlu0 %v4457, 43
  %v4534 = vpop.permute.xlu0 %4533
  %4535 = vrot.lane.b32.xlu0 %v4458, 43
  %v4536 = vpop.permute.xlu0 %4535
  %4537 = vrot.lane.b32.xlu0 %v4459, 43
  %v4538 = vpop.permute.xlu0 %4537
  %4539 = vrot.lane.b32.xlu0 %v4460, 43
  %v4540 = vpop.permute.xlu0 %4539
  %4541 = vrot.lane.b32.xlu0 %v4461, 43
  %v4542 = vpop.permute.xlu0 %4541
  %4543 = vrot.lane.b32.xlu0 %v4462, 43
  %v4544 = vpop.permute.xlu0 %4543
  %4545 = vrot.lane.b32.xlu0 %v4463, 43
  %v4546 = vpop.permute.xlu0 %4545
  %4547 = vrot.lane.b32.xlu0 %v4464, 43
  %v4548 = vpop.permute.xlu0 %4547
  %4549 = vrot.lane.b32.xlu0 %v4465, 43
  %v4550 = vpop.permute.xlu0 %4549
  %4551 = vrot.lane.b32.xlu0 %v4466, 43
  %v4552 = vpop.permute.xlu0 %4551
  %4553 = vrot.lane.b32.xlu0 %v4467, 43
  %v4554 = vpop.permute.xlu0 %4553
  %4555 = vrot.lane.b32.xlu0 %v4468, 43
  %v4556 = vpop.permute.xlu0 %4555
  %4557 = vrot.lane.b32.xlu0 %v4469, 43
  %v4558 = vpop.permute.xlu0 %4557
  %4559 = vrot.lane.b32.xlu0 %v4470, 43
  %v4560 = vpop.permute.xlu0 %4559
  %4561 = vrot.lane.b32.xlu0 %v4471, 43
  %v4562 = vpop.permute.xlu0 %4561
  %4563 = vrot.lane.b32.xlu0 %v4472, 43
  %v4564 = vpop.permute.xlu0 %4563
  %4565 = vrot.lane.b32.xlu0 %v4473, 43
  %v4566 = vpop.permute.xlu0 %4565
  %4567 = vrot.lane.b32.xlu0 %v4474, 43
  %v4568 = vpop.permute.xlu0 %4567
  %4569 = vrot.lane.b32.xlu0 %v4475, 43
  %v4570 = vpop.permute.xlu0 %4569
  %4571 = vrot.lane.b32.xlu0 %v4476, 43
  %v4572 = vpop.permute.xlu0 %4571
  %v4605 = vmul.f32 %v591, %v4510
  %v4606 = vmul.f32 %v592, %v4512
  %v4607 = vmul.f32 %v593, %v4514
  %v4608 = vmul.f32 %v594, %v4516
  %v4609 = vmul.f32 %v595, %v4518
  %v4610 = vmul.f32 %v596, %v4520
  %v4611 = vmul.f32 %v597, %v4522
  %v4612 = vmul.f32 %v598, %v4524
  %v4613 = vmul.f32 %v599, %v4526
  %v4614 = vmul.f32 %v600, %v4528
  %v4615 = vmul.f32 %v601, %v4530
  %v4616 = vmul.f32 %v602, %v4532
  %v4617 = vmul.f32 %v603, %v4534
  %v4618 = vmul.f32 %v604, %v4536
  %v4619 = vmul.f32 %v605, %v4538
  %v4620 = vmul.f32 %v606, %v4540
  %v4621 = vmul.f32 %v607, %v4542
  %v4622 = vmul.f32 %v608, %v4544
  %v4623 = vmul.f32 %v609, %v4546
  %v4624 = vmul.f32 %v610, %v4548
  %v4625 = vmul.f32 %v611, %v4550
  %v4626 = vmul.f32 %v612, %v4552
  %v4627 = vmul.f32 %v613, %v4554
  %v4628 = vmul.f32 %v614, %v4556
  %v4629 = vmul.f32 %v615, %v4558
  %v4630 = vmul.f32 %v616, %v4560
  %v4631 = vmul.f32 %v617, %v4562
  %v4632 = vmul.f32 %v618, %v4564
  %v4633 = vmul.f32 %v619, %v4566
  %v4634 = vmul.f32 %v620, %v4568
  %v4635 = vmul.f32 %v621, %v4570
  %v4636 = vmul.f32 %v622, %v4572
  %v4637 = vlaneseq
  %v4638 = vshrl.u32 %v4637, 7
  %v4639 = vsub.s32 0, %v4638
  %v4640 = vrot.slane %v320, %v4639
  %v4641 = vlaneseq
  %v4642 = vshrl.u32 %v4641, 7
  %v4643 = vsub.s32 0, %v4642
  %v4644 = vrot.slane %v334, %v4643
  %v4645 = vlaneseq
  %v4646 = vshrl.u32 %v4645, 7
  %v4647 = vsub.s32 0, %v4646
  %v4648 = vrot.slane %v342, %v4647
  %v4649 = vlaneseq
  %v4650 = vshrl.u32 %v4649, 7
  %v4651 = vsub.s32 0, %v4650
  %v4652 = vrot.slane %v344, %v4651
  %v4653 = vlaneseq
  %v4654 = vshrl.u32 %v4653, 7
  %v4655 = vsub.s32 0, %v4654
  %v4656 = vrot.slane %v327, %v4655
  %v4657 = vlaneseq
  %v4658 = vshrl.u32 %v4657, 7
  %v4659 = vsub.s32 0, %v4658
  %v4660 = vrot.slane %v341, %v4659
  %v4661 = vlaneseq
  %v4662 = vshrl.u32 %v4661, 7
  %v4663 = vsub.s32 0, %v4662
  %v4664 = vrot.slane %v343, %v4663
  %v4665 = vlaneseq
  %v4666 = vshrl.u32 %v4665, 7
  %v4667 = vsub.s32 0, %v4666
  %v4668 = vrot.slane %v345, %v4667
  %v4677 = vmul.f32 %v4216, %v4640
  %v4678 = vmul.f32 %v4221, %v4640
  %v4679 = vmul.f32 %v4226, %v4640
  %v4680 = vmul.f32 %v4231, %v4640
  %v4681 = vmul.f32 %v4236, %v4644
  %v4682 = vmul.f32 %v4241, %v4644
  %v4683 = vmul.f32 %v4246, %v4644
  %v4684 = vmul.f32 %v4251, %v4644
  %v4685 = vmul.f32 %v4256, %v4648
  %v4686 = vmul.f32 %v4261, %v4648
  %v4687 = vmul.f32 %v4266, %v4648
  %v4688 = vmul.f32 %v4271, %v4648
  %v4689 = vmul.f32 %v4276, %v4652
  %v4690 = vmul.f32 %v4281, %v4652
  %v4691 = vmul.f32 %v4286, %v4652
  %v4692 = vmul.f32 %v4291, %v4652
  %v4693 = vmul.f32 %v4296, %v4656
  %v4694 = vmul.f32 %v4301, %v4656
  %v4695 = vmul.f32 %v4306, %v4656
  %v4696 = vmul.f32 %v4311, %v4656
  %v4697 = vmul.f32 %v4316, %v4660
  %v4698 = vmul.f32 %v4321, %v4660
  %v4699 = vmul.f32 %v4326, %v4660
  %v4700 = vmul.f32 %v4331, %v4660
  %v4701 = vmul.f32 %v4336, %v4664
  %v4702 = vmul.f32 %v4341, %v4664
  %v4703 = vmul.f32 %v4346, %v4664
  %v4704 = vmul.f32 %v4351, %v4664
  %v4705 = vmul.f32 %v4356, %v4668
  %v4706 = vmul.f32 %v4361, %v4668
  %v4707 = vmul.f32 %v4366, %v4668
  %v4708 = vmul.f32 %v4371, %v4668
  %4741 = vrot.lane.b32.xlu0 %v4677, 27
  %v4742 = vpop.permute.xlu0 %4741
  %4743 = vrot.lane.b32.xlu0 %v4678, 27
  %v4744 = vpop.permute.xlu0 %4743
  %4745 = vrot.lane.b32.xlu0 %v4679, 27
  %v4746 = vpop.permute.xlu0 %4745
  %4747 = vrot.lane.b32.xlu0 %v4680, 27
  %v4748 = vpop.permute.xlu0 %4747
  %4749 = vrot.lane.b32.xlu0 %v4681, 27
  %v4750 = vpop.permute.xlu0 %4749
  %4751 = vrot.lane.b32.xlu0 %v4682, 27
  %v4752 = vpop.permute.xlu0 %4751
  %4753 = vrot.lane.b32.xlu0 %v4683, 27
  %v4754 = vpop.permute.xlu0 %4753
  %4755 = vrot.lane.b32.xlu0 %v4684, 27
  %v4756 = vpop.permute.xlu0 %4755
  %4757 = vrot.lane.b32.xlu0 %v4685, 27
  %v4758 = vpop.permute.xlu0 %4757
  %4759 = vrot.lane.b32.xlu0 %v4686, 27
  %v4760 = vpop.permute.xlu0 %4759
  %4761 = vrot.lane.b32.xlu0 %v4687, 27
  %v4762 = vpop.permute.xlu0 %4761
  %4763 = vrot.lane.b32.xlu0 %v4688, 27
  %v4764 = vpop.permute.xlu0 %4763
  %4765 = vrot.lane.b32.xlu0 %v4689, 27
  %v4766 = vpop.permute.xlu0 %4765
  %4767 = vrot.lane.b32.xlu0 %v4690, 27
  %v4768 = vpop.permute.xlu0 %4767
  %4769 = vrot.lane.b32.xlu0 %v4691, 27
  %v4770 = vpop.permute.xlu0 %4769
  %4771 = vrot.lane.b32.xlu0 %v4692, 27
  %v4772 = vpop.permute.xlu0 %4771
  %4773 = vrot.lane.b32.xlu0 %v4693, 27
  %v4774 = vpop.permute.xlu0 %4773
  %4775 = vrot.lane.b32.xlu0 %v4694, 27
  %v4776 = vpop.permute.xlu0 %4775
  %4777 = vrot.lane.b32.xlu0 %v4695, 27
  %v4778 = vpop.permute.xlu0 %4777
  %4779 = vrot.lane.b32.xlu0 %v4696, 27
  %v4780 = vpop.permute.xlu0 %4779
  %4781 = vrot.lane.b32.xlu0 %v4697, 27
  %v4782 = vpop.permute.xlu0 %4781
  %4783 = vrot.lane.b32.xlu0 %v4698, 27
  %v4784 = vpop.permute.xlu0 %4783
  %4785 = vrot.lane.b32.xlu0 %v4699, 27
  %v4786 = vpop.permute.xlu0 %4785
  %4787 = vrot.lane.b32.xlu0 %v4700, 27
  %v4788 = vpop.permute.xlu0 %4787
  %4789 = vrot.lane.b32.xlu0 %v4701, 27
  %v4790 = vpop.permute.xlu0 %4789
  %4791 = vrot.lane.b32.xlu0 %v4702, 27
  %v4792 = vpop.permute.xlu0 %4791
  %4793 = vrot.lane.b32.xlu0 %v4703, 27
  %v4794 = vpop.permute.xlu0 %4793
  %4795 = vrot.lane.b32.xlu0 %v4704, 27
  %v4796 = vpop.permute.xlu0 %4795
  %4797 = vrot.lane.b32.xlu0 %v4705, 27
  %v4798 = vpop.permute.xlu0 %4797
  %4799 = vrot.lane.b32.xlu0 %v4706, 27
  %v4800 = vpop.permute.xlu0 %4799
  %4801 = vrot.lane.b32.xlu0 %v4707, 27
  %v4802 = vpop.permute.xlu0 %4801
  %4803 = vrot.lane.b32.xlu0 %v4708, 27
  %v4804 = vpop.permute.xlu0 %4803
  %v4837 = vadd.f32 %v4605, %v4742
  %v4838 = vadd.f32 %v4606, %v4744
  %v4839 = vadd.f32 %v4607, %v4746
  %v4840 = vadd.f32 %v4608, %v4748
  %v4841 = vadd.f32 %v4609, %v4750
  %v4842 = vadd.f32 %v4610, %v4752
  %v4843 = vadd.f32 %v4611, %v4754
  %v4844 = vadd.f32 %v4612, %v4756
  %v4845 = vadd.f32 %v4613, %v4758
  %v4846 = vadd.f32 %v4614, %v4760
  %v4847 = vadd.f32 %v4615, %v4762
  %v4848 = vadd.f32 %v4616, %v4764
  %v4849 = vadd.f32 %v4617, %v4766
  %v4850 = vadd.f32 %v4618, %v4768
  %v4851 = vadd.f32 %v4619, %v4770
  %v4852 = vadd.f32 %v4620, %v4772
  %v4853 = vadd.f32 %v4621, %v4774
  %v4854 = vadd.f32 %v4622, %v4776
  %v4855 = vadd.f32 %v4623, %v4778
  %v4856 = vadd.f32 %v4624, %v4780
  %v4857 = vadd.f32 %v4625, %v4782
  %v4858 = vadd.f32 %v4626, %v4784
  %v4859 = vadd.f32 %v4627, %v4786
  %v4860 = vadd.f32 %v4628, %v4788
  %v4861 = vadd.f32 %v4629, %v4790
  %v4862 = vadd.f32 %v4630, %v4792
  %v4863 = vadd.f32 %v4631, %v4794
  %v4864 = vadd.f32 %v4632, %v4796
  %v4865 = vadd.f32 %v4633, %v4798
  %v4866 = vadd.f32 %v4634, %v4800
  %v4867 = vadd.f32 %v4635, %v4802
  %v4868 = vadd.f32 %v4636, %v4804
  %v4869 = vmul.f32 %v196, %v196
  %v4870 = vmul.f32 %v220, %v220
  %v4871 = vmul.f32 %v203, %v203
  %v4872 = vmul.f32 %v221, %v221
  %v4873 = vmul.f32 %v212, %v212
  %v4874 = vmul.f32 %v222, %v222
  %v4875 = vmul.f32 %v219, %v219
  %v4876 = vmul.f32 %v223, %v223
  %vm4877 = vcmask 125952
  %v4878 = vsel %vm4877, %v4869, 0.0
  %4879 = vadd.xlane.f32.xlu0 %v4878
  %v4880 = vpop.xlane.xlu0 %4879
  %v4881 = vsel %vm4877, %v4870, 0.0
  %4882 = vadd.xlane.f32.xlu0 %v4881
  %v4883 = vpop.xlane.xlu0 %4882
  %v4884 = vsel %vm4877, %v4871, 0.0
  %4885 = vadd.xlane.f32.xlu0 %v4884
  %v4886 = vpop.xlane.xlu0 %4885
  %v4887 = vsel %vm4877, %v4872, 0.0
  %4888 = vadd.xlane.f32.xlu0 %v4887
  %v4889 = vpop.xlane.xlu0 %4888
  %v4890 = vsel %vm4877, %v4873, 0.0
  %4891 = vadd.xlane.f32.xlu0 %v4890
  %v4892 = vpop.xlane.xlu0 %4891
  %v4893 = vsel %vm4877, %v4874, 0.0
  %4894 = vadd.xlane.f32.xlu0 %v4893
  %v4895 = vpop.xlane.xlu0 %4894
  %v4896 = vsel %vm4877, %v4875, 0.0
  %4897 = vadd.xlane.f32.xlu0 %v4896
  %v4898 = vpop.xlane.xlu0 %4897
  %v4899 = vsel %vm4877, %v4876, 0.0
  %4900 = vadd.xlane.f32.xlu0 %v4899
  %v4901 = vpop.xlane.xlu0 %4900
  %v4902 = vrsqrt.pop %v4880
  %v4903 = vmul.f32 %v4880, %v4902
  %vm4904 = vcmp.eq.f32.partialorder %v4880, inf
  %v4905 = vsel %vm4904, %v4880, %v4903
  %vm4906 = vcmp.eq.f32.partialorder %v4880, 0.0
  %v4907 = vand.u32 %v4880, 2147483648
  %v4908 = vsel %vm4906, %v4907, %v4905
  %v4909 = vrsqrt.pop %v4883
  %v4910 = vmul.f32 %v4883, %v4909
  %vm4911 = vcmp.eq.f32.partialorder %v4883, inf
  %v4912 = vsel %vm4911, %v4883, %v4910
  %vm4913 = vcmp.eq.f32.partialorder %v4883, 0.0
  %v4914 = vand.u32 %v4883, 2147483648
  %v4915 = vsel %vm4913, %v4914, %v4912
  %v4916 = vrsqrt.pop %v4886
  %v4917 = vmul.f32 %v4886, %v4916
  %vm4918 = vcmp.eq.f32.partialorder %v4886, inf
  %v4919 = vsel %vm4918, %v4886, %v4917
  %vm4920 = vcmp.eq.f32.partialorder %v4886, 0.0
  %v4921 = vand.u32 %v4886, 2147483648
  %v4922 = vsel %vm4920, %v4921, %v4919
  %v4923 = vrsqrt.pop %v4889
  %v4924 = vmul.f32 %v4889, %v4923
  %vm4925 = vcmp.eq.f32.partialorder %v4889, inf
  %v4926 = vsel %vm4925, %v4889, %v4924
  %vm4927 = vcmp.eq.f32.partialorder %v4889, 0.0
  %v4928 = vand.u32 %v4889, 2147483648
  %v4929 = vsel %vm4927, %v4928, %v4926
  %v4930 = vrsqrt.pop %v4892
  %v4931 = vmul.f32 %v4892, %v4930
  %vm4932 = vcmp.eq.f32.partialorder %v4892, inf
  %v4933 = vsel %vm4932, %v4892, %v4931
  %vm4934 = vcmp.eq.f32.partialorder %v4892, 0.0
  %v4935 = vand.u32 %v4892, 2147483648
  %v4936 = vsel %vm4934, %v4935, %v4933
  %v4937 = vrsqrt.pop %v4895
  %v4938 = vmul.f32 %v4895, %v4937
  %vm4939 = vcmp.eq.f32.partialorder %v4895, inf
  %v4940 = vsel %vm4939, %v4895, %v4938
  %vm4941 = vcmp.eq.f32.partialorder %v4895, 0.0
  %v4942 = vand.u32 %v4895, 2147483648
  %v4943 = vsel %vm4941, %v4942, %v4940
  %v4944 = vrsqrt.pop %v4898
  %v4945 = vmul.f32 %v4898, %v4944
  %vm4946 = vcmp.eq.f32.partialorder %v4898, inf
  %v4947 = vsel %vm4946, %v4898, %v4945
  %vm4948 = vcmp.eq.f32.partialorder %v4898, 0.0
  %v4949 = vand.u32 %v4898, 2147483648
  %v4950 = vsel %vm4948, %v4949, %v4947
  %v4951 = vrsqrt.pop %v4901
  %v4952 = vmul.f32 %v4901, %v4951
  %vm4953 = vcmp.eq.f32.partialorder %v4901, inf
  %v4954 = vsel %vm4953, %v4901, %v4952
  %vm4955 = vcmp.eq.f32.partialorder %v4901, 0.0
  %v4956 = vand.u32 %v4901, 2147483648
  %v4957 = vsel %vm4955, %v4956, %v4954
  %v4958 = vmul.f32 %v4837, %v4837
  %v4959 = vmul.f32 %v4838, %v4838
  %v4960 = vmul.f32 %v4839, %v4839
  %v4961 = vmul.f32 %v4840, %v4840
  %v4962 = vmul.f32 %v4841, %v4841
  %v4963 = vmul.f32 %v4842, %v4842
  %v4964 = vmul.f32 %v4843, %v4843
  %v4965 = vmul.f32 %v4844, %v4844
  %v4966 = vmul.f32 %v4845, %v4845
  %v4967 = vmul.f32 %v4846, %v4846
  %v4968 = vmul.f32 %v4847, %v4847
  %v4969 = vmul.f32 %v4848, %v4848
  %v4970 = vmul.f32 %v4849, %v4849
  %v4971 = vmul.f32 %v4850, %v4850
  %v4972 = vmul.f32 %v4851, %v4851
  %v4973 = vmul.f32 %v4852, %v4852
  %v4974 = vmul.f32 %v4853, %v4853
  %v4975 = vmul.f32 %v4854, %v4854
  %v4976 = vmul.f32 %v4855, %v4855
  %v4977 = vmul.f32 %v4856, %v4856
  %v4978 = vmul.f32 %v4857, %v4857
  %v4979 = vmul.f32 %v4858, %v4858
  %v4980 = vmul.f32 %v4859, %v4859
  %v4981 = vmul.f32 %v4860, %v4860
  %v4982 = vmul.f32 %v4861, %v4861
  %v4983 = vmul.f32 %v4862, %v4862
  %v4984 = vmul.f32 %v4863, %v4863
  %v4985 = vmul.f32 %v4864, %v4864
  %v4986 = vmul.f32 %v4865, %v4865
  %v4987 = vmul.f32 %v4866, %v4866
  %v4988 = vmul.f32 %v4867, %v4867
  %v4989 = vmul.f32 %v4868, %v4868
  %v4990 = vsel %vm944, %v4958, 0.0
  %4991 = vadd.xlane.f32.xlu0 %v4990
  %v4992 = vpop.xlane.xlu0 %4991
  %v4993 = vsel %vm944, %v4959, 0.0
  %4994 = vadd.xlane.f32.xlu0 %v4993
  %v4995 = vpop.xlane.xlu0 %4994
  %v4996 = vsel %vm944, %v4960, 0.0
  %4997 = vadd.xlane.f32.xlu0 %v4996
  %v4998 = vpop.xlane.xlu0 %4997
  %v4999 = vsel %vm944, %v4961, 0.0
  %5000 = vadd.xlane.f32.xlu0 %v4999
  %v5001 = vpop.xlane.xlu0 %5000
  %v5002 = vsel %vm944, %v4962, 0.0
  %5003 = vadd.xlane.f32.xlu0 %v5002
  %v5004 = vpop.xlane.xlu0 %5003
  %v5005 = vsel %vm944, %v4963, 0.0
  %5006 = vadd.xlane.f32.xlu0 %v5005
  %v5007 = vpop.xlane.xlu0 %5006
  %v5008 = vsel %vm944, %v4964, 0.0
  %5009 = vadd.xlane.f32.xlu0 %v5008
  %v5010 = vpop.xlane.xlu0 %5009
  %v5011 = vsel %vm944, %v4965, 0.0
  %5012 = vadd.xlane.f32.xlu0 %v5011
  %v5013 = vpop.xlane.xlu0 %5012
  %v5014 = vsel %vm944, %v4966, 0.0
  %5015 = vadd.xlane.f32.xlu0 %v5014
  %v5016 = vpop.xlane.xlu0 %5015
  %v5017 = vsel %vm944, %v4967, 0.0
  %5018 = vadd.xlane.f32.xlu0 %v5017
  %v5019 = vpop.xlane.xlu0 %5018
  %v5020 = vsel %vm944, %v4968, 0.0
  %5021 = vadd.xlane.f32.xlu0 %v5020
  %v5022 = vpop.xlane.xlu0 %5021
  %v5023 = vsel %vm944, %v4969, 0.0
  %5024 = vadd.xlane.f32.xlu0 %v5023
  %v5025 = vpop.xlane.xlu0 %5024
  %v5026 = vsel %vm944, %v4970, 0.0
  %5027 = vadd.xlane.f32.xlu0 %v5026
  %v5028 = vpop.xlane.xlu0 %5027
  %v5029 = vsel %vm944, %v4971, 0.0
  %5030 = vadd.xlane.f32.xlu0 %v5029
  %v5031 = vpop.xlane.xlu0 %5030
  %v5032 = vsel %vm944, %v4972, 0.0
  %5033 = vadd.xlane.f32.xlu0 %v5032
  %v5034 = vpop.xlane.xlu0 %5033
  %v5035 = vsel %vm944, %v4973, 0.0
  %5036 = vadd.xlane.f32.xlu0 %v5035
  %v5037 = vpop.xlane.xlu0 %5036
  %v5038 = vsel %vm944, %v4974, 0.0
  %5039 = vadd.xlane.f32.xlu0 %v5038
  %v5040 = vpop.xlane.xlu0 %5039
  %v5041 = vsel %vm944, %v4975, 0.0
  %5042 = vadd.xlane.f32.xlu0 %v5041
  %v5043 = vpop.xlane.xlu0 %5042
  %v5044 = vsel %vm944, %v4976, 0.0
  %5045 = vadd.xlane.f32.xlu0 %v5044
  %v5046 = vpop.xlane.xlu0 %5045
  %v5047 = vsel %vm944, %v4977, 0.0
  %5048 = vadd.xlane.f32.xlu0 %v5047
  %v5049 = vpop.xlane.xlu0 %5048
  %v5050 = vsel %vm944, %v4978, 0.0
  %5051 = vadd.xlane.f32.xlu0 %v5050
  %v5052 = vpop.xlane.xlu0 %5051
  %v5053 = vsel %vm944, %v4979, 0.0
  %5054 = vadd.xlane.f32.xlu0 %v5053
  %v5055 = vpop.xlane.xlu0 %5054
  %v5056 = vsel %vm944, %v4980, 0.0
  %5057 = vadd.xlane.f32.xlu0 %v5056
  %v5058 = vpop.xlane.xlu0 %5057
  %v5059 = vsel %vm944, %v4981, 0.0
  %5060 = vadd.xlane.f32.xlu0 %v5059
  %v5061 = vpop.xlane.xlu0 %5060
  %v5062 = vsel %vm944, %v4982, 0.0
  %5063 = vadd.xlane.f32.xlu0 %v5062
  %v5064 = vpop.xlane.xlu0 %5063
  %v5065 = vsel %vm944, %v4983, 0.0
  %5066 = vadd.xlane.f32.xlu0 %v5065
  %v5067 = vpop.xlane.xlu0 %5066
  %v5068 = vsel %vm944, %v4984, 0.0
  %5069 = vadd.xlane.f32.xlu0 %v5068
  %v5070 = vpop.xlane.xlu0 %5069
  %v5071 = vsel %vm944, %v4985, 0.0
  %5072 = vadd.xlane.f32.xlu0 %v5071
  %v5073 = vpop.xlane.xlu0 %5072
  %v5074 = vsel %vm944, %v4986, 0.0
  %5075 = vadd.xlane.f32.xlu0 %v5074
  %v5076 = vpop.xlane.xlu0 %5075
  %v5077 = vsel %vm944, %v4987, 0.0
  %5078 = vadd.xlane.f32.xlu0 %v5077
  %v5079 = vpop.xlane.xlu0 %5078
  %v5080 = vsel %vm944, %v4988, 0.0
  %5081 = vadd.xlane.f32.xlu0 %v5080
  %v5082 = vpop.xlane.xlu0 %5081
  %v5083 = vsel %vm944, %v4989, 0.0
  %5084 = vadd.xlane.f32.xlu0 %v5083
  %v5085 = vpop.xlane.xlu0 %5084
  %v5086 = vrsqrt.pop %v4992
  %v5087 = vmul.f32 %v4992, %v5086
  %vm5088 = vcmp.eq.f32.partialorder %v4992, inf
  %v5089 = vsel %vm5088, %v4992, %v5087
  %vm5090 = vcmp.eq.f32.partialorder %v4992, 0.0
  %v5091 = vand.u32 %v4992, 2147483648
  %v5092 = vsel %vm5090, %v5091, %v5089
  %v5093 = vrsqrt.pop %v4995
  %v5094 = vmul.f32 %v4995, %v5093
  %vm5095 = vcmp.eq.f32.partialorder %v4995, inf
  %v5096 = vsel %vm5095, %v4995, %v5094
  %vm5097 = vcmp.eq.f32.partialorder %v4995, 0.0
  %v5098 = vand.u32 %v4995, 2147483648
  %v5099 = vsel %vm5097, %v5098, %v5096
  %v5100 = vrsqrt.pop %v4998
  %v5101 = vmul.f32 %v4998, %v5100
  %vm5102 = vcmp.eq.f32.partialorder %v4998, inf
  %v5103 = vsel %vm5102, %v4998, %v5101
  %vm5104 = vcmp.eq.f32.partialorder %v4998, 0.0
  %v5105 = vand.u32 %v4998, 2147483648
  %v5106 = vsel %vm5104, %v5105, %v5103
  %v5107 = vrsqrt.pop %v5001
  %v5108 = vmul.f32 %v5001, %v5107
  %vm5109 = vcmp.eq.f32.partialorder %v5001, inf
  %v5110 = vsel %vm5109, %v5001, %v5108
  %vm5111 = vcmp.eq.f32.partialorder %v5001, 0.0
  %v5112 = vand.u32 %v5001, 2147483648
  %v5113 = vsel %vm5111, %v5112, %v5110
  %v5114 = vrsqrt.pop %v5004
  %v5115 = vmul.f32 %v5004, %v5114
  %vm5116 = vcmp.eq.f32.partialorder %v5004, inf
  %v5117 = vsel %vm5116, %v5004, %v5115
  %vm5118 = vcmp.eq.f32.partialorder %v5004, 0.0
  %v5119 = vand.u32 %v5004, 2147483648
  %v5120 = vsel %vm5118, %v5119, %v5117
  %v5121 = vrsqrt.pop %v5007
  %v5122 = vmul.f32 %v5007, %v5121
  %vm5123 = vcmp.eq.f32.partialorder %v5007, inf
  %v5124 = vsel %vm5123, %v5007, %v5122
  %vm5125 = vcmp.eq.f32.partialorder %v5007, 0.0
  %v5126 = vand.u32 %v5007, 2147483648
  %v5127 = vsel %vm5125, %v5126, %v5124
  %v5128 = vrsqrt.pop %v5010
  %v5129 = vmul.f32 %v5010, %v5128
  %vm5130 = vcmp.eq.f32.partialorder %v5010, inf
  %v5131 = vsel %vm5130, %v5010, %v5129
  %vm5132 = vcmp.eq.f32.partialorder %v5010, 0.0
  %v5133 = vand.u32 %v5010, 2147483648
  %v5134 = vsel %vm5132, %v5133, %v5131
  %v5135 = vrsqrt.pop %v5013
  %v5136 = vmul.f32 %v5013, %v5135
  %vm5137 = vcmp.eq.f32.partialorder %v5013, inf
  %v5138 = vsel %vm5137, %v5013, %v5136
  %vm5139 = vcmp.eq.f32.partialorder %v5013, 0.0
  %v5140 = vand.u32 %v5013, 2147483648
  %v5141 = vsel %vm5139, %v5140, %v5138
  %v5142 = vrsqrt.pop %v5016
  %v5143 = vmul.f32 %v5016, %v5142
  %vm5144 = vcmp.eq.f32.partialorder %v5016, inf
  %v5145 = vsel %vm5144, %v5016, %v5143
  %vm5146 = vcmp.eq.f32.partialorder %v5016, 0.0
  %v5147 = vand.u32 %v5016, 2147483648
  %v5148 = vsel %vm5146, %v5147, %v5145
  %v5149 = vrsqrt.pop %v5019
  %v5150 = vmul.f32 %v5019, %v5149
  %vm5151 = vcmp.eq.f32.partialorder %v5019, inf
  %v5152 = vsel %vm5151, %v5019, %v5150
  %vm5153 = vcmp.eq.f32.partialorder %v5019, 0.0
  %v5154 = vand.u32 %v5019, 2147483648
  %v5155 = vsel %vm5153, %v5154, %v5152
  %v5156 = vrsqrt.pop %v5022
  %v5157 = vmul.f32 %v5022, %v5156
  %vm5158 = vcmp.eq.f32.partialorder %v5022, inf
  %v5159 = vsel %vm5158, %v5022, %v5157
  %vm5160 = vcmp.eq.f32.partialorder %v5022, 0.0
  %v5161 = vand.u32 %v5022, 2147483648
  %v5162 = vsel %vm5160, %v5161, %v5159
  %v5163 = vrsqrt.pop %v5025
  %v5164 = vmul.f32 %v5025, %v5163
  %vm5165 = vcmp.eq.f32.partialorder %v5025, inf
  %v5166 = vsel %vm5165, %v5025, %v5164
  %vm5167 = vcmp.eq.f32.partialorder %v5025, 0.0
  %v5168 = vand.u32 %v5025, 2147483648
  %v5169 = vsel %vm5167, %v5168, %v5166
  %v5170 = vrsqrt.pop %v5028
  %v5171 = vmul.f32 %v5028, %v5170
  %vm5172 = vcmp.eq.f32.partialorder %v5028, inf
  %v5173 = vsel %vm5172, %v5028, %v5171
  %vm5174 = vcmp.eq.f32.partialorder %v5028, 0.0
  %v5175 = vand.u32 %v5028, 2147483648
  %v5176 = vsel %vm5174, %v5175, %v5173
  %v5177 = vrsqrt.pop %v5031
  %v5178 = vmul.f32 %v5031, %v5177
  %vm5179 = vcmp.eq.f32.partialorder %v5031, inf
  %v5180 = vsel %vm5179, %v5031, %v5178
  %vm5181 = vcmp.eq.f32.partialorder %v5031, 0.0
  %v5182 = vand.u32 %v5031, 2147483648
  %v5183 = vsel %vm5181, %v5182, %v5180
  %v5184 = vrsqrt.pop %v5034
  %v5185 = vmul.f32 %v5034, %v5184
  %vm5186 = vcmp.eq.f32.partialorder %v5034, inf
  %v5187 = vsel %vm5186, %v5034, %v5185
  %vm5188 = vcmp.eq.f32.partialorder %v5034, 0.0
  %v5189 = vand.u32 %v5034, 2147483648
  %v5190 = vsel %vm5188, %v5189, %v5187
  %v5191 = vrsqrt.pop %v5037
  %v5192 = vmul.f32 %v5037, %v5191
  %vm5193 = vcmp.eq.f32.partialorder %v5037, inf
  %v5194 = vsel %vm5193, %v5037, %v5192
  %vm5195 = vcmp.eq.f32.partialorder %v5037, 0.0
  %v5196 = vand.u32 %v5037, 2147483648
  %v5197 = vsel %vm5195, %v5196, %v5194
  %v5198 = vrsqrt.pop %v5040
  %v5199 = vmul.f32 %v5040, %v5198
  %vm5200 = vcmp.eq.f32.partialorder %v5040, inf
  %v5201 = vsel %vm5200, %v5040, %v5199
  %vm5202 = vcmp.eq.f32.partialorder %v5040, 0.0
  %v5203 = vand.u32 %v5040, 2147483648
  %v5204 = vsel %vm5202, %v5203, %v5201
  %v5205 = vrsqrt.pop %v5043
  %v5206 = vmul.f32 %v5043, %v5205
  %vm5207 = vcmp.eq.f32.partialorder %v5043, inf
  %v5208 = vsel %vm5207, %v5043, %v5206
  %vm5209 = vcmp.eq.f32.partialorder %v5043, 0.0
  %v5210 = vand.u32 %v5043, 2147483648
  %v5211 = vsel %vm5209, %v5210, %v5208
  %v5212 = vrsqrt.pop %v5046
  %v5213 = vmul.f32 %v5046, %v5212
  %vm5214 = vcmp.eq.f32.partialorder %v5046, inf
  %v5215 = vsel %vm5214, %v5046, %v5213
  %vm5216 = vcmp.eq.f32.partialorder %v5046, 0.0
  %v5217 = vand.u32 %v5046, 2147483648
  %v5218 = vsel %vm5216, %v5217, %v5215
  %v5219 = vrsqrt.pop %v5049
  %v5220 = vmul.f32 %v5049, %v5219
  %vm5221 = vcmp.eq.f32.partialorder %v5049, inf
  %v5222 = vsel %vm5221, %v5049, %v5220
  %vm5223 = vcmp.eq.f32.partialorder %v5049, 0.0
  %v5224 = vand.u32 %v5049, 2147483648
  %v5225 = vsel %vm5223, %v5224, %v5222
  %v5226 = vrsqrt.pop %v5052
  %v5227 = vmul.f32 %v5052, %v5226
  %vm5228 = vcmp.eq.f32.partialorder %v5052, inf
  %v5229 = vsel %vm5228, %v5052, %v5227
  %vm5230 = vcmp.eq.f32.partialorder %v5052, 0.0
  %v5231 = vand.u32 %v5052, 2147483648
  %v5232 = vsel %vm5230, %v5231, %v5229
  %v5233 = vrsqrt.pop %v5055
  %v5234 = vmul.f32 %v5055, %v5233
  %vm5235 = vcmp.eq.f32.partialorder %v5055, inf
  %v5236 = vsel %vm5235, %v5055, %v5234
  %vm5237 = vcmp.eq.f32.partialorder %v5055, 0.0
  %v5238 = vand.u32 %v5055, 2147483648
  %v5239 = vsel %vm5237, %v5238, %v5236
  %v5240 = vrsqrt.pop %v5058
  %v5241 = vmul.f32 %v5058, %v5240
  %vm5242 = vcmp.eq.f32.partialorder %v5058, inf
  %v5243 = vsel %vm5242, %v5058, %v5241
  %vm5244 = vcmp.eq.f32.partialorder %v5058, 0.0
  %v5245 = vand.u32 %v5058, 2147483648
  %v5246 = vsel %vm5244, %v5245, %v5243
  %v5247 = vrsqrt.pop %v5061
  %v5248 = vmul.f32 %v5061, %v5247
  %vm5249 = vcmp.eq.f32.partialorder %v5061, inf
  %v5250 = vsel %vm5249, %v5061, %v5248
  %vm5251 = vcmp.eq.f32.partialorder %v5061, 0.0
  %v5252 = vand.u32 %v5061, 2147483648
  %v5253 = vsel %vm5251, %v5252, %v5250
  %v5254 = vrsqrt.pop %v5064
  %v5255 = vmul.f32 %v5064, %v5254
  %vm5256 = vcmp.eq.f32.partialorder %v5064, inf
  %v5257 = vsel %vm5256, %v5064, %v5255
  %vm5258 = vcmp.eq.f32.partialorder %v5064, 0.0
  %v5259 = vand.u32 %v5064, 2147483648
  %v5260 = vsel %vm5258, %v5259, %v5257
  %v5261 = vrsqrt.pop %v5067
  %v5262 = vmul.f32 %v5067, %v5261
  %vm5263 = vcmp.eq.f32.partialorder %v5067, inf
  %v5264 = vsel %vm5263, %v5067, %v5262
  %vm5265 = vcmp.eq.f32.partialorder %v5067, 0.0
  %v5266 = vand.u32 %v5067, 2147483648
  %v5267 = vsel %vm5265, %v5266, %v5264
  %v5268 = vrsqrt.pop %v5070
  %v5269 = vmul.f32 %v5070, %v5268
  %vm5270 = vcmp.eq.f32.partialorder %v5070, inf
  %v5271 = vsel %vm5270, %v5070, %v5269
  %vm5272 = vcmp.eq.f32.partialorder %v5070, 0.0
  %v5273 = vand.u32 %v5070, 2147483648
  %v5274 = vsel %vm5272, %v5273, %v5271
  %v5275 = vrsqrt.pop %v5073
  %v5276 = vmul.f32 %v5073, %v5275
  %vm5277 = vcmp.eq.f32.partialorder %v5073, inf
  %v5278 = vsel %vm5277, %v5073, %v5276
  %vm5279 = vcmp.eq.f32.partialorder %v5073, 0.0
  %v5280 = vand.u32 %v5073, 2147483648
  %v5281 = vsel %vm5279, %v5280, %v5278
  %v5282 = vrsqrt.pop %v5076
  %v5283 = vmul.f32 %v5076, %v5282
  %vm5284 = vcmp.eq.f32.partialorder %v5076, inf
  %v5285 = vsel %vm5284, %v5076, %v5283
  %vm5286 = vcmp.eq.f32.partialorder %v5076, 0.0
  %v5287 = vand.u32 %v5076, 2147483648
  %v5288 = vsel %vm5286, %v5287, %v5285
  %v5289 = vrsqrt.pop %v5079
  %v5290 = vmul.f32 %v5079, %v5289
  %vm5291 = vcmp.eq.f32.partialorder %v5079, inf
  %v5292 = vsel %vm5291, %v5079, %v5290
  %vm5293 = vcmp.eq.f32.partialorder %v5079, 0.0
  %v5294 = vand.u32 %v5079, 2147483648
  %v5295 = vsel %vm5293, %v5294, %v5292
  %v5296 = vrsqrt.pop %v5082
  %v5297 = vmul.f32 %v5082, %v5296
  %vm5298 = vcmp.eq.f32.partialorder %v5082, inf
  %v5299 = vsel %vm5298, %v5082, %v5297
  %vm5300 = vcmp.eq.f32.partialorder %v5082, 0.0
  %v5301 = vand.u32 %v5082, 2147483648
  %v5302 = vsel %vm5300, %v5301, %v5299
  %v5303 = vrsqrt.pop %v5085
  %v5304 = vmul.f32 %v5085, %v5303
  %vm5305 = vcmp.eq.f32.partialorder %v5085, inf
  %v5306 = vsel %vm5305, %v5085, %v5304
  %vm5307 = vcmp.eq.f32.partialorder %v5085, 0.0
  %v5308 = vand.u32 %v5085, 2147483648
  %v5309 = vsel %vm5307, %v5308, %v5306
  %v5310 = vadd.f32 %v4908, 1e-06
  %v5311 = vadd.f32 %v4915, 1e-06
  %v5312 = vadd.f32 %v4922, 1e-06
  %v5313 = vadd.f32 %v4929, 1e-06
  %v5314 = vadd.f32 %v4936, 1e-06
  %v5315 = vadd.f32 %v4943, 1e-06
  %v5316 = vadd.f32 %v4950, 1e-06
  %v5317 = vadd.f32 %v4957, 1e-06
  %v5318 = vrcp.pop %v5310
  %v5319 = vmul.f32 %v196, %v5318
  %v5320 = vrcp.pop %v5311
  %v5321 = vmul.f32 %v220, %v5320
  %v5322 = vrcp.pop %v5312
  %v5323 = vmul.f32 %v203, %v5322
  %v5324 = vrcp.pop %v5313
  %v5325 = vmul.f32 %v221, %v5324
  %v5326 = vrcp.pop %v5314
  %v5327 = vmul.f32 %v212, %v5326
  %v5328 = vrcp.pop %v5315
  %v5329 = vmul.f32 %v222, %v5328
  %v5330 = vrcp.pop %v5316
  %v5331 = vmul.f32 %v219, %v5330
  %v5332 = vrcp.pop %v5317
  %v5333 = vmul.f32 %v223, %v5332
  %v5334 = vadd.f32 %v5092, 1e-06
  %v5335 = vadd.f32 %v5099, 1e-06
  %v5336 = vadd.f32 %v5106, 1e-06
  %v5337 = vadd.f32 %v5113, 1e-06
  %v5338 = vadd.f32 %v5120, 1e-06
  %v5339 = vadd.f32 %v5127, 1e-06
  %v5340 = vadd.f32 %v5134, 1e-06
  %v5341 = vadd.f32 %v5141, 1e-06
  %v5342 = vadd.f32 %v5148, 1e-06
  %v5343 = vadd.f32 %v5155, 1e-06
  %v5344 = vadd.f32 %v5162, 1e-06
  %v5345 = vadd.f32 %v5169, 1e-06
  %v5346 = vadd.f32 %v5176, 1e-06
  %v5347 = vadd.f32 %v5183, 1e-06
  %v5348 = vadd.f32 %v5190, 1e-06
  %v5349 = vadd.f32 %v5197, 1e-06
  %v5350 = vadd.f32 %v5204, 1e-06
  %v5351 = vadd.f32 %v5211, 1e-06
  %v5352 = vadd.f32 %v5218, 1e-06
  %v5353 = vadd.f32 %v5225, 1e-06
  %v5354 = vadd.f32 %v5232, 1e-06
  %v5355 = vadd.f32 %v5239, 1e-06
  %v5356 = vadd.f32 %v5246, 1e-06
  %v5357 = vadd.f32 %v5253, 1e-06
  %v5358 = vadd.f32 %v5260, 1e-06
  %v5359 = vadd.f32 %v5267, 1e-06
  %v5360 = vadd.f32 %v5274, 1e-06
  %v5361 = vadd.f32 %v5281, 1e-06
  %v5362 = vadd.f32 %v5288, 1e-06
  %v5363 = vadd.f32 %v5295, 1e-06
  %v5364 = vadd.f32 %v5302, 1e-06
  %v5365 = vadd.f32 %v5309, 1e-06
  %v5366 = vrcp.pop %v5334
  %v5367 = vmul.f32 %v4837, %v5366
  %v5368 = vrcp.pop %v5335
  %v5369 = vmul.f32 %v4838, %v5368
  %v5370 = vrcp.pop %v5336
  %v5371 = vmul.f32 %v4839, %v5370
  %v5372 = vrcp.pop %v5337
  %v5373 = vmul.f32 %v4840, %v5372
  %v5374 = vrcp.pop %v5338
  %v5375 = vmul.f32 %v4841, %v5374
  %v5376 = vrcp.pop %v5339
  %v5377 = vmul.f32 %v4842, %v5376
  %v5378 = vrcp.pop %v5340
  %v5379 = vmul.f32 %v4843, %v5378
  %v5380 = vrcp.pop %v5341
  %v5381 = vmul.f32 %v4844, %v5380
  %v5382 = vrcp.pop %v5342
  %v5383 = vmul.f32 %v4845, %v5382
  %v5384 = vrcp.pop %v5343
  %v5385 = vmul.f32 %v4846, %v5384
  %v5386 = vrcp.pop %v5344
  %v5387 = vmul.f32 %v4847, %v5386
  %v5388 = vrcp.pop %v5345
  %v5389 = vmul.f32 %v4848, %v5388
  %v5390 = vrcp.pop %v5346
  %v5391 = vmul.f32 %v4849, %v5390
  %v5392 = vrcp.pop %v5347
  %v5393 = vmul.f32 %v4850, %v5392
  %v5394 = vrcp.pop %v5348
  %v5395 = vmul.f32 %v4851, %v5394
  %v5396 = vrcp.pop %v5349
  %v5397 = vmul.f32 %v4852, %v5396
  %v5398 = vrcp.pop %v5350
  %v5399 = vmul.f32 %v4853, %v5398
  %v5400 = vrcp.pop %v5351
  %v5401 = vmul.f32 %v4854, %v5400
  %v5402 = vrcp.pop %v5352
  %v5403 = vmul.f32 %v4855, %v5402
  %v5404 = vrcp.pop %v5353
  %v5405 = vmul.f32 %v4856, %v5404
  %v5406 = vrcp.pop %v5354
  %v5407 = vmul.f32 %v4857, %v5406
  %v5408 = vrcp.pop %v5355
  %v5409 = vmul.f32 %v4858, %v5408
  %v5410 = vrcp.pop %v5356
  %v5411 = vmul.f32 %v4859, %v5410
  %v5412 = vrcp.pop %v5357
  %v5413 = vmul.f32 %v4860, %v5412
  %v5414 = vrcp.pop %v5358
  %v5415 = vmul.f32 %v4861, %v5414
  %v5416 = vrcp.pop %v5359
  %v5417 = vmul.f32 %v4862, %v5416
  %v5418 = vrcp.pop %v5360
  %v5419 = vmul.f32 %v4863, %v5418
  %v5420 = vrcp.pop %v5361
  %v5421 = vmul.f32 %v4864, %v5420
  %v5422 = vrcp.pop %v5362
  %v5423 = vmul.f32 %v4865, %v5422
  %v5424 = vrcp.pop %v5363
  %v5425 = vmul.f32 %v4866, %v5424
  %v5426 = vrcp.pop %v5364
  %v5427 = vmul.f32 %v4867, %v5426
  %v5428 = vrcp.pop %v5365
  %v5429 = vmul.f32 %v4868, %v5428
  %v5431 = vsel %vm944, %v5319, 0
  %v5434 = vsel %vm944, %v5367, 0
  %v5437 = vsel %vm944, %v5369, 0
  %v5440 = vsel %vm944, %v5371, 0
  %v5443 = vsel %vm944, %v5373, 0
  %5445 = vmatprep.subr.mxu0 0.0
  %5446 = vmatpush1.xpose.msra.mxu0 %v5434
  %5447 = vmatprep.subr.mxu0 0.0
  %5448 = vmatpush1.xpose.msra.mxu0 %v5437
  %5449 = vmatprep.subr.mxu0 0.0
  %5450 = vmatpush1.xpose.msra.mxu0 %v5440
  %5451 = vmatprep.subr.mxu0 0.0
  %5452 = vmatpush1.xpose.msra.mxu0 %v5443
  %5453 = vmatprep.subr.mxu0 0.0
  %5454 = vmatpush1.xpose.msra.mxu0 0.0
  %5455 = vmatprep.subr.mxu0 0.0
  %5456 = vmatpush1.xpose.msra.mxu0 0.0
  %5457 = vmatprep.subr.mxu0 0.0
  %5458 = vmatpush1.xpose.msra.mxu0 0.0
  %5459 = vmatprep.subr.mxu0 0.0
  %5460 = vmatpush1.xpose.msra.mxu0 0.0
  %5461 = vmatprep.subr.mxu0 0.0
  %5462 = vmatpush1.xpose.msra.mxu0 0.0
  %5463 = vmatprep.subr.mxu0 0.0
  %5464 = vmatpush1.xpose.msra.mxu0 0.0
  %5465 = vmatprep.subr.mxu0 0.0
  %5466 = vmatpush1.xpose.msra.mxu0 0.0
  %5467 = vmatprep.subr.mxu0 0.0
  %5468 = vmatpush1.xpose.msra.mxu0 0.0
  %5469 = vmatprep.subr.mxu0 0.0
  %5470 = vmatpush1.xpose.msra.mxu0 0.0
  %5471 = vmatprep.subr.mxu0 0.0
  %5472 = vmatpush1.xpose.msra.mxu0 0.0
  %5473 = vmatprep.subr.mxu0 0.0
  %5474 = vmatpush1.xpose.msra.mxu0 0.0
  %5475 = vmatprep.subr.mxu0 0.0
  %5476 = vmatpush1.xpose.msra.mxu0 0.0
  %5477 = vmatprep.subr.mxu0 0.0
  %5478 = vmatpush1.xpose.msra.mxu0 0.0
  %5479 = vmatprep.subr.mxu0 0.0
  %5480 = vmatpush1.xpose.msra.mxu0 0.0
  %5481 = vmatprep.subr.mxu0 0.0
  %5482 = vmatpush1.xpose.msra.mxu0 0.0
  %5483 = vmatprep.subr.mxu0 0.0
  %5484 = vmatpush1.xpose.msra.mxu0 0.0
  %5485 = vmatprep.subr.mxu0 0.0
  %5486 = vmatpush1.xpose.msra.mxu0 0.0
  %5487 = vmatprep.subr.mxu0 0.0
  %5488 = vmatpush1.xpose.msra.mxu0 0.0
  %5489 = vmatprep.subr.mxu0 0.0
  %5490 = vmatpush1.xpose.msra.mxu0 0.0
  %5491 = vmatprep.subr.mxu0 0.0
  %5492 = vmatpush1.xpose.msra.mxu0 0.0
  %5493 = vmatprep.subr.mxu0 0.0
  %5494 = vmatpush1.xpose.msra.mxu0 0.0
  %5495 = vmatprep.subr.mxu0 0.0
  %5496 = vmatpush1.xpose.msra.mxu0 0.0
  %5497 = vmatprep.subr.mxu0 0.0
  %5498 = vmatpush1.xpose.msra.mxu0 0.0
  %5499 = vmatprep.subr.mxu0 0.0
  %5500 = vmatpush1.xpose.msra.mxu0 0.0
  %5501 = vmatprep.subr.mxu0 0.0
  %5502 = vmatpush1.xpose.msra.mxu0 0.0
  %5503 = vmatprep.subr.mxu0 0.0
  %5504 = vmatpush1.xpose.msra.mxu0 0.0
  %5505 = vmatprep.subr.mxu0 0.0
  %5506 = vmatpush1.xpose.msra.mxu0 0.0
  %5507 = vmatprep.subr.mxu0 0.0
  %5508 = vmatpush1.xpose.msra.mxu0 0.0
  %5509 = vmatprep.mubr.f32.mxu0 0.0
  %5510 = vmatmul.mubr.f32.gmra.mrb[0].mxu0 %v5431
  %v5511 = vpop.f32.mrb[0].mxu0
  %v5512 = vadd.f32 0.0, %v5511
  %v5513 = vpop.f32.mrb[0].mxu0
  %5514 = vdwg.mxu0
  %v5516 = vsel %vm944, %v5321, 0
  %v5519 = vsel %vm944, %v5375, 0
  %v5522 = vsel %vm944, %v5377, 0
  %v5525 = vsel %vm944, %v5379, 0
  %v5528 = vsel %vm944, %v5381, 0
  %5530 = vmatprep.subr.mxu0 0.0
  %5531 = vmatpush1.xpose.msra.mxu0 %v5519
  %5532 = vmatprep.subr.mxu0 0.0
  %5533 = vmatpush1.xpose.msra.mxu0 %v5522
  %5534 = vmatprep.subr.mxu0 0.0
  %5535 = vmatpush1.xpose.msra.mxu0 %v5525
  %5536 = vmatprep.subr.mxu0 0.0
  %5537 = vmatpush1.xpose.msra.mxu0 %v5528
  %5538 = vmatprep.subr.mxu0 0.0
  %5539 = vmatpush1.xpose.msra.mxu0 0.0
  %5540 = vmatprep.subr.mxu0 0.0
  %5541 = vmatpush1.xpose.msra.mxu0 0.0
  %5542 = vmatprep.subr.mxu0 0.0
  %5543 = vmatpush1.xpose.msra.mxu0 0.0
  %5544 = vmatprep.subr.mxu0 0.0
  %5545 = vmatpush1.xpose.msra.mxu0 0.0
  %5546 = vmatprep.subr.mxu0 0.0
  %5547 = vmatpush1.xpose.msra.mxu0 0.0
  %5548 = vmatprep.subr.mxu0 0.0
  %5549 = vmatpush1.xpose.msra.mxu0 0.0
  %5550 = vmatprep.subr.mxu0 0.0
  %5551 = vmatpush1.xpose.msra.mxu0 0.0
  %5552 = vmatprep.subr.mxu0 0.0
  %5553 = vmatpush1.xpose.msra.mxu0 0.0
  %5554 = vmatprep.subr.mxu0 0.0
  %5555 = vmatpush1.xpose.msra.mxu0 0.0
  %5556 = vmatprep.subr.mxu0 0.0
  %5557 = vmatpush1.xpose.msra.mxu0 0.0
  %5558 = vmatprep.subr.mxu0 0.0
  %5559 = vmatpush1.xpose.msra.mxu0 0.0
  %5560 = vmatprep.subr.mxu0 0.0
  %5561 = vmatpush1.xpose.msra.mxu0 0.0
  %5562 = vmatprep.subr.mxu0 0.0
  %5563 = vmatpush1.xpose.msra.mxu0 0.0
  %5564 = vmatprep.subr.mxu0 0.0
  %5565 = vmatpush1.xpose.msra.mxu0 0.0
  %5566 = vmatprep.subr.mxu0 0.0
  %5567 = vmatpush1.xpose.msra.mxu0 0.0
  %5568 = vmatprep.subr.mxu0 0.0
  %5569 = vmatpush1.xpose.msra.mxu0 0.0
  %5570 = vmatprep.subr.mxu0 0.0
  %5571 = vmatpush1.xpose.msra.mxu0 0.0
  %5572 = vmatprep.subr.mxu0 0.0
  %5573 = vmatpush1.xpose.msra.mxu0 0.0
  %5574 = vmatprep.subr.mxu0 0.0
  %5575 = vmatpush1.xpose.msra.mxu0 0.0
  %5576 = vmatprep.subr.mxu0 0.0
  %5577 = vmatpush1.xpose.msra.mxu0 0.0
  %5578 = vmatprep.subr.mxu0 0.0
  %5579 = vmatpush1.xpose.msra.mxu0 0.0
  %5580 = vmatprep.subr.mxu0 0.0
  %5581 = vmatpush1.xpose.msra.mxu0 0.0
  %5582 = vmatprep.subr.mxu0 0.0
  %5583 = vmatpush1.xpose.msra.mxu0 0.0
  %5584 = vmatprep.subr.mxu0 0.0
  %5585 = vmatpush1.xpose.msra.mxu0 0.0
  %5586 = vmatprep.subr.mxu0 0.0
  %5587 = vmatpush1.xpose.msra.mxu0 0.0
  %5588 = vmatprep.subr.mxu0 0.0
  %5589 = vmatpush1.xpose.msra.mxu0 0.0
  %5590 = vmatprep.subr.mxu0 0.0
  %5591 = vmatpush1.xpose.msra.mxu0 0.0
  %5592 = vmatprep.subr.mxu0 0.0
  %5593 = vmatpush1.xpose.msra.mxu0 0.0
  %5594 = vmatprep.mubr.f32.mxu0 0.0
  %5595 = vmatmul.mubr.f32.gmra.mrb[0].mxu0 %v5516
  %v5596 = vpop.f32.mrb[0].mxu0
  %v5597 = vadd.f32 0.0, %v5596
  %v5598 = vpop.f32.mrb[0].mxu0
  %5599 = vdwg.mxu0
  %v5601 = vsel %vm944, %v5323, 0
  %v5604 = vsel %vm944, %v5383, 0
  %v5607 = vsel %vm944, %v5385, 0
  %v5610 = vsel %vm944, %v5387, 0
  %v5613 = vsel %vm944, %v5389, 0
  %5615 = vmatprep.subr.mxu0 0.0
  %5616 = vmatpush1.xpose.msra.mxu0 %v5604
  %5617 = vmatprep.subr.mxu0 0.0
  %5618 = vmatpush1.xpose.msra.mxu0 %v5607
  %5619 = vmatprep.subr.mxu0 0.0
  %5620 = vmatpush1.xpose.msra.mxu0 %v5610
  %5621 = vmatprep.subr.mxu0 0.0
  %5622 = vmatpush1.xpose.msra.mxu0 %v5613
  %5623 = vmatprep.subr.mxu0 0.0
  %5624 = vmatpush1.xpose.msra.mxu0 0.0
  %5625 = vmatprep.subr.mxu0 0.0
  %5626 = vmatpush1.xpose.msra.mxu0 0.0
  %5627 = vmatprep.subr.mxu0 0.0
  %5628 = vmatpush1.xpose.msra.mxu0 0.0
  %5629 = vmatprep.subr.mxu0 0.0
  %5630 = vmatpush1.xpose.msra.mxu0 0.0
  %5631 = vmatprep.subr.mxu0 0.0
  %5632 = vmatpush1.xpose.msra.mxu0 0.0
  %5633 = vmatprep.subr.mxu0 0.0
  %5634 = vmatpush1.xpose.msra.mxu0 0.0
  %5635 = vmatprep.subr.mxu0 0.0
  %5636 = vmatpush1.xpose.msra.mxu0 0.0
  %5637 = vmatprep.subr.mxu0 0.0
  %5638 = vmatpush1.xpose.msra.mxu0 0.0
  %5639 = vmatprep.subr.mxu0 0.0
  %5640 = vmatpush1.xpose.msra.mxu0 0.0
  %5641 = vmatprep.subr.mxu0 0.0
  %5642 = vmatpush1.xpose.msra.mxu0 0.0
  %5643 = vmatprep.subr.mxu0 0.0
  %5644 = vmatpush1.xpose.msra.mxu0 0.0
  %5645 = vmatprep.subr.mxu0 0.0
  %5646 = vmatpush1.xpose.msra.mxu0 0.0
  %5647 = vmatprep.subr.mxu0 0.0
  %5648 = vmatpush1.xpose.msra.mxu0 0.0
  %5649 = vmatprep.subr.mxu0 0.0
  %5650 = vmatpush1.xpose.msra.mxu0 0.0
  %5651 = vmatprep.subr.mxu0 0.0
  %5652 = vmatpush1.xpose.msra.mxu0 0.0
  %5653 = vmatprep.subr.mxu0 0.0
  %5654 = vmatpush1.xpose.msra.mxu0 0.0
  %5655 = vmatprep.subr.mxu0 0.0
  %5656 = vmatpush1.xpose.msra.mxu0 0.0
  %5657 = vmatprep.subr.mxu0 0.0
  %5658 = vmatpush1.xpose.msra.mxu0 0.0
  %5659 = vmatprep.subr.mxu0 0.0
  %5660 = vmatpush1.xpose.msra.mxu0 0.0
  %5661 = vmatprep.subr.mxu0 0.0
  %5662 = vmatpush1.xpose.msra.mxu0 0.0
  %5663 = vmatprep.subr.mxu0 0.0
  %5664 = vmatpush1.xpose.msra.mxu0 0.0
  %5665 = vmatprep.subr.mxu0 0.0
  %5666 = vmatpush1.xpose.msra.mxu0 0.0
  %5667 = vmatprep.subr.mxu0 0.0
  %5668 = vmatpush1.xpose.msra.mxu0 0.0
  %5669 = vmatprep.subr.mxu0 0.0
  %5670 = vmatpush1.xpose.msra.mxu0 0.0
  %5671 = vmatprep.subr.mxu0 0.0
  %5672 = vmatpush1.xpose.msra.mxu0 0.0
  %5673 = vmatprep.subr.mxu0 0.0
  %5674 = vmatpush1.xpose.msra.mxu0 0.0
  %5675 = vmatprep.subr.mxu0 0.0
  %5676 = vmatpush1.xpose.msra.mxu0 0.0
  %5677 = vmatprep.subr.mxu0 0.0
  %5678 = vmatpush1.xpose.msra.mxu0 0.0
  %5679 = vmatprep.mubr.f32.mxu0 0.0
  %5680 = vmatmul.mubr.f32.gmra.mrb[0].mxu0 %v5601
  %v5681 = vpop.f32.mrb[0].mxu0
  %v5682 = vadd.f32 0.0, %v5681
  %v5683 = vpop.f32.mrb[0].mxu0
  %5684 = vdwg.mxu0
  %v5686 = vsel %vm944, %v5325, 0
  %v5689 = vsel %vm944, %v5391, 0
  %v5692 = vsel %vm944, %v5393, 0
  %v5695 = vsel %vm944, %v5395, 0
  %v5698 = vsel %vm944, %v5397, 0
  %5700 = vmatprep.subr.mxu0 0.0
  %5701 = vmatpush1.xpose.msra.mxu0 %v5689
  %5702 = vmatprep.subr.mxu0 0.0
  %5703 = vmatpush1.xpose.msra.mxu0 %v5692
  %5704 = vmatprep.subr.mxu0 0.0
  %5705 = vmatpush1.xpose.msra.mxu0 %v5695
  %5706 = vmatprep.subr.mxu0 0.0
  %5707 = vmatpush1.xpose.msra.mxu0 %v5698
  %5708 = vmatprep.subr.mxu0 0.0
  %5709 = vmatpush1.xpose.msra.mxu0 0.0
  %5710 = vmatprep.subr.mxu0 0.0
  %5711 = vmatpush1.xpose.msra.mxu0 0.0
  %5712 = vmatprep.subr.mxu0 0.0
  %5713 = vmatpush1.xpose.msra.mxu0 0.0
  %5714 = vmatprep.subr.mxu0 0.0
  %5715 = vmatpush1.xpose.msra.mxu0 0.0
  %5716 = vmatprep.subr.mxu0 0.0
  %5717 = vmatpush1.xpose.msra.mxu0 0.0
  %5718 = vmatprep.subr.mxu0 0.0
  %5719 = vmatpush1.xpose.msra.mxu0 0.0
  %5720 = vmatprep.subr.mxu0 0.0
  %5721 = vmatpush1.xpose.msra.mxu0 0.0
  %5722 = vmatprep.subr.mxu0 0.0
  %5723 = vmatpush1.xpose.msra.mxu0 0.0
  %5724 = vmatprep.subr.mxu0 0.0
  %5725 = vmatpush1.xpose.msra.mxu0 0.0
  %5726 = vmatprep.subr.mxu0 0.0
  %5727 = vmatpush1.xpose.msra.mxu0 0.0
  %5728 = vmatprep.subr.mxu0 0.0
  %5729 = vmatpush1.xpose.msra.mxu0 0.0
  %5730 = vmatprep.subr.mxu0 0.0
  %5731 = vmatpush1.xpose.msra.mxu0 0.0
  %5732 = vmatprep.subr.mxu0 0.0
  %5733 = vmatpush1.xpose.msra.mxu0 0.0
  %5734 = vmatprep.subr.mxu0 0.0
  %5735 = vmatpush1.xpose.msra.mxu0 0.0
  %5736 = vmatprep.subr.mxu0 0.0
  %5737 = vmatpush1.xpose.msra.mxu0 0.0
  %5738 = vmatprep.subr.mxu0 0.0
  %5739 = vmatpush1.xpose.msra.mxu0 0.0
  %5740 = vmatprep.subr.mxu0 0.0
  %5741 = vmatpush1.xpose.msra.mxu0 0.0
  %5742 = vmatprep.subr.mxu0 0.0
  %5743 = vmatpush1.xpose.msra.mxu0 0.0
  %5744 = vmatprep.subr.mxu0 0.0
  %5745 = vmatpush1.xpose.msra.mxu0 0.0
  %5746 = vmatprep.subr.mxu0 0.0
  %5747 = vmatpush1.xpose.msra.mxu0 0.0
  %5748 = vmatprep.subr.mxu0 0.0
  %5749 = vmatpush1.xpose.msra.mxu0 0.0
  %5750 = vmatprep.subr.mxu0 0.0
  %5751 = vmatpush1.xpose.msra.mxu0 0.0
  %5752 = vmatprep.subr.mxu0 0.0
  %5753 = vmatpush1.xpose.msra.mxu0 0.0
  %5754 = vmatprep.subr.mxu0 0.0
  %5755 = vmatpush1.xpose.msra.mxu0 0.0
  %5756 = vmatprep.subr.mxu0 0.0
  %5757 = vmatpush1.xpose.msra.mxu0 0.0
  %5758 = vmatprep.subr.mxu0 0.0
  %5759 = vmatpush1.xpose.msra.mxu0 0.0
  %5760 = vmatprep.subr.mxu0 0.0
  %5761 = vmatpush1.xpose.msra.mxu0 0.0
  %5762 = vmatprep.subr.mxu0 0.0
  %5763 = vmatpush1.xpose.msra.mxu0 0.0
  %5764 = vmatprep.mubr.f32.mxu0 0.0
  %5765 = vmatmul.mubr.f32.gmra.mrb[0].mxu0 %v5686
  %v5766 = vpop.f32.mrb[0].mxu0
  %v5767 = vadd.f32 0.0, %v5766
  %v5768 = vpop.f32.mrb[0].mxu0
  %5769 = vdwg.mxu0
  %v5771 = vsel %vm944, %v5327, 0
  %v5774 = vsel %vm944, %v5399, 0
  %v5777 = vsel %vm944, %v5401, 0
  %v5780 = vsel %vm944, %v5403, 0
  %v5783 = vsel %vm944, %v5405, 0
  %5785 = vmatprep.subr.mxu0 0.0
  %5786 = vmatpush1.xpose.msra.mxu0 %v5774
  %5787 = vmatprep.subr.mxu0 0.0
  %5788 = vmatpush1.xpose.msra.mxu0 %v5777
  %5789 = vmatprep.subr.mxu0 0.0
  %5790 = vmatpush1.xpose.msra.mxu0 %v5780
  %5791 = vmatprep.subr.mxu0 0.0
  %5792 = vmatpush1.xpose.msra.mxu0 %v5783
  %5793 = vmatprep.subr.mxu0 0.0
  %5794 = vmatpush1.xpose.msra.mxu0 0.0
  %5795 = vmatprep.subr.mxu0 0.0
  %5796 = vmatpush1.xpose.msra.mxu0 0.0
  %5797 = vmatprep.subr.mxu0 0.0
  %5798 = vmatpush1.xpose.msra.mxu0 0.0
  %5799 = vmatprep.subr.mxu0 0.0
  %5800 = vmatpush1.xpose.msra.mxu0 0.0
  %5801 = vmatprep.subr.mxu0 0.0
  %5802 = vmatpush1.xpose.msra.mxu0 0.0
  %5803 = vmatprep.subr.mxu0 0.0
  %5804 = vmatpush1.xpose.msra.mxu0 0.0
  %5805 = vmatprep.subr.mxu0 0.0
  %5806 = vmatpush1.xpose.msra.mxu0 0.0
  %5807 = vmatprep.subr.mxu0 0.0
  %5808 = vmatpush1.xpose.msra.mxu0 0.0
  %5809 = vmatprep.subr.mxu0 0.0
  %5810 = vmatpush1.xpose.msra.mxu0 0.0
  %5811 = vmatprep.subr.mxu0 0.0
  %5812 = vmatpush1.xpose.msra.mxu0 0.0
  %5813 = vmatprep.subr.mxu0 0.0
  %5814 = vmatpush1.xpose.msra.mxu0 0.0
  %5815 = vmatprep.subr.mxu0 0.0
  %5816 = vmatpush1.xpose.msra.mxu0 0.0
  %5817 = vmatprep.subr.mxu0 0.0
  %5818 = vmatpush1.xpose.msra.mxu0 0.0
  %5819 = vmatprep.subr.mxu0 0.0
  %5820 = vmatpush1.xpose.msra.mxu0 0.0
  %5821 = vmatprep.subr.mxu0 0.0
  %5822 = vmatpush1.xpose.msra.mxu0 0.0
  %5823 = vmatprep.subr.mxu0 0.0
  %5824 = vmatpush1.xpose.msra.mxu0 0.0
  %5825 = vmatprep.subr.mxu0 0.0
  %5826 = vmatpush1.xpose.msra.mxu0 0.0
  %5827 = vmatprep.subr.mxu0 0.0
  %5828 = vmatpush1.xpose.msra.mxu0 0.0
  %5829 = vmatprep.subr.mxu0 0.0
  %5830 = vmatpush1.xpose.msra.mxu0 0.0
  %5831 = vmatprep.subr.mxu0 0.0
  %5832 = vmatpush1.xpose.msra.mxu0 0.0
  %5833 = vmatprep.subr.mxu0 0.0
  %5834 = vmatpush1.xpose.msra.mxu0 0.0
  %5835 = vmatprep.subr.mxu0 0.0
  %5836 = vmatpush1.xpose.msra.mxu0 0.0
  %5837 = vmatprep.subr.mxu0 0.0
  %5838 = vmatpush1.xpose.msra.mxu0 0.0
  %5839 = vmatprep.subr.mxu0 0.0
  %5840 = vmatpush1.xpose.msra.mxu0 0.0
  %5841 = vmatprep.subr.mxu0 0.0
  %5842 = vmatpush1.xpose.msra.mxu0 0.0
  %5843 = vmatprep.subr.mxu0 0.0
  %5844 = vmatpush1.xpose.msra.mxu0 0.0
  %5845 = vmatprep.subr.mxu0 0.0
  %5846 = vmatpush1.xpose.msra.mxu0 0.0
  %5847 = vmatprep.subr.mxu0 0.0
  %5848 = vmatpush1.xpose.msra.mxu0 0.0
  %5849 = vmatprep.mubr.f32.mxu0 0.0
  %5850 = vmatmul.mubr.f32.gmra.mrb[0].mxu0 %v5771
  %v5851 = vpop.f32.mrb[0].mxu0
  %v5852 = vadd.f32 0.0, %v5851
  %v5853 = vpop.f32.mrb[0].mxu0
  %5854 = vdwg.mxu0
  %v5856 = vsel %vm944, %v5329, 0
  %v5859 = vsel %vm944, %v5407, 0
  %v5862 = vsel %vm944, %v5409, 0
  %v5865 = vsel %vm944, %v5411, 0
  %v5868 = vsel %vm944, %v5413, 0
  %5870 = vmatprep.subr.mxu0 0.0
  %5871 = vmatpush1.xpose.msra.mxu0 %v5859
  %5872 = vmatprep.subr.mxu0 0.0
  %5873 = vmatpush1.xpose.msra.mxu0 %v5862
  %5874 = vmatprep.subr.mxu0 0.0
  %5875 = vmatpush1.xpose.msra.mxu0 %v5865
  %5876 = vmatprep.subr.mxu0 0.0
  %5877 = vmatpush1.xpose.msra.mxu0 %v5868
  %5878 = vmatprep.subr.mxu0 0.0
  %5879 = vmatpush1.xpose.msra.mxu0 0.0
  %5880 = vmatprep.subr.mxu0 0.0
  %5881 = vmatpush1.xpose.msra.mxu0 0.0
  %5882 = vmatprep.subr.mxu0 0.0
  %5883 = vmatpush1.xpose.msra.mxu0 0.0
  %5884 = vmatprep.subr.mxu0 0.0
  %5885 = vmatpush1.xpose.msra.mxu0 0.0
  %5886 = vmatprep.subr.mxu0 0.0
  %5887 = vmatpush1.xpose.msra.mxu0 0.0
  %5888 = vmatprep.subr.mxu0 0.0
  %5889 = vmatpush1.xpose.msra.mxu0 0.0
  %5890 = vmatprep.subr.mxu0 0.0
  %5891 = vmatpush1.xpose.msra.mxu0 0.0
  %5892 = vmatprep.subr.mxu0 0.0
  %5893 = vmatpush1.xpose.msra.mxu0 0.0
  %5894 = vmatprep.subr.mxu0 0.0
  %5895 = vmatpush1.xpose.msra.mxu0 0.0
  %5896 = vmatprep.subr.mxu0 0.0
  %5897 = vmatpush1.xpose.msra.mxu0 0.0
  %5898 = vmatprep.subr.mxu0 0.0
  %5899 = vmatpush1.xpose.msra.mxu0 0.0
  %5900 = vmatprep.subr.mxu0 0.0
  %5901 = vmatpush1.xpose.msra.mxu0 0.0
  %5902 = vmatprep.subr.mxu0 0.0
  %5903 = vmatpush1.xpose.msra.mxu0 0.0
  %5904 = vmatprep.subr.mxu0 0.0
  %5905 = vmatpush1.xpose.msra.mxu0 0.0
  %5906 = vmatprep.subr.mxu0 0.0
  %5907 = vmatpush1.xpose.msra.mxu0 0.0
  %5908 = vmatprep.subr.mxu0 0.0
  %5909 = vmatpush1.xpose.msra.mxu0 0.0
  %5910 = vmatprep.subr.mxu0 0.0
  %5911 = vmatpush1.xpose.msra.mxu0 0.0
  %5912 = vmatprep.subr.mxu0 0.0
  %5913 = vmatpush1.xpose.msra.mxu0 0.0
  %5914 = vmatprep.subr.mxu0 0.0
  %5915 = vmatpush1.xpose.msra.mxu0 0.0
  %5916 = vmatprep.subr.mxu0 0.0
  %5917 = vmatpush1.xpose.msra.mxu0 0.0
  %5918 = vmatprep.subr.mxu0 0.0
  %5919 = vmatpush1.xpose.msra.mxu0 0.0
  %5920 = vmatprep.subr.mxu0 0.0
  %5921 = vmatpush1.xpose.msra.mxu0 0.0
  %5922 = vmatprep.subr.mxu0 0.0
  %5923 = vmatpush1.xpose.msra.mxu0 0.0
  %5924 = vmatprep.subr.mxu0 0.0
  %5925 = vmatpush1.xpose.msra.mxu0 0.0
  %5926 = vmatprep.subr.mxu0 0.0
  %5927 = vmatpush1.xpose.msra.mxu0 0.0
  %5928 = vmatprep.subr.mxu0 0.0
  %5929 = vmatpush1.xpose.msra.mxu0 0.0
  %5930 = vmatprep.subr.mxu0 0.0
  %5931 = vmatpush1.xpose.msra.mxu0 0.0
  %5932 = vmatprep.subr.mxu0 0.0
  %5933 = vmatpush1.xpose.msra.mxu0 0.0
  %5934 = vmatprep.mubr.f32.mxu0 0.0
  %5935 = vmatmul.mubr.f32.gmra.mrb[0].mxu0 %v5856
  %v5936 = vpop.f32.mrb[0].mxu0
  %v5937 = vadd.f32 0.0, %v5936
  %v5938 = vpop.f32.mrb[0].mxu0
  %5939 = vdwg.mxu0
  %v5941 = vsel %vm944, %v5331, 0
  %v5944 = vsel %vm944, %v5415, 0
  %v5947 = vsel %vm944, %v5417, 0
  %v5950 = vsel %vm944, %v5419, 0
  %v5953 = vsel %vm944, %v5421, 0
  %5955 = vmatprep.subr.mxu0 0.0
  %5956 = vmatpush1.xpose.msra.mxu0 %v5944
  %5957 = vmatprep.subr.mxu0 0.0
  %5958 = vmatpush1.xpose.msra.mxu0 %v5947
  %5959 = vmatprep.subr.mxu0 0.0
  %5960 = vmatpush1.xpose.msra.mxu0 %v5950
  %5961 = vmatprep.subr.mxu0 0.0
  %5962 = vmatpush1.xpose.msra.mxu0 %v5953
  %5963 = vmatprep.subr.mxu0 0.0
  %5964 = vmatpush1.xpose.msra.mxu0 0.0
  %5965 = vmatprep.subr.mxu0 0.0
  %5966 = vmatpush1.xpose.msra.mxu0 0.0
  %5967 = vmatprep.subr.mxu0 0.0
  %5968 = vmatpush1.xpose.msra.mxu0 0.0
  %5969 = vmatprep.subr.mxu0 0.0
  %5970 = vmatpush1.xpose.msra.mxu0 0.0
  %5971 = vmatprep.subr.mxu0 0.0
  %5972 = vmatpush1.xpose.msra.mxu0 0.0
  %5973 = vmatprep.subr.mxu0 0.0
  %5974 = vmatpush1.xpose.msra.mxu0 0.0
  %5975 = vmatprep.subr.mxu0 0.0
  %5976 = vmatpush1.xpose.msra.mxu0 0.0
  %5977 = vmatprep.subr.mxu0 0.0
  %5978 = vmatpush1.xpose.msra.mxu0 0.0
  %5979 = vmatprep.subr.mxu0 0.0
  %5980 = vmatpush1.xpose.msra.mxu0 0.0
  %5981 = vmatprep.subr.mxu0 0.0
  %5982 = vmatpush1.xpose.msra.mxu0 0.0
  %5983 = vmatprep.subr.mxu0 0.0
  %5984 = vmatpush1.xpose.msra.mxu0 0.0
  %5985 = vmatprep.subr.mxu0 0.0
  %5986 = vmatpush1.xpose.msra.mxu0 0.0
  %5987 = vmatprep.subr.mxu0 0.0
  %5988 = vmatpush1.xpose.msra.mxu0 0.0
  %5989 = vmatprep.subr.mxu0 0.0
  %5990 = vmatpush1.xpose.msra.mxu0 0.0
  %5991 = vmatprep.subr.mxu0 0.0
  %5992 = vmatpush1.xpose.msra.mxu0 0.0
  %5993 = vmatprep.subr.mxu0 0.0
  %5994 = vmatpush1.xpose.msra.mxu0 0.0
  %5995 = vmatprep.subr.mxu0 0.0
  %5996 = vmatpush1.xpose.msra.mxu0 0.0
  %5997 = vmatprep.subr.mxu0 0.0
  %5998 = vmatpush1.xpose.msra.mxu0 0.0
  %5999 = vmatprep.subr.mxu0 0.0
  %6000 = vmatpush1.xpose.msra.mxu0 0.0
  %6001 = vmatprep.subr.mxu0 0.0
  %6002 = vmatpush1.xpose.msra.mxu0 0.0
  %6003 = vmatprep.subr.mxu0 0.0
  %6004 = vmatpush1.xpose.msra.mxu0 0.0
  %6005 = vmatprep.subr.mxu0 0.0
  %6006 = vmatpush1.xpose.msra.mxu0 0.0
  %6007 = vmatprep.subr.mxu0 0.0
  %6008 = vmatpush1.xpose.msra.mxu0 0.0
  %6009 = vmatprep.subr.mxu0 0.0
  %6010 = vmatpush1.xpose.msra.mxu0 0.0
  %6011 = vmatprep.subr.mxu0 0.0
  %6012 = vmatpush1.xpose.msra.mxu0 0.0
  %6013 = vmatprep.subr.mxu0 0.0
  %6014 = vmatpush1.xpose.msra.mxu0 0.0
  %6015 = vmatprep.subr.mxu0 0.0
  %6016 = vmatpush1.xpose.msra.mxu0 0.0
  %6017 = vmatprep.subr.mxu0 0.0
  %6018 = vmatpush1.xpose.msra.mxu0 0.0
  %6019 = vmatprep.mubr.f32.mxu0 0.0
  %6020 = vmatmul.mubr.f32.gmra.mrb[0].mxu0 %v5941
  %v6021 = vpop.f32.mrb[0].mxu0
  %v6022 = vadd.f32 0.0, %v6021
  %v6023 = vpop.f32.mrb[0].mxu0
  %6024 = vdwg.mxu0
  %v6026 = vsel %vm944, %v5333, 0
  %v6029 = vsel %vm944, %v5423, 0
  %v6032 = vsel %vm944, %v5425, 0
  %v6035 = vsel %vm944, %v5427, 0
  %v6038 = vsel %vm944, %v5429, 0
  %6040 = vmatprep.subr.mxu0 0.0
  %6041 = vmatpush1.xpose.msra.mxu0 %v6029
  %6042 = vmatprep.subr.mxu0 0.0
  %6043 = vmatpush1.xpose.msra.mxu0 %v6032
  %6044 = vmatprep.subr.mxu0 0.0
  %6045 = vmatpush1.xpose.msra.mxu0 %v6035
  %6046 = vmatprep.subr.mxu0 0.0
  %6047 = vmatpush1.xpose.msra.mxu0 %v6038
  %6048 = vmatprep.subr.mxu0 0.0
  %6049 = vmatpush1.xpose.msra.mxu0 0.0
  %6050 = vmatprep.subr.mxu0 0.0
  %6051 = vmatpush1.xpose.msra.mxu0 0.0
  %6052 = vmatprep.subr.mxu0 0.0
  %6053 = vmatpush1.xpose.msra.mxu0 0.0
  %6054 = vmatprep.subr.mxu0 0.0
  %6055 = vmatpush1.xpose.msra.mxu0 0.0
  %6056 = vmatprep.subr.mxu0 0.0
  %6057 = vmatpush1.xpose.msra.mxu0 0.0
  %6058 = vmatprep.subr.mxu0 0.0
  %6059 = vmatpush1.xpose.msra.mxu0 0.0
  %6060 = vmatprep.subr.mxu0 0.0
  %6061 = vmatpush1.xpose.msra.mxu0 0.0
  %6062 = vmatprep.subr.mxu0 0.0
  %6063 = vmatpush1.xpose.msra.mxu0 0.0
  %6064 = vmatprep.subr.mxu0 0.0
  %6065 = vmatpush1.xpose.msra.mxu0 0.0
  %6066 = vmatprep.subr.mxu0 0.0
  %6067 = vmatpush1.xpose.msra.mxu0 0.0
  %6068 = vmatprep.subr.mxu0 0.0
  %6069 = vmatpush1.xpose.msra.mxu0 0.0
  %6070 = vmatprep.subr.mxu0 0.0
  %6071 = vmatpush1.xpose.msra.mxu0 0.0
  %6072 = vmatprep.subr.mxu0 0.0
  %6073 = vmatpush1.xpose.msra.mxu0 0.0
  %6074 = vmatprep.subr.mxu0 0.0
  %6075 = vmatpush1.xpose.msra.mxu0 0.0
  %6076 = vmatprep.subr.mxu0 0.0
  %6077 = vmatpush1.xpose.msra.mxu0 0.0
  %6078 = vmatprep.subr.mxu0 0.0
  %6079 = vmatpush1.xpose.msra.mxu0 0.0
  %6080 = vmatprep.subr.mxu0 0.0
  %6081 = vmatpush1.xpose.msra.mxu0 0.0
  %6082 = vmatprep.subr.mxu0 0.0
  %6083 = vmatpush1.xpose.msra.mxu0 0.0
  %6084 = vmatprep.subr.mxu0 0.0
  %6085 = vmatpush1.xpose.msra.mxu0 0.0
  %6086 = vmatprep.subr.mxu0 0.0
  %6087 = vmatpush1.xpose.msra.mxu0 0.0
  %6088 = vmatprep.subr.mxu0 0.0
  %6089 = vmatpush1.xpose.msra.mxu0 0.0
  %6090 = vmatprep.subr.mxu0 0.0
  %6091 = vmatpush1.xpose.msra.mxu0 0.0
  %6092 = vmatprep.subr.mxu0 0.0
  %6093 = vmatpush1.xpose.msra.mxu0 0.0
  %6094 = vmatprep.subr.mxu0 0.0
  %6095 = vmatpush1.xpose.msra.mxu0 0.0
  %6096 = vmatprep.subr.mxu0 0.0
  %6097 = vmatpush1.xpose.msra.mxu0 0.0
  %6098 = vmatprep.subr.mxu0 0.0
  %6099 = vmatpush1.xpose.msra.mxu0 0.0
  %6100 = vmatprep.subr.mxu0 0.0
  %6101 = vmatpush1.xpose.msra.mxu0 0.0
  %6102 = vmatprep.subr.mxu0 0.0
  %6103 = vmatpush1.xpose.msra.mxu0 0.0
  %6104 = vmatprep.mubr.f32.mxu0 0.0
  %6105 = vmatmul.mubr.f32.gmra.mrb[0].mxu0 %v6026
  %v6106 = vpop.f32.mrb[0].mxu0
  %v6107 = vadd.f32 0.0, %v6106
  %v6108 = vpop.f32.mrb[0].mxu0
  %6109 = vdwg.mxu0
  %v6110 = vmul.f32 %v5512, %v240
  %v6111 = vmul.f32 %v5597, %v248
  %v6112 = vmul.f32 %v5682, %v256
  %v6113 = vmul.f32 %v5767, %v264
  %v6114 = vmul.f32 %v5852, %v272
  %v6115 = vmul.f32 %v5937, %v280
  %v6116 = vmul.f32 %v6022, %v288
  %v6117 = vmul.f32 %v6107, %v296
  %vm6118 = vcmask 257024
  %v6119 = vsel %vm6118, %v6110, -inf
  %6120 = vmax.xlane.f32.xlu0 %v6119
  %v6121 = vpop.xlane.xlu0 %6120
  %v6122 = vsel %vm6118, %v6111, -inf
  %6123 = vmax.xlane.f32.xlu0 %v6122
  %v6124 = vpop.xlane.xlu0 %6123
  %v6125 = vsel %vm6118, %v6112, -inf
  %6126 = vmax.xlane.f32.xlu0 %v6125
  %v6127 = vpop.xlane.xlu0 %6126
  %v6128 = vsel %vm6118, %v6113, -inf
  %6129 = vmax.xlane.f32.xlu0 %v6128
  %v6130 = vpop.xlane.xlu0 %6129
  %v6131 = vsel %vm6118, %v6114, -inf
  %6132 = vmax.xlane.f32.xlu0 %v6131
  %v6133 = vpop.xlane.xlu0 %6132
  %v6134 = vsel %vm6118, %v6115, -inf
  %6135 = vmax.xlane.f32.xlu0 %v6134
  %v6136 = vpop.xlane.xlu0 %6135
  %v6137 = vsel %vm6118, %v6116, -inf
  %6138 = vmax.xlane.f32.xlu0 %v6137
  %v6139 = vpop.xlane.xlu0 %6138
  %v6140 = vsel %vm6118, %v6117, -inf
  %6141 = vmax.xlane.f32.xlu0 %v6140
  %v6142 = vpop.xlane.xlu0 %6141
  %v6143 = vsub.f32 %v6110, %v6121
  %v6144 = vsub.f32 %v6111, %v6124
  %v6145 = vsub.f32 %v6112, %v6127
  %v6146 = vsub.f32 %v6113, %v6130
  %v6147 = vsub.f32 %v6114, %v6133
  %v6148 = vsub.f32 %v6115, %v6136
  %v6149 = vsub.f32 %v6116, %v6139
  %v6150 = vsub.f32 %v6117, %v6142
  %v6151 = vmul.f32 %v6143, 1.442695
  %v6152 = vpow.pop %v6151
  %v6153 = vmul.f32 %v6144, 1.442695
  %v6154 = vpow.pop %v6153
  %v6155 = vmul.f32 %v6145, 1.442695
  %v6156 = vpow.pop %v6155
  %v6157 = vmul.f32 %v6146, 1.442695
  %v6158 = vpow.pop %v6157
  %v6159 = vmul.f32 %v6147, 1.442695
  %v6160 = vpow.pop %v6159
  %v6161 = vmul.f32 %v6148, 1.442695
  %v6162 = vpow.pop %v6161
  %v6163 = vmul.f32 %v6149, 1.442695
  %v6164 = vpow.pop %v6163
  %v6165 = vmul.f32 %v6150, 1.442695
  %v6166 = vpow.pop %v6165
  %v6167 = vsel %vm6118, %v6152, 0.0
  %6168 = vadd.xlane.f32.xlu0 %v6167
  %v6169 = vpop.xlane.xlu0 %6168
  %v6170 = vsel %vm6118, %v6154, 0.0
  %6171 = vadd.xlane.f32.xlu0 %v6170
  %v6172 = vpop.xlane.xlu0 %6171
  %v6173 = vsel %vm6118, %v6156, 0.0
  %6174 = vadd.xlane.f32.xlu0 %v6173
  %v6175 = vpop.xlane.xlu0 %6174
  %v6176 = vsel %vm6118, %v6158, 0.0
  %6177 = vadd.xlane.f32.xlu0 %v6176
  %v6178 = vpop.xlane.xlu0 %6177
  %v6179 = vsel %vm6118, %v6160, 0.0
  %6180 = vadd.xlane.f32.xlu0 %v6179
  %v6181 = vpop.xlane.xlu0 %6180
  %v6182 = vsel %vm6118, %v6162, 0.0
  %6183 = vadd.xlane.f32.xlu0 %v6182
  %v6184 = vpop.xlane.xlu0 %6183
  %v6185 = vsel %vm6118, %v6164, 0.0
  %6186 = vadd.xlane.f32.xlu0 %v6185
  %v6187 = vpop.xlane.xlu0 %6186
  %v6188 = vsel %vm6118, %v6166, 0.0
  %6189 = vadd.xlane.f32.xlu0 %v6188
  %v6190 = vpop.xlane.xlu0 %6189
  %v6191 = vrcp.pop %v6169
  %v6192 = vmul.f32 %v6152, %v6191
  %v6193 = vrcp.pop %v6172
  %v6194 = vmul.f32 %v6154, %v6193
  %v6195 = vrcp.pop %v6175
  %v6196 = vmul.f32 %v6156, %v6195
  %v6197 = vrcp.pop %v6178
  %v6198 = vmul.f32 %v6158, %v6197
  %v6199 = vrcp.pop %v6181
  %v6200 = vmul.f32 %v6160, %v6199
  %v6201 = vrcp.pop %v6184
  %v6202 = vmul.f32 %v6162, %v6201
  %v6203 = vrcp.pop %v6187
  %v6204 = vmul.f32 %v6164, %v6203
  %v6205 = vrcp.pop %v6190
  %v6206 = vmul.f32 %v6166, %v6205
  %v6208 = vsel %vm34, %v6192, 0
  %6210 = vmatprep.subr.mxu0 0.0
  %6211 = vmatpush1.msra.mxu0 %v4837
  %6212 = vmatprep.subr.mxu0 0.0
  %6213 = vmatpush1.msra.mxu0 %v4838
  %6214 = vmatprep.subr.mxu0 0.0
  %6215 = vmatpush1.msra.mxu0 %v4839
  %6216 = vmatprep.subr.mxu0 0.0
  %6217 = vmatpush1.msra.mxu0 %v4840
  %6218 = vmatprep.subr.mxu0 0.0
  %6219 = vmatpush1.msra.mxu0 0.0
  %6220 = vmatprep.subr.mxu0 0.0
  %6221 = vmatpush1.msra.mxu0 0.0
  %6222 = vmatprep.subr.mxu0 0.0
  %6223 = vmatpush1.msra.mxu0 0.0
  %6224 = vmatprep.subr.mxu0 0.0
  %6225 = vmatpush1.msra.mxu0 0.0
  %6226 = vmatprep.subr.mxu0 0.0
  %6227 = vmatpush1.msra.mxu0 0.0
  %6228 = vmatprep.subr.mxu0 0.0
  %6229 = vmatpush1.msra.mxu0 0.0
  %6230 = vmatprep.subr.mxu0 0.0
  %6231 = vmatpush1.msra.mxu0 0.0
  %6232 = vmatprep.subr.mxu0 0.0
  %6233 = vmatpush1.msra.mxu0 0.0
  %6234 = vmatprep.subr.mxu0 0.0
  %6235 = vmatpush1.msra.mxu0 0.0
  %6236 = vmatprep.subr.mxu0 0.0
  %6237 = vmatpush1.msra.mxu0 0.0
  %6238 = vmatprep.subr.mxu0 0.0
  %6239 = vmatpush1.msra.mxu0 0.0
  %6240 = vmatprep.subr.mxu0 0.0
  %6241 = vmatpush1.msra.mxu0 0.0
  %6242 = vmatprep.subr.mxu0 0.0
  %6243 = vmatpush1.msra.mxu0 0.0
  %6244 = vmatprep.subr.mxu0 0.0
  %6245 = vmatpush1.msra.mxu0 0.0
  %6246 = vmatprep.subr.mxu0 0.0
  %6247 = vmatpush1.msra.mxu0 0.0
  %6248 = vmatprep.subr.mxu0 0.0
  %6249 = vmatpush1.msra.mxu0 0.0
  %6250 = vmatprep.subr.mxu0 0.0
  %6251 = vmatpush1.msra.mxu0 0.0
  %6252 = vmatprep.subr.mxu0 0.0
  %6253 = vmatpush1.msra.mxu0 0.0
  %6254 = vmatprep.subr.mxu0 0.0
  %6255 = vmatpush1.msra.mxu0 0.0
  %6256 = vmatprep.subr.mxu0 0.0
  %6257 = vmatpush1.msra.mxu0 0.0
  %6258 = vmatprep.subr.mxu0 0.0
  %6259 = vmatpush1.msra.mxu0 0.0
  %6260 = vmatprep.subr.mxu0 0.0
  %6261 = vmatpush1.msra.mxu0 0.0
  %6262 = vmatprep.subr.mxu0 0.0
  %6263 = vmatpush1.msra.mxu0 0.0
  %6264 = vmatprep.subr.mxu0 0.0
  %6265 = vmatpush1.msra.mxu0 0.0
  %6266 = vmatprep.subr.mxu0 0.0
  %6267 = vmatpush1.msra.mxu0 0.0
  %6268 = vmatprep.subr.mxu0 0.0
  %6269 = vmatpush1.msra.mxu0 0.0
  %6270 = vmatprep.subr.mxu0 0.0
  %6271 = vmatpush1.msra.mxu0 0.0
  %6272 = vmatprep.subr.mxu0 0.0
  %6273 = vmatpush1.msra.mxu0 0.0
  %6274 = vmatprep.mubr.f32.mxu0 0.0
  %6275 = vmatmul.mubr.f32.gmra.mrb[0].mxu0 %v6208
  %v6276 = vpop.f32.mrb[0].mxu0
  %v6277 = vadd.f32 0.0, %v6276
  %v6278 = vpop.f32.mrb[0].mxu0
  %6279 = vdwg.mxu0
  %v6281 = vsel %vm34, %v6194, 0
  %6283 = vmatprep.subr.mxu0 0.0
  %6284 = vmatpush1.msra.mxu0 %v4841
  %6285 = vmatprep.subr.mxu0 0.0
  %6286 = vmatpush1.msra.mxu0 %v4842
  %6287 = vmatprep.subr.mxu0 0.0
  %6288 = vmatpush1.msra.mxu0 %v4843
  %6289 = vmatprep.subr.mxu0 0.0
  %6290 = vmatpush1.msra.mxu0 %v4844
  %6291 = vmatprep.subr.mxu0 0.0
  %6292 = vmatpush1.msra.mxu0 0.0
  %6293 = vmatprep.subr.mxu0 0.0
  %6294 = vmatpush1.msra.mxu0 0.0
  %6295 = vmatprep.subr.mxu0 0.0
  %6296 = vmatpush1.msra.mxu0 0.0
  %6297 = vmatprep.subr.mxu0 0.0
  %6298 = vmatpush1.msra.mxu0 0.0
  %6299 = vmatprep.subr.mxu0 0.0
  %6300 = vmatpush1.msra.mxu0 0.0
  %6301 = vmatprep.subr.mxu0 0.0
  %6302 = vmatpush1.msra.mxu0 0.0
  %6303 = vmatprep.subr.mxu0 0.0
  %6304 = vmatpush1.msra.mxu0 0.0
  %6305 = vmatprep.subr.mxu0 0.0
  %6306 = vmatpush1.msra.mxu0 0.0
  %6307 = vmatprep.subr.mxu0 0.0
  %6308 = vmatpush1.msra.mxu0 0.0
  %6309 = vmatprep.subr.mxu0 0.0
  %6310 = vmatpush1.msra.mxu0 0.0
  %6311 = vmatprep.subr.mxu0 0.0
  %6312 = vmatpush1.msra.mxu0 0.0
  %6313 = vmatprep.subr.mxu0 0.0
  %6314 = vmatpush1.msra.mxu0 0.0
  %6315 = vmatprep.subr.mxu0 0.0
  %6316 = vmatpush1.msra.mxu0 0.0
  %6317 = vmatprep.subr.mxu0 0.0
  %6318 = vmatpush1.msra.mxu0 0.0
  %6319 = vmatprep.subr.mxu0 0.0
  %6320 = vmatpush1.msra.mxu0 0.0
  %6321 = vmatprep.subr.mxu0 0.0
  %6322 = vmatpush1.msra.mxu0 0.0
  %6323 = vmatprep.subr.mxu0 0.0
  %6324 = vmatpush1.msra.mxu0 0.0
  %6325 = vmatprep.subr.mxu0 0.0
  %6326 = vmatpush1.msra.mxu0 0.0
  %6327 = vmatprep.subr.mxu0 0.0
  %6328 = vmatpush1.msra.mxu0 0.0
  %6329 = vmatprep.subr.mxu0 0.0
  %6330 = vmatpush1.msra.mxu0 0.0
  %6331 = vmatprep.subr.mxu0 0.0
  %6332 = vmatpush1.msra.mxu0 0.0
  %6333 = vmatprep.subr.mxu0 0.0
  %6334 = vmatpush1.msra.mxu0 0.0
  %6335 = vmatprep.subr.mxu0 0.0
  %6336 = vmatpush1.msra.mxu0 0.0
  %6337 = vmatprep.subr.mxu0 0.0
  %6338 = vmatpush1.msra.mxu0 0.0
  %6339 = vmatprep.subr.mxu0 0.0
  %6340 = vmatpush1.msra.mxu0 0.0
  %6341 = vmatprep.subr.mxu0 0.0
  %6342 = vmatpush1.msra.mxu0 0.0
  %6343 = vmatprep.subr.mxu0 0.0
  %6344 = vmatpush1.msra.mxu0 0.0
  %6345 = vmatprep.subr.mxu0 0.0
  %6346 = vmatpush1.msra.mxu0 0.0
  %6347 = vmatprep.mubr.f32.mxu0 0.0
  %6348 = vmatmul.mubr.f32.gmra.mrb[0].mxu0 %v6281
  %v6349 = vpop.f32.mrb[0].mxu0
  %v6350 = vadd.f32 0.0, %v6349
  %v6351 = vpop.f32.mrb[0].mxu0
  %6352 = vdwg.mxu0
  %v6354 = vsel %vm34, %v6196, 0
  %6356 = vmatprep.subr.mxu0 0.0
  %6357 = vmatpush1.msra.mxu0 %v4845
  %6358 = vmatprep.subr.mxu0 0.0
  %6359 = vmatpush1.msra.mxu0 %v4846
  %6360 = vmatprep.subr.mxu0 0.0
  %6361 = vmatpush1.msra.mxu0 %v4847
  %6362 = vmatprep.subr.mxu0 0.0
  %6363 = vmatpush1.msra.mxu0 %v4848
  %6364 = vmatprep.subr.mxu0 0.0
  %6365 = vmatpush1.msra.mxu0 0.0
  %6366 = vmatprep.subr.mxu0 0.0
  %6367 = vmatpush1.msra.mxu0 0.0
  %6368 = vmatprep.subr.mxu0 0.0
  %6369 = vmatpush1.msra.mxu0 0.0
  %6370 = vmatprep.subr.mxu0 0.0
  %6371 = vmatpush1.msra.mxu0 0.0
  %6372 = vmatprep.subr.mxu0 0.0
  %6373 = vmatpush1.msra.mxu0 0.0
  %6374 = vmatprep.subr.mxu0 0.0
  %6375 = vmatpush1.msra.mxu0 0.0
  %6376 = vmatprep.subr.mxu0 0.0
  %6377 = vmatpush1.msra.mxu0 0.0
  %6378 = vmatprep.subr.mxu0 0.0
  %6379 = vmatpush1.msra.mxu0 0.0
  %6380 = vmatprep.subr.mxu0 0.0
  %6381 = vmatpush1.msra.mxu0 0.0
  %6382 = vmatprep.subr.mxu0 0.0
  %6383 = vmatpush1.msra.mxu0 0.0
  %6384 = vmatprep.subr.mxu0 0.0
  %6385 = vmatpush1.msra.mxu0 0.0
  %6386 = vmatprep.subr.mxu0 0.0
  %6387 = vmatpush1.msra.mxu0 0.0
  %6388 = vmatprep.subr.mxu0 0.0
  %6389 = vmatpush1.msra.mxu0 0.0
  %6390 = vmatprep.subr.mxu0 0.0
  %6391 = vmatpush1.msra.mxu0 0.0
  %6392 = vmatprep.subr.mxu0 0.0
  %6393 = vmatpush1.msra.mxu0 0.0
  %6394 = vmatprep.subr.mxu0 0.0
  %6395 = vmatpush1.msra.mxu0 0.0
  %6396 = vmatprep.subr.mxu0 0.0
  %6397 = vmatpush1.msra.mxu0 0.0
  %6398 = vmatprep.subr.mxu0 0.0
  %6399 = vmatpush1.msra.mxu0 0.0
  %6400 = vmatprep.subr.mxu0 0.0
  %6401 = vmatpush1.msra.mxu0 0.0
  %6402 = vmatprep.subr.mxu0 0.0
  %6403 = vmatpush1.msra.mxu0 0.0
  %6404 = vmatprep.subr.mxu0 0.0
  %6405 = vmatpush1.msra.mxu0 0.0
  %6406 = vmatprep.subr.mxu0 0.0
  %6407 = vmatpush1.msra.mxu0 0.0
  %6408 = vmatprep.subr.mxu0 0.0
  %6409 = vmatpush1.msra.mxu0 0.0
  %6410 = vmatprep.subr.mxu0 0.0
  %6411 = vmatpush1.msra.mxu0 0.0
  %6412 = vmatprep.subr.mxu0 0.0
  %6413 = vmatpush1.msra.mxu0 0.0
  %6414 = vmatprep.subr.mxu0 0.0
  %6415 = vmatpush1.msra.mxu0 0.0
  %6416 = vmatprep.subr.mxu0 0.0
  %6417 = vmatpush1.msra.mxu0 0.0
  %6418 = vmatprep.subr.mxu0 0.0
  %6419 = vmatpush1.msra.mxu0 0.0
  %6420 = vmatprep.mubr.f32.mxu0 0.0
  %6421 = vmatmul.mubr.f32.gmra.mrb[0].mxu0 %v6354
  %v6422 = vpop.f32.mrb[0].mxu0
  %v6423 = vadd.f32 0.0, %v6422
  %v6424 = vpop.f32.mrb[0].mxu0
  %6425 = vdwg.mxu0
  %v6427 = vsel %vm34, %v6198, 0
  %6429 = vmatprep.subr.mxu0 0.0
  %6430 = vmatpush1.msra.mxu0 %v4849
  %6431 = vmatprep.subr.mxu0 0.0
  %6432 = vmatpush1.msra.mxu0 %v4850
  %6433 = vmatprep.subr.mxu0 0.0
  %6434 = vmatpush1.msra.mxu0 %v4851
  %6435 = vmatprep.subr.mxu0 0.0
  %6436 = vmatpush1.msra.mxu0 %v4852
  %6437 = vmatprep.subr.mxu0 0.0
  %6438 = vmatpush1.msra.mxu0 0.0
  %6439 = vmatprep.subr.mxu0 0.0
  %6440 = vmatpush1.msra.mxu0 0.0
  %6441 = vmatprep.subr.mxu0 0.0
  %6442 = vmatpush1.msra.mxu0 0.0
  %6443 = vmatprep.subr.mxu0 0.0
  %6444 = vmatpush1.msra.mxu0 0.0
  %6445 = vmatprep.subr.mxu0 0.0
  %6446 = vmatpush1.msra.mxu0 0.0
  %6447 = vmatprep.subr.mxu0 0.0
  %6448 = vmatpush1.msra.mxu0 0.0
  %6449 = vmatprep.subr.mxu0 0.0
  %6450 = vmatpush1.msra.mxu0 0.0
  %6451 = vmatprep.subr.mxu0 0.0
  %6452 = vmatpush1.msra.mxu0 0.0
  %6453 = vmatprep.subr.mxu0 0.0
  %6454 = vmatpush1.msra.mxu0 0.0
  %6455 = vmatprep.subr.mxu0 0.0
  %6456 = vmatpush1.msra.mxu0 0.0
  %6457 = vmatprep.subr.mxu0 0.0
  %6458 = vmatpush1.msra.mxu0 0.0
  %6459 = vmatprep.subr.mxu0 0.0
  %6460 = vmatpush1.msra.mxu0 0.0
  %6461 = vmatprep.subr.mxu0 0.0
  %6462 = vmatpush1.msra.mxu0 0.0
  %6463 = vmatprep.subr.mxu0 0.0
  %6464 = vmatpush1.msra.mxu0 0.0
  %6465 = vmatprep.subr.mxu0 0.0
  %6466 = vmatpush1.msra.mxu0 0.0
  %6467 = vmatprep.subr.mxu0 0.0
  %6468 = vmatpush1.msra.mxu0 0.0
  %6469 = vmatprep.subr.mxu0 0.0
  %6470 = vmatpush1.msra.mxu0 0.0
  %6471 = vmatprep.subr.mxu0 0.0
  %6472 = vmatpush1.msra.mxu0 0.0
  %6473 = vmatprep.subr.mxu0 0.0
  %6474 = vmatpush1.msra.mxu0 0.0
  %6475 = vmatprep.subr.mxu0 0.0
  %6476 = vmatpush1.msra.mxu0 0.0
  %6477 = vmatprep.subr.mxu0 0.0
  %6478 = vmatpush1.msra.mxu0 0.0
  %6479 = vmatprep.subr.mxu0 0.0
  %6480 = vmatpush1.msra.mxu0 0.0
  %6481 = vmatprep.subr.mxu0 0.0
  %6482 = vmatpush1.msra.mxu0 0.0
  %6483 = vmatprep.subr.mxu0 0.0
  %6484 = vmatpush1.msra.mxu0 0.0
  %6485 = vmatprep.subr.mxu0 0.0
  %6486 = vmatpush1.msra.mxu0 0.0
  %6487 = vmatprep.subr.mxu0 0.0
  %6488 = vmatpush1.msra.mxu0 0.0
  %6489 = vmatprep.subr.mxu0 0.0
  %6490 = vmatpush1.msra.mxu0 0.0
  %6491 = vmatprep.subr.mxu0 0.0
  %6492 = vmatpush1.msra.mxu0 0.0
  %6493 = vmatprep.mubr.f32.mxu0 0.0
  %6494 = vmatmul.mubr.f32.gmra.mrb[0].mxu0 %v6427
  %v6495 = vpop.f32.mrb[0].mxu0
  %v6496 = vadd.f32 0.0, %v6495
  %v6497 = vpop.f32.mrb[0].mxu0
  %6498 = vdwg.mxu0
  %v6500 = vsel %vm34, %v6200, 0
  %6502 = vmatprep.subr.mxu0 0.0
  %6503 = vmatpush1.msra.mxu0 %v4853
  %6504 = vmatprep.subr.mxu0 0.0
  %6505 = vmatpush1.msra.mxu0 %v4854
  %6506 = vmatprep.subr.mxu0 0.0
  %6507 = vmatpush1.msra.mxu0 %v4855
  %6508 = vmatprep.subr.mxu0 0.0
  %6509 = vmatpush1.msra.mxu0 %v4856
  %6510 = vmatprep.subr.mxu0 0.0
  %6511 = vmatpush1.msra.mxu0 0.0
  %6512 = vmatprep.subr.mxu0 0.0
  %6513 = vmatpush1.msra.mxu0 0.0
  %6514 = vmatprep.subr.mxu0 0.0
  %6515 = vmatpush1.msra.mxu0 0.0
  %6516 = vmatprep.subr.mxu0 0.0
  %6517 = vmatpush1.msra.mxu0 0.0
  %6518 = vmatprep.subr.mxu0 0.0
  %6519 = vmatpush1.msra.mxu0 0.0
  %6520 = vmatprep.subr.mxu0 0.0
  %6521 = vmatpush1.msra.mxu0 0.0
  %6522 = vmatprep.subr.mxu0 0.0
  %6523 = vmatpush1.msra.mxu0 0.0
  %6524 = vmatprep.subr.mxu0 0.0
  %6525 = vmatpush1.msra.mxu0 0.0
  %6526 = vmatprep.subr.mxu0 0.0
  %6527 = vmatpush1.msra.mxu0 0.0
  %6528 = vmatprep.subr.mxu0 0.0
  %6529 = vmatpush1.msra.mxu0 0.0
  %6530 = vmatprep.subr.mxu0 0.0
  %6531 = vmatpush1.msra.mxu0 0.0
  %6532 = vmatprep.subr.mxu0 0.0
  %6533 = vmatpush1.msra.mxu0 0.0
  %6534 = vmatprep.subr.mxu0 0.0
  %6535 = vmatpush1.msra.mxu0 0.0
  %6536 = vmatprep.subr.mxu0 0.0
  %6537 = vmatpush1.msra.mxu0 0.0
  %6538 = vmatprep.subr.mxu0 0.0
  %6539 = vmatpush1.msra.mxu0 0.0
  %6540 = vmatprep.subr.mxu0 0.0
  %6541 = vmatpush1.msra.mxu0 0.0
  %6542 = vmatprep.subr.mxu0 0.0
  %6543 = vmatpush1.msra.mxu0 0.0
  %6544 = vmatprep.subr.mxu0 0.0
  %6545 = vmatpush1.msra.mxu0 0.0
  %6546 = vmatprep.subr.mxu0 0.0
  %6547 = vmatpush1.msra.mxu0 0.0
  %6548 = vmatprep.subr.mxu0 0.0
  %6549 = vmatpush1.msra.mxu0 0.0
  %6550 = vmatprep.subr.mxu0 0.0
  %6551 = vmatpush1.msra.mxu0 0.0
  %6552 = vmatprep.subr.mxu0 0.0
  %6553 = vmatpush1.msra.mxu0 0.0
  %6554 = vmatprep.subr.mxu0 0.0
  %6555 = vmatpush1.msra.mxu0 0.0
  %6556 = vmatprep.subr.mxu0 0.0
  %6557 = vmatpush1.msra.mxu0 0.0
  %6558 = vmatprep.subr.mxu0 0.0
  %6559 = vmatpush1.msra.mxu0 0.0
  %6560 = vmatprep.subr.mxu0 0.0
  %6561 = vmatpush1.msra.mxu0 0.0
  %6562 = vmatprep.subr.mxu0 0.0
  %6563 = vmatpush1.msra.mxu0 0.0
  %6564 = vmatprep.subr.mxu0 0.0
  %6565 = vmatpush1.msra.mxu0 0.0
  %6566 = vmatprep.mubr.f32.mxu0 0.0
  %6567 = vmatmul.mubr.f32.gmra.mrb[0].mxu0 %v6500
  %v6568 = vpop.f32.mrb[0].mxu0
  %v6569 = vadd.f32 0.0, %v6568
  %v6570 = vpop.f32.mrb[0].mxu0
  %6571 = vdwg.mxu0
  %v6573 = vsel %vm34, %v6202, 0
  %6575 = vmatprep.subr.mxu0 0.0
  %6576 = vmatpush1.msra.mxu0 %v4857
  %6577 = vmatprep.subr.mxu0 0.0
  %6578 = vmatpush1.msra.mxu0 %v4858
  %6579 = vmatprep.subr.mxu0 0.0
  %6580 = vmatpush1.msra.mxu0 %v4859
  %6581 = vmatprep.subr.mxu0 0.0
  %6582 = vmatpush1.msra.mxu0 %v4860
  %6583 = vmatprep.subr.mxu0 0.0
  %6584 = vmatpush1.msra.mxu0 0.0
  %6585 = vmatprep.subr.mxu0 0.0
  %6586 = vmatpush1.msra.mxu0 0.0
  %6587 = vmatprep.subr.mxu0 0.0
  %6588 = vmatpush1.msra.mxu0 0.0
  %6589 = vmatprep.subr.mxu0 0.0
  %6590 = vmatpush1.msra.mxu0 0.0
  %6591 = vmatprep.subr.mxu0 0.0
  %6592 = vmatpush1.msra.mxu0 0.0
  %6593 = vmatprep.subr.mxu0 0.0
  %6594 = vmatpush1.msra.mxu0 0.0
  %6595 = vmatprep.subr.mxu0 0.0
  %6596 = vmatpush1.msra.mxu0 0.0
  %6597 = vmatprep.subr.mxu0 0.0
  %6598 = vmatpush1.msra.mxu0 0.0
  %6599 = vmatprep.subr.mxu0 0.0
  %6600 = vmatpush1.msra.mxu0 0.0
  %6601 = vmatprep.subr.mxu0 0.0
  %6602 = vmatpush1.msra.mxu0 0.0
  %6603 = vmatprep.subr.mxu0 0.0
  %6604 = vmatpush1.msra.mxu0 0.0
  %6605 = vmatprep.subr.mxu0 0.0
  %6606 = vmatpush1.msra.mxu0 0.0
  %6607 = vmatprep.subr.mxu0 0.0
  %6608 = vmatpush1.msra.mxu0 0.0
  %6609 = vmatprep.subr.mxu0 0.0
  %6610 = vmatpush1.msra.mxu0 0.0
  %6611 = vmatprep.subr.mxu0 0.0
  %6612 = vmatpush1.msra.mxu0 0.0
  %6613 = vmatprep.subr.mxu0 0.0
  %6614 = vmatpush1.msra.mxu0 0.0
  %6615 = vmatprep.subr.mxu0 0.0
  %6616 = vmatpush1.msra.mxu0 0.0
  %6617 = vmatprep.subr.mxu0 0.0
  %6618 = vmatpush1.msra.mxu0 0.0
  %6619 = vmatprep.subr.mxu0 0.0
  %6620 = vmatpush1.msra.mxu0 0.0
  %6621 = vmatprep.subr.mxu0 0.0
  %6622 = vmatpush1.msra.mxu0 0.0
  %6623 = vmatprep.subr.mxu0 0.0
  %6624 = vmatpush1.msra.mxu0 0.0
  %6625 = vmatprep.subr.mxu0 0.0
  %6626 = vmatpush1.msra.mxu0 0.0
  %6627 = vmatprep.subr.mxu0 0.0
  %6628 = vmatpush1.msra.mxu0 0.0
  %6629 = vmatprep.subr.mxu0 0.0
  %6630 = vmatpush1.msra.mxu0 0.0
  %6631 = vmatprep.subr.mxu0 0.0
  %6632 = vmatpush1.msra.mxu0 0.0
  %6633 = vmatprep.subr.mxu0 0.0
  %6634 = vmatpush1.msra.mxu0 0.0
  %6635 = vmatprep.subr.mxu0 0.0
  %6636 = vmatpush1.msra.mxu0 0.0
  %6637 = vmatprep.subr.mxu0 0.0
  %6638 = vmatpush1.msra.mxu0 0.0
  %6639 = vmatprep.mubr.f32.mxu0 0.0
  %6640 = vmatmul.mubr.f32.gmra.mrb[0].mxu0 %v6573
  %v6641 = vpop.f32.mrb[0].mxu0
  %v6642 = vadd.f32 0.0, %v6641
  %v6643 = vpop.f32.mrb[0].mxu0
  %6644 = vdwg.mxu0
  %v6646 = vsel %vm34, %v6204, 0
  %6648 = vmatprep.subr.mxu0 0.0
  %6649 = vmatpush1.msra.mxu0 %v4861
  %6650 = vmatprep.subr.mxu0 0.0
  %6651 = vmatpush1.msra.mxu0 %v4862
  %6652 = vmatprep.subr.mxu0 0.0
  %6653 = vmatpush1.msra.mxu0 %v4863
  %6654 = vmatprep.subr.mxu0 0.0
  %6655 = vmatpush1.msra.mxu0 %v4864
  %6656 = vmatprep.subr.mxu0 0.0
  %6657 = vmatpush1.msra.mxu0 0.0
  %6658 = vmatprep.subr.mxu0 0.0
  %6659 = vmatpush1.msra.mxu0 0.0
  %6660 = vmatprep.subr.mxu0 0.0
  %6661 = vmatpush1.msra.mxu0 0.0
  %6662 = vmatprep.subr.mxu0 0.0
  %6663 = vmatpush1.msra.mxu0 0.0
  %6664 = vmatprep.subr.mxu0 0.0
  %6665 = vmatpush1.msra.mxu0 0.0
  %6666 = vmatprep.subr.mxu0 0.0
  %6667 = vmatpush1.msra.mxu0 0.0
  %6668 = vmatprep.subr.mxu0 0.0
  %6669 = vmatpush1.msra.mxu0 0.0
  %6670 = vmatprep.subr.mxu0 0.0
  %6671 = vmatpush1.msra.mxu0 0.0
  %6672 = vmatprep.subr.mxu0 0.0
  %6673 = vmatpush1.msra.mxu0 0.0
  %6674 = vmatprep.subr.mxu0 0.0
  %6675 = vmatpush1.msra.mxu0 0.0
  %6676 = vmatprep.subr.mxu0 0.0
  %6677 = vmatpush1.msra.mxu0 0.0
  %6678 = vmatprep.subr.mxu0 0.0
  %6679 = vmatpush1.msra.mxu0 0.0
  %6680 = vmatprep.subr.mxu0 0.0
  %6681 = vmatpush1.msra.mxu0 0.0
  %6682 = vmatprep.subr.mxu0 0.0
  %6683 = vmatpush1.msra.mxu0 0.0
  %6684 = vmatprep.subr.mxu0 0.0
  %6685 = vmatpush1.msra.mxu0 0.0
  %6686 = vmatprep.subr.mxu0 0.0
  %6687 = vmatpush1.msra.mxu0 0.0
  %6688 = vmatprep.subr.mxu0 0.0
  %6689 = vmatpush1.msra.mxu0 0.0
  %6690 = vmatprep.subr.mxu0 0.0
  %6691 = vmatpush1.msra.mxu0 0.0
  %6692 = vmatprep.subr.mxu0 0.0
  %6693 = vmatpush1.msra.mxu0 0.0
  %6694 = vmatprep.subr.mxu0 0.0
  %6695 = vmatpush1.msra.mxu0 0.0
  %6696 = vmatprep.subr.mxu0 0.0
  %6697 = vmatpush1.msra.mxu0 0.0
  %6698 = vmatprep.subr.mxu0 0.0
  %6699 = vmatpush1.msra.mxu0 0.0
  %6700 = vmatprep.subr.mxu0 0.0
  %6701 = vmatpush1.msra.mxu0 0.0
  %6702 = vmatprep.subr.mxu0 0.0
  %6703 = vmatpush1.msra.mxu0 0.0
  %6704 = vmatprep.subr.mxu0 0.0
  %6705 = vmatpush1.msra.mxu0 0.0
  %6706 = vmatprep.subr.mxu0 0.0
  %6707 = vmatpush1.msra.mxu0 0.0
  %6708 = vmatprep.subr.mxu0 0.0
  %6709 = vmatpush1.msra.mxu0 0.0
  %6710 = vmatprep.subr.mxu0 0.0
  %6711 = vmatpush1.msra.mxu0 0.0
  %6712 = vmatprep.mubr.f32.mxu0 0.0
  %6713 = vmatmul.mubr.f32.gmra.mrb[0].mxu0 %v6646
  %v6714 = vpop.f32.mrb[0].mxu0
  %v6715 = vadd.f32 0.0, %v6714
  %v6716 = vpop.f32.mrb[0].mxu0
  %6717 = vdwg.mxu0
  %v6719 = vsel %vm34, %v6206, 0
  %6721 = vmatprep.subr.mxu0 0.0
  %6722 = vmatpush1.msra.mxu0 %v4865
  %6723 = vmatprep.subr.mxu0 0.0
  %6724 = vmatpush1.msra.mxu0 %v4866
  %6725 = vmatprep.subr.mxu0 0.0
  %6726 = vmatpush1.msra.mxu0 %v4867
  %6727 = vmatprep.subr.mxu0 0.0
  %6728 = vmatpush1.msra.mxu0 %v4868
  %6729 = vmatprep.subr.mxu0 0.0
  %6730 = vmatpush1.msra.mxu0 0.0
  %6731 = vmatprep.subr.mxu0 0.0
  %6732 = vmatpush1.msra.mxu0 0.0
  %6733 = vmatprep.subr.mxu0 0.0
  %6734 = vmatpush1.msra.mxu0 0.0
  %6735 = vmatprep.subr.mxu0 0.0
  %6736 = vmatpush1.msra.mxu0 0.0
  %6737 = vmatprep.subr.mxu0 0.0
  %6738 = vmatpush1.msra.mxu0 0.0
  %6739 = vmatprep.subr.mxu0 0.0
  %6740 = vmatpush1.msra.mxu0 0.0
  %6741 = vmatprep.subr.mxu0 0.0
  %6742 = vmatpush1.msra.mxu0 0.0
  %6743 = vmatprep.subr.mxu0 0.0
  %6744 = vmatpush1.msra.mxu0 0.0
  %6745 = vmatprep.subr.mxu0 0.0
  %6746 = vmatpush1.msra.mxu0 0.0
  %6747 = vmatprep.subr.mxu0 0.0
  %6748 = vmatpush1.msra.mxu0 0.0
  %6749 = vmatprep.subr.mxu0 0.0
  %6750 = vmatpush1.msra.mxu0 0.0
  %6751 = vmatprep.subr.mxu0 0.0
  %6752 = vmatpush1.msra.mxu0 0.0
  %6753 = vmatprep.subr.mxu0 0.0
  %6754 = vmatpush1.msra.mxu0 0.0
  %6755 = vmatprep.subr.mxu0 0.0
  %6756 = vmatpush1.msra.mxu0 0.0
  %6757 = vmatprep.subr.mxu0 0.0
  %6758 = vmatpush1.msra.mxu0 0.0
  %6759 = vmatprep.subr.mxu0 0.0
  %6760 = vmatpush1.msra.mxu0 0.0
  %6761 = vmatprep.subr.mxu0 0.0
  %6762 = vmatpush1.msra.mxu0 0.0
  %6763 = vmatprep.subr.mxu0 0.0
  %6764 = vmatpush1.msra.mxu0 0.0
  %6765 = vmatprep.subr.mxu0 0.0
  %6766 = vmatpush1.msra.mxu0 0.0
  %6767 = vmatprep.subr.mxu0 0.0
  %6768 = vmatpush1.msra.mxu0 0.0
  %6769 = vmatprep.subr.mxu0 0.0
  %6770 = vmatpush1.msra.mxu0 0.0
  %6771 = vmatprep.subr.mxu0 0.0
  %6772 = vmatpush1.msra.mxu0 0.0
  %6773 = vmatprep.subr.mxu0 0.0
  %6774 = vmatpush1.msra.mxu0 0.0
  %6775 = vmatprep.subr.mxu0 0.0
  %6776 = vmatpush1.msra.mxu0 0.0
  %6777 = vmatprep.subr.mxu0 0.0
  %6778 = vmatpush1.msra.mxu0 0.0
  %6779 = vmatprep.subr.mxu0 0.0
  %6780 = vmatpush1.msra.mxu0 0.0
  %6781 = vmatprep.subr.mxu0 0.0
  %6782 = vmatpush1.msra.mxu0 0.0
  %6783 = vmatprep.subr.mxu0 0.0
  %6784 = vmatpush1.msra.mxu0 0.0
  %6785 = vmatprep.mubr.f32.mxu0 0.0
  %6786 = vmatmul.mubr.f32.gmra.mrb[0].mxu0 %v6719
  %v6787 = vpop.f32.mrb[0].mxu0
  %v6788 = vadd.f32 0.0, %v6787
  %v6789 = vpop.f32.mrb[0].mxu0
  %6790 = vdwg.mxu0
  %6791 = vst.msk [vmem:[%s6] sm:$0xff] %vm944, %v4837
  %6792 = vst.msk [vmem:[%s6 + $0x8] sm:$0xff] %vm944, %v4838
  %6793 = vst.msk [vmem:[%s6 + $0x10] sm:$0xff] %vm944, %v4839
  %6794 = vst.msk [vmem:[%s6 + $0x18] sm:$0xff] %vm944, %v4840
  %6795 = vst.msk [vmem:[%s6 + $0x30] sm:$0xff] %vm944, %v4841
  %6796 = vst.msk [vmem:[%s6 + $0x38] sm:$0xff] %vm944, %v4842
  %6797 = vst.msk [vmem:[%s6 + $0x40] sm:$0xff] %vm944, %v4843
  %6798 = vst.msk [vmem:[%s6 + $0x48] sm:$0xff] %vm944, %v4844
  %6799 = vst.msk [vmem:[%s6 + $0x60] sm:$0xff] %vm944, %v4845
  %6800 = vst.msk [vmem:[%s6 + $0x68] sm:$0xff] %vm944, %v4846
  %6801 = vst.msk [vmem:[%s6 + $0x70] sm:$0xff] %vm944, %v4847
  %6802 = vst.msk [vmem:[%s6 + $0x78] sm:$0xff] %vm944, %v4848
  %6803 = vst.msk [vmem:[%s6 + $0x90] sm:$0xff] %vm944, %v4849
  %6804 = vst.msk [vmem:[%s6 + $0x98] sm:$0xff] %vm944, %v4850
  %6805 = vst.msk [vmem:[%s6 + $0xa0] sm:$0xff] %vm944, %v4851
  %6806 = vst.msk [vmem:[%s6 + $0xa8] sm:$0xff] %vm944, %v4852
  %6807 = vst.msk [vmem:[%s6 + $0xc0] sm:$0xff] %vm944, %v4853
  %6808 = vst.msk [vmem:[%s6 + $0xc8] sm:$0xff] %vm944, %v4854
  %6809 = vst.msk [vmem:[%s6 + $0xd0] sm:$0xff] %vm944, %v4855
  %6810 = vst.msk [vmem:[%s6 + $0xd8] sm:$0xff] %vm944, %v4856
  %6811 = vst.msk [vmem:[%s6 + $0xf0] sm:$0xff] %vm944, %v4857
  %6812 = vst.msk [vmem:[%s6 + $0xf8] sm:$0xff] %vm944, %v4858
  %6813 = vst.msk [vmem:[%s6 + $0x100] sm:$0xff] %vm944, %v4859
  %6814 = vst.msk [vmem:[%s6 + $0x108] sm:$0xff] %vm944, %v4860
  %6815 = vst.msk [vmem:[%s6 + $0x120] sm:$0xff] %vm944, %v4861
  %6816 = vst.msk [vmem:[%s6 + $0x128] sm:$0xff] %vm944, %v4862
  %6817 = vst.msk [vmem:[%s6 + $0x130] sm:$0xff] %vm944, %v4863
  %6818 = vst.msk [vmem:[%s6 + $0x138] sm:$0xff] %vm944, %v4864
  %6819 = vst.msk [vmem:[%s6 + $0x150] sm:$0xff] %vm944, %v4865
  %6820 = vst.msk [vmem:[%s6 + $0x158] sm:$0xff] %vm944, %v4866
  %6821 = vst.msk [vmem:[%s6 + $0x160] sm:$0xff] %vm944, %v4867
  %6822 = vst.msk [vmem:[%s6 + $0x168] sm:$0xff] %vm944, %v4868
  %6823 = vst.msk [vmem:[%s6 + $0x20] sm:$0xf] %vm4877, %v6277
  %6824 = vst.msk [vmem:[%s6 + $0x50] sm:$0xf] %vm4877, %v6350
  %6825 = vst.msk [vmem:[%s6 + $0x80] sm:$0xf] %vm4877, %v6423
  %6826 = vst.msk [vmem:[%s6 + $0xb0] sm:$0xf] %vm4877, %v6496
  %6827 = vst.msk [vmem:[%s6 + $0xe0] sm:$0xf] %vm4877, %v6569
  %6828 = vst.msk [vmem:[%s6 + $0x110] sm:$0xf] %vm4877, %v6642
  %6829 = vst.msk [vmem:[%s6 + $0x140] sm:$0xf] %vm4877, %v6715
  %6830 = vst.msk [vmem:[%s6 + $0x170] sm:$0xf] %vm4877, %v6788
  %6831 = vst.msk [vmem:[%s6 + $0x24] sm:$0xf] %vm4877, %v196
  %6832 = vst.msk [vmem:[%s6 + $0x54] sm:$0xf] %vm4877, %v220
  %6833 = vst.msk [vmem:[%s6 + $0x84] sm:$0xf] %vm4877, %v203
  %6834 = vst.msk [vmem:[%s6 + $0xb4] sm:$0xf] %vm4877, %v221
  %6835 = vst.msk [vmem:[%s6 + $0xe4] sm:$0xf] %vm4877, %v212
  %6836 = vst.msk [vmem:[%s6 + $0x114] sm:$0xf] %vm4877, %v222
  %6837 = vst.msk [vmem:[%s6 + $0x144] sm:$0xf] %vm4877, %v219
  %6838 = vst.msk [vmem:[%s6 + $0x174] sm:$0xf] %vm4877, %v223
  %6839 = vrot.lane.b32.xlu0 %v4640, 60
  %v6840 = vpop.permute.xlu0 %6839
  %6841 = vrot.lane.b32.xlu0 %v4644, 60
  %v6842 = vpop.permute.xlu0 %6841
  %6843 = vrot.lane.b32.xlu0 %v4648, 60
  %v6844 = vpop.permute.xlu0 %6843
  %6845 = vrot.lane.b32.xlu0 %v4652, 60
  %v6846 = vpop.permute.xlu0 %6845
  %6847 = vrot.lane.b32.xlu0 %v4656, 60
  %v6848 = vpop.permute.xlu0 %6847
  %6849 = vrot.lane.b32.xlu0 %v4660, 60
  %v6850 = vpop.permute.xlu0 %6849
  %6851 = vrot.lane.b32.xlu0 %v4664, 60
  %v6852 = vpop.permute.xlu0 %6851
  %6853 = vrot.lane.b32.xlu0 %v4668, 60
  %v6854 = vpop.permute.xlu0 %6853
  %6863 = vst.msk [vmem:[%s6 + $0x28] sm:$0x1] %vm831, %v6840
  %6864 = vst.msk [vmem:[%s6 + $0x58] sm:$0x1] %vm831, %v6842
  %6865 = vst.msk [vmem:[%s6 + $0x88] sm:$0x1] %vm831, %v6844
  %6866 = vst.msk [vmem:[%s6 + $0xb8] sm:$0x1] %vm831, %v6846
  %6867 = vst.msk [vmem:[%s6 + $0xe8] sm:$0x1] %vm831, %v6848
  %6868 = vst.msk [vmem:[%s6 + $0x118] sm:$0x1] %vm831, %v6850
  %6869 = vst.msk [vmem:[%s6 + $0x148] sm:$0x1] %vm831, %v6852
  %6870 = vst.msk [vmem:[%s6 + $0x178] sm:$0x1] %vm831, %v6854
  %6871 = vst.msk [vmem:[%s7] sm:$0xf] %vm6118, %v6192
  %6872 = vst.msk [vmem:[%s7 + $0x8] sm:$0xf] %vm6118, %v6194
  %6873 = vst.msk [vmem:[%s7 + $0x10] sm:$0xf] %vm6118, %v6196
  %6874 = vst.msk [vmem:[%s7 + $0x18] sm:$0xf] %vm6118, %v6198
  %6875 = vst.msk [vmem:[%s7 + $0x20] sm:$0xf] %vm6118, %v6200
  %6876 = vst.msk [vmem:[%s7 + $0x28] sm:$0xf] %vm6118, %v6202
  %6877 = vst.msk [vmem:[%s7 + $0x30] sm:$0xf] %vm6118, %v6204
  %6878 = vst.msk [vmem:[%s7 + $0x38] sm:$0xf] %vm6118, %v6206
  %6879 = vst.msk [vmem:[%s7 + $0x4] sm:$0x1] %vm2185, %v3949
  %6880 = vst.msk [vmem:[%s7 + $0xc] sm:$0x1] %vm2185, %v3950
  %6881 = vst.msk [vmem:[%s7 + $0x14] sm:$0x1] %vm2185, %v3951
  %6882 = vst.msk [vmem:[%s7 + $0x1c] sm:$0x1] %vm2185, %v3952
  %6883 = vst.msk [vmem:[%s7 + $0x24] sm:$0x1] %vm2185, %v3953
  %6884 = vst.msk [vmem:[%s7 + $0x2c] sm:$0x1] %vm2185, %v3954
  %6885 = vst.msk [vmem:[%s7 + $0x34] sm:$0x1] %vm2185, %v3955
  %6886 = vst.msk [vmem:[%s7 + $0x3c] sm:$0x1] %vm2185, %v3956
  %6887 = vst.msk [vmem:[%s7 + $0x5] sm:$0x1] %vm2185, %v751
  %6888 = vst.msk [vmem:[%s7 + $0xd] sm:$0x1] %vm2185, %v752
  %6889 = vst.msk [vmem:[%s7 + $0x15] sm:$0x1] %vm2185, %v753
  %6890 = vst.msk [vmem:[%s7 + $0x1d] sm:$0x1] %vm2185, %v754
  %6891 = vst.msk [vmem:[%s7 + $0x25] sm:$0x1] %vm2185, %v755
  %6892 = vst.msk [vmem:[%s7 + $0x2d] sm:$0x1] %vm2185, %v756
  %6893 = vst.msk [vmem:[%s7 + $0x35] sm:$0x1] %vm2185, %v757
  %6894 = vst.msk [vmem:[%s7 + $0x3d] sm:$0x1] %vm2185, %v758
  // Predicated region
  $region26: #{tpu_custom_call.1} parent=0 // pred_check
    _
  $region27: #{tpu_custom_call.1} parent=0 // pred_check_branch
    %6896 = sbr.rel (0) target = $region29
  $region28: #{tpu_custom_call.1} parent=0 // pred_region
    _
  $region29: #{tpu_custom_call.1} parent=0 // pred_fallthru
    _
  // Predicated region
  $region30: #{tpu_custom_call.1} parent=0 // pred_check
    _
  $region31: #{tpu_custom_call.1} parent=0 // pred_check_branch
    %6898 = sbr.rel (0) target = $region33
  $region32: #{tpu_custom_call.1} parent=0 // pred_region
    _
  $region33: #{tpu_custom_call.1} parent=0 // pred_fallthru
    _
  // Predicated region
  $region34: #{tpu_custom_call.1} parent=0 // pred_check
    _
  $region35: #{tpu_custom_call.1} parent=0 // pred_check_branch
    %6900 = sbr.rel (0) target = $region37
  $region36: #{tpu_custom_call.1} parent=0 // pred_region
    _
  $region37: #{tpu_custom_call.1} parent=0 // pred_fallthru
    _
  // Predicated region
  $region38: #{tpu_custom_call.1} parent=0 // pred_check
    _
  $region39: #{tpu_custom_call.1} parent=0 // pred_check_branch
    %6902 = sbr.rel (0) target = $region41
  $region40: #{tpu_custom_call.1} parent=0 // pred_region
    _
  $region41: #{tpu_custom_call.1} parent=0 // pred_fallthru
    _

</llo_original>
